<compile_context>
chip_gen: v6e
topology: v6e:2x2x1
jax: 0.10.0
libtpu: 0.0.40
codegen_flags: <defaults>
</compile_context>

<pallas_src>
import math
import jax
import jax.numpy as jnp
from jax.experimental import pallas as pl
from jax.experimental.pallas import tpu as pltpu


_VMEM = pl.BlockSpec(memory_space=pltpu.MemorySpace.VMEM)
_ANY = pl.BlockSpec(memory_space=pl.ANY)

_UNROLL = 16   # timesteps per fori_loop iteration (static inner unroll)
_SEQ = 512     # LSTM sequence length == MLP feature width (fixed by the module)


# --------------------------- fused LSTM + MLP kernel ---------------------------
def fused_rnn_mlp_kernel(wx4_ref, bx4_ref, wh4_ref, x_ref,
                         w1_hbm, b1_ref, w2_hbm, b2_ref, w3_hbm, b3_ref,
                         out_ref,
                         hbuf, w1v, w2v, w3v, dma_sem):
    # wx4/bx4/wh4 : (4, 1) VMEM f32, gate order (i, f, g, o); rows i,f,o pre-scaled by 0.5.
    # x_ref       : (T, Bp) VMEM f32, time-major input, batch in lanes.
    # wN_hbm      : (512, 512) bf16 in HBM (pl.ANY), PyTorch (out, in) layout.
    # bN_ref      : (512, 1) VMEM f32.
    # out_ref     : (512, Bp) VMEM f32 (features in sublanes, batch in lanes).
    # hbuf        : (T, Bp) VMEM f32 scratch holding every h_t.
    # wNv         : (512, 512) bf16 VMEM scratch (DMA landing buffers).
    # dma_sem     : (3,) DMA semaphores.
    T, Bp = x_ref.shape

    # Kick off the MLP-weight DMAs now; they complete under the serial recurrence.
    w_copies = (
        pltpu.make_async_copy(w1_hbm, w1v, dma_sem.at[0]),
        pltpu.make_async_copy(w2_hbm, w2v, dma_sem.at[1]),
        pltpu.make_async_copy(w3_hbm, w3v, dma_sem.at[2]),
    )
    for cp in w_copies:
        cp.start()

    # Hoist the (4, Bp) gate-constant lane broadcasts out of the loop (JAX won't CSE).
    wxv = jnp.broadcast_to(wx4_ref[...], (4, Bp))
    bxv = jnp.broadcast_to(bx4_ref[...], (4, Bp))
    whv = jnp.broadcast_to(wh4_ref[...], (4, Bp))

    def block_step(blk, carry):
        h, c = carry                                       # (1, Bp) f32 each
        base = pl.multiple_of(blk * _UNROLL, _UNROLL)
        for r in range(_UNROLL):                           # static unroll
            t = base + r
            xr = x_ref[pl.ds(t, 1), :]                     # (1, Bp) row load
            zx = xr * wxv + bxv                            # (4, Bp); off the h critical path
            tz = jnp.tanh(zx + h * whv)                    # ONE EUP issue for all 4 gates
            ti, tf = tz[0:1, :], tz[1:2, :]
            tg, to = tz[2:3, :], tz[3:4, :]
            # i,f,o = 0.5*(t?+1) (sigmoid via tanh); g = tg; folded into the update:
            c = 0.5 * ((tf + 1.0) * c + (ti + 1.0) * tg)
            h = (0.5 * (to + 1.0)) * jnp.tanh(c)
            hbuf[pl.ds(t, 1), :] = h                       # direct row store (idle vst slot)
        return h, c

    zero = jnp.zeros((1, Bp), jnp.float32)
    jax.lax.fori_loop(0, T // _UNROLL, block_step, (zero, zero))

    # ------------- 3-layer MLP in (feature, batch) orientation: y = W @ h + b -------------
    h_fb = hbuf[...].astype(jnp.bfloat16)                  # (512, Bp)
    w_copies[0].wait()
    a1 = jnp.dot(w1v[...], h_fb, preferred_element_type=jnp.float32) + b1_ref[...]
    a1 = jnp.maximum(a1, 0.0).astype(jnp.bfloat16)
    # TODO(synk): Dropout(p=0.3) layers are identity here (inference semantics).
    w_copies[1].wait()
    a2 = jnp.dot(w2v[...], a1, preferred_element_type=jnp.float32) + b2_ref[...]
    a2 = jnp.maximum(a2, 0.0).astype(jnp.bfloat16)
    w_copies[2].wait()
    out_ref[...] = jnp.dot(w3v[...], a2, preferred_element_type=jnp.float32) + b3_ref[...]


# ------------------------------- wrapper --------------------------------
def prepare_kernel_params(params):
    """One-time conversion to kernel-friendly layouts/dtypes (outside the fwd path)."""
    scale = jnp.array([0.5, 0.5, 1.0, 0.5], jnp.float32)    # (i, f, g, o); g unscaled
    b = (params["b_ih"] + params["b_hh"]).astype(jnp.float32)
    return {
        "wx4": (scale * params["w_ih"].astype(jnp.float32))[:, None],   # (4, 1)
        "wh4": (scale * params["w_hh"].astype(jnp.float32))[:, None],
        "bx4": (scale * b)[:, None],
        "w1": params["w1"].astype(jnp.bfloat16),             # (512, 512), (out, in) layout
        "w2": params["w2"].astype(jnp.bfloat16),
        "w3": params["w3"].astype(jnp.bfloat16),
        "b1": params["b1"][:, None].astype(jnp.float32),      # (512, 1)
        "b2": params["b2"][:, None].astype(jnp.float32),
        "b3": params["b3"][:, None].astype(jnp.float32),
    }


@jax.jit
def rnn_forward(x, kp):
    """x: (B, 1, T) float32 with T == 512. Returns (B, 512)."""
    B, _, T = x.shape
    if T != _SEQ or T % _UNROLL != 0:
        raise ValueError(f"sequence length must be {_SEQ} (multiple of {_UNROLL}), got {T}")
    xs = x[:, 0, :]                                      # squeeze(1): (B, T)
    # Keep Bp pinned to 128 lanes: serial-recurrence cost scales with lane groups.
    # TODO(synk): for B > 128 add a batch grid axis (Bp=128 blocks, "parallel") so
    # v7x's two TensorCores each run an independent recurrence on half the batch.
    Bp = ((B + 127) // 128) * 128
    x_tb = jnp.zeros((T, Bp), jnp.float32).at[:, :B].set(jnp.transpose(xs))

    out_fb = pl.pallas_call(
        fused_rnn_mlp_kernel,
        out_shape=jax.ShapeDtypeStruct((_SEQ, Bp), jnp.float32),
        in_specs=[_VMEM, _VMEM, _VMEM, _VMEM,            # wx4, bx4, wh4, x
                  _ANY, _VMEM, _ANY, _VMEM, _ANY, _VMEM],  # w1, b1, w2, b2, w3, b3
        out_specs=_VMEM,
        scratch_shapes=[
            pltpu.VMEM((T, Bp), jnp.float32),             # hbuf: every h_t
            pltpu.VMEM((_SEQ, _SEQ), jnp.bfloat16),       # w1 landing buffer
            pltpu.VMEM((_SEQ, _SEQ), jnp.bfloat16),       # w2
            pltpu.VMEM((_SEQ, _SEQ), jnp.bfloat16),       # w3
            pltpu.SemaphoreType.DMA((3,)),
        ],
    )(kp["wx4"], kp["bx4"], kp["wh4"], x_tb,
      kp["w1"], kp["b1"], kp["w2"], kp["b2"], kp["w3"], kp["b3"])

    return jnp.transpose(out_fb)[:B]                     # (B, 512)


# --------------------------- pure-JAX reference --------------------------
def rnn_reference(x, params):
    B, _, T = x.shape
    xs = x[:, 0, :]
    w_ih, w_hh = params["w_ih"], params["w_hh"]
    b = params["b_ih"] + params["b_hh"]

    def cell(carry, x_t):
        h, c = carry
        gates = w_ih * x_t[:, None] + w_hh * h[:, None] + b[None, :]   # (B, 4)
        i = jax.nn.sigmoid(gates[:, 0])
        f = jax.nn.sigmoid(gates[:, 1])
        g = jnp.tanh(gates[:, 2])
        o = jax.nn.sigmoid(gates[:, 3])
        c = f * c + i * g
        h = o * jnp.tanh(c)
        return (h, c), h

    h0 = jnp.zeros((B,), jnp.float32)
    (_, _), hs = jax.lax.scan(cell, (h0, h0), jnp.transpose(xs))       # hs: (T, B)
    h = jnp.transpose(hs)                                              # (B, 512)

    h = jnp.maximum(h @ params["w1"].T + params["b1"], 0.0)
    h = jnp.maximum(h @ params["w2"].T + params["b2"], 0.0)
    return h @ params["w3"].T + params["b3"]


def init_params(key):
    ks = jax.random.split(key, 10)
    u = lambda k, shape, bound: jax.random.uniform(
        k, shape, jnp.float32, minval=-bound, maxval=bound
    )
    # nn.LSTM(1, 1): params uniform(-1, 1); gate order (i, f, g, o)
    params = {
        "w_ih": u(ks[0], (4,), 1.0),
        "w_hh": u(ks[1], (4,), 1.0),
        "b_ih": u(ks[2], (4,), 1.0),
        "b_hh": u(ks[3], (4,), 1.0),
    }
    # nn.Linear(512, 512): uniform(-1/sqrt(512), 1/sqrt(512))
    bound = 1.0 / math.sqrt(512.0)
    params["w1"] = u(ks[4], (512, 512), bound)
    params["b1"] = u(ks[5], (512,), bound)
    params["w2"] = u(ks[6], (512, 512), bound)
    params["b2"] = u(ks[7], (512,), bound)
    params["w3"] = u(ks[8], (512, 512), bound)
    params["b3"] = u(ks[9], (512,), bound)
    return params


if __name__ == "__main__":
    key = jax.random.PRNGKey(0)
    k_param, k_x = jax.random.split(key)
    params = init_params(k_param)
    kparams = prepare_kernel_params(params)

    B, T = 2, _SEQ
    x = jax.random.normal(k_x, (B, 1, T), jnp.float32)

    out = jax.block_until_ready(rnn_forward(x, kparams))
    ref = jax.block_until_ready(rnn_reference(x, params))

    assert out.shape == (B, 512)
    max_err = float(jnp.max(jnp.abs(out - ref)))
    # bf16 MLP weights/activations (f32 accumulation) vs. pure-f32 reference.
    assert jnp.allclose(out, ref, atol=5e-2, rtol=5e-2), max_err
    print("KERNEL_OK")
</pallas_src>

<mosaic_0001>
module attributes {stable_mosaic.version = 11 : i64} {
  func.func @fused_rnn_mlp_kernel(%arg0: memref<4x1xf32, #tpu.memory_space<vmem>>, %arg1: memref<4x1xf32, #tpu.memory_space<vmem>>, %arg2: memref<4x1xf32, #tpu.memory_space<vmem>>, %arg3: memref<512x128xf32, #tpu.memory_space<vmem>>, %arg4: memref<512x512xbf16, #tpu.memory_space<any>>, %arg5: memref<512x1xf32, #tpu.memory_space<vmem>>, %arg6: memref<512x512xbf16, #tpu.memory_space<any>>, %arg7: memref<512x1xf32, #tpu.memory_space<vmem>>, %arg8: memref<512x512xbf16, #tpu.memory_space<any>>, %arg9: memref<512x1xf32, #tpu.memory_space<vmem>>, %arg10: memref<512x128xf32, #tpu.memory_space<vmem>>, %arg11: memref<512x128xf32, #tpu.memory_space<vmem>>, %arg12: memref<512x512xbf16, #tpu.memory_space<vmem>>, %arg13: memref<512x512xbf16, #tpu.memory_space<vmem>>, %arg14: memref<512x512xbf16, #tpu.memory_space<vmem>>, %arg15: memref<3x!tpu.dma_semaphore, #tpu.memory_space<semaphore_mem>>) attributes {dimension_semantics = [], scalar_prefetch = 0 : i64, scratch_operands = 5 : i64, tpu.core_type = #tpu.core_type<tc>} {
    %c0_i32 = arith.constant 0 : i32
    %0 = tpu.memref_slice %arg15[%c0_i32] : memref<3x!tpu.dma_semaphore, #tpu.memory_space<semaphore_mem>> -> memref<1x!tpu.dma_semaphore, #tpu.memory_space<semaphore_mem>>
    %1 = tpu.memref_squeeze %0 : memref<1x!tpu.dma_semaphore, #tpu.memory_space<semaphore_mem>> -> memref<!tpu.dma_semaphore, #tpu.memory_space<semaphore_mem>>
    tpu.enqueue_dma source(%arg4 : memref<512x512xbf16, #tpu.memory_space<any>>) target(%arg12 : memref<512x512xbf16, #tpu.memory_space<vmem>>) target_semaphore(%1 : memref<!tpu.dma_semaphore, #tpu.memory_space<semaphore_mem>>)
    %c1_i32 = arith.constant 1 : i32
    %2 = tpu.memref_slice %arg15[%c1_i32] : memref<3x!tpu.dma_semaphore, #tpu.memory_space<semaphore_mem>> -> memref<1x!tpu.dma_semaphore, #tpu.memory_space<semaphore_mem>>
    %3 = tpu.memref_squeeze %2 : memref<1x!tpu.dma_semaphore, #tpu.memory_space<semaphore_mem>> -> memref<!tpu.dma_semaphore, #tpu.memory_space<semaphore_mem>>
    tpu.enqueue_dma source(%arg6 : memref<512x512xbf16, #tpu.memory_space<any>>) target(%arg13 : memref<512x512xbf16, #tpu.memory_space<vmem>>) target_semaphore(%3 : memref<!tpu.dma_semaphore, #tpu.memory_space<semaphore_mem>>)
    %c2_i32 = arith.constant 2 : i32
    %4 = tpu.memref_slice %arg15[%c2_i32] : memref<3x!tpu.dma_semaphore, #tpu.memory_space<semaphore_mem>> -> memref<1x!tpu.dma_semaphore, #tpu.memory_space<semaphore_mem>>
    %5 = tpu.memref_squeeze %4 : memref<1x!tpu.dma_semaphore, #tpu.memory_space<semaphore_mem>> -> memref<!tpu.dma_semaphore, #tpu.memory_space<semaphore_mem>>
    tpu.enqueue_dma source(%arg8 : memref<512x512xbf16, #tpu.memory_space<any>>) target(%arg14 : memref<512x512xbf16, #tpu.memory_space<vmem>>) target_semaphore(%5 : memref<!tpu.dma_semaphore, #tpu.memory_space<semaphore_mem>>)
    %c0 = arith.constant 0 : index
    %c0_0 = arith.constant 0 : index
    %6 = vector.load %arg0[%c0, %c0_0] : memref<4x1xf32, #tpu.memory_space<vmem>>, vector<4x1xf32>
    %7 = vector.shape_cast %6 : vector<4x1xf32> to vector<4x1xf32>
    %8 = vector.broadcast %7 : vector<4x1xf32> to vector<4x128xf32>
    %c0_1 = arith.constant 0 : index
    %c0_2 = arith.constant 0 : index
    %9 = vector.load %arg1[%c0_1, %c0_2] : memref<4x1xf32, #tpu.memory_space<vmem>>, vector<4x1xf32>
    %10 = vector.shape_cast %9 : vector<4x1xf32> to vector<4x1xf32>
    %11 = vector.broadcast %10 : vector<4x1xf32> to vector<4x128xf32>
    %c0_3 = arith.constant 0 : index
    %c0_4 = arith.constant 0 : index
    %12 = vector.load %arg2[%c0_3, %c0_4] : memref<4x1xf32, #tpu.memory_space<vmem>>, vector<4x1xf32>
    %13 = vector.shape_cast %12 : vector<4x1xf32> to vector<4x1xf32>
    %14 = vector.broadcast %13 : vector<4x1xf32> to vector<4x128xf32>
    %cst = arith.constant 0.000000e+00 : f32
    %15 = vector.broadcast %cst : f32 to vector<1x128xf32>
    %c0_i32_5 = arith.constant 0 : i32
    %c32_i32 = arith.constant 32 : i32
    %16 = arith.addi %c0_i32_5, %c32_i32 : i32
    %c1_i32_6 = arith.constant 1 : i32
    %17:2 = scf.for %arg16 = %c0_i32_5 to %16 step %c1_i32_6 iter_args(%arg17 = %15, %arg18 = %15) -> (vector<1x128xf32>, vector<1x128xf32>)  : i32 {
      %c16_i32 = arith.constant 16 : i32
      %48 = arith.muli %arg16, %c16_i32 : i32
      %49 = tpu.assume_multiple %48, 16 : i32
      %c0_i32_32 = arith.constant 0 : i32
      %50 = arith.addi %49, %c0_i32_32 : i32
      %51 = arith.index_cast %50 : i32 to index
      %c0_33 = arith.constant 0 : index
      %52 = vector.load %arg3[%51, %c0_33] : memref<512x128xf32, #tpu.memory_space<vmem>>, vector<1x128xf32>
      %53 = vector.broadcast %52 : vector<1x128xf32> to vector<4x128xf32>
      %54 = arith.mulf %53, %8 : vector<4x128xf32>
      %55 = arith.addf %54, %11 : vector<4x128xf32>
      %56 = vector.broadcast %arg17 : vector<1x128xf32> to vector<4x128xf32>
      %57 = arith.mulf %56, %14 : vector<4x128xf32>
      %58 = arith.addf %55, %57 : vector<4x128xf32>
      %59 = math.tanh %58 : vector<4x128xf32>
      %60 = vector.extract_strided_slice %59 {offsets = [0, 0], sizes = [1, 128], strides = [1, 1]} : vector<4x128xf32> to vector<1x128xf32>
      %61 = vector.extract_strided_slice %59 {offsets = [1, 0], sizes = [1, 128], strides = [1, 1]} : vector<4x128xf32> to vector<1x128xf32>
      %62 = vector.extract_strided_slice %59 {offsets = [2, 0], sizes = [1, 128], strides = [1, 1]} : vector<4x128xf32> to vector<1x128xf32>
      %63 = vector.extract_strided_slice %59 {offsets = [3, 0], sizes = [1, 128], strides = [1, 1]} : vector<4x128xf32> to vector<1x128xf32>
      %cst_34 = arith.constant 1.000000e+00 : f32
      %64 = vector.broadcast %cst_34 : f32 to vector<1x128xf32>
      %65 = arith.addf %61, %64 : vector<1x128xf32>
      %66 = arith.mulf %65, %arg18 : vector<1x128xf32>
      %cst_35 = arith.constant 1.000000e+00 : f32
      %67 = vector.broadcast %cst_35 : f32 to vector<1x128xf32>
      %68 = arith.addf %60, %67 : vector<1x128xf32>
      %69 = arith.mulf %68, %62 : vector<1x128xf32>
      %70 = arith.addf %66, %69 : vector<1x128xf32>
      %cst_36 = arith.constant 5.000000e-01 : f32
      %71 = vector.broadcast %cst_36 : f32 to vector<1x128xf32>
      %72 = arith.mulf %71, %70 : vector<1x128xf32>
      %cst_37 = arith.constant 1.000000e+00 : f32
      %73 = vector.broadcast %cst_37 : f32 to vector<1x128xf32>
      %74 = arith.addf %63, %73 : vector<1x128xf32>
      %cst_38 = arith.constant 5.000000e-01 : f32
      %75 = vector.broadcast %cst_38 : f32 to vector<1x128xf32>
      %76 = arith.mulf %75, %74 : vector<1x128xf32>
      %77 = math.tanh %72 : vector<1x128xf32>
      %78 = arith.mulf %76, %77 : vector<1x128xf32>
      %79 = arith.index_cast %50 : i32 to index
      %c0_39 = arith.constant 0 : index
      %80 = vector.load %arg11[%79, %c0_39] : memref<512x128xf32, #tpu.memory_space<vmem>>, vector<1x128xf32>
      tpu.vector_store %arg11[%79, %c0_39], %78 {strides = array<i32>} : memref<512x128xf32, #tpu.memory_space<vmem>>, vector<1x128xf32>,
      %c1_i32_40 = arith.constant 1 : i32
      %81 = arith.addi %49, %c1_i32_40 : i32
      %82 = arith.index_cast %81 : i32 to index
      %c0_41 = arith.constant 0 : index
      %83 = vector.load %arg3[%82, %c0_41] : memref<512x128xf32, #tpu.memory_space<vmem>>, vector<1x128xf32>
      %84 = vector.broadcast %83 : vector<1x128xf32> to vector<4x128xf32>
      %85 = arith.mulf %84, %8 : vector<4x128xf32>
      %86 = arith.addf %85, %11 : vector<4x128xf32>
      %87 = vector.broadcast %78 : vector<1x128xf32> to vector<4x128xf32>
      %88 = arith.mulf %87, %14 : vector<4x128xf32>
      %89 = arith.addf %86, %88 : vector<4x128xf32>
      %90 = math.tanh %89 : vector<4x128xf32>
      %91 = vector.extract_strided_slice %90 {offsets = [0, 0], sizes = [1, 128], strides = [1, 1]} : vector<4x128xf32> to vector<1x128xf32>
      %92 = vector.extract_strided_slice %90 {offsets = [1, 0], sizes = [1, 128], strides = [1, 1]} : vector<4x128xf32> to vector<1x128xf32>
      %93 = vector.extract_strided_slice %90 {offsets = [2, 0], sizes = [1, 128], strides = [1, 1]} : vector<4x128xf32> to vector<1x128xf32>
      %94 = vector.extract_strided_slice %90 {offsets = [3, 0], sizes = [1, 128], strides = [1, 1]} : vector<4x128xf32> to vector<1x128xf32>
      %cst_42 = arith.constant 1.000000e+00 : f32
      %95 = vector.broadcast %cst_42 : f32 to vector<1x128xf32>
      %96 = arith.addf %92, %95 : vector<1x128xf32>
      %97 = arith.mulf %96, %72 : vector<1x128xf32>
      %cst_43 = arith.constant 1.000000e+00 : f32
      %98 = vector.broadcast %cst_43 : f32 to vector<1x128xf32>
      %99 = arith.addf %91, %98 : vector<1x128xf32>
      %100 = arith.mulf %99, %93 : vector<1x128xf32>
      %101 = arith.addf %97, %100 : vector<1x128xf32>
      %cst_44 = arith.constant 5.000000e-01 : f32
      %102 = vector.broadcast %cst_44 : f32 to vector<1x128xf32>
      %103 = arith.mulf %102, %101 : vector<1x128xf32>
      %cst_45 = arith.constant 1.000000e+00 : f32
      %104 = vector.broadcast %cst_45 : f32 to vector<1x128xf32>
      %105 = arith.addf %94, %104 : vector<1x128xf32>
      %cst_46 = arith.constant 5.000000e-01 : f32
      %106 = vector.broadcast %cst_46 : f32 to vector<1x128xf32>
      %107 = arith.mulf %106, %105 : vector<1x128xf32>
      %108 = math.tanh %103 : vector<1x128xf32>
      %109 = arith.mulf %107, %108 : vector<1x128xf32>
      %110 = arith.index_cast %81 : i32 to index
      %c0_47 = arith.constant 0 : index
      %111 = vector.load %arg11[%110, %c0_47] : memref<512x128xf32, #tpu.memory_space<vmem>>, vector<1x128xf32>
      tpu.vector_store %arg11[%110, %c0_47], %109 {strides = array<i32>} : memref<512x128xf32, #tpu.memory_space<vmem>>, vector<1x128xf32>,
      %c2_i32_48 = arith.constant 2 : i32
      %112 = arith.addi %49, %c2_i32_48 : i32
      %113 = arith.index_cast %112 : i32 to index
      %c0_49 = arith.constant 0 : index
      %114 = vector.load %arg3[%113, %c0_49] : memref<512x128xf32, #tpu.memory_space<vmem>>, vector<1x128xf32>
      %115 = vector.broadcast %114 : vector<1x128xf32> to vector<4x128xf32>
      %116 = arith.mulf %115, %8 : vector<4x128xf32>
      %117 = arith.addf %116, %11 : vector<4x128xf32>
      %118 = vector.broadcast %109 : vector<1x128xf32> to vector<4x128xf32>
      %119 = arith.mulf %118, %14 : vector<4x128xf32>
      %120 = arith.addf %117, %119 : vector<4x128xf32>
      %121 = math.tanh %120 : vector<4x128xf32>
      %122 = vector.extract_strided_slice %121 {offsets = [0, 0], sizes = [1, 128], strides = [1, 1]} : vector<4x128xf32> to vector<1x128xf32>
      %123 = vector.extract_strided_slice %121 {offsets = [1, 0], sizes = [1, 128], strides = [1, 1]} : vector<4x128xf32> to vector<1x128xf32>
      %124 = vector.extract_strided_slice %121 {offsets = [2, 0], sizes = [1, 128], strides = [1, 1]} : vector<4x128xf32> to vector<1x128xf32>
      %125 = vector.extract_strided_slice %121 {offsets = [3, 0], sizes = [1, 128], strides = [1, 1]} : vector<4x128xf32> to vector<1x128xf32>
      %cst_50 = arith.constant 1.000000e+00 : f32
      %126 = vector.broadcast %cst_50 : f32 to vector<1x128xf32>
      %127 = arith.addf %123, %126 : vector<1x128xf32>
      %128 = arith.mulf %127, %103 : vector<1x128xf32>
      %cst_51 = arith.constant 1.000000e+00 : f32
      %129 = vector.broadcast %cst_51 : f32 to vector<1x128xf32>
      %130 = arith.addf %122, %129 : vector<1x128xf32>
      %131 = arith.mulf %130, %124 : vector<1x128xf32>
      %132 = arith.addf %128, %131 : vector<1x128xf32>
      %cst_52 = arith.constant 5.000000e-01 : f32
      %133 = vector.broadcast %cst_52 : f32 to vector<1x128xf32>
      %134 = arith.mulf %133, %132 : vector<1x128xf32>
      %cst_53 = arith.constant 1.000000e+00 : f32
      %135 = vector.broadcast %cst_53 : f32 to vector<1x128xf32>
      %136 = arith.addf %125, %135 : vector<1x128xf32>
      %cst_54 = arith.constant 5.000000e-01 : f32
      %137 = vector.broadcast %cst_54 : f32 to vector<1x128xf32>
      %138 = arith.mulf %137, %136 : vector<1x128xf32>
      %139 = math.tanh %134 : vector<1x128xf32>
      %140 = arith.mulf %138, %139 : vector<1x128xf32>
      %141 = arith.index_cast %112 : i32 to index
      %c0_55 = arith.constant 0 : index
      %142 = vector.load %arg11[%141, %c0_55] : memref<512x128xf32, #tpu.memory_space<vmem>>, vector<1x128xf32>
      tpu.vector_store %arg11[%141, %c0_55], %140 {strides = array<i32>} : memref<512x128xf32, #tpu.memory_space<vmem>>, vector<1x128xf32>,
      %c3_i32 = arith.constant 3 : i32
      %143 = arith.addi %49, %c3_i32 : i32
      %144 = arith.index_cast %143 : i32 to index
      %c0_56 = arith.constant 0 : index
      %145 = vector.load %arg3[%144, %c0_56] : memref<512x128xf32, #tpu.memory_space<vmem>>, vector<1x128xf32>
      %146 = vector.broadcast %145 : vector<1x128xf32> to vector<4x128xf32>
      %147 = arith.mulf %146, %8 : vector<4x128xf32>
      %148 = arith.addf %147, %11 : vector<4x128xf32>
      %149 = vector.broadcast %140 : vector<1x128xf32> to vector<4x128xf32>
      %150 = arith.mulf %149, %14 : vector<4x128xf32>
      %151 = arith.addf %148, %150 : vector<4x128xf32>
      %152 = math.tanh %151 : vector<4x128xf32>
      %153 = vector.extract_strided_slice %152 {offsets = [0, 0], sizes = [1, 128], strides = [1, 1]} : vector<4x128xf32> to vector<1x128xf32>
      %154 = vector.extract_strided_slice %152 {offsets = [1, 0], sizes = [1, 128], strides = [1, 1]} : vector<4x128xf32> to vector<1x128xf32>
      %155 = vector.extract_strided_slice %152 {offsets = [2, 0], sizes = [1, 128], strides = [1, 1]} : vector<4x128xf32> to vector<1x128xf32>
      %156 = vector.extract_strided_slice %152 {offsets = [3, 0], sizes = [1, 128], strides = [1, 1]} : vector<4x128xf32> to vector<1x128xf32>
      %cst_57 = arith.constant 1.000000e+00 : f32
      %157 = vector.broadcast %cst_57 : f32 to vector<1x128xf32>
      %158 = arith.addf %154, %157 : vector<1x128xf32>
      %159 = arith.mulf %158, %134 : vector<1x128xf32>
      %cst_58 = arith.constant 1.000000e+00 : f32
      %160 = vector.broadcast %cst_58 : f32 to vector<1x128xf32>
      %161 = arith.addf %153, %160 : vector<1x128xf32>
      %162 = arith.mulf %161, %155 : vector<1x128xf32>
      %163 = arith.addf %159, %162 : vector<1x128xf32>
      %cst_59 = arith.constant 5.000000e-01 : f32
      %164 = vector.broadcast %cst_59 : f32 to vector<1x128xf32>
      %165 = arith.mulf %164, %163 : vector<1x128xf32>
      %cst_60 = arith.constant 1.000000e+00 : f32
      %166 = vector.broadcast %cst_60 : f32 to vector<1x128xf32>
      %167 = arith.addf %156, %166 : vector<1x128xf32>
      %cst_61 = arith.constant 5.000000e-01 : f32
      %168 = vector.broadcast %cst_61 : f32 to vector<1x128xf32>
      %169 = arith.mulf %168, %167 : vector<1x128xf32>
      %170 = math.tanh %165 : vector<1x128xf32>
      %171 = arith.mulf %169, %170 : vector<1x128xf32>
      %172 = arith.index_cast %143 : i32 to index
      %c0_62 = arith.constant 0 : index
      %173 = vector.load %arg11[%172, %c0_62] : memref<512x128xf32, #tpu.memory_space<vmem>>, vector<1x128xf32>
      tpu.vector_store %arg11[%172, %c0_62], %171 {strides = array<i32>} : memref<512x128xf32, #tpu.memory_space<vmem>>, vector<1x128xf32>,
      %c4_i32 = arith.constant 4 : i32
      %174 = arith.addi %49, %c4_i32 : i32
      %175 = arith.index_cast %174 : i32 to index
      %c0_63 = arith.constant 0 : index
      %176 = vector.load %arg3[%175, %c0_63] : memref<512x128xf32, #tpu.memory_space<vmem>>, vector<1x128xf32>
      %177 = vector.broadcast %176 : vector<1x128xf32> to vector<4x128xf32>
      %178 = arith.mulf %177, %8 : vector<4x128xf32>
      %179 = arith.addf %178, %11 : vector<4x128xf32>
      %180 = vector.broadcast %171 : vector<1x128xf32> to vector<4x128xf32>
      %181 = arith.mulf %180, %14 : vector<4x128xf32>
      %182 = arith.addf %179, %181 : vector<4x128xf32>
      %183 = math.tanh %182 : vector<4x128xf32>
      %184 = vector.extract_strided_slice %183 {offsets = [0, 0], sizes = [1, 128], strides = [1, 1]} : vector<4x128xf32> to vector<1x128xf32>
      %185 = vector.extract_strided_slice %183 {offsets = [1, 0], sizes = [1, 128], strides = [1, 1]} : vector<4x128xf32> to vector<1x128xf32>
      %186 = vector.extract_strided_slice %183 {offsets = [2, 0], sizes = [1, 128], strides = [1, 1]} : vector<4x128xf32> to vector<1x128xf32>
      %187 = vector.extract_strided_slice %183 {offsets = [3, 0], sizes = [1, 128], strides = [1, 1]} : vector<4x128xf32> to vector<1x128xf32>
      %cst_64 = arith.constant 1.000000e+00 : f32
      %188 = vector.broadcast %cst_64 : f32 to vector<1x128xf32>
      %189 = arith.addf %185, %188 : vector<1x128xf32>
      %190 = arith.mulf %189, %165 : vector<1x128xf32>
      %cst_65 = arith.constant 1.000000e+00 : f32
      %191 = vector.broadcast %cst_65 : f32 to vector<1x128xf32>
      %192 = arith.addf %184, %191 : vector<1x128xf32>
      %193 = arith.mulf %192, %186 : vector<1x128xf32>
      %194 = arith.addf %190, %193 : vector<1x128xf32>
      %cst_66 = arith.constant 5.000000e-01 : f32
      %195 = vector.broadcast %cst_66 : f32 to vector<1x128xf32>
      %196 = arith.mulf %195, %194 : vector<1x128xf32>
      %cst_67 = arith.constant 1.000000e+00 : f32
      %197 = vector.broadcast %cst_67 : f32 to vector<1x128xf32>
      %198 = arith.addf %187, %197 : vector<1x128xf32>
      %cst_68 = arith.constant 5.000000e-01 : f32
      %199 = vector.broadcast %cst_68 : f32 to vector<1x128xf32>
      %200 = arith.mulf %199, %198 : vector<1x128xf32>
      %201 = math.tanh %196 : vector<1x128xf32>
      %202 = arith.mulf %200, %201 : vector<1x128xf32>
      %203 = arith.index_cast %174 : i32 to index
      %c0_69 = arith.constant 0 : index
      %204 = vector.load %arg11[%203, %c0_69] : memref<512x128xf32, #tpu.memory_space<vmem>>, vector<1x128xf32>
      tpu.vector_store %arg11[%203, %c0_69], %202 {strides = array<i32>} : memref<512x128xf32, #tpu.memory_space<vmem>>, vector<1x128xf32>,
      %c5_i32 = arith.constant 5 : i32
      %205 = arith.addi %49, %c5_i32 : i32
      %206 = arith.index_cast %205 : i32 to index
      %c0_70 = arith.constant 0 : index
      %207 = vector.load %arg3[%206, %c0_70] : memref<512x128xf32, #tpu.memory_space<vmem>>, vector<1x128xf32>
      %208 = vector.broadcast %207 : vector<1x128xf32> to vector<4x128xf32>
      %209 = arith.mulf %208, %8 : vector<4x128xf32>
      %210 = arith.addf %209, %11 : vector<4x128xf32>
      %211 = vector.broadcast %202 : vector<1x128xf32> to vector<4x128xf32>
      %212 = arith.mulf %211, %14 : vector<4x128xf32>
      %213 = arith.addf %210, %212 : vector<4x128xf32>
      %214 = math.tanh %213 : vector<4x128xf32>
      %215 = vector.extract_strided_slice %214 {offsets = [0, 0], sizes = [1, 128], strides = [1, 1]} : vector<4x128xf32> to vector<1x128xf32>
      %216 = vector.extract_strided_slice %214 {offsets = [1, 0], sizes = [1, 128], strides = [1, 1]} : vector<4x128xf32> to vector<1x128xf32>
      %217 = vector.extract_strided_slice %214 {offsets = [2, 0], sizes = [1, 128], strides = [1, 1]} : vector<4x128xf32> to vector<1x128xf32>
      %218 = vector.extract_strided_slice %214 {offsets = [3, 0], sizes = [1, 128], strides = [1, 1]} : vector<4x128xf32> to vector<1x128xf32>
      %cst_71 = arith.constant 1.000000e+00 : f32
      %219 = vector.broadcast %cst_71 : f32 to vector<1x128xf32>
      %220 = arith.addf %216, %219 : vector<1x128xf32>
      %221 = arith.mulf %220, %196 : vector<1x128xf32>
      %cst_72 = arith.constant 1.000000e+00 : f32
      %222 = vector.broadcast %cst_72 : f32 to vector<1x128xf32>
      %223 = arith.addf %215, %222 : vector<1x128xf32>
      %224 = arith.mulf %223, %217 : vector<1x128xf32>
      %225 = arith.addf %221, %224 : vector<1x128xf32>
      %cst_73 = arith.constant 5.000000e-01 : f32
      %226 = vector.broadcast %cst_73 : f32 to vector<1x128xf32>
      %227 = arith.mulf %226, %225 : vector<1x128xf32>
      %cst_74 = arith.constant 1.000000e+00 : f32
      %228 = vector.broadcast %cst_74 : f32 to vector<1x128xf32>
      %229 = arith.addf %218, %228 : vector<1x128xf32>
      %cst_75 = arith.constant 5.000000e-01 : f32
      %230 = vector.broadcast %cst_75 : f32 to vector<1x128xf32>
      %231 = arith.mulf %230, %229 : vector<1x128xf32>
      %232 = math.tanh %227 : vector<1x128xf32>
      %233 = arith.mulf %231, %232 : vector<1x128xf32>
      %234 = arith.index_cast %205 : i32 to index
      %c0_76 = arith.constant 0 : index
      %235 = vector.load %arg11[%234, %c0_76] : memref<512x128xf32, #tpu.memory_space<vmem>>, vector<1x128xf32>
      tpu.vector_store %arg11[%234, %c0_76], %233 {strides = array<i32>} : memref<512x128xf32, #tpu.memory_space<vmem>>, vector<1x128xf32>,
      %c6_i32 = arith.constant 6 : i32
      %236 = arith.addi %49, %c6_i32 : i32
      %237 = arith.index_cast %236 : i32 to index
      %c0_77 = arith.constant 0 : index
      %238 = vector.load %arg3[%237, %c0_77] : memref<512x128xf32, #tpu.memory_space<vmem>>, vector<1x128xf32>
      %239 = vector.broadcast %238 : vector<1x128xf32> to vector<4x128xf32>
      %240 = arith.mulf %239, %8 : vector<4x128xf32>
      %241 = arith.addf %240, %11 : vector<4x128xf32>
      %242 = vector.broadcast %233 : vector<1x128xf32> to vector<4x128xf32>
      %243 = arith.mulf %242, %14 : vector<4x128xf32>
      %244 = arith.addf %241, %243 : vector<4x128xf32>
      %245 = math.tanh %244 : vector<4x128xf32>
      %246 = vector.extract_strided_slice %245 {offsets = [0, 0], sizes = [1, 128], strides = [1, 1]} : vector<4x128xf32> to vector<1x128xf32>
      %247 = vector.extract_strided_slice %245 {offsets = [1, 0], sizes = [1, 128], strides = [1, 1]} : vector<4x128xf32> to vector<1x128xf32>
      %248 = vector.extract_strided_slice %245 {offsets = [2, 0], sizes = [1, 128], strides = [1, 1]} : vector<4x128xf32> to vector<1x128xf32>
      %249 = vector.extract_strided_slice %245 {offsets = [3, 0], sizes = [1, 128], strides = [1, 1]} : vector<4x128xf32> to vector<1x128xf32>
      %cst_78 = arith.constant 1.000000e+00 : f32
      %250 = vector.broadcast %cst_78 : f32 to vector<1x128xf32>
      %251 = arith.addf %247, %250 : vector<1x128xf32>
      %252 = arith.mulf %251, %227 : vector<1x128xf32>
      %cst_79 = arith.constant 1.000000e+00 : f32
      %253 = vector.broadcast %cst_79 : f32 to vector<1x128xf32>
      %254 = arith.addf %246, %253 : vector<1x128xf32>
      %255 = arith.mulf %254, %248 : vector<1x128xf32>
      %256 = arith.addf %252, %255 : vector<1x128xf32>
      %cst_80 = arith.constant 5.000000e-01 : f32
      %257 = vector.broadcast %cst_80 : f32 to vector<1x128xf32>
      %258 = arith.mulf %257, %256 : vector<1x128xf32>
      %cst_81 = arith.constant 1.000000e+00 : f32
      %259 = vector.broadcast %cst_81 : f32 to vector<1x128xf32>
      %260 = arith.addf %249, %259 : vector<1x128xf32>
      %cst_82 = arith.constant 5.000000e-01 : f32
      %261 = vector.broadcast %cst_82 : f32 to vector<1x128xf32>
      %262 = arith.mulf %261, %260 : vector<1x128xf32>
      %263 = math.tanh %258 : vector<1x128xf32>
      %264 = arith.mulf %262, %263 : vector<1x128xf32>
      %265 = arith.index_cast %236 : i32 to index
      %c0_83 = arith.constant 0 : index
      %266 = vector.load %arg11[%265, %c0_83] : memref<512x128xf32, #tpu.memory_space<vmem>>, vector<1x128xf32>
      tpu.vector_store %arg11[%265, %c0_83], %264 {strides = array<i32>} : memref<512x128xf32, #tpu.memory_space<vmem>>, vector<1x128xf32>,
      %c7_i32 = arith.constant 7 : i32
      %267 = arith.addi %49, %c7_i32 : i32
      %268 = arith.index_cast %267 : i32 to index
      %c0_84 = arith.constant 0 : index
      %269 = vector.load %arg3[%268, %c0_84] : memref<512x128xf32, #tpu.memory_space<vmem>>, vector<1x128xf32>
      %270 = vector.broadcast %269 : vector<1x128xf32> to vector<4x128xf32>
      %271 = arith.mulf %270, %8 : vector<4x128xf32>
      %272 = arith.addf %271, %11 : vector<4x128xf32>
      %273 = vector.broadcast %264 : vector<1x128xf32> to vector<4x128xf32>
      %274 = arith.mulf %273, %14 : vector<4x128xf32>
      %275 = arith.addf %272, %274 : vector<4x128xf32>
      %276 = math.tanh %275 : vector<4x128xf32>
      %277 = vector.extract_strided_slice %276 {offsets = [0, 0], sizes = [1, 128], strides = [1, 1]} : vector<4x128xf32> to vector<1x128xf32>
      %278 = vector.extract_strided_slice %276 {offsets = [1, 0], sizes = [1, 128], strides = [1, 1]} : vector<4x128xf32> to vector<1x128xf32>
      %279 = vector.extract_strided_slice %276 {offsets = [2, 0], sizes = [1, 128], strides = [1, 1]} : vector<4x128xf32> to vector<1x128xf32>
      %280 = vector.extract_strided_slice %276 {offsets = [3, 0], sizes = [1, 128], strides = [1, 1]} : vector<4x128xf32> to vector<1x128xf32>
      %cst_85 = arith.constant 1.000000e+00 : f32
      %281 = vector.broadcast %cst_85 : f32 to vector<1x128xf32>
      %282 = arith.addf %278, %281 : vector<1x128xf32>
      %283 = arith.mulf %282, %258 : vector<1x128xf32>
      %cst_86 = arith.constant 1.000000e+00 : f32
      %284 = vector.broadcast %cst_86 : f32 to vector<1x128xf32>
      %285 = arith.addf %277, %284 : vector<1x128xf32>
      %286 = arith.mulf %285, %279 : vector<1x128xf32>
      %287 = arith.addf %283, %286 : vector<1x128xf32>
      %cst_87 = arith.constant 5.000000e-01 : f32
      %288 = vector.broadcast %cst_87 : f32 to vector<1x128xf32>
      %289 = arith.mulf %288, %287 : vector<1x128xf32>
      %cst_88 = arith.constant 1.000000e+00 : f32
      %290 = vector.broadcast %cst_88 : f32 to vector<1x128xf32>
      %291 = arith.addf %280, %290 : vector<1x128xf32>
      %cst_89 = arith.constant 5.000000e-01 : f32
      %292 = vector.broadcast %cst_89 : f32 to vector<1x128xf32>
      %293 = arith.mulf %292, %291 : vector<1x128xf32>
      %294 = math.tanh %289 : vector<1x128xf32>
      %295 = arith.mulf %293, %294 : vector<1x128xf32>
      %296 = arith.index_cast %267 : i32 to index
      %c0_90 = arith.constant 0 : index
      %297 = vector.load %arg11[%296, %c0_90] : memref<512x128xf32, #tpu.memory_space<vmem>>, vector<1x128xf32>
      tpu.vector_store %arg11[%296, %c0_90], %295 {strides = array<i32>} : memref<512x128xf32, #tpu.memory_space<vmem>>, vector<1x128xf32>,
      %c8_i32 = arith.constant 8 : i32
      %298 = arith.addi %49, %c8_i32 : i32
      %299 = arith.index_cast %298 : i32 to index
      %c0_91 = arith.constant 0 : index
      %300 = vector.load %arg3[%299, %c0_91] : memref<512x128xf32, #tpu.memory_space<vmem>>, vector<1x128xf32>
      %301 = vector.broadcast %300 : vector<1x128xf32> to vector<4x128xf32>
      %302 = arith.mulf %301, %8 : vector<4x128xf32>
      %303 = arith.addf %302, %11 : vector<4x128xf32>
      %304 = vector.broadcast %295 : vector<1x128xf32> to vector<4x128xf32>
      %305 = arith.mulf %304, %14 : vector<4x128xf32>
      %306 = arith.addf %303, %305 : vector<4x128xf32>
      %307 = math.tanh %306 : vector<4x128xf32>
      %308 = vector.extract_strided_slice %307 {offsets = [0, 0], sizes = [1, 128], strides = [1, 1]} : vector<4x128xf32> to vector<1x128xf32>
      %309 = vector.extract_strided_slice %307 {offsets = [1, 0], sizes = [1, 128], strides = [1, 1]} : vector<4x128xf32> to vector<1x128xf32>
      %310 = vector.extract_strided_slice %307 {offsets = [2, 0], sizes = [1, 128], strides = [1, 1]} : vector<4x128xf32> to vector<1x128xf32>
      %311 = vector.extract_strided_slice %307 {offsets = [3, 0], sizes = [1, 128], strides = [1, 1]} : vector<4x128xf32> to vector<1x128xf32>
      %cst_92 = arith.constant 1.000000e+00 : f32
      %312 = vector.broadcast %cst_92 : f32 to vector<1x128xf32>
      %313 = arith.addf %309, %312 : vector<1x128xf32>
      %314 = arith.mulf %313, %289 : vector<1x128xf32>
      %cst_93 = arith.constant 1.000000e+00 : f32
      %315 = vector.broadcast %cst_93 : f32 to vector<1x128xf32>
      %316 = arith.addf %308, %315 : vector<1x128xf32>
      %317 = arith.mulf %316, %310 : vector<1x128xf32>
      %318 = arith.addf %314, %317 : vector<1x128xf32>
      %cst_94 = arith.constant 5.000000e-01 : f32
      %319 = vector.broadcast %cst_94 : f32 to vector<1x128xf32>
      %320 = arith.mulf %319, %318 : vector<1x128xf32>
      %cst_95 = arith.constant 1.000000e+00 : f32
      %321 = vector.broadcast %cst_95 : f32 to vector<1x128xf32>
      %322 = arith.addf %311, %321 : vector<1x128xf32>
      %cst_96 = arith.constant 5.000000e-01 : f32
      %323 = vector.broadcast %cst_96 : f32 to vector<1x128xf32>
      %324 = arith.mulf %323, %322 : vector<1x128xf32>
      %325 = math.tanh %320 : vector<1x128xf32>
      %326 = arith.mulf %324, %325 : vector<1x128xf32>
      %327 = arith.index_cast %298 : i32 to index
      %c0_97 = arith.constant 0 : index
      %328 = vector.load %arg11[%327, %c0_97] : memref<512x128xf32, #tpu.memory_space<vmem>>, vector<1x128xf32>
      tpu.vector_store %arg11[%327, %c0_97], %326 {strides = array<i32>} : memref<512x128xf32, #tpu.memory_space<vmem>>, vector<1x128xf32>,
      %c9_i32 = arith.constant 9 : i32
      %329 = arith.addi %49, %c9_i32 : i32
      %330 = arith.index_cast %329 : i32 to index
      %c0_98 = arith.constant 0 : index
      %331 = vector.load %arg3[%330, %c0_98] : memref<512x128xf32, #tpu.memory_space<vmem>>, vector<1x128xf32>
      %332 = vector.broadcast %331 : vector<1x128xf32> to vector<4x128xf32>
      %333 = arith.mulf %332, %8 : vector<4x128xf32>
      %334 = arith.addf %333, %11 : vector<4x128xf32>
      %335 = vector.broadcast %326 : vector<1x128xf32> to vector<4x128xf32>
      %336 = arith.mulf %335, %14 : vector<4x128xf32>
      %337 = arith.addf %334, %336 : vector<4x128xf32>
      %338 = math.tanh %337 : vector<4x128xf32>
      %339 = vector.extract_strided_slice %338 {offsets = [0, 0], sizes = [1, 128], strides = [1, 1]} : vector<4x128xf32> to vector<1x128xf32>
      %340 = vector.extract_strided_slice %338 {offsets = [1, 0], sizes = [1, 128], strides = [1, 1]} : vector<4x128xf32> to vector<1x128xf32>
      %341 = vector.extract_strided_slice %338 {offsets = [2, 0], sizes = [1, 128], strides = [1, 1]} : vector<4x128xf32> to vector<1x128xf32>
      %342 = vector.extract_strided_slice %338 {offsets = [3, 0], sizes = [1, 128], strides = [1, 1]} : vector<4x128xf32> to vector<1x128xf32>
      %cst_99 = arith.constant 1.000000e+00 : f32
      %343 = vector.broadcast %cst_99 : f32 to vector<1x128xf32>
      %344 = arith.addf %340, %343 : vector<1x128xf32>
      %345 = arith.mulf %344, %320 : vector<1x128xf32>
      %cst_100 = arith.constant 1.000000e+00 : f32
      %346 = vector.broadcast %cst_100 : f32 to vector<1x128xf32>
      %347 = arith.addf %339, %346 : vector<1x128xf32>
      %348 = arith.mulf %347, %341 : vector<1x128xf32>
      %349 = arith.addf %345, %348 : vector<1x128xf32>
      %cst_101 = arith.constant 5.000000e-01 : f32
      %350 = vector.broadcast %cst_101 : f32 to vector<1x128xf32>
      %351 = arith.mulf %350, %349 : vector<1x128xf32>
      %cst_102 = arith.constant 1.000000e+00 : f32
      %352 = vector.broadcast %cst_102 : f32 to vector<1x128xf32>
      %353 = arith.addf %342, %352 : vector<1x128xf32>
      %cst_103 = arith.constant 5.000000e-01 : f32
      %354 = vector.broadcast %cst_103 : f32 to vector<1x128xf32>
      %355 = arith.mulf %354, %353 : vector<1x128xf32>
      %356 = math.tanh %351 : vector<1x128xf32>
      %357 = arith.mulf %355, %356 : vector<1x128xf32>
      %358 = arith.index_cast %329 : i32 to index
      %c0_104 = arith.constant 0 : index
      %359 = vector.load %arg11[%358, %c0_104] : memref<512x128xf32, #tpu.memory_space<vmem>>, vector<1x128xf32>
      tpu.vector_store %arg11[%358, %c0_104], %357 {strides = array<i32>} : memref<512x128xf32, #tpu.memory_space<vmem>>, vector<1x128xf32>,
      %c10_i32 = arith.constant 10 : i32
      %360 = arith.addi %49, %c10_i32 : i32
      %361 = arith.index_cast %360 : i32 to index
      %c0_105 = arith.constant 0 : index
      %362 = vector.load %arg3[%361, %c0_105] : memref<512x128xf32, #tpu.memory_space<vmem>>, vector<1x128xf32>
      %363 = vector.broadcast %362 : vector<1x128xf32> to vector<4x128xf32>
      %364 = arith.mulf %363, %8 : vector<4x128xf32>
      %365 = arith.addf %364, %11 : vector<4x128xf32>
      %366 = vector.broadcast %357 : vector<1x128xf32> to vector<4x128xf32>
      %367 = arith.mulf %366, %14 : vector<4x128xf32>
      %368 = arith.addf %365, %367 : vector<4x128xf32>
      %369 = math.tanh %368 : vector<4x128xf32>
      %370 = vector.extract_strided_slice %369 {offsets = [0, 0], sizes = [1, 128], strides = [1, 1]} : vector<4x128xf32> to vector<1x128xf32>
      %371 = vector.extract_strided_slice %369 {offsets = [1, 0], sizes = [1, 128], strides = [1, 1]} : vector<4x128xf32> to vector<1x128xf32>
      %372 = vector.extract_strided_slice %369 {offsets = [2, 0], sizes = [1, 128], strides = [1, 1]} : vector<4x128xf32> to vector<1x128xf32>
      %373 = vector.extract_strided_slice %369 {offsets = [3, 0], sizes = [1, 128], strides = [1, 1]} : vector<4x128xf32> to vector<1x128xf32>
      %cst_106 = arith.constant 1.000000e+00 : f32
      %374 = vector.broadcast %cst_106 : f32 to vector<1x128xf32>
      %375 = arith.addf %371, %374 : vector<1x128xf32>
      %376 = arith.mulf %375, %351 : vector<1x128xf32>
      %cst_107 = arith.constant 1.000000e+00 : f32
      %377 = vector.broadcast %cst_107 : f32 to vector<1x128xf32>
      %378 = arith.addf %370, %377 : vector<1x128xf32>
      %379 = arith.mulf %378, %372 : vector<1x128xf32>
      %380 = arith.addf %376, %379 : vector<1x128xf32>
      %cst_108 = arith.constant 5.000000e-01 : f32
      %381 = vector.broadcast %cst_108 : f32 to vector<1x128xf32>
      %382 = arith.mulf %381, %380 : vector<1x128xf32>
      %cst_109 = arith.constant 1.000000e+00 : f32
      %383 = vector.broadcast %cst_109 : f32 to vector<1x128xf32>
      %384 = arith.addf %373, %383 : vector<1x128xf32>
      %cst_110 = arith.constant 5.000000e-01 : f32
      %385 = vector.broadcast %cst_110 : f32 to vector<1x128xf32>
      %386 = arith.mulf %385, %384 : vector<1x128xf32>
      %387 = math.tanh %382 : vector<1x128xf32>
      %388 = arith.mulf %386, %387 : vector<1x128xf32>
      %389 = arith.index_cast %360 : i32 to index
      %c0_111 = arith.constant 0 : index
      %390 = vector.load %arg11[%389, %c0_111] : memref<512x128xf32, #tpu.memory_space<vmem>>, vector<1x128xf32>
      tpu.vector_store %arg11[%389, %c0_111], %388 {strides = array<i32>} : memref<512x128xf32, #tpu.memory_space<vmem>>, vector<1x128xf32>,
      %c11_i32 = arith.constant 11 : i32
      %391 = arith.addi %49, %c11_i32 : i32
      %392 = arith.index_cast %391 : i32 to index
      %c0_112 = arith.constant 0 : index
      %393 = vector.load %arg3[%392, %c0_112] : memref<512x128xf32, #tpu.memory_space<vmem>>, vector<1x128xf32>
      %394 = vector.broadcast %393 : vector<1x128xf32> to vector<4x128xf32>
      %395 = arith.mulf %394, %8 : vector<4x128xf32>
      %396 = arith.addf %395, %11 : vector<4x128xf32>
      %397 = vector.broadcast %388 : vector<1x128xf32> to vector<4x128xf32>
      %398 = arith.mulf %397, %14 : vector<4x128xf32>
      %399 = arith.addf %396, %398 : vector<4x128xf32>
      %400 = math.tanh %399 : vector<4x128xf32>
      %401 = vector.extract_strided_slice %400 {offsets = [0, 0], sizes = [1, 128], strides = [1, 1]} : vector<4x128xf32> to vector<1x128xf32>
      %402 = vector.extract_strided_slice %400 {offsets = [1, 0], sizes = [1, 128], strides = [1, 1]} : vector<4x128xf32> to vector<1x128xf32>
      %403 = vector.extract_strided_slice %400 {offsets = [2, 0], sizes = [1, 128], strides = [1, 1]} : vector<4x128xf32> to vector<1x128xf32>
      %404 = vector.extract_strided_slice %400 {offsets = [3, 0], sizes = [1, 128], strides = [1, 1]} : vector<4x128xf32> to vector<1x128xf32>
      %cst_113 = arith.constant 1.000000e+00 : f32
      %405 = vector.broadcast %cst_113 : f32 to vector<1x128xf32>
      %406 = arith.addf %402, %405 : vector<1x128xf32>
      %407 = arith.mulf %406, %382 : vector<1x128xf32>
      %cst_114 = arith.constant 1.000000e+00 : f32
      %408 = vector.broadcast %cst_114 : f32 to vector<1x128xf32>
      %409 = arith.addf %401, %408 : vector<1x128xf32>
      %410 = arith.mulf %409, %403 : vector<1x128xf32>
      %411 = arith.addf %407, %410 : vector<1x128xf32>
      %cst_115 = arith.constant 5.000000e-01 : f32
      %412 = vector.broadcast %cst_115 : f32 to vector<1x128xf32>
      %413 = arith.mulf %412, %411 : vector<1x128xf32>
      %cst_116 = arith.constant 1.000000e+00 : f32
      %414 = vector.broadcast %cst_116 : f32 to vector<1x128xf32>
      %415 = arith.addf %404, %414 : vector<1x128xf32>
      %cst_117 = arith.constant 5.000000e-01 : f32
      %416 = vector.broadcast %cst_117 : f32 to vector<1x128xf32>
      %417 = arith.mulf %416, %415 : vector<1x128xf32>
      %418 = math.tanh %413 : vector<1x128xf32>
      %419 = arith.mulf %417, %418 : vector<1x128xf32>
      %420 = arith.index_cast %391 : i32 to index
      %c0_118 = arith.constant 0 : index
      %421 = vector.load %arg11[%420, %c0_118] : memref<512x128xf32, #tpu.memory_space<vmem>>, vector<1x128xf32>
      tpu.vector_store %arg11[%420, %c0_118], %419 {strides = array<i32>} : memref<512x128xf32, #tpu.memory_space<vmem>>, vector<1x128xf32>,
      %c12_i32 = arith.constant 12 : i32
      %422 = arith.addi %49, %c12_i32 : i32
      %423 = arith.index_cast %422 : i32 to index
      %c0_119 = arith.constant 0 : index
      %424 = vector.load %arg3[%423, %c0_119] : memref<512x128xf32, #tpu.memory_space<vmem>>, vector<1x128xf32>
      %425 = vector.broadcast %424 : vector<1x128xf32> to vector<4x128xf32>
      %426 = arith.mulf %425, %8 : vector<4x128xf32>
      %427 = arith.addf %426, %11 : vector<4x128xf32>
      %428 = vector.broadcast %419 : vector<1x128xf32> to vector<4x128xf32>
      %429 = arith.mulf %428, %14 : vector<4x128xf32>
      %430 = arith.addf %427, %429 : vector<4x128xf32>
      %431 = math.tanh %430 : vector<4x128xf32>
      %432 = vector.extract_strided_slice %431 {offsets = [0, 0], sizes = [1, 128], strides = [1, 1]} : vector<4x128xf32> to vector<1x128xf32>
      %433 = vector.extract_strided_slice %431 {offsets = [1, 0], sizes = [1, 128], strides = [1, 1]} : vector<4x128xf32> to vector<1x128xf32>
      %434 = vector.extract_strided_slice %431 {offsets = [2, 0], sizes = [1, 128], strides = [1, 1]} : vector<4x128xf32> to vector<1x128xf32>
      %435 = vector.extract_strided_slice %431 {offsets = [3, 0], sizes = [1, 128], strides = [1, 1]} : vector<4x128xf32> to vector<1x128xf32>
      %cst_120 = arith.constant 1.000000e+00 : f32
      %436 = vector.broadcast %cst_120 : f32 to vector<1x128xf32>
      %437 = arith.addf %433, %436 : vector<1x128xf32>
      %438 = arith.mulf %437, %413 : vector<1x128xf32>
      %cst_121 = arith.constant 1.000000e+00 : f32
      %439 = vector.broadcast %cst_121 : f32 to vector<1x128xf32>
      %440 = arith.addf %432, %439 : vector<1x128xf32>
      %441 = arith.mulf %440, %434 : vector<1x128xf32>
      %442 = arith.addf %438, %441 : vector<1x128xf32>
      %cst_122 = arith.constant 5.000000e-01 : f32
      %443 = vector.broadcast %cst_122 : f32 to vector<1x128xf32>
      %444 = arith.mulf %443, %442 : vector<1x128xf32>
      %cst_123 = arith.constant 1.000000e+00 : f32
      %445 = vector.broadcast %cst_123 : f32 to vector<1x128xf32>
      %446 = arith.addf %435, %445 : vector<1x128xf32>
      %cst_124 = arith.constant 5.000000e-01 : f32
      %447 = vector.broadcast %cst_124 : f32 to vector<1x128xf32>
      %448 = arith.mulf %447, %446 : vector<1x128xf32>
      %449 = math.tanh %444 : vector<1x128xf32>
      %450 = arith.mulf %448, %449 : vector<1x128xf32>
      %451 = arith.index_cast %422 : i32 to index
      %c0_125 = arith.constant 0 : index
      %452 = vector.load %arg11[%451, %c0_125] : memref<512x128xf32, #tpu.memory_space<vmem>>, vector<1x128xf32>
      tpu.vector_store %arg11[%451, %c0_125], %450 {strides = array<i32>} : memref<512x128xf32, #tpu.memory_space<vmem>>, vector<1x128xf32>,
      %c13_i32 = arith.constant 13 : i32
      %453 = arith.addi %49, %c13_i32 : i32
      %454 = arith.index_cast %453 : i32 to index
      %c0_126 = arith.constant 0 : index
      %455 = vector.load %arg3[%454, %c0_126] : memref<512x128xf32, #tpu.memory_space<vmem>>, vector<1x128xf32>
      %456 = vector.broadcast %455 : vector<1x128xf32> to vector<4x128xf32>
      %457 = arith.mulf %456, %8 : vector<4x128xf32>
      %458 = arith.addf %457, %11 : vector<4x128xf32>
      %459 = vector.broadcast %450 : vector<1x128xf32> to vector<4x128xf32>
      %460 = arith.mulf %459, %14 : vector<4x128xf32>
      %461 = arith.addf %458, %460 : vector<4x128xf32>
      %462 = math.tanh %461 : vector<4x128xf32>
      %463 = vector.extract_strided_slice %462 {offsets = [0, 0], sizes = [1, 128], strides = [1, 1]} : vector<4x128xf32> to vector<1x128xf32>
      %464 = vector.extract_strided_slice %462 {offsets = [1, 0], sizes = [1, 128], strides = [1, 1]} : vector<4x128xf32> to vector<1x128xf32>
      %465 = vector.extract_strided_slice %462 {offsets = [2, 0], sizes = [1, 128], strides = [1, 1]} : vector<4x128xf32> to vector<1x128xf32>
      %466 = vector.extract_strided_slice %462 {offsets = [3, 0], sizes = [1, 128], strides = [1, 1]} : vector<4x128xf32> to vector<1x128xf32>
      %cst_127 = arith.constant 1.000000e+00 : f32
      %467 = vector.broadcast %cst_127 : f32 to vector<1x128xf32>
      %468 = arith.addf %464, %467 : vector<1x128xf32>
      %469 = arith.mulf %468, %444 : vector<1x128xf32>
      %cst_128 = arith.constant 1.000000e+00 : f32
      %470 = vector.broadcast %cst_128 : f32 to vector<1x128xf32>
      %471 = arith.addf %463, %470 : vector<1x128xf32>
      %472 = arith.mulf %471, %465 : vector<1x128xf32>
      %473 = arith.addf %469, %472 : vector<1x128xf32>
      %cst_129 = arith.constant 5.000000e-01 : f32
      %474 = vector.broadcast %cst_129 : f32 to vector<1x128xf32>
      %475 = arith.mulf %474, %473 : vector<1x128xf32>
      %cst_130 = arith.constant 1.000000e+00 : f32
      %476 = vector.broadcast %cst_130 : f32 to vector<1x128xf32>
      %477 = arith.addf %466, %476 : vector<1x128xf32>
      %cst_131 = arith.constant 5.000000e-01 : f32
      %478 = vector.broadcast %cst_131 : f32 to vector<1x128xf32>
      %479 = arith.mulf %478, %477 : vector<1x128xf32>
      %480 = math.tanh %475 : vector<1x128xf32>
      %481 = arith.mulf %479, %480 : vector<1x128xf32>
      %482 = arith.index_cast %453 : i32 to index
      %c0_132 = arith.constant 0 : index
      %483 = vector.load %arg11[%482, %c0_132] : memref<512x128xf32, #tpu.memory_space<vmem>>, vector<1x128xf32>
      tpu.vector_store %arg11[%482, %c0_132], %481 {strides = array<i32>} : memref<512x128xf32, #tpu.memory_space<vmem>>, vector<1x128xf32>,
      %c14_i32 = arith.constant 14 : i32
      %484 = arith.addi %49, %c14_i32 : i32
      %485 = arith.index_cast %484 : i32 to index
      %c0_133 = arith.constant 0 : index
      %486 = vector.load %arg3[%485, %c0_133] : memref<512x128xf32, #tpu.memory_space<vmem>>, vector<1x128xf32>
      %487 = vector.broadcast %486 : vector<1x128xf32> to vector<4x128xf32>
      %488 = arith.mulf %487, %8 : vector<4x128xf32>
      %489 = arith.addf %488, %11 : vector<4x128xf32>
      %490 = vector.broadcast %481 : vector<1x128xf32> to vector<4x128xf32>
      %491 = arith.mulf %490, %14 : vector<4x128xf32>
      %492 = arith.addf %489, %491 : vector<4x128xf32>
      %493 = math.tanh %492 : vector<4x128xf32>
      %494 = vector.extract_strided_slice %493 {offsets = [0, 0], sizes = [1, 128], strides = [1, 1]} : vector<4x128xf32> to vector<1x128xf32>
      %495 = vector.extract_strided_slice %493 {offsets = [1, 0], sizes = [1, 128], strides = [1, 1]} : vector<4x128xf32> to vector<1x128xf32>
      %496 = vector.extract_strided_slice %493 {offsets = [2, 0], sizes = [1, 128], strides = [1, 1]} : vector<4x128xf32> to vector<1x128xf32>
      %497 = vector.extract_strided_slice %493 {offsets = [3, 0], sizes = [1, 128], strides = [1, 1]} : vector<4x128xf32> to vector<1x128xf32>
      %cst_134 = arith.constant 1.000000e+00 : f32
      %498 = vector.broadcast %cst_134 : f32 to vector<1x128xf32>
      %499 = arith.addf %495, %498 : vector<1x128xf32>
      %500 = arith.mulf %499, %475 : vector<1x128xf32>
      %cst_135 = arith.constant 1.000000e+00 : f32
      %501 = vector.broadcast %cst_135 : f32 to vector<1x128xf32>
      %502 = arith.addf %494, %501 : vector<1x128xf32>
      %503 = arith.mulf %502, %496 : vector<1x128xf32>
      %504 = arith.addf %500, %503 : vector<1x128xf32>
      %cst_136 = arith.constant 5.000000e-01 : f32
      %505 = vector.broadcast %cst_136 : f32 to vector<1x128xf32>
      %506 = arith.mulf %505, %504 : vector<1x128xf32>
      %cst_137 = arith.constant 1.000000e+00 : f32
      %507 = vector.broadcast %cst_137 : f32 to vector<1x128xf32>
      %508 = arith.addf %497, %507 : vector<1x128xf32>
      %cst_138 = arith.constant 5.000000e-01 : f32
      %509 = vector.broadcast %cst_138 : f32 to vector<1x128xf32>
      %510 = arith.mulf %509, %508 : vector<1x128xf32>
      %511 = math.tanh %506 : vector<1x128xf32>
      %512 = arith.mulf %510, %511 : vector<1x128xf32>
      %513 = arith.index_cast %484 : i32 to index
      %c0_139 = arith.constant 0 : index
      %514 = vector.load %arg11[%513, %c0_139] : memref<512x128xf32, #tpu.memory_space<vmem>>, vector<1x128xf32>
      tpu.vector_store %arg11[%513, %c0_139], %512 {strides = array<i32>} : memref<512x128xf32, #tpu.memory_space<vmem>>, vector<1x128xf32>,
      %c15_i32 = arith.constant 15 : i32
      %515 = arith.addi %49, %c15_i32 : i32
      %516 = arith.index_cast %515 : i32 to index
      %c0_140 = arith.constant 0 : index
      %517 = vector.load %arg3[%516, %c0_140] : memref<512x128xf32, #tpu.memory_space<vmem>>, vector<1x128xf32>
      %518 = vector.broadcast %517 : vector<1x128xf32> to vector<4x128xf32>
      %519 = arith.mulf %518, %8 : vector<4x128xf32>
      %520 = arith.addf %519, %11 : vector<4x128xf32>
      %521 = vector.broadcast %512 : vector<1x128xf32> to vector<4x128xf32>
      %522 = arith.mulf %521, %14 : vector<4x128xf32>
      %523 = arith.addf %520, %522 : vector<4x128xf32>
      %524 = math.tanh %523 : vector<4x128xf32>
      %525 = vector.extract_strided_slice %524 {offsets = [0, 0], sizes = [1, 128], strides = [1, 1]} : vector<4x128xf32> to vector<1x128xf32>
      %526 = vector.extract_strided_slice %524 {offsets = [1, 0], sizes = [1, 128], strides = [1, 1]} : vector<4x128xf32> to vector<1x128xf32>
      %527 = vector.extract_strided_slice %524 {offsets = [2, 0], sizes = [1, 128], strides = [1, 1]} : vector<4x128xf32> to vector<1x128xf32>
      %528 = vector.extract_strided_slice %524 {offsets = [3, 0], sizes = [1, 128], strides = [1, 1]} : vector<4x128xf32> to vector<1x128xf32>
      %cst_141 = arith.constant 1.000000e+00 : f32
      %529 = vector.broadcast %cst_141 : f32 to vector<1x128xf32>
      %530 = arith.addf %526, %529 : vector<1x128xf32>
      %531 = arith.mulf %530, %506 : vector<1x128xf32>
      %cst_142 = arith.constant 1.000000e+00 : f32
      %532 = vector.broadcast %cst_142 : f32 to vector<1x128xf32>
      %533 = arith.addf %525, %532 : vector<1x128xf32>
      %534 = arith.mulf %533, %527 : vector<1x128xf32>
      %535 = arith.addf %531, %534 : vector<1x128xf32>
      %cst_143 = arith.constant 5.000000e-01 : f32
      %536 = vector.broadcast %cst_143 : f32 to vector<1x128xf32>
      %537 = arith.mulf %536, %535 : vector<1x128xf32>
      %cst_144 = arith.constant 1.000000e+00 : f32
      %538 = vector.broadcast %cst_144 : f32 to vector<1x128xf32>
      %539 = arith.addf %528, %538 : vector<1x128xf32>
      %cst_145 = arith.constant 5.000000e-01 : f32
      %540 = vector.broadcast %cst_145 : f32 to vector<1x128xf32>
      %541 = arith.mulf %540, %539 : vector<1x128xf32>
      %542 = math.tanh %537 : vector<1x128xf32>
      %543 = arith.mulf %541, %542 : vector<1x128xf32>
      %544 = arith.index_cast %515 : i32 to index
      %c0_146 = arith.constant 0 : index
      %545 = vector.load %arg11[%544, %c0_146] : memref<512x128xf32, #tpu.memory_space<vmem>>, vector<1x128xf32>
      tpu.vector_store %arg11[%544, %c0_146], %543 {strides = array<i32>} : memref<512x128xf32, #tpu.memory_space<vmem>>, vector<1x128xf32>,
      scf.yield %543, %537 : vector<1x128xf32>, vector<1x128xf32>
    }
    %c32_i32_7 = arith.constant 32 : i32
    %c0_8 = arith.constant 0 : index
    %c0_9 = arith.constant 0 : index
    %18 = vector.load %arg11[%c0_8, %c0_9] : memref<512x128xf32, #tpu.memory_space<vmem>>, vector<512x128xf32>
    %19 = arith.truncf %18 : vector<512x128xf32> to vector<512x128xbf16>
    %c0_i32_10 = arith.constant 0 : i32
    %20 = tpu.memref_slice %arg15[%c0_i32_10] : memref<3x!tpu.dma_semaphore, #tpu.memory_space<semaphore_mem>> -> memref<1x!tpu.dma_semaphore, #tpu.memory_space<semaphore_mem>>
    %21 = tpu.memref_squeeze %20 : memref<1x!tpu.dma_semaphore, #tpu.memory_space<semaphore_mem>> -> memref<!tpu.dma_semaphore, #tpu.memory_space<semaphore_mem>>
    tpu.wait_dma2 semaphore(%21 : memref<!tpu.dma_semaphore, #tpu.memory_space<semaphore_mem>>) src(%arg4 : memref<512x512xbf16, #tpu.memory_space<any>>) dst(%arg12 : memref<512x512xbf16, #tpu.memory_space<vmem>>)
    %c0_11 = arith.constant 0 : index
    %c0_12 = arith.constant 0 : index
    %22 = vector.load %arg12[%c0_11, %c0_12] : memref<512x512xbf16, #tpu.memory_space<vmem>>, vector<512x512xbf16>
    %cst_13 = arith.constant dense<0.000000e+00> : vector<512x128xf32>
    %23 = tpu.matmul %22, %19, %cst_13 {dimension_numbers = #tpu.dot_dimension_numbers<[1], [0], [0], [1], [0, 0, 1, 1], [], []>} : vector<512x512xbf16>, vector<512x128xbf16>, vector<512x128xf32> -> vector<512x128xf32>
    %c0_14 = arith.constant 0 : index
    %c0_15 = arith.constant 0 : index
    %24 = vector.load %arg5[%c0_14, %c0_15] : memref<512x1xf32, #tpu.memory_space<vmem>>, vector<512x1xf32>
    %25 = vector.broadcast %24 : vector<512x1xf32> to vector<512x128xf32>
    %26 = arith.addf %23, %25 : vector<512x128xf32>
    %cst_16 = arith.constant 0.000000e+00 : f32
    %27 = vector.broadcast %cst_16 : f32 to vector<512x128xf32>
    %28 = arith.maximumf %26, %27 : vector<512x128xf32>
    %29 = arith.truncf %28 : vector<512x128xf32> to vector<512x128xbf16>
    %c1_i32_17 = arith.constant 1 : i32
    %30 = tpu.memref_slice %arg15[%c1_i32_17] : memref<3x!tpu.dma_semaphore, #tpu.memory_space<semaphore_mem>> -> memref<1x!tpu.dma_semaphore, #tpu.memory_space<semaphore_mem>>
    %31 = tpu.memref_squeeze %30 : memref<1x!tpu.dma_semaphore, #tpu.memory_space<semaphore_mem>> -> memref<!tpu.dma_semaphore, #tpu.memory_space<semaphore_mem>>
    tpu.wait_dma2 semaphore(%31 : memref<!tpu.dma_semaphore, #tpu.memory_space<semaphore_mem>>) src(%arg6 : memref<512x512xbf16, #tpu.memory_space<any>>) dst(%arg13 : memref<512x512xbf16, #tpu.memory_space<vmem>>)
    %c0_18 = arith.constant 0 : index
    %c0_19 = arith.constant 0 : index
    %32 = vector.load %arg13[%c0_18, %c0_19] : memref<512x512xbf16, #tpu.memory_space<vmem>>, vector<512x512xbf16>
    %cst_20 = arith.constant dense<0.000000e+00> : vector<512x128xf32>
    %33 = tpu.matmul %32, %29, %cst_20 {dimension_numbers = #tpu.dot_dimension_numbers<[1], [0], [0], [1], [0, 0, 1, 1], [], []>} : vector<512x512xbf16>, vector<512x128xbf16>, vector<512x128xf32> -> vector<512x128xf32>
    %c0_21 = arith.constant 0 : index
    %c0_22 = arith.constant 0 : index
    %34 = vector.load %arg7[%c0_21, %c0_22] : memref<512x1xf32, #tpu.memory_space<vmem>>, vector<512x1xf32>
    %35 = vector.broadcast %34 : vector<512x1xf32> to vector<512x128xf32>
    %36 = arith.addf %33, %35 : vector<512x128xf32>
    %cst_23 = arith.constant 0.000000e+00 : f32
    %37 = vector.broadcast %cst_23 : f32 to vector<512x128xf32>
    %38 = arith.maximumf %36, %37 : vector<512x128xf32>
    %39 = arith.truncf %38 : vector<512x128xf32> to vector<512x128xbf16>
    %c2_i32_24 = arith.constant 2 : i32
    %40 = tpu.memref_slice %arg15[%c2_i32_24] : memref<3x!tpu.dma_semaphore, #tpu.memory_space<semaphore_mem>> -> memref<1x!tpu.dma_semaphore, #tpu.memory_space<semaphore_mem>>
    %41 = tpu.memref_squeeze %40 : memref<1x!tpu.dma_semaphore, #tpu.memory_space<semaphore_mem>> -> memref<!tpu.dma_semaphore, #tpu.memory_space<semaphore_mem>>
    tpu.wait_dma2 semaphore(%41 : memref<!tpu.dma_semaphore, #tpu.memory_space<semaphore_mem>>) src(%arg8 : memref<512x512xbf16, #tpu.memory_space<any>>) dst(%arg14 : memref<512x512xbf16, #tpu.memory_space<vmem>>)
    %c0_25 = arith.constant 0 : index
    %c0_26 = arith.constant 0 : index
    %42 = vector.load %arg14[%c0_25, %c0_26] : memref<512x512xbf16, #tpu.memory_space<vmem>>, vector<512x512xbf16>
    %cst_27 = arith.constant dense<0.000000e+00> : vector<512x128xf32>
    %43 = tpu.matmul %42, %39, %cst_27 {dimension_numbers = #tpu.dot_dimension_numbers<[1], [0], [0], [1], [0, 0, 1, 1], [], []>} : vector<512x512xbf16>, vector<512x128xbf16>, vector<512x128xf32> -> vector<512x128xf32>
    %c0_28 = arith.constant 0 : index
    %c0_29 = arith.constant 0 : index
    %44 = vector.load %arg9[%c0_28, %c0_29] : memref<512x1xf32, #tpu.memory_space<vmem>>, vector<512x1xf32>
    %45 = vector.broadcast %44 : vector<512x1xf32> to vector<512x128xf32>
    %46 = arith.addf %43, %45 : vector<512x128xf32>
    %c0_30 = arith.constant 0 : index
    %c0_31 = arith.constant 0 : index
    %47 = vector.load %arg10[%c0_30, %c0_31] : memref<512x128xf32, #tpu.memory_space<vmem>>, vector<512x128xf32>
    tpu.vector_store %arg10[%c0_30, %c0_31], %46 {strides = array<i32>} : memref<512x128xf32, #tpu.memory_space<vmem>>, vector<512x128xf32>,
    return
  }
}

</mosaic_0001>

<llo_original>
// kernel: rnn_forward.1
$region0: #{rnn_forward.1}
  #allocation0 [shape = 'u32[]', space=smem, size = 0x4, offset = 0x4, fixed_abs, tag = 'smem constant byte address 0x4 - core index']
  #allocation1 [shape = 'u32[144,128]{1,0:T(1,128)}', space=vmem, size = 0x12000, scoped, tag = 'internal scratch']
  #allocation2 [shape = 'f32[512,128]{1,0:T(8,128)}', space=vmem, size = 0x40000, scoped, tag = 'scratch operand']
  #allocation3 [shape = 'bf16[512,512]{1,0:T(8,128)(2,1)}', space=vmem, size = 0x80000, scoped, tag = 'scratch operand']
  #allocation4 [shape = 'bf16[512,512]{1,0:T(8,128)(2,1)}', space=vmem, size = 0x80000, scoped, tag = 'scratch operand']
  #allocation5 [shape = 'bf16[512,512]{1,0:T(8,128)(2,1)}', space=vmem, size = 0x80000, scoped, tag = 'scratch operand']
  #allocation6 [shape = 's32[3]{0}', space=sflag, size = 0xc, scoped, tag = 'scratch operand']
  #allocation7 [shape = 's32[]', space=sflag, size = 0x4, offset = 0, fixed_abs, tag = 'sflag constant byte address 0x0 - dummy sync flag']
  #allocation8 [shape = 's32[]', space=sflag, size = 0x4, offset = 0, fixed_abs, tag = 'sflag constant byte address 0x0 - dummy sync flag']
  #allocation9 [shape = 's32[]', space=sflag, size = 0x4, offset = 0, fixed_abs, tag = 'sflag constant byte address 0x0 - dummy sync flag']
  %s0 = inlined_call_operand.vmem [shape: f32[4,1], index: 0, kind: input, shape index: {}]
  %s1 = inlined_call_operand.vmem [shape: f32[4,1], index: 1, kind: input, shape index: {}]
  %s2 = inlined_call_operand.vmem [shape: f32[4,1], index: 2, kind: input, shape index: {}]
  %s3 = inlined_call_operand.vmem [shape: f32[512,128], index: 3, kind: input, shape index: {}]
  %s4 = inlined_call_operand.vmem [shape: bf16[512,512], index: 4, kind: input, shape index: {}]
  %s5 = inlined_call_operand.vmem [shape: f32[512,1], index: 5, kind: input, shape index: {}]
  %s6 = inlined_call_operand.vmem [shape: bf16[512,512], index: 6, kind: input, shape index: {}]
  %s7 = inlined_call_operand.vmem [shape: f32[512,1], index: 7, kind: input, shape index: {}]
  %s8 = inlined_call_operand.vmem [shape: bf16[512,512], index: 8, kind: input, shape index: {}]
  %s9 = inlined_call_operand.vmem [shape: f32[512,1], index: 9, kind: input, shape index: {}]
  %s10 = inlined_call_operand.vmem [shape: f32[512,128], index: 10, kind: output, shape index: {}]
  %s11 = sld [smem:[#allocation0]]
  $region147: #{rnn_forward.1} parent=0
    _
  %s13 = ssub.s32 1, %s11
  %s14 = scalar_select 0, %s13, %s11
  // Predicated region
  $region2: #{rnn_forward.1} parent=0 // pred_check
    _
  $region3: #{rnn_forward.1} parent=0 // pred_check_branch
    %16 = sbr.rel (0) target = $region5
  $region4: #{rnn_forward.1} parent=0 // pred_region
    _
  $region5: #{rnn_forward.1} parent=0 // pred_fallthru
    _
  // Predicated region
  $region6: #{rnn_forward.1} parent=0 // pred_check
    _
  $region7: #{rnn_forward.1} parent=0 // pred_check_branch
    %18 = sbr.rel (0) target = $region9
  $region8: #{rnn_forward.1} parent=0 // pred_region
    _
  $region9: #{rnn_forward.1} parent=0 // pred_fallthru
    _
  // Predicated region
  $region10: #{rnn_forward.1} parent=0 // pred_check
    _
  $region11: #{rnn_forward.1} parent=0 // pred_check_branch
    %20 = sbr.rel (0) target = $region13
  $region12: #{rnn_forward.1} parent=0 // pred_region
    _
  $region13: #{rnn_forward.1} parent=0 // pred_fallthru
    _
  // Predicated region
  $region14: #{rnn_forward.1} parent=0 // pred_check
    _
  $region15: #{rnn_forward.1} parent=0 // pred_check_branch
    %22 = sbr.rel (0) target = $region17
  $region16: #{rnn_forward.1} parent=0 // pred_region
    _
  $region17: #{rnn_forward.1} parent=0 // pred_fallthru
    _
  // Predicated region
  $region18: #{rnn_forward.1} parent=0 // pred_check
    _
  $region19: #{rnn_forward.1} parent=0 // pred_check_branch
    %24 = sbr.rel (0) target = $region21
  $region20: #{rnn_forward.1} parent=0 // pred_region
    _
  $region21: #{rnn_forward.1} parent=0 // pred_fallthru
    _
  // Predicated region
  $region22: #{rnn_forward.1} parent=0 // pred_check
    _
  $region23: #{rnn_forward.1} parent=0 // pred_check_branch
    %26 = sbr.rel (0) target = $region25
  $region24: #{rnn_forward.1} parent=0 // pred_region
    _
  $region25: #{rnn_forward.1} parent=0 // pred_fallthru
    _
  // Predicated region
  $region26: #{rnn_forward.1} parent=0 // pred_check
    _
  $region27: #{rnn_forward.1} parent=0 // pred_check_branch
    %28 = sbr.rel (0) target = $region29
  $region28: #{rnn_forward.1} parent=0 // pred_region
    _
  $region29: #{rnn_forward.1} parent=0 // pred_fallthru
    _
  %p31 = scmp.lt.u32.totalorder 1024, 8
  %p32 = pneg %p31
  // Predicated region
  $region30: #{rnn_forward.1} parent=0 // pred_check
    _
  $region31: #{rnn_forward.1} parent=0 // pred_check_branch
    %34 = sbr.rel (%p31) target = $region33
  $region32: #{rnn_forward.1} parent=0 // pred_region
    %s50 = sand.u32 1024, 7
    %p51 = scmp.eq.s32.totalorder %s50, 0
    // Predicated region
    $region45: #{rnn_forward.1} parent=32 // pred_check
      %p52 = pneg %p51
    $region46: #{rnn_forward.1} parent=32 // pred_check_branch
      %54 = sbr.rel (%p52) target = $region48
    $region47: #{rnn_forward.1} parent=32 // pred_region
      loop: start=0, step=1, limit=1
      $region49: #{rnn_forward.1} parent=47 // loop_pre_header
        _
      $region50: #{rnn_forward.1} parent=47 // loop_header
        %s56 = sphi 0, %s60
        %p57 = scmp.ge.s32.totalorder %s56, 1
        %s61 = sphi %s4, %s4
        %s62 = sphi [#allocation3], [#allocation3]
      $region51: #{rnn_forward.1} parent=47 // loop_header_branch
        %59 = sbr.rel (%p57) target = $region55
      $region52: #{rnn_forward.1} parent=47 // loop_body
        %v63 = vld [vmem:[%s61] sm:$0xff]
        %64 = vst [vmem:[%s62] sm:$0xff] %v63
        %v65 = vld [vmem:[%s61 + $0x8] sm:$0xff]
        %66 = vst [vmem:[%s62 + $0x8] sm:$0xff] %v65
        %v67 = vld [vmem:[%s61 + $0x10] sm:$0xff]
        %68 = vst [vmem:[%s62 + $0x10] sm:$0xff] %v67
        %v69 = vld [vmem:[%s61 + $0x18] sm:$0xff]
        %70 = vst [vmem:[%s62 + $0x18] sm:$0xff] %v69
        %v71 = vld [vmem:[%s61 + $0x20] sm:$0xff]
        %72 = vst [vmem:[%s62 + $0x20] sm:$0xff] %v71
        %v73 = vld [vmem:[%s61 + $0x28] sm:$0xff]
        %74 = vst [vmem:[%s62 + $0x28] sm:$0xff] %v73
        %v75 = vld [vmem:[%s61 + $0x30] sm:$0xff]
        %76 = vst [vmem:[%s62 + $0x30] sm:$0xff] %v75
        %v77 = vld [vmem:[%s61 + $0x38] sm:$0xff]
        %78 = vst [vmem:[%s62 + $0x38] sm:$0xff] %v77
        %v79 = vld [vmem:[%s61 + $0x40] sm:$0xff]
        %80 = vst [vmem:[%s62 + $0x40] sm:$0xff] %v79
        %v81 = vld [vmem:[%s61 + $0x48] sm:$0xff]
        %82 = vst [vmem:[%s62 + $0x48] sm:$0xff] %v81
        %v83 = vld [vmem:[%s61 + $0x50] sm:$0xff]
        %84 = vst [vmem:[%s62 + $0x50] sm:$0xff] %v83
        %v85 = vld [vmem:[%s61 + $0x58] sm:$0xff]
        %86 = vst [vmem:[%s62 + $0x58] sm:$0xff] %v85
        %v87 = vld [vmem:[%s61 + $0x60] sm:$0xff]
        %88 = vst [vmem:[%s62 + $0x60] sm:$0xff] %v87
        %v89 = vld [vmem:[%s61 + $0x68] sm:$0xff]
        %90 = vst [vmem:[%s62 + $0x68] sm:$0xff] %v89
        %v91 = vld [vmem:[%s61 + $0x70] sm:$0xff]
        %92 = vst [vmem:[%s62 + $0x70] sm:$0xff] %v91
        %v93 = vld [vmem:[%s61 + $0x78] sm:$0xff]
        %94 = vst [vmem:[%s62 + $0x78] sm:$0xff] %v93
        %v95 = vld [vmem:[%s61 + $0x80] sm:$0xff]
        %96 = vst [vmem:[%s62 + $0x80] sm:$0xff] %v95
        %v97 = vld [vmem:[%s61 + $0x88] sm:$0xff]
        %98 = vst [vmem:[%s62 + $0x88] sm:$0xff] %v97
        %v99 = vld [vmem:[%s61 + $0x90] sm:$0xff]
        %100 = vst [vmem:[%s62 + $0x90] sm:$0xff] %v99
        %v101 = vld [vmem:[%s61 + $0x98] sm:$0xff]
        %102 = vst [vmem:[%s62 + $0x98] sm:$0xff] %v101
        %v103 = vld [vmem:[%s61 + $0xa0] sm:$0xff]
        %104 = vst [vmem:[%s62 + $0xa0] sm:$0xff] %v103
        %v105 = vld [vmem:[%s61 + $0xa8] sm:$0xff]
        %106 = vst [vmem:[%s62 + $0xa8] sm:$0xff] %v105
        %v107 = vld [vmem:[%s61 + $0xb0] sm:$0xff]
        %108 = vst [vmem:[%s62 + $0xb0] sm:$0xff] %v107
        %v109 = vld [vmem:[%s61 + $0xb8] sm:$0xff]
        %110 = vst [vmem:[%s62 + $0xb8] sm:$0xff] %v109
        %v111 = vld [vmem:[%s61 + $0xc0] sm:$0xff]
        %112 = vst [vmem:[%s62 + $0xc0] sm:$0xff] %v111
        %v113 = vld [vmem:[%s61 + $0xc8] sm:$0xff]
        %114 = vst [vmem:[%s62 + $0xc8] sm:$0xff] %v113
        %v115 = vld [vmem:[%s61 + $0xd0] sm:$0xff]
        %116 = vst [vmem:[%s62 + $0xd0] sm:$0xff] %v115
        %v117 = vld [vmem:[%s61 + $0xd8] sm:$0xff]
        %118 = vst [vmem:[%s62 + $0xd8] sm:$0xff] %v117
        %v119 = vld [vmem:[%s61 + $0xe0] sm:$0xff]
        %120 = vst [vmem:[%s62 + $0xe0] sm:$0xff] %v119
        %v121 = vld [vmem:[%s61 + $0xe8] sm:$0xff]
        %122 = vst [vmem:[%s62 + $0xe8] sm:$0xff] %v121
        %v123 = vld [vmem:[%s61 + $0xf0] sm:$0xff]
        %124 = vst [vmem:[%s62 + $0xf0] sm:$0xff] %v123
        %v125 = vld [vmem:[%s61 + $0xf8] sm:$0xff]
        %126 = vst [vmem:[%s62 + $0xf8] sm:$0xff] %v125
        %v127 = vld [vmem:[%s61 + $0x100] sm:$0xff]
        %128 = vst [vmem:[%s62 + $0x100] sm:$0xff] %v127
        %v129 = vld [vmem:[%s61 + $0x108] sm:$0xff]
        %130 = vst [vmem:[%s62 + $0x108] sm:$0xff] %v129
        %v131 = vld [vmem:[%s61 + $0x110] sm:$0xff]
        %132 = vst [vmem:[%s62 + $0x110] sm:$0xff] %v131
        %v133 = vld [vmem:[%s61 + $0x118] sm:$0xff]
        %134 = vst [vmem:[%s62 + $0x118] sm:$0xff] %v133
        %v135 = vld [vmem:[%s61 + $0x120] sm:$0xff]
        %136 = vst [vmem:[%s62 + $0x120] sm:$0xff] %v135
        %v137 = vld [vmem:[%s61 + $0x128] sm:$0xff]
        %138 = vst [vmem:[%s62 + $0x128] sm:$0xff] %v137
        %v139 = vld [vmem:[%s61 + $0x130] sm:$0xff]
        %140 = vst [vmem:[%s62 + $0x130] sm:$0xff] %v139
        %v141 = vld [vmem:[%s61 + $0x138] sm:$0xff]
        %142 = vst [vmem:[%s62 + $0x138] sm:$0xff] %v141
        %v143 = vld [vmem:[%s61 + $0x140] sm:$0xff]
        %144 = vst [vmem:[%s62 + $0x140] sm:$0xff] %v143
        %v145 = vld [vmem:[%s61 + $0x148] sm:$0xff]
        %146 = vst [vmem:[%s62 + $0x148] sm:$0xff] %v145
        %v147 = vld [vmem:[%s61 + $0x150] sm:$0xff]
        %148 = vst [vmem:[%s62 + $0x150] sm:$0xff] %v147
        %v149 = vld [vmem:[%s61 + $0x158] sm:$0xff]
        %150 = vst [vmem:[%s62 + $0x158] sm:$0xff] %v149
        %v151 = vld [vmem:[%s61 + $0x160] sm:$0xff]
        %152 = vst [vmem:[%s62 + $0x160] sm:$0xff] %v151
        %v153 = vld [vmem:[%s61 + $0x168] sm:$0xff]
        %154 = vst [vmem:[%s62 + $0x168] sm:$0xff] %v153
        %v155 = vld [vmem:[%s61 + $0x170] sm:$0xff]
        %156 = vst [vmem:[%s62 + $0x170] sm:$0xff] %v155
        %v157 = vld [vmem:[%s61 + $0x178] sm:$0xff]
        %158 = vst [vmem:[%s62 + $0x178] sm:$0xff] %v157
        %v159 = vld [vmem:[%s61 + $0x180] sm:$0xff]
        %160 = vst [vmem:[%s62 + $0x180] sm:$0xff] %v159
        %v161 = vld [vmem:[%s61 + $0x188] sm:$0xff]
        %162 = vst [vmem:[%s62 + $0x188] sm:$0xff] %v161
        %v163 = vld [vmem:[%s61 + $0x190] sm:$0xff]
        %164 = vst [vmem:[%s62 + $0x190] sm:$0xff] %v163
        %v165 = vld [vmem:[%s61 + $0x198] sm:$0xff]
        %166 = vst [vmem:[%s62 + $0x198] sm:$0xff] %v165
        %v167 = vld [vmem:[%s61 + $0x1a0] sm:$0xff]
        %168 = vst [vmem:[%s62 + $0x1a0] sm:$0xff] %v167
        %v169 = vld [vmem:[%s61 + $0x1a8] sm:$0xff]
        %170 = vst [vmem:[%s62 + $0x1a8] sm:$0xff] %v169
        %v171 = vld [vmem:[%s61 + $0x1b0] sm:$0xff]
        %172 = vst [vmem:[%s62 + $0x1b0] sm:$0xff] %v171
        %v173 = vld [vmem:[%s61 + $0x1b8] sm:$0xff]
        %174 = vst [vmem:[%s62 + $0x1b8] sm:$0xff] %v173
        %v175 = vld [vmem:[%s61 + $0x1c0] sm:$0xff]
        %176 = vst [vmem:[%s62 + $0x1c0] sm:$0xff] %v175
        %v177 = vld [vmem:[%s61 + $0x1c8] sm:$0xff]
        %178 = vst [vmem:[%s62 + $0x1c8] sm:$0xff] %v177
        %v179 = vld [vmem:[%s61 + $0x1d0] sm:$0xff]
        %180 = vst [vmem:[%s62 + $0x1d0] sm:$0xff] %v179
        %v181 = vld [vmem:[%s61 + $0x1d8] sm:$0xff]
        %182 = vst [vmem:[%s62 + $0x1d8] sm:$0xff] %v181
        %v183 = vld [vmem:[%s61 + $0x1e0] sm:$0xff]
        %184 = vst [vmem:[%s62 + $0x1e0] sm:$0xff] %v183
        %v185 = vld [vmem:[%s61 + $0x1e8] sm:$0xff]
        %186 = vst [vmem:[%s62 + $0x1e8] sm:$0xff] %v185
        %v187 = vld [vmem:[%s61 + $0x1f0] sm:$0xff]
        %188 = vst [vmem:[%s62 + $0x1f0] sm:$0xff] %v187
        %v189 = vld [vmem:[%s61 + $0x1f8] sm:$0xff]
        %190 = vst [vmem:[%s62 + $0x1f8] sm:$0xff] %v189
        %v191 = vld [vmem:[%s61 + $0x200] sm:$0xff]
        %192 = vst [vmem:[%s62 + $0x200] sm:$0xff] %v191
        %v193 = vld [vmem:[%s61 + $0x208] sm:$0xff]
        %194 = vst [vmem:[%s62 + $0x208] sm:$0xff] %v193
        %v195 = vld [vmem:[%s61 + $0x210] sm:$0xff]
        %196 = vst [vmem:[%s62 + $0x210] sm:$0xff] %v195
        %v197 = vld [vmem:[%s61 + $0x218] sm:$0xff]
        %198 = vst [vmem:[%s62 + $0x218] sm:$0xff] %v197
        %v199 = vld [vmem:[%s61 + $0x220] sm:$0xff]
        %200 = vst [vmem:[%s62 + $0x220] sm:$0xff] %v199
        %v201 = vld [vmem:[%s61 + $0x228] sm:$0xff]
        %202 = vst [vmem:[%s62 + $0x228] sm:$0xff] %v201
        %v203 = vld [vmem:[%s61 + $0x230] sm:$0xff]
        %204 = vst [vmem:[%s62 + $0x230] sm:$0xff] %v203
        %v205 = vld [vmem:[%s61 + $0x238] sm:$0xff]
        %206 = vst [vmem:[%s62 + $0x238] sm:$0xff] %v205
        %v207 = vld [vmem:[%s61 + $0x240] sm:$0xff]
        %208 = vst [vmem:[%s62 + $0x240] sm:$0xff] %v207
        %v209 = vld [vmem:[%s61 + $0x248] sm:$0xff]
        %210 = vst [vmem:[%s62 + $0x248] sm:$0xff] %v209
        %v211 = vld [vmem:[%s61 + $0x250] sm:$0xff]
        %212 = vst [vmem:[%s62 + $0x250] sm:$0xff] %v211
        %v213 = vld [vmem:[%s61 + $0x258] sm:$0xff]
        %214 = vst [vmem:[%s62 + $0x258] sm:$0xff] %v213
        %v215 = vld [vmem:[%s61 + $0x260] sm:$0xff]
        %216 = vst [vmem:[%s62 + $0x260] sm:$0xff] %v215
        %v217 = vld [vmem:[%s61 + $0x268] sm:$0xff]
        %218 = vst [vmem:[%s62 + $0x268] sm:$0xff] %v217
        %v219 = vld [vmem:[%s61 + $0x270] sm:$0xff]
        %220 = vst [vmem:[%s62 + $0x270] sm:$0xff] %v219
        %v221 = vld [vmem:[%s61 + $0x278] sm:$0xff]
        %222 = vst [vmem:[%s62 + $0x278] sm:$0xff] %v221
        %v223 = vld [vmem:[%s61 + $0x280] sm:$0xff]
        %224 = vst [vmem:[%s62 + $0x280] sm:$0xff] %v223
        %v225 = vld [vmem:[%s61 + $0x288] sm:$0xff]
        %226 = vst [vmem:[%s62 + $0x288] sm:$0xff] %v225
        %v227 = vld [vmem:[%s61 + $0x290] sm:$0xff]
        %228 = vst [vmem:[%s62 + $0x290] sm:$0xff] %v227
        %v229 = vld [vmem:[%s61 + $0x298] sm:$0xff]
        %230 = vst [vmem:[%s62 + $0x298] sm:$0xff] %v229
        %v231 = vld [vmem:[%s61 + $0x2a0] sm:$0xff]
        %232 = vst [vmem:[%s62 + $0x2a0] sm:$0xff] %v231
        %v233 = vld [vmem:[%s61 + $0x2a8] sm:$0xff]
        %234 = vst [vmem:[%s62 + $0x2a8] sm:$0xff] %v233
        %v235 = vld [vmem:[%s61 + $0x2b0] sm:$0xff]
        %236 = vst [vmem:[%s62 + $0x2b0] sm:$0xff] %v235
        %v237 = vld [vmem:[%s61 + $0x2b8] sm:$0xff]
        %238 = vst [vmem:[%s62 + $0x2b8] sm:$0xff] %v237
        %v239 = vld [vmem:[%s61 + $0x2c0] sm:$0xff]
        %240 = vst [vmem:[%s62 + $0x2c0] sm:$0xff] %v239
        %v241 = vld [vmem:[%s61 + $0x2c8] sm:$0xff]
        %242 = vst [vmem:[%s62 + $0x2c8] sm:$0xff] %v241
        %v243 = vld [vmem:[%s61 + $0x2d0] sm:$0xff]
        %244 = vst [vmem:[%s62 + $0x2d0] sm:$0xff] %v243
        %v245 = vld [vmem:[%s61 + $0x2d8] sm:$0xff]
        %246 = vst [vmem:[%s62 + $0x2d8] sm:$0xff] %v245
        %v247 = vld [vmem:[%s61 + $0x2e0] sm:$0xff]
        %248 = vst [vmem:[%s62 + $0x2e0] sm:$0xff] %v247
        %v249 = vld [vmem:[%s61 + $0x2e8] sm:$0xff]
        %250 = vst [vmem:[%s62 + $0x2e8] sm:$0xff] %v249
        %v251 = vld [vmem:[%s61 + $0x2f0] sm:$0xff]
        %252 = vst [vmem:[%s62 + $0x2f0] sm:$0xff] %v251
        %v253 = vld [vmem:[%s61 + $0x2f8] sm:$0xff]
        %254 = vst [vmem:[%s62 + $0x2f8] sm:$0xff] %v253
        %v255 = vld [vmem:[%s61 + $0x300] sm:$0xff]
        %256 = vst [vmem:[%s62 + $0x300] sm:$0xff] %v255
        %v257 = vld [vmem:[%s61 + $0x308] sm:$0xff]
        %258 = vst [vmem:[%s62 + $0x308] sm:$0xff] %v257
        %v259 = vld [vmem:[%s61 + $0x310] sm:$0xff]
        %260 = vst [vmem:[%s62 + $0x310] sm:$0xff] %v259
        %v261 = vld [vmem:[%s61 + $0x318] sm:$0xff]
        %262 = vst [vmem:[%s62 + $0x318] sm:$0xff] %v261
        %v263 = vld [vmem:[%s61 + $0x320] sm:$0xff]
        %264 = vst [vmem:[%s62 + $0x320] sm:$0xff] %v263
        %v265 = vld [vmem:[%s61 + $0x328] sm:$0xff]
        %266 = vst [vmem:[%s62 + $0x328] sm:$0xff] %v265
        %v267 = vld [vmem:[%s61 + $0x330] sm:$0xff]
        %268 = vst [vmem:[%s62 + $0x330] sm:$0xff] %v267
        %v269 = vld [vmem:[%s61 + $0x338] sm:$0xff]
        %270 = vst [vmem:[%s62 + $0x338] sm:$0xff] %v269
        %v271 = vld [vmem:[%s61 + $0x340] sm:$0xff]
        %272 = vst [vmem:[%s62 + $0x340] sm:$0xff] %v271
        %v273 = vld [vmem:[%s61 + $0x348] sm:$0xff]
        %274 = vst [vmem:[%s62 + $0x348] sm:$0xff] %v273
        %v275 = vld [vmem:[%s61 + $0x350] sm:$0xff]
        %276 = vst [vmem:[%s62 + $0x350] sm:$0xff] %v275
        %v277 = vld [vmem:[%s61 + $0x358] sm:$0xff]
        %278 = vst [vmem:[%s62 + $0x358] sm:$0xff] %v277
        %v279 = vld [vmem:[%s61 + $0x360] sm:$0xff]
        %280 = vst [vmem:[%s62 + $0x360] sm:$0xff] %v279
        %v281 = vld [vmem:[%s61 + $0x368] sm:$0xff]
        %282 = vst [vmem:[%s62 + $0x368] sm:$0xff] %v281
        %v283 = vld [vmem:[%s61 + $0x370] sm:$0xff]
        %284 = vst [vmem:[%s62 + $0x370] sm:$0xff] %v283
        %v285 = vld [vmem:[%s61 + $0x378] sm:$0xff]
        %286 = vst [vmem:[%s62 + $0x378] sm:$0xff] %v285
        %v287 = vld [vmem:[%s61 + $0x380] sm:$0xff]
        %288 = vst [vmem:[%s62 + $0x380] sm:$0xff] %v287
        %v289 = vld [vmem:[%s61 + $0x388] sm:$0xff]
        %290 = vst [vmem:[%s62 + $0x388] sm:$0xff] %v289
        %v291 = vld [vmem:[%s61 + $0x390] sm:$0xff]
        %292 = vst [vmem:[%s62 + $0x390] sm:$0xff] %v291
        %v293 = vld [vmem:[%s61 + $0x398] sm:$0xff]
        %294 = vst [vmem:[%s62 + $0x398] sm:$0xff] %v293
        %v295 = vld [vmem:[%s61 + $0x3a0] sm:$0xff]
        %296 = vst [vmem:[%s62 + $0x3a0] sm:$0xff] %v295
        %v297 = vld [vmem:[%s61 + $0x3a8] sm:$0xff]
        %298 = vst [vmem:[%s62 + $0x3a8] sm:$0xff] %v297
        %v299 = vld [vmem:[%s61 + $0x3b0] sm:$0xff]
        %300 = vst [vmem:[%s62 + $0x3b0] sm:$0xff] %v299
        %v301 = vld [vmem:[%s61 + $0x3b8] sm:$0xff]
        %302 = vst [vmem:[%s62 + $0x3b8] sm:$0xff] %v301
        %v303 = vld [vmem:[%s61 + $0x3c0] sm:$0xff]
        %304 = vst [vmem:[%s62 + $0x3c0] sm:$0xff] %v303
        %v305 = vld [vmem:[%s61 + $0x3c8] sm:$0xff]
        %306 = vst [vmem:[%s62 + $0x3c8] sm:$0xff] %v305
        %v307 = vld [vmem:[%s61 + $0x3d0] sm:$0xff]
        %308 = vst [vmem:[%s62 + $0x3d0] sm:$0xff] %v307
        %v309 = vld [vmem:[%s61 + $0x3d8] sm:$0xff]
        %310 = vst [vmem:[%s62 + $0x3d8] sm:$0xff] %v309
        %v311 = vld [vmem:[%s61 + $0x3e0] sm:$0xff]
        %312 = vst [vmem:[%s62 + $0x3e0] sm:$0xff] %v311
        %v313 = vld [vmem:[%s61 + $0x3e8] sm:$0xff]
        %314 = vst [vmem:[%s62 + $0x3e8] sm:$0xff] %v313
        %v315 = vld [vmem:[%s61 + $0x3f0] sm:$0xff]
        %316 = vst [vmem:[%s62 + $0x3f0] sm:$0xff] %v315
        %v317 = vld [vmem:[%s61 + $0x3f8] sm:$0xff]
        %318 = vst [vmem:[%s62 + $0x3f8] sm:$0xff] %v317
      $region53: #{rnn_forward.1} parent=47 // loop_footer
        %s60 = sadd.s32 1, %s56
      $region54: #{rnn_forward.1} parent=47 // loop_footer_branch
        %55 = sbr.rel target = $region50
      $region55: #{rnn_forward.1} parent=47 // loop_exit
        _
    $region48: #{rnn_forward.1} parent=32 // pred_fallthru
      _
    %p319 = pneg %p51
    // Predicated region
    $region56: #{rnn_forward.1} parent=32 // pred_check
      _
    $region57: #{rnn_forward.1} parent=32 // pred_check_branch
      %321 = sbr.rel (%p51) target = $region59
    $region58: #{rnn_forward.1} parent=32 // pred_region
      %s322 = sand.u32 1024, 7
    $region59: #{rnn_forward.1} parent=32 // pred_fallthru
      _
  $region33: #{rnn_forward.1} parent=0 // pred_fallthru
    _
  // Predicated region
  $region34: #{rnn_forward.1} parent=0 // pred_check
    %p35 = pneg %p31
  $region35: #{rnn_forward.1} parent=0 // pred_check_branch
    %37 = sbr.rel (%p35) target = $region37
  $region36: #{rnn_forward.1} parent=0 // pred_region
    %s38 = sshll.u32 1, 1024
    %s39 = ssub.s32 %s38, 1
    loop: start=0, step=1, limit=1
    $region38: #{rnn_forward.1} parent=36 // loop_pre_header
      _
    $region39: #{rnn_forward.1} parent=36 // loop_header
      %s41 = sphi 0, %s45
      %p42 = scmp.ge.s32.totalorder %s41, 1
      %s46 = sphi %s4, %s4
      %s47 = sphi [#allocation3], [#allocation3]
    $region40: #{rnn_forward.1} parent=36 // loop_header_branch
      %44 = sbr.rel (%p42) target = $region44
    $region41: #{rnn_forward.1} parent=36 // loop_body
      %v48 = vld [vmem:[%s46] sm:%s39]
      %49 = vst [vmem:[%s47] sm:%s39] %v48
    $region42: #{rnn_forward.1} parent=36 // loop_footer
      %s45 = sadd.s32 1, %s41
    $region43: #{rnn_forward.1} parent=36 // loop_footer_branch
      %40 = sbr.rel target = $region39
    $region44: #{rnn_forward.1} parent=36 // loop_exit
      _
  $region37: #{rnn_forward.1} parent=0 // pred_fallthru
    _
  // Predicated region
  $region60: #{rnn_forward.1} parent=0 // pred_check
    _
  $region61: #{rnn_forward.1} parent=0 // pred_check_branch
    %325 = sbr.rel (0) target = $region63
  $region62: #{rnn_forward.1} parent=0 // pred_region
    %326 = vsyncadd [#allocation6], 16384
  $region63: #{rnn_forward.1} parent=0 // pred_fallthru
    _
  %s327 = scalar_lea.sflag [#allocation6], 1
  %p329 = scmp.lt.u32.totalorder 1024, 8
  %p330 = pneg %p329
  // Predicated region
  $region64: #{rnn_forward.1} parent=0 // pred_check
    _
  $region65: #{rnn_forward.1} parent=0 // pred_check_branch
    %332 = sbr.rel (%p329) target = $region67
  $region66: #{rnn_forward.1} parent=0 // pred_region
    %s348 = sand.u32 1024, 7
    %p349 = scmp.eq.s32.totalorder %s348, 0
    // Predicated region
    $region79: #{rnn_forward.1} parent=66 // pred_check
      %p350 = pneg %p349
    $region80: #{rnn_forward.1} parent=66 // pred_check_branch
      %352 = sbr.rel (%p350) target = $region82
    $region81: #{rnn_forward.1} parent=66 // pred_region
      loop: start=0, step=1, limit=1
      $region83: #{rnn_forward.1} parent=81 // loop_pre_header
        _
      $region84: #{rnn_forward.1} parent=81 // loop_header
        %s354 = sphi 0, %s358
        %p355 = scmp.ge.s32.totalorder %s354, 1
        %s359 = sphi %s6, %s6
        %s360 = sphi [#allocation4], [#allocation4]
      $region85: #{rnn_forward.1} parent=81 // loop_header_branch
        %357 = sbr.rel (%p355) target = $region89
      $region86: #{rnn_forward.1} parent=81 // loop_body
        %v361 = vld [vmem:[%s359] sm:$0xff]
        %362 = vst [vmem:[%s360] sm:$0xff] %v361
        %v363 = vld [vmem:[%s359 + $0x8] sm:$0xff]
        %364 = vst [vmem:[%s360 + $0x8] sm:$0xff] %v363
        %v365 = vld [vmem:[%s359 + $0x10] sm:$0xff]
        %366 = vst [vmem:[%s360 + $0x10] sm:$0xff] %v365
        %v367 = vld [vmem:[%s359 + $0x18] sm:$0xff]
        %368 = vst [vmem:[%s360 + $0x18] sm:$0xff] %v367
        %v369 = vld [vmem:[%s359 + $0x20] sm:$0xff]
        %370 = vst [vmem:[%s360 + $0x20] sm:$0xff] %v369
        %v371 = vld [vmem:[%s359 + $0x28] sm:$0xff]
        %372 = vst [vmem:[%s360 + $0x28] sm:$0xff] %v371
        %v373 = vld [vmem:[%s359 + $0x30] sm:$0xff]
        %374 = vst [vmem:[%s360 + $0x30] sm:$0xff] %v373
        %v375 = vld [vmem:[%s359 + $0x38] sm:$0xff]
        %376 = vst [vmem:[%s360 + $0x38] sm:$0xff] %v375
        %v377 = vld [vmem:[%s359 + $0x40] sm:$0xff]
        %378 = vst [vmem:[%s360 + $0x40] sm:$0xff] %v377
        %v379 = vld [vmem:[%s359 + $0x48] sm:$0xff]
        %380 = vst [vmem:[%s360 + $0x48] sm:$0xff] %v379
        %v381 = vld [vmem:[%s359 + $0x50] sm:$0xff]
        %382 = vst [vmem:[%s360 + $0x50] sm:$0xff] %v381
        %v383 = vld [vmem:[%s359 + $0x58] sm:$0xff]
        %384 = vst [vmem:[%s360 + $0x58] sm:$0xff] %v383
        %v385 = vld [vmem:[%s359 + $0x60] sm:$0xff]
        %386 = vst [vmem:[%s360 + $0x60] sm:$0xff] %v385
        %v387 = vld [vmem:[%s359 + $0x68] sm:$0xff]
        %388 = vst [vmem:[%s360 + $0x68] sm:$0xff] %v387
        %v389 = vld [vmem:[%s359 + $0x70] sm:$0xff]
        %390 = vst [vmem:[%s360 + $0x70] sm:$0xff] %v389
        %v391 = vld [vmem:[%s359 + $0x78] sm:$0xff]
        %392 = vst [vmem:[%s360 + $0x78] sm:$0xff] %v391
        %v393 = vld [vmem:[%s359 + $0x80] sm:$0xff]
        %394 = vst [vmem:[%s360 + $0x80] sm:$0xff] %v393
        %v395 = vld [vmem:[%s359 + $0x88] sm:$0xff]
        %396 = vst [vmem:[%s360 + $0x88] sm:$0xff] %v395
        %v397 = vld [vmem:[%s359 + $0x90] sm:$0xff]
        %398 = vst [vmem:[%s360 + $0x90] sm:$0xff] %v397
        %v399 = vld [vmem:[%s359 + $0x98] sm:$0xff]
        %400 = vst [vmem:[%s360 + $0x98] sm:$0xff] %v399
        %v401 = vld [vmem:[%s359 + $0xa0] sm:$0xff]
        %402 = vst [vmem:[%s360 + $0xa0] sm:$0xff] %v401
        %v403 = vld [vmem:[%s359 + $0xa8] sm:$0xff]
        %404 = vst [vmem:[%s360 + $0xa8] sm:$0xff] %v403
        %v405 = vld [vmem:[%s359 + $0xb0] sm:$0xff]
        %406 = vst [vmem:[%s360 + $0xb0] sm:$0xff] %v405
        %v407 = vld [vmem:[%s359 + $0xb8] sm:$0xff]
        %408 = vst [vmem:[%s360 + $0xb8] sm:$0xff] %v407
        %v409 = vld [vmem:[%s359 + $0xc0] sm:$0xff]
        %410 = vst [vmem:[%s360 + $0xc0] sm:$0xff] %v409
        %v411 = vld [vmem:[%s359 + $0xc8] sm:$0xff]
        %412 = vst [vmem:[%s360 + $0xc8] sm:$0xff] %v411
        %v413 = vld [vmem:[%s359 + $0xd0] sm:$0xff]
        %414 = vst [vmem:[%s360 + $0xd0] sm:$0xff] %v413
        %v415 = vld [vmem:[%s359 + $0xd8] sm:$0xff]
        %416 = vst [vmem:[%s360 + $0xd8] sm:$0xff] %v415
        %v417 = vld [vmem:[%s359 + $0xe0] sm:$0xff]
        %418 = vst [vmem:[%s360 + $0xe0] sm:$0xff] %v417
        %v419 = vld [vmem:[%s359 + $0xe8] sm:$0xff]
        %420 = vst [vmem:[%s360 + $0xe8] sm:$0xff] %v419
        %v421 = vld [vmem:[%s359 + $0xf0] sm:$0xff]
        %422 = vst [vmem:[%s360 + $0xf0] sm:$0xff] %v421
        %v423 = vld [vmem:[%s359 + $0xf8] sm:$0xff]
        %424 = vst [vmem:[%s360 + $0xf8] sm:$0xff] %v423
        %v425 = vld [vmem:[%s359 + $0x100] sm:$0xff]
        %426 = vst [vmem:[%s360 + $0x100] sm:$0xff] %v425
        %v427 = vld [vmem:[%s359 + $0x108] sm:$0xff]
        %428 = vst [vmem:[%s360 + $0x108] sm:$0xff] %v427
        %v429 = vld [vmem:[%s359 + $0x110] sm:$0xff]
        %430 = vst [vmem:[%s360 + $0x110] sm:$0xff] %v429
        %v431 = vld [vmem:[%s359 + $0x118] sm:$0xff]
        %432 = vst [vmem:[%s360 + $0x118] sm:$0xff] %v431
        %v433 = vld [vmem:[%s359 + $0x120] sm:$0xff]
        %434 = vst [vmem:[%s360 + $0x120] sm:$0xff] %v433
        %v435 = vld [vmem:[%s359 + $0x128] sm:$0xff]
        %436 = vst [vmem:[%s360 + $0x128] sm:$0xff] %v435
        %v437 = vld [vmem:[%s359 + $0x130] sm:$0xff]
        %438 = vst [vmem:[%s360 + $0x130] sm:$0xff] %v437
        %v439 = vld [vmem:[%s359 + $0x138] sm:$0xff]
        %440 = vst [vmem:[%s360 + $0x138] sm:$0xff] %v439
        %v441 = vld [vmem:[%s359 + $0x140] sm:$0xff]
        %442 = vst [vmem:[%s360 + $0x140] sm:$0xff] %v441
        %v443 = vld [vmem:[%s359 + $0x148] sm:$0xff]
        %444 = vst [vmem:[%s360 + $0x148] sm:$0xff] %v443
        %v445 = vld [vmem:[%s359 + $0x150] sm:$0xff]
        %446 = vst [vmem:[%s360 + $0x150] sm:$0xff] %v445
        %v447 = vld [vmem:[%s359 + $0x158] sm:$0xff]
        %448 = vst [vmem:[%s360 + $0x158] sm:$0xff] %v447
        %v449 = vld [vmem:[%s359 + $0x160] sm:$0xff]
        %450 = vst [vmem:[%s360 + $0x160] sm:$0xff] %v449
        %v451 = vld [vmem:[%s359 + $0x168] sm:$0xff]
        %452 = vst [vmem:[%s360 + $0x168] sm:$0xff] %v451
        %v453 = vld [vmem:[%s359 + $0x170] sm:$0xff]
        %454 = vst [vmem:[%s360 + $0x170] sm:$0xff] %v453
        %v455 = vld [vmem:[%s359 + $0x178] sm:$0xff]
        %456 = vst [vmem:[%s360 + $0x178] sm:$0xff] %v455
        %v457 = vld [vmem:[%s359 + $0x180] sm:$0xff]
        %458 = vst [vmem:[%s360 + $0x180] sm:$0xff] %v457
        %v459 = vld [vmem:[%s359 + $0x188] sm:$0xff]
        %460 = vst [vmem:[%s360 + $0x188] sm:$0xff] %v459
        %v461 = vld [vmem:[%s359 + $0x190] sm:$0xff]
        %462 = vst [vmem:[%s360 + $0x190] sm:$0xff] %v461
        %v463 = vld [vmem:[%s359 + $0x198] sm:$0xff]
        %464 = vst [vmem:[%s360 + $0x198] sm:$0xff] %v463
        %v465 = vld [vmem:[%s359 + $0x1a0] sm:$0xff]
        %466 = vst [vmem:[%s360 + $0x1a0] sm:$0xff] %v465
        %v467 = vld [vmem:[%s359 + $0x1a8] sm:$0xff]
        %468 = vst [vmem:[%s360 + $0x1a8] sm:$0xff] %v467
        %v469 = vld [vmem:[%s359 + $0x1b0] sm:$0xff]
        %470 = vst [vmem:[%s360 + $0x1b0] sm:$0xff] %v469
        %v471 = vld [vmem:[%s359 + $0x1b8] sm:$0xff]
        %472 = vst [vmem:[%s360 + $0x1b8] sm:$0xff] %v471
        %v473 = vld [vmem:[%s359 + $0x1c0] sm:$0xff]
        %474 = vst [vmem:[%s360 + $0x1c0] sm:$0xff] %v473
        %v475 = vld [vmem:[%s359 + $0x1c8] sm:$0xff]
        %476 = vst [vmem:[%s360 + $0x1c8] sm:$0xff] %v475
        %v477 = vld [vmem:[%s359 + $0x1d0] sm:$0xff]
        %478 = vst [vmem:[%s360 + $0x1d0] sm:$0xff] %v477
        %v479 = vld [vmem:[%s359 + $0x1d8] sm:$0xff]
        %480 = vst [vmem:[%s360 + $0x1d8] sm:$0xff] %v479
        %v481 = vld [vmem:[%s359 + $0x1e0] sm:$0xff]
        %482 = vst [vmem:[%s360 + $0x1e0] sm:$0xff] %v481
        %v483 = vld [vmem:[%s359 + $0x1e8] sm:$0xff]
        %484 = vst [vmem:[%s360 + $0x1e8] sm:$0xff] %v483
        %v485 = vld [vmem:[%s359 + $0x1f0] sm:$0xff]
        %486 = vst [vmem:[%s360 + $0x1f0] sm:$0xff] %v485
        %v487 = vld [vmem:[%s359 + $0x1f8] sm:$0xff]
        %488 = vst [vmem:[%s360 + $0x1f8] sm:$0xff] %v487
        %v489 = vld [vmem:[%s359 + $0x200] sm:$0xff]
        %490 = vst [vmem:[%s360 + $0x200] sm:$0xff] %v489
        %v491 = vld [vmem:[%s359 + $0x208] sm:$0xff]
        %492 = vst [vmem:[%s360 + $0x208] sm:$0xff] %v491
        %v493 = vld [vmem:[%s359 + $0x210] sm:$0xff]
        %494 = vst [vmem:[%s360 + $0x210] sm:$0xff] %v493
        %v495 = vld [vmem:[%s359 + $0x218] sm:$0xff]
        %496 = vst [vmem:[%s360 + $0x218] sm:$0xff] %v495
        %v497 = vld [vmem:[%s359 + $0x220] sm:$0xff]
        %498 = vst [vmem:[%s360 + $0x220] sm:$0xff] %v497
        %v499 = vld [vmem:[%s359 + $0x228] sm:$0xff]
        %500 = vst [vmem:[%s360 + $0x228] sm:$0xff] %v499
        %v501 = vld [vmem:[%s359 + $0x230] sm:$0xff]
        %502 = vst [vmem:[%s360 + $0x230] sm:$0xff] %v501
        %v503 = vld [vmem:[%s359 + $0x238] sm:$0xff]
        %504 = vst [vmem:[%s360 + $0x238] sm:$0xff] %v503
        %v505 = vld [vmem:[%s359 + $0x240] sm:$0xff]
        %506 = vst [vmem:[%s360 + $0x240] sm:$0xff] %v505
        %v507 = vld [vmem:[%s359 + $0x248] sm:$0xff]
        %508 = vst [vmem:[%s360 + $0x248] sm:$0xff] %v507
        %v509 = vld [vmem:[%s359 + $0x250] sm:$0xff]
        %510 = vst [vmem:[%s360 + $0x250] sm:$0xff] %v509
        %v511 = vld [vmem:[%s359 + $0x258] sm:$0xff]
        %512 = vst [vmem:[%s360 + $0x258] sm:$0xff] %v511
        %v513 = vld [vmem:[%s359 + $0x260] sm:$0xff]
        %514 = vst [vmem:[%s360 + $0x260] sm:$0xff] %v513
        %v515 = vld [vmem:[%s359 + $0x268] sm:$0xff]
        %516 = vst [vmem:[%s360 + $0x268] sm:$0xff] %v515
        %v517 = vld [vmem:[%s359 + $0x270] sm:$0xff]
        %518 = vst [vmem:[%s360 + $0x270] sm:$0xff] %v517
        %v519 = vld [vmem:[%s359 + $0x278] sm:$0xff]
        %520 = vst [vmem:[%s360 + $0x278] sm:$0xff] %v519
        %v521 = vld [vmem:[%s359 + $0x280] sm:$0xff]
        %522 = vst [vmem:[%s360 + $0x280] sm:$0xff] %v521
        %v523 = vld [vmem:[%s359 + $0x288] sm:$0xff]
        %524 = vst [vmem:[%s360 + $0x288] sm:$0xff] %v523
        %v525 = vld [vmem:[%s359 + $0x290] sm:$0xff]
        %526 = vst [vmem:[%s360 + $0x290] sm:$0xff] %v525
        %v527 = vld [vmem:[%s359 + $0x298] sm:$0xff]
        %528 = vst [vmem:[%s360 + $0x298] sm:$0xff] %v527
        %v529 = vld [vmem:[%s359 + $0x2a0] sm:$0xff]
        %530 = vst [vmem:[%s360 + $0x2a0] sm:$0xff] %v529
        %v531 = vld [vmem:[%s359 + $0x2a8] sm:$0xff]
        %532 = vst [vmem:[%s360 + $0x2a8] sm:$0xff] %v531
        %v533 = vld [vmem:[%s359 + $0x2b0] sm:$0xff]
        %534 = vst [vmem:[%s360 + $0x2b0] sm:$0xff] %v533
        %v535 = vld [vmem:[%s359 + $0x2b8] sm:$0xff]
        %536 = vst [vmem:[%s360 + $0x2b8] sm:$0xff] %v535
        %v537 = vld [vmem:[%s359 + $0x2c0] sm:$0xff]
        %538 = vst [vmem:[%s360 + $0x2c0] sm:$0xff] %v537
        %v539 = vld [vmem:[%s359 + $0x2c8] sm:$0xff]
        %540 = vst [vmem:[%s360 + $0x2c8] sm:$0xff] %v539
        %v541 = vld [vmem:[%s359 + $0x2d0] sm:$0xff]
        %542 = vst [vmem:[%s360 + $0x2d0] sm:$0xff] %v541
        %v543 = vld [vmem:[%s359 + $0x2d8] sm:$0xff]
        %544 = vst [vmem:[%s360 + $0x2d8] sm:$0xff] %v543
        %v545 = vld [vmem:[%s359 + $0x2e0] sm:$0xff]
        %546 = vst [vmem:[%s360 + $0x2e0] sm:$0xff] %v545
        %v547 = vld [vmem:[%s359 + $0x2e8] sm:$0xff]
        %548 = vst [vmem:[%s360 + $0x2e8] sm:$0xff] %v547
        %v549 = vld [vmem:[%s359 + $0x2f0] sm:$0xff]
        %550 = vst [vmem:[%s360 + $0x2f0] sm:$0xff] %v549
        %v551 = vld [vmem:[%s359 + $0x2f8] sm:$0xff]
        %552 = vst [vmem:[%s360 + $0x2f8] sm:$0xff] %v551
        %v553 = vld [vmem:[%s359 + $0x300] sm:$0xff]
        %554 = vst [vmem:[%s360 + $0x300] sm:$0xff] %v553
        %v555 = vld [vmem:[%s359 + $0x308] sm:$0xff]
        %556 = vst [vmem:[%s360 + $0x308] sm:$0xff] %v555
        %v557 = vld [vmem:[%s359 + $0x310] sm:$0xff]
        %558 = vst [vmem:[%s360 + $0x310] sm:$0xff] %v557
        %v559 = vld [vmem:[%s359 + $0x318] sm:$0xff]
        %560 = vst [vmem:[%s360 + $0x318] sm:$0xff] %v559
        %v561 = vld [vmem:[%s359 + $0x320] sm:$0xff]
        %562 = vst [vmem:[%s360 + $0x320] sm:$0xff] %v561
        %v563 = vld [vmem:[%s359 + $0x328] sm:$0xff]
        %564 = vst [vmem:[%s360 + $0x328] sm:$0xff] %v563
        %v565 = vld [vmem:[%s359 + $0x330] sm:$0xff]
        %566 = vst [vmem:[%s360 + $0x330] sm:$0xff] %v565
        %v567 = vld [vmem:[%s359 + $0x338] sm:$0xff]
        %568 = vst [vmem:[%s360 + $0x338] sm:$0xff] %v567
        %v569 = vld [vmem:[%s359 + $0x340] sm:$0xff]
        %570 = vst [vmem:[%s360 + $0x340] sm:$0xff] %v569
        %v571 = vld [vmem:[%s359 + $0x348] sm:$0xff]
        %572 = vst [vmem:[%s360 + $0x348] sm:$0xff] %v571
        %v573 = vld [vmem:[%s359 + $0x350] sm:$0xff]
        %574 = vst [vmem:[%s360 + $0x350] sm:$0xff] %v573
        %v575 = vld [vmem:[%s359 + $0x358] sm:$0xff]
        %576 = vst [vmem:[%s360 + $0x358] sm:$0xff] %v575
        %v577 = vld [vmem:[%s359 + $0x360] sm:$0xff]
        %578 = vst [vmem:[%s360 + $0x360] sm:$0xff] %v577
        %v579 = vld [vmem:[%s359 + $0x368] sm:$0xff]
        %580 = vst [vmem:[%s360 + $0x368] sm:$0xff] %v579
        %v581 = vld [vmem:[%s359 + $0x370] sm:$0xff]
        %582 = vst [vmem:[%s360 + $0x370] sm:$0xff] %v581
        %v583 = vld [vmem:[%s359 + $0x378] sm:$0xff]
        %584 = vst [vmem:[%s360 + $0x378] sm:$0xff] %v583
        %v585 = vld [vmem:[%s359 + $0x380] sm:$0xff]
        %586 = vst [vmem:[%s360 + $0x380] sm:$0xff] %v585
        %v587 = vld [vmem:[%s359 + $0x388] sm:$0xff]
        %588 = vst [vmem:[%s360 + $0x388] sm:$0xff] %v587
        %v589 = vld [vmem:[%s359 + $0x390] sm:$0xff]
        %590 = vst [vmem:[%s360 + $0x390] sm:$0xff] %v589
        %v591 = vld [vmem:[%s359 + $0x398] sm:$0xff]
        %592 = vst [vmem:[%s360 + $0x398] sm:$0xff] %v591
        %v593 = vld [vmem:[%s359 + $0x3a0] sm:$0xff]
        %594 = vst [vmem:[%s360 + $0x3a0] sm:$0xff] %v593
        %v595 = vld [vmem:[%s359 + $0x3a8] sm:$0xff]
        %596 = vst [vmem:[%s360 + $0x3a8] sm:$0xff] %v595
        %v597 = vld [vmem:[%s359 + $0x3b0] sm:$0xff]
        %598 = vst [vmem:[%s360 + $0x3b0] sm:$0xff] %v597
        %v599 = vld [vmem:[%s359 + $0x3b8] sm:$0xff]
        %600 = vst [vmem:[%s360 + $0x3b8] sm:$0xff] %v599
        %v601 = vld [vmem:[%s359 + $0x3c0] sm:$0xff]
        %602 = vst [vmem:[%s360 + $0x3c0] sm:$0xff] %v601
        %v603 = vld [vmem:[%s359 + $0x3c8] sm:$0xff]
        %604 = vst [vmem:[%s360 + $0x3c8] sm:$0xff] %v603
        %v605 = vld [vmem:[%s359 + $0x3d0] sm:$0xff]
        %606 = vst [vmem:[%s360 + $0x3d0] sm:$0xff] %v605
        %v607 = vld [vmem:[%s359 + $0x3d8] sm:$0xff]
        %608 = vst [vmem:[%s360 + $0x3d8] sm:$0xff] %v607
        %v609 = vld [vmem:[%s359 + $0x3e0] sm:$0xff]
        %610 = vst [vmem:[%s360 + $0x3e0] sm:$0xff] %v609
        %v611 = vld [vmem:[%s359 + $0x3e8] sm:$0xff]
        %612 = vst [vmem:[%s360 + $0x3e8] sm:$0xff] %v611
        %v613 = vld [vmem:[%s359 + $0x3f0] sm:$0xff]
        %614 = vst [vmem:[%s360 + $0x3f0] sm:$0xff] %v613
        %v615 = vld [vmem:[%s359 + $0x3f8] sm:$0xff]
        %616 = vst [vmem:[%s360 + $0x3f8] sm:$0xff] %v615
      $region87: #{rnn_forward.1} parent=81 // loop_footer
        %s358 = sadd.s32 1, %s354
      $region88: #{rnn_forward.1} parent=81 // loop_footer_branch
        %353 = sbr.rel target = $region84
      $region89: #{rnn_forward.1} parent=81 // loop_exit
        _
    $region82: #{rnn_forward.1} parent=66 // pred_fallthru
      _
    %p617 = pneg %p349
    // Predicated region
    $region90: #{rnn_forward.1} parent=66 // pred_check
      _
    $region91: #{rnn_forward.1} parent=66 // pred_check_branch
      %619 = sbr.rel (%p349) target = $region93
    $region92: #{rnn_forward.1} parent=66 // pred_region
      %s620 = sand.u32 1024, 7
    $region93: #{rnn_forward.1} parent=66 // pred_fallthru
      _
  $region67: #{rnn_forward.1} parent=0 // pred_fallthru
    _
  // Predicated region
  $region68: #{rnn_forward.1} parent=0 // pred_check
    %p333 = pneg %p329
  $region69: #{rnn_forward.1} parent=0 // pred_check_branch
    %335 = sbr.rel (%p333) target = $region71
  $region70: #{rnn_forward.1} parent=0 // pred_region
    %s336 = sshll.u32 1, 1024
    %s337 = ssub.s32 %s336, 1
    loop: start=0, step=1, limit=1
    $region72: #{rnn_forward.1} parent=70 // loop_pre_header
      _
    $region73: #{rnn_forward.1} parent=70 // loop_header
      %s339 = sphi 0, %s343
      %p340 = scmp.ge.s32.totalorder %s339, 1
      %s344 = sphi %s6, %s6
      %s345 = sphi [#allocation4], [#allocation4]
    $region74: #{rnn_forward.1} parent=70 // loop_header_branch
      %342 = sbr.rel (%p340) target = $region78
    $region75: #{rnn_forward.1} parent=70 // loop_body
      %v346 = vld [vmem:[%s344] sm:%s337]
      %347 = vst [vmem:[%s345] sm:%s337] %v346
    $region76: #{rnn_forward.1} parent=70 // loop_footer
      %s343 = sadd.s32 1, %s339
    $region77: #{rnn_forward.1} parent=70 // loop_footer_branch
      %338 = sbr.rel target = $region73
    $region78: #{rnn_forward.1} parent=70 // loop_exit
      _
  $region71: #{rnn_forward.1} parent=0 // pred_fallthru
    _
  // Predicated region
  $region94: #{rnn_forward.1} parent=0 // pred_check
    _
  $region95: #{rnn_forward.1} parent=0 // pred_check_branch
    %623 = sbr.rel (0) target = $region97
  $region96: #{rnn_forward.1} parent=0 // pred_region
    %624 = vsyncadd %s327, 16384
  $region97: #{rnn_forward.1} parent=0 // pred_fallthru
    _
  %s625 = scalar_lea.sflag [#allocation6], 2
  %p627 = scmp.lt.u32.totalorder 1024, 8
  %p628 = pneg %p627
  // Predicated region
  $region98: #{rnn_forward.1} parent=0 // pred_check
    _
  $region99: #{rnn_forward.1} parent=0 // pred_check_branch
    %630 = sbr.rel (%p627) target = $region101
  $region100: #{rnn_forward.1} parent=0 // pred_region
    %s646 = sand.u32 1024, 7
    %p647 = scmp.eq.s32.totalorder %s646, 0
    // Predicated region
    $region113: #{rnn_forward.1} parent=100 // pred_check
      %p648 = pneg %p647
    $region114: #{rnn_forward.1} parent=100 // pred_check_branch
      %650 = sbr.rel (%p648) target = $region116
    $region115: #{rnn_forward.1} parent=100 // pred_region
      loop: start=0, step=1, limit=1
      $region117: #{rnn_forward.1} parent=115 // loop_pre_header
        _
      $region118: #{rnn_forward.1} parent=115 // loop_header
        %s652 = sphi 0, %s656
        %p653 = scmp.ge.s32.totalorder %s652, 1
        %s657 = sphi %s8, %s8
        %s658 = sphi [#allocation5], [#allocation5]
      $region119: #{rnn_forward.1} parent=115 // loop_header_branch
        %655 = sbr.rel (%p653) target = $region123
      $region120: #{rnn_forward.1} parent=115 // loop_body
        %v659 = vld [vmem:[%s657] sm:$0xff]
        %660 = vst [vmem:[%s658] sm:$0xff] %v659
        %v661 = vld [vmem:[%s657 + $0x8] sm:$0xff]
        %662 = vst [vmem:[%s658 + $0x8] sm:$0xff] %v661
        %v663 = vld [vmem:[%s657 + $0x10] sm:$0xff]
        %664 = vst [vmem:[%s658 + $0x10] sm:$0xff] %v663
        %v665 = vld [vmem:[%s657 + $0x18] sm:$0xff]
        %666 = vst [vmem:[%s658 + $0x18] sm:$0xff] %v665
        %v667 = vld [vmem:[%s657 + $0x20] sm:$0xff]
        %668 = vst [vmem:[%s658 + $0x20] sm:$0xff] %v667
        %v669 = vld [vmem:[%s657 + $0x28] sm:$0xff]
        %670 = vst [vmem:[%s658 + $0x28] sm:$0xff] %v669
        %v671 = vld [vmem:[%s657 + $0x30] sm:$0xff]
        %672 = vst [vmem:[%s658 + $0x30] sm:$0xff] %v671
        %v673 = vld [vmem:[%s657 + $0x38] sm:$0xff]
        %674 = vst [vmem:[%s658 + $0x38] sm:$0xff] %v673
        %v675 = vld [vmem:[%s657 + $0x40] sm:$0xff]
        %676 = vst [vmem:[%s658 + $0x40] sm:$0xff] %v675
        %v677 = vld [vmem:[%s657 + $0x48] sm:$0xff]
        %678 = vst [vmem:[%s658 + $0x48] sm:$0xff] %v677
        %v679 = vld [vmem:[%s657 + $0x50] sm:$0xff]
        %680 = vst [vmem:[%s658 + $0x50] sm:$0xff] %v679
        %v681 = vld [vmem:[%s657 + $0x58] sm:$0xff]
        %682 = vst [vmem:[%s658 + $0x58] sm:$0xff] %v681
        %v683 = vld [vmem:[%s657 + $0x60] sm:$0xff]
        %684 = vst [vmem:[%s658 + $0x60] sm:$0xff] %v683
        %v685 = vld [vmem:[%s657 + $0x68] sm:$0xff]
        %686 = vst [vmem:[%s658 + $0x68] sm:$0xff] %v685
        %v687 = vld [vmem:[%s657 + $0x70] sm:$0xff]
        %688 = vst [vmem:[%s658 + $0x70] sm:$0xff] %v687
        %v689 = vld [vmem:[%s657 + $0x78] sm:$0xff]
        %690 = vst [vmem:[%s658 + $0x78] sm:$0xff] %v689
        %v691 = vld [vmem:[%s657 + $0x80] sm:$0xff]
        %692 = vst [vmem:[%s658 + $0x80] sm:$0xff] %v691
        %v693 = vld [vmem:[%s657 + $0x88] sm:$0xff]
        %694 = vst [vmem:[%s658 + $0x88] sm:$0xff] %v693
        %v695 = vld [vmem:[%s657 + $0x90] sm:$0xff]
        %696 = vst [vmem:[%s658 + $0x90] sm:$0xff] %v695
        %v697 = vld [vmem:[%s657 + $0x98] sm:$0xff]
        %698 = vst [vmem:[%s658 + $0x98] sm:$0xff] %v697
        %v699 = vld [vmem:[%s657 + $0xa0] sm:$0xff]
        %700 = vst [vmem:[%s658 + $0xa0] sm:$0xff] %v699
        %v701 = vld [vmem:[%s657 + $0xa8] sm:$0xff]
        %702 = vst [vmem:[%s658 + $0xa8] sm:$0xff] %v701
        %v703 = vld [vmem:[%s657 + $0xb0] sm:$0xff]
        %704 = vst [vmem:[%s658 + $0xb0] sm:$0xff] %v703
        %v705 = vld [vmem:[%s657 + $0xb8] sm:$0xff]
        %706 = vst [vmem:[%s658 + $0xb8] sm:$0xff] %v705
        %v707 = vld [vmem:[%s657 + $0xc0] sm:$0xff]
        %708 = vst [vmem:[%s658 + $0xc0] sm:$0xff] %v707
        %v709 = vld [vmem:[%s657 + $0xc8] sm:$0xff]
        %710 = vst [vmem:[%s658 + $0xc8] sm:$0xff] %v709
        %v711 = vld [vmem:[%s657 + $0xd0] sm:$0xff]
        %712 = vst [vmem:[%s658 + $0xd0] sm:$0xff] %v711
        %v713 = vld [vmem:[%s657 + $0xd8] sm:$0xff]
        %714 = vst [vmem:[%s658 + $0xd8] sm:$0xff] %v713
        %v715 = vld [vmem:[%s657 + $0xe0] sm:$0xff]
        %716 = vst [vmem:[%s658 + $0xe0] sm:$0xff] %v715
        %v717 = vld [vmem:[%s657 + $0xe8] sm:$0xff]
        %718 = vst [vmem:[%s658 + $0xe8] sm:$0xff] %v717
        %v719 = vld [vmem:[%s657 + $0xf0] sm:$0xff]
        %720 = vst [vmem:[%s658 + $0xf0] sm:$0xff] %v719
        %v721 = vld [vmem:[%s657 + $0xf8] sm:$0xff]
        %722 = vst [vmem:[%s658 + $0xf8] sm:$0xff] %v721
        %v723 = vld [vmem:[%s657 + $0x100] sm:$0xff]
        %724 = vst [vmem:[%s658 + $0x100] sm:$0xff] %v723
        %v725 = vld [vmem:[%s657 + $0x108] sm:$0xff]
        %726 = vst [vmem:[%s658 + $0x108] sm:$0xff] %v725
        %v727 = vld [vmem:[%s657 + $0x110] sm:$0xff]
        %728 = vst [vmem:[%s658 + $0x110] sm:$0xff] %v727
        %v729 = vld [vmem:[%s657 + $0x118] sm:$0xff]
        %730 = vst [vmem:[%s658 + $0x118] sm:$0xff] %v729
        %v731 = vld [vmem:[%s657 + $0x120] sm:$0xff]
        %732 = vst [vmem:[%s658 + $0x120] sm:$0xff] %v731
        %v733 = vld [vmem:[%s657 + $0x128] sm:$0xff]
        %734 = vst [vmem:[%s658 + $0x128] sm:$0xff] %v733
        %v735 = vld [vmem:[%s657 + $0x130] sm:$0xff]
        %736 = vst [vmem:[%s658 + $0x130] sm:$0xff] %v735
        %v737 = vld [vmem:[%s657 + $0x138] sm:$0xff]
        %738 = vst [vmem:[%s658 + $0x138] sm:$0xff] %v737
        %v739 = vld [vmem:[%s657 + $0x140] sm:$0xff]
        %740 = vst [vmem:[%s658 + $0x140] sm:$0xff] %v739
        %v741 = vld [vmem:[%s657 + $0x148] sm:$0xff]
        %742 = vst [vmem:[%s658 + $0x148] sm:$0xff] %v741
        %v743 = vld [vmem:[%s657 + $0x150] sm:$0xff]
        %744 = vst [vmem:[%s658 + $0x150] sm:$0xff] %v743
        %v745 = vld [vmem:[%s657 + $0x158] sm:$0xff]
        %746 = vst [vmem:[%s658 + $0x158] sm:$0xff] %v745
        %v747 = vld [vmem:[%s657 + $0x160] sm:$0xff]
        %748 = vst [vmem:[%s658 + $0x160] sm:$0xff] %v747
        %v749 = vld [vmem:[%s657 + $0x168] sm:$0xff]
        %750 = vst [vmem:[%s658 + $0x168] sm:$0xff] %v749
        %v751 = vld [vmem:[%s657 + $0x170] sm:$0xff]
        %752 = vst [vmem:[%s658 + $0x170] sm:$0xff] %v751
        %v753 = vld [vmem:[%s657 + $0x178] sm:$0xff]
        %754 = vst [vmem:[%s658 + $0x178] sm:$0xff] %v753
        %v755 = vld [vmem:[%s657 + $0x180] sm:$0xff]
        %756 = vst [vmem:[%s658 + $0x180] sm:$0xff] %v755
        %v757 = vld [vmem:[%s657 + $0x188] sm:$0xff]
        %758 = vst [vmem:[%s658 + $0x188] sm:$0xff] %v757
        %v759 = vld [vmem:[%s657 + $0x190] sm:$0xff]
        %760 = vst [vmem:[%s658 + $0x190] sm:$0xff] %v759
        %v761 = vld [vmem:[%s657 + $0x198] sm:$0xff]
        %762 = vst [vmem:[%s658 + $0x198] sm:$0xff] %v761
        %v763 = vld [vmem:[%s657 + $0x1a0] sm:$0xff]
        %764 = vst [vmem:[%s658 + $0x1a0] sm:$0xff] %v763
        %v765 = vld [vmem:[%s657 + $0x1a8] sm:$0xff]
        %766 = vst [vmem:[%s658 + $0x1a8] sm:$0xff] %v765
        %v767 = vld [vmem:[%s657 + $0x1b0] sm:$0xff]
        %768 = vst [vmem:[%s658 + $0x1b0] sm:$0xff] %v767
        %v769 = vld [vmem:[%s657 + $0x1b8] sm:$0xff]
        %770 = vst [vmem:[%s658 + $0x1b8] sm:$0xff] %v769
        %v771 = vld [vmem:[%s657 + $0x1c0] sm:$0xff]
        %772 = vst [vmem:[%s658 + $0x1c0] sm:$0xff] %v771
        %v773 = vld [vmem:[%s657 + $0x1c8] sm:$0xff]
        %774 = vst [vmem:[%s658 + $0x1c8] sm:$0xff] %v773
        %v775 = vld [vmem:[%s657 + $0x1d0] sm:$0xff]
        %776 = vst [vmem:[%s658 + $0x1d0] sm:$0xff] %v775
        %v777 = vld [vmem:[%s657 + $0x1d8] sm:$0xff]
        %778 = vst [vmem:[%s658 + $0x1d8] sm:$0xff] %v777
        %v779 = vld [vmem:[%s657 + $0x1e0] sm:$0xff]
        %780 = vst [vmem:[%s658 + $0x1e0] sm:$0xff] %v779
        %v781 = vld [vmem:[%s657 + $0x1e8] sm:$0xff]
        %782 = vst [vmem:[%s658 + $0x1e8] sm:$0xff] %v781
        %v783 = vld [vmem:[%s657 + $0x1f0] sm:$0xff]
        %784 = vst [vmem:[%s658 + $0x1f0] sm:$0xff] %v783
        %v785 = vld [vmem:[%s657 + $0x1f8] sm:$0xff]
        %786 = vst [vmem:[%s658 + $0x1f8] sm:$0xff] %v785
        %v787 = vld [vmem:[%s657 + $0x200] sm:$0xff]
        %788 = vst [vmem:[%s658 + $0x200] sm:$0xff] %v787
        %v789 = vld [vmem:[%s657 + $0x208] sm:$0xff]
        %790 = vst [vmem:[%s658 + $0x208] sm:$0xff] %v789
        %v791 = vld [vmem:[%s657 + $0x210] sm:$0xff]
        %792 = vst [vmem:[%s658 + $0x210] sm:$0xff] %v791
        %v793 = vld [vmem:[%s657 + $0x218] sm:$0xff]
        %794 = vst [vmem:[%s658 + $0x218] sm:$0xff] %v793
        %v795 = vld [vmem:[%s657 + $0x220] sm:$0xff]
        %796 = vst [vmem:[%s658 + $0x220] sm:$0xff] %v795
        %v797 = vld [vmem:[%s657 + $0x228] sm:$0xff]
        %798 = vst [vmem:[%s658 + $0x228] sm:$0xff] %v797
        %v799 = vld [vmem:[%s657 + $0x230] sm:$0xff]
        %800 = vst [vmem:[%s658 + $0x230] sm:$0xff] %v799
        %v801 = vld [vmem:[%s657 + $0x238] sm:$0xff]
        %802 = vst [vmem:[%s658 + $0x238] sm:$0xff] %v801
        %v803 = vld [vmem:[%s657 + $0x240] sm:$0xff]
        %804 = vst [vmem:[%s658 + $0x240] sm:$0xff] %v803
        %v805 = vld [vmem:[%s657 + $0x248] sm:$0xff]
        %806 = vst [vmem:[%s658 + $0x248] sm:$0xff] %v805
        %v807 = vld [vmem:[%s657 + $0x250] sm:$0xff]
        %808 = vst [vmem:[%s658 + $0x250] sm:$0xff] %v807
        %v809 = vld [vmem:[%s657 + $0x258] sm:$0xff]
        %810 = vst [vmem:[%s658 + $0x258] sm:$0xff] %v809
        %v811 = vld [vmem:[%s657 + $0x260] sm:$0xff]
        %812 = vst [vmem:[%s658 + $0x260] sm:$0xff] %v811
        %v813 = vld [vmem:[%s657 + $0x268] sm:$0xff]
        %814 = vst [vmem:[%s658 + $0x268] sm:$0xff] %v813
        %v815 = vld [vmem:[%s657 + $0x270] sm:$0xff]
        %816 = vst [vmem:[%s658 + $0x270] sm:$0xff] %v815
        %v817 = vld [vmem:[%s657 + $0x278] sm:$0xff]
        %818 = vst [vmem:[%s658 + $0x278] sm:$0xff] %v817
        %v819 = vld [vmem:[%s657 + $0x280] sm:$0xff]
        %820 = vst [vmem:[%s658 + $0x280] sm:$0xff] %v819
        %v821 = vld [vmem:[%s657 + $0x288] sm:$0xff]
        %822 = vst [vmem:[%s658 + $0x288] sm:$0xff] %v821
        %v823 = vld [vmem:[%s657 + $0x290] sm:$0xff]
        %824 = vst [vmem:[%s658 + $0x290] sm:$0xff] %v823
        %v825 = vld [vmem:[%s657 + $0x298] sm:$0xff]
        %826 = vst [vmem:[%s658 + $0x298] sm:$0xff] %v825
        %v827 = vld [vmem:[%s657 + $0x2a0] sm:$0xff]
        %828 = vst [vmem:[%s658 + $0x2a0] sm:$0xff] %v827
        %v829 = vld [vmem:[%s657 + $0x2a8] sm:$0xff]
        %830 = vst [vmem:[%s658 + $0x2a8] sm:$0xff] %v829
        %v831 = vld [vmem:[%s657 + $0x2b0] sm:$0xff]
        %832 = vst [vmem:[%s658 + $0x2b0] sm:$0xff] %v831
        %v833 = vld [vmem:[%s657 + $0x2b8] sm:$0xff]
        %834 = vst [vmem:[%s658 + $0x2b8] sm:$0xff] %v833
        %v835 = vld [vmem:[%s657 + $0x2c0] sm:$0xff]
        %836 = vst [vmem:[%s658 + $0x2c0] sm:$0xff] %v835
        %v837 = vld [vmem:[%s657 + $0x2c8] sm:$0xff]
        %838 = vst [vmem:[%s658 + $0x2c8] sm:$0xff] %v837
        %v839 = vld [vmem:[%s657 + $0x2d0] sm:$0xff]
        %840 = vst [vmem:[%s658 + $0x2d0] sm:$0xff] %v839
        %v841 = vld [vmem:[%s657 + $0x2d8] sm:$0xff]
        %842 = vst [vmem:[%s658 + $0x2d8] sm:$0xff] %v841
        %v843 = vld [vmem:[%s657 + $0x2e0] sm:$0xff]
        %844 = vst [vmem:[%s658 + $0x2e0] sm:$0xff] %v843
        %v845 = vld [vmem:[%s657 + $0x2e8] sm:$0xff]
        %846 = vst [vmem:[%s658 + $0x2e8] sm:$0xff] %v845
        %v847 = vld [vmem:[%s657 + $0x2f0] sm:$0xff]
        %848 = vst [vmem:[%s658 + $0x2f0] sm:$0xff] %v847
        %v849 = vld [vmem:[%s657 + $0x2f8] sm:$0xff]
        %850 = vst [vmem:[%s658 + $0x2f8] sm:$0xff] %v849
        %v851 = vld [vmem:[%s657 + $0x300] sm:$0xff]
        %852 = vst [vmem:[%s658 + $0x300] sm:$0xff] %v851
        %v853 = vld [vmem:[%s657 + $0x308] sm:$0xff]
        %854 = vst [vmem:[%s658 + $0x308] sm:$0xff] %v853
        %v855 = vld [vmem:[%s657 + $0x310] sm:$0xff]
        %856 = vst [vmem:[%s658 + $0x310] sm:$0xff] %v855
        %v857 = vld [vmem:[%s657 + $0x318] sm:$0xff]
        %858 = vst [vmem:[%s658 + $0x318] sm:$0xff] %v857
        %v859 = vld [vmem:[%s657 + $0x320] sm:$0xff]
        %860 = vst [vmem:[%s658 + $0x320] sm:$0xff] %v859
        %v861 = vld [vmem:[%s657 + $0x328] sm:$0xff]
        %862 = vst [vmem:[%s658 + $0x328] sm:$0xff] %v861
        %v863 = vld [vmem:[%s657 + $0x330] sm:$0xff]
        %864 = vst [vmem:[%s658 + $0x330] sm:$0xff] %v863
        %v865 = vld [vmem:[%s657 + $0x338] sm:$0xff]
        %866 = vst [vmem:[%s658 + $0x338] sm:$0xff] %v865
        %v867 = vld [vmem:[%s657 + $0x340] sm:$0xff]
        %868 = vst [vmem:[%s658 + $0x340] sm:$0xff] %v867
        %v869 = vld [vmem:[%s657 + $0x348] sm:$0xff]
        %870 = vst [vmem:[%s658 + $0x348] sm:$0xff] %v869
        %v871 = vld [vmem:[%s657 + $0x350] sm:$0xff]
        %872 = vst [vmem:[%s658 + $0x350] sm:$0xff] %v871
        %v873 = vld [vmem:[%s657 + $0x358] sm:$0xff]
        %874 = vst [vmem:[%s658 + $0x358] sm:$0xff] %v873
        %v875 = vld [vmem:[%s657 + $0x360] sm:$0xff]
        %876 = vst [vmem:[%s658 + $0x360] sm:$0xff] %v875
        %v877 = vld [vmem:[%s657 + $0x368] sm:$0xff]
        %878 = vst [vmem:[%s658 + $0x368] sm:$0xff] %v877
        %v879 = vld [vmem:[%s657 + $0x370] sm:$0xff]
        %880 = vst [vmem:[%s658 + $0x370] sm:$0xff] %v879
        %v881 = vld [vmem:[%s657 + $0x378] sm:$0xff]
        %882 = vst [vmem:[%s658 + $0x378] sm:$0xff] %v881
        %v883 = vld [vmem:[%s657 + $0x380] sm:$0xff]
        %884 = vst [vmem:[%s658 + $0x380] sm:$0xff] %v883
        %v885 = vld [vmem:[%s657 + $0x388] sm:$0xff]
        %886 = vst [vmem:[%s658 + $0x388] sm:$0xff] %v885
        %v887 = vld [vmem:[%s657 + $0x390] sm:$0xff]
        %888 = vst [vmem:[%s658 + $0x390] sm:$0xff] %v887
        %v889 = vld [vmem:[%s657 + $0x398] sm:$0xff]
        %890 = vst [vmem:[%s658 + $0x398] sm:$0xff] %v889
        %v891 = vld [vmem:[%s657 + $0x3a0] sm:$0xff]
        %892 = vst [vmem:[%s658 + $0x3a0] sm:$0xff] %v891
        %v893 = vld [vmem:[%s657 + $0x3a8] sm:$0xff]
        %894 = vst [vmem:[%s658 + $0x3a8] sm:$0xff] %v893
        %v895 = vld [vmem:[%s657 + $0x3b0] sm:$0xff]
        %896 = vst [vmem:[%s658 + $0x3b0] sm:$0xff] %v895
        %v897 = vld [vmem:[%s657 + $0x3b8] sm:$0xff]
        %898 = vst [vmem:[%s658 + $0x3b8] sm:$0xff] %v897
        %v899 = vld [vmem:[%s657 + $0x3c0] sm:$0xff]
        %900 = vst [vmem:[%s658 + $0x3c0] sm:$0xff] %v899
        %v901 = vld [vmem:[%s657 + $0x3c8] sm:$0xff]
        %902 = vst [vmem:[%s658 + $0x3c8] sm:$0xff] %v901
        %v903 = vld [vmem:[%s657 + $0x3d0] sm:$0xff]
        %904 = vst [vmem:[%s658 + $0x3d0] sm:$0xff] %v903
        %v905 = vld [vmem:[%s657 + $0x3d8] sm:$0xff]
        %906 = vst [vmem:[%s658 + $0x3d8] sm:$0xff] %v905
        %v907 = vld [vmem:[%s657 + $0x3e0] sm:$0xff]
        %908 = vst [vmem:[%s658 + $0x3e0] sm:$0xff] %v907
        %v909 = vld [vmem:[%s657 + $0x3e8] sm:$0xff]
        %910 = vst [vmem:[%s658 + $0x3e8] sm:$0xff] %v909
        %v911 = vld [vmem:[%s657 + $0x3f0] sm:$0xff]
        %912 = vst [vmem:[%s658 + $0x3f0] sm:$0xff] %v911
        %v913 = vld [vmem:[%s657 + $0x3f8] sm:$0xff]
        %914 = vst [vmem:[%s658 + $0x3f8] sm:$0xff] %v913
      $region121: #{rnn_forward.1} parent=115 // loop_footer
        %s656 = sadd.s32 1, %s652
      $region122: #{rnn_forward.1} parent=115 // loop_footer_branch
        %651 = sbr.rel target = $region118
      $region123: #{rnn_forward.1} parent=115 // loop_exit
        _
    $region116: #{rnn_forward.1} parent=100 // pred_fallthru
      _
    %p915 = pneg %p647
    // Predicated region
    $region124: #{rnn_forward.1} parent=100 // pred_check
      _
    $region125: #{rnn_forward.1} parent=100 // pred_check_branch
      %917 = sbr.rel (%p647) target = $region127
    $region126: #{rnn_forward.1} parent=100 // pred_region
      %s918 = sand.u32 1024, 7
    $region127: #{rnn_forward.1} parent=100 // pred_fallthru
      _
  $region101: #{rnn_forward.1} parent=0 // pred_fallthru
    _
  // Predicated region
  $region102: #{rnn_forward.1} parent=0 // pred_check
    %p631 = pneg %p627
  $region103: #{rnn_forward.1} parent=0 // pred_check_branch
    %633 = sbr.rel (%p631) target = $region105
  $region104: #{rnn_forward.1} parent=0 // pred_region
    %s634 = sshll.u32 1, 1024
    %s635 = ssub.s32 %s634, 1
    loop: start=0, step=1, limit=1
    $region106: #{rnn_forward.1} parent=104 // loop_pre_header
      _
    $region107: #{rnn_forward.1} parent=104 // loop_header
      %s637 = sphi 0, %s641
      %p638 = scmp.ge.s32.totalorder %s637, 1
      %s642 = sphi %s8, %s8
      %s643 = sphi [#allocation5], [#allocation5]
    $region108: #{rnn_forward.1} parent=104 // loop_header_branch
      %640 = sbr.rel (%p638) target = $region112
    $region109: #{rnn_forward.1} parent=104 // loop_body
      %v644 = vld [vmem:[%s642] sm:%s635]
      %645 = vst [vmem:[%s643] sm:%s635] %v644
    $region110: #{rnn_forward.1} parent=104 // loop_footer
      %s641 = sadd.s32 1, %s637
    $region111: #{rnn_forward.1} parent=104 // loop_footer_branch
      %636 = sbr.rel target = $region107
    $region112: #{rnn_forward.1} parent=104 // loop_exit
      _
  $region105: #{rnn_forward.1} parent=0 // pred_fallthru
    _
  // Predicated region
  $region128: #{rnn_forward.1} parent=0 // pred_check
    _
  $region129: #{rnn_forward.1} parent=0 // pred_check_branch
    %921 = sbr.rel (0) target = $region131
  $region130: #{rnn_forward.1} parent=0 // pred_region
    %922 = vsyncadd %s625, 16384
  $region131: #{rnn_forward.1} parent=0 // pred_fallthru
    _
  %v923 = vld [vmem:[%s0] sm:$0xf]
  %925 = vset.pattern.permute.xlu0 0
  %926 = vperm.xlu0 %925, %v923
  %v927 = vpop.permute.xlu0 %926
  %v929 = vld [vmem:[%s1] sm:$0xf]
  %931 = vset.pattern.permute.xlu0 0
  %932 = vperm.xlu0 %931, %v929
  %v933 = vpop.permute.xlu0 %932
  %v935 = vld [vmem:[%s2] sm:$0xf]
  %937 = vset.pattern.permute.xlu0 0
  %938 = vperm.xlu0 %937, %v935
  %v939 = vpop.permute.xlu0 %938
  loop: start=0, step=1, limit=32
  $region132: #{rnn_forward.1} parent=0 // loop_pre_header
    _
  $region133: #{rnn_forward.1} parent=0 // loop_header
    %s942 = sphi 0, %s946
    %p943 = scmp.ge.s32.totalorder %s942, 32
    %v947 = vphi 0.0, %v1506
    %v948 = vphi 0.0, %v1500
  $region134: #{rnn_forward.1} parent=0 // loop_header_branch
    %945 = sbr.rel (%p943) target = $region138
  $region135: #{rnn_forward.1} parent=0 // loop_body
    %s949 = smul.u32 %s942, 16
    %s950 = scalar_lea.vmem %s3, %s949
    %v951 = vld [vmem:[%s950] sm:$0x1]
    %v952 = vlaneseq
    %v953 = vshrl.u32 %v952, 7
    %v954 = vsub.s32 0, %v953
    %v955 = vrot.slane %v951, %v954
    %v956 = vmul.f32 %v955, %v927
    %v957 = vadd.f32 %v956, %v933
    %v958 = vlaneseq
    %v959 = vshrl.u32 %v958, 7
    %v960 = vsub.s32 3, %v959
    %v961 = vrot.slane %v947, %v960
    %v962 = vmul.f32 %v961, %v939
    %v963 = vadd.f32 %v957, %v962
    %v964 = vtanh.pop %v963
    %v965 = vadd.f32 %v964, 1.0
    %v966 = vmul.f32 %v965, %v948
    %v968 = vrot.slane %v964, 2
    %v970 = vmul.f32 %v965, %v968
    %v972 = vrot.slane %v970, 7
    %v974 = vadd.f32 %v966, %v972
    %v975 = vmul.f32 %v974, 0.5
    %v976 = vmul.f32 %v965, 0.5
    %v977 = vtanh.pop %v975
    %v979 = vrot.slane %v977, 6
    %v981 = vmul.f32 %v976, %v979
    %s982 = scalar_lea.vmem [#allocation2], %s949
    %983 = vst [vmem:[%s982 - $0x3] sm:$0x8] %v981
    %s984 = sadd.s32 %s949, 1
    %s985 = scalar_lea.vmem %s3, %s984
    %v986 = vld [vmem:[%s985] sm:$0x1]
    %v987 = vlaneseq
    %v988 = vshrl.u32 %v987, 7
    %v989 = vsub.s32 0, %v988
    %v990 = vrot.slane %v986, %v989
    %v991 = vmul.f32 %v990, %v927
    %v992 = vadd.f32 %v991, %v933
    %v993 = vlaneseq
    %v994 = vshrl.u32 %v993, 7
    %v995 = vsub.s32 3, %v994
    %v996 = vrot.slane %v981, %v995
    %v997 = vmul.f32 %v996, %v939
    %v998 = vadd.f32 %v992, %v997
    %v999 = vtanh.pop %v998
    %v1000 = vadd.f32 %v999, 1.0
    %v1001 = vmul.f32 %v1000, %v975
    %v1003 = vrot.slane %v999, 2
    %v1005 = vmul.f32 %v1000, %v1003
    %v1007 = vrot.slane %v1005, 7
    %v1009 = vadd.f32 %v1001, %v1007
    %v1010 = vmul.f32 %v1009, 0.5
    %v1011 = vmul.f32 %v1000, 0.5
    %v1012 = vtanh.pop %v1010
    %v1014 = vrot.slane %v1012, 6
    %v1016 = vmul.f32 %v1011, %v1014
    %s1017 = scalar_lea.vmem [#allocation2], %s984
    %1018 = vst [vmem:[%s1017 - $0x3] sm:$0x8] %v1016
    %s1019 = sadd.s32 %s949, 2
    %s1020 = scalar_lea.vmem %s3, %s1019
    %v1021 = vld [vmem:[%s1020] sm:$0x1]
    %v1022 = vlaneseq
    %v1023 = vshrl.u32 %v1022, 7
    %v1024 = vsub.s32 0, %v1023
    %v1025 = vrot.slane %v1021, %v1024
    %v1026 = vmul.f32 %v1025, %v927
    %v1027 = vadd.f32 %v1026, %v933
    %v1028 = vlaneseq
    %v1029 = vshrl.u32 %v1028, 7
    %v1030 = vsub.s32 3, %v1029
    %v1031 = vrot.slane %v1016, %v1030
    %v1032 = vmul.f32 %v1031, %v939
    %v1033 = vadd.f32 %v1027, %v1032
    %v1034 = vtanh.pop %v1033
    %v1035 = vadd.f32 %v1034, 1.0
    %v1036 = vmul.f32 %v1035, %v1010
    %v1038 = vrot.slane %v1034, 2
    %v1040 = vmul.f32 %v1035, %v1038
    %v1042 = vrot.slane %v1040, 7
    %v1044 = vadd.f32 %v1036, %v1042
    %v1045 = vmul.f32 %v1044, 0.5
    %v1046 = vmul.f32 %v1035, 0.5
    %v1047 = vtanh.pop %v1045
    %v1049 = vrot.slane %v1047, 6
    %v1051 = vmul.f32 %v1046, %v1049
    %s1052 = scalar_lea.vmem [#allocation2], %s1019
    %1053 = vst [vmem:[%s1052 - $0x3] sm:$0x8] %v1051
    %s1054 = sadd.s32 %s949, 3
    %s1055 = scalar_lea.vmem %s3, %s1054
    %v1056 = vld [vmem:[%s1055] sm:$0x1]
    %v1057 = vlaneseq
    %v1058 = vshrl.u32 %v1057, 7
    %v1059 = vsub.s32 0, %v1058
    %v1060 = vrot.slane %v1056, %v1059
    %v1061 = vmul.f32 %v1060, %v927
    %v1062 = vadd.f32 %v1061, %v933
    %v1063 = vlaneseq
    %v1064 = vshrl.u32 %v1063, 7
    %v1065 = vsub.s32 3, %v1064
    %v1066 = vrot.slane %v1051, %v1065
    %v1067 = vmul.f32 %v1066, %v939
    %v1068 = vadd.f32 %v1062, %v1067
    %v1069 = vtanh.pop %v1068
    %v1070 = vadd.f32 %v1069, 1.0
    %v1071 = vmul.f32 %v1070, %v1045
    %v1073 = vrot.slane %v1069, 2
    %v1075 = vmul.f32 %v1070, %v1073
    %v1077 = vrot.slane %v1075, 7
    %v1079 = vadd.f32 %v1071, %v1077
    %v1080 = vmul.f32 %v1079, 0.5
    %v1081 = vmul.f32 %v1070, 0.5
    %v1082 = vtanh.pop %v1080
    %v1084 = vrot.slane %v1082, 6
    %v1086 = vmul.f32 %v1081, %v1084
    %s1087 = scalar_lea.vmem [#allocation2], %s1054
    %1088 = vst [vmem:[%s1087 - $0x3] sm:$0x8] %v1086
    %s1089 = sadd.s32 %s949, 4
    %s1090 = scalar_lea.vmem %s3, %s1089
    %v1091 = vld [vmem:[%s1090] sm:$0x1]
    %v1092 = vlaneseq
    %v1093 = vshrl.u32 %v1092, 7
    %v1094 = vsub.s32 0, %v1093
    %v1095 = vrot.slane %v1091, %v1094
    %v1096 = vmul.f32 %v1095, %v927
    %v1097 = vadd.f32 %v1096, %v933
    %v1098 = vlaneseq
    %v1099 = vshrl.u32 %v1098, 7
    %v1100 = vsub.s32 3, %v1099
    %v1101 = vrot.slane %v1086, %v1100
    %v1102 = vmul.f32 %v1101, %v939
    %v1103 = vadd.f32 %v1097, %v1102
    %v1104 = vtanh.pop %v1103
    %v1105 = vadd.f32 %v1104, 1.0
    %v1106 = vmul.f32 %v1105, %v1080
    %v1108 = vrot.slane %v1104, 2
    %v1110 = vmul.f32 %v1105, %v1108
    %v1112 = vrot.slane %v1110, 7
    %v1114 = vadd.f32 %v1106, %v1112
    %v1115 = vmul.f32 %v1114, 0.5
    %v1116 = vmul.f32 %v1105, 0.5
    %v1117 = vtanh.pop %v1115
    %v1119 = vrot.slane %v1117, 6
    %v1121 = vmul.f32 %v1116, %v1119
    %s1122 = scalar_lea.vmem [#allocation2], %s1089
    %1123 = vst [vmem:[%s1122 - $0x3] sm:$0x8] %v1121
    %s1124 = sadd.s32 %s949, 5
    %s1125 = scalar_lea.vmem %s3, %s1124
    %v1126 = vld [vmem:[%s1125] sm:$0x1]
    %v1127 = vlaneseq
    %v1128 = vshrl.u32 %v1127, 7
    %v1129 = vsub.s32 0, %v1128
    %v1130 = vrot.slane %v1126, %v1129
    %v1131 = vmul.f32 %v1130, %v927
    %v1132 = vadd.f32 %v1131, %v933
    %v1133 = vlaneseq
    %v1134 = vshrl.u32 %v1133, 7
    %v1135 = vsub.s32 3, %v1134
    %v1136 = vrot.slane %v1121, %v1135
    %v1137 = vmul.f32 %v1136, %v939
    %v1138 = vadd.f32 %v1132, %v1137
    %v1139 = vtanh.pop %v1138
    %v1140 = vadd.f32 %v1139, 1.0
    %v1141 = vmul.f32 %v1140, %v1115
    %v1143 = vrot.slane %v1139, 2
    %v1145 = vmul.f32 %v1140, %v1143
    %v1147 = vrot.slane %v1145, 7
    %v1149 = vadd.f32 %v1141, %v1147
    %v1150 = vmul.f32 %v1149, 0.5
    %v1151 = vmul.f32 %v1140, 0.5
    %v1152 = vtanh.pop %v1150
    %v1154 = vrot.slane %v1152, 6
    %v1156 = vmul.f32 %v1151, %v1154
    %s1157 = scalar_lea.vmem [#allocation2], %s1124
    %1158 = vst [vmem:[%s1157 - $0x3] sm:$0x8] %v1156
    %s1159 = sadd.s32 %s949, 6
    %s1160 = scalar_lea.vmem %s3, %s1159
    %v1161 = vld [vmem:[%s1160] sm:$0x1]
    %v1162 = vlaneseq
    %v1163 = vshrl.u32 %v1162, 7
    %v1164 = vsub.s32 0, %v1163
    %v1165 = vrot.slane %v1161, %v1164
    %v1166 = vmul.f32 %v1165, %v927
    %v1167 = vadd.f32 %v1166, %v933
    %v1168 = vlaneseq
    %v1169 = vshrl.u32 %v1168, 7
    %v1170 = vsub.s32 3, %v1169
    %v1171 = vrot.slane %v1156, %v1170
    %v1172 = vmul.f32 %v1171, %v939
    %v1173 = vadd.f32 %v1167, %v1172
    %v1174 = vtanh.pop %v1173
    %v1175 = vadd.f32 %v1174, 1.0
    %v1176 = vmul.f32 %v1175, %v1150
    %v1178 = vrot.slane %v1174, 2
    %v1180 = vmul.f32 %v1175, %v1178
    %v1182 = vrot.slane %v1180, 7
    %v1184 = vadd.f32 %v1176, %v1182
    %v1185 = vmul.f32 %v1184, 0.5
    %v1186 = vmul.f32 %v1175, 0.5
    %v1187 = vtanh.pop %v1185
    %v1189 = vrot.slane %v1187, 6
    %v1191 = vmul.f32 %v1186, %v1189
    %s1192 = scalar_lea.vmem [#allocation2], %s1159
    %1193 = vst [vmem:[%s1192 - $0x3] sm:$0x8] %v1191
    %s1194 = sadd.s32 %s949, 7
    %s1195 = scalar_lea.vmem %s3, %s1194
    %v1196 = vld [vmem:[%s1195] sm:$0x1]
    %v1197 = vlaneseq
    %v1198 = vshrl.u32 %v1197, 7
    %v1199 = vsub.s32 0, %v1198
    %v1200 = vrot.slane %v1196, %v1199
    %v1201 = vmul.f32 %v1200, %v927
    %v1202 = vadd.f32 %v1201, %v933
    %v1203 = vlaneseq
    %v1204 = vshrl.u32 %v1203, 7
    %v1205 = vsub.s32 3, %v1204
    %v1206 = vrot.slane %v1191, %v1205
    %v1207 = vmul.f32 %v1206, %v939
    %v1208 = vadd.f32 %v1202, %v1207
    %v1209 = vtanh.pop %v1208
    %v1210 = vadd.f32 %v1209, 1.0
    %v1211 = vmul.f32 %v1210, %v1185
    %v1213 = vrot.slane %v1209, 2
    %v1215 = vmul.f32 %v1210, %v1213
    %v1217 = vrot.slane %v1215, 7
    %v1219 = vadd.f32 %v1211, %v1217
    %v1220 = vmul.f32 %v1219, 0.5
    %v1221 = vmul.f32 %v1210, 0.5
    %v1222 = vtanh.pop %v1220
    %v1224 = vrot.slane %v1222, 6
    %v1226 = vmul.f32 %v1221, %v1224
    %s1227 = scalar_lea.vmem [#allocation2], %s1194
    %1228 = vst [vmem:[%s1227 - $0x3] sm:$0x8] %v1226
    %s1229 = sadd.s32 %s949, 8
    %s1230 = scalar_lea.vmem %s3, %s1229
    %v1231 = vld [vmem:[%s1230] sm:$0x1]
    %v1232 = vlaneseq
    %v1233 = vshrl.u32 %v1232, 7
    %v1234 = vsub.s32 0, %v1233
    %v1235 = vrot.slane %v1231, %v1234
    %v1236 = vmul.f32 %v1235, %v927
    %v1237 = vadd.f32 %v1236, %v933
    %v1238 = vlaneseq
    %v1239 = vshrl.u32 %v1238, 7
    %v1240 = vsub.s32 3, %v1239
    %v1241 = vrot.slane %v1226, %v1240
    %v1242 = vmul.f32 %v1241, %v939
    %v1243 = vadd.f32 %v1237, %v1242
    %v1244 = vtanh.pop %v1243
    %v1245 = vadd.f32 %v1244, 1.0
    %v1246 = vmul.f32 %v1245, %v1220
    %v1248 = vrot.slane %v1244, 2
    %v1250 = vmul.f32 %v1245, %v1248
    %v1252 = vrot.slane %v1250, 7
    %v1254 = vadd.f32 %v1246, %v1252
    %v1255 = vmul.f32 %v1254, 0.5
    %v1256 = vmul.f32 %v1245, 0.5
    %v1257 = vtanh.pop %v1255
    %v1259 = vrot.slane %v1257, 6
    %v1261 = vmul.f32 %v1256, %v1259
    %s1262 = scalar_lea.vmem [#allocation2], %s1229
    %1263 = vst [vmem:[%s1262 - $0x3] sm:$0x8] %v1261
    %s1264 = sadd.s32 %s949, 9
    %s1265 = scalar_lea.vmem %s3, %s1264
    %v1266 = vld [vmem:[%s1265] sm:$0x1]
    %v1267 = vlaneseq
    %v1268 = vshrl.u32 %v1267, 7
    %v1269 = vsub.s32 0, %v1268
    %v1270 = vrot.slane %v1266, %v1269
    %v1271 = vmul.f32 %v1270, %v927
    %v1272 = vadd.f32 %v1271, %v933
    %v1273 = vlaneseq
    %v1274 = vshrl.u32 %v1273, 7
    %v1275 = vsub.s32 3, %v1274
    %v1276 = vrot.slane %v1261, %v1275
    %v1277 = vmul.f32 %v1276, %v939
    %v1278 = vadd.f32 %v1272, %v1277
    %v1279 = vtanh.pop %v1278
    %v1280 = vadd.f32 %v1279, 1.0
    %v1281 = vmul.f32 %v1280, %v1255
    %v1283 = vrot.slane %v1279, 2
    %v1285 = vmul.f32 %v1280, %v1283
    %v1287 = vrot.slane %v1285, 7
    %v1289 = vadd.f32 %v1281, %v1287
    %v1290 = vmul.f32 %v1289, 0.5
    %v1291 = vmul.f32 %v1280, 0.5
    %v1292 = vtanh.pop %v1290
    %v1294 = vrot.slane %v1292, 6
    %v1296 = vmul.f32 %v1291, %v1294
    %s1297 = scalar_lea.vmem [#allocation2], %s1264
    %1298 = vst [vmem:[%s1297 - $0x3] sm:$0x8] %v1296
    %s1299 = sadd.s32 %s949, 10
    %s1300 = scalar_lea.vmem %s3, %s1299
    %v1301 = vld [vmem:[%s1300] sm:$0x1]
    %v1302 = vlaneseq
    %v1303 = vshrl.u32 %v1302, 7
    %v1304 = vsub.s32 0, %v1303
    %v1305 = vrot.slane %v1301, %v1304
    %v1306 = vmul.f32 %v1305, %v927
    %v1307 = vadd.f32 %v1306, %v933
    %v1308 = vlaneseq
    %v1309 = vshrl.u32 %v1308, 7
    %v1310 = vsub.s32 3, %v1309
    %v1311 = vrot.slane %v1296, %v1310
    %v1312 = vmul.f32 %v1311, %v939
    %v1313 = vadd.f32 %v1307, %v1312
    %v1314 = vtanh.pop %v1313
    %v1315 = vadd.f32 %v1314, 1.0
    %v1316 = vmul.f32 %v1315, %v1290
    %v1318 = vrot.slane %v1314, 2
    %v1320 = vmul.f32 %v1315, %v1318
    %v1322 = vrot.slane %v1320, 7
    %v1324 = vadd.f32 %v1316, %v1322
    %v1325 = vmul.f32 %v1324, 0.5
    %v1326 = vmul.f32 %v1315, 0.5
    %v1327 = vtanh.pop %v1325
    %v1329 = vrot.slane %v1327, 6
    %v1331 = vmul.f32 %v1326, %v1329
    %s1332 = scalar_lea.vmem [#allocation2], %s1299
    %1333 = vst [vmem:[%s1332 - $0x3] sm:$0x8] %v1331
    %s1334 = sadd.s32 %s949, 11
    %s1335 = scalar_lea.vmem %s3, %s1334
    %v1336 = vld [vmem:[%s1335] sm:$0x1]
    %v1337 = vlaneseq
    %v1338 = vshrl.u32 %v1337, 7
    %v1339 = vsub.s32 0, %v1338
    %v1340 = vrot.slane %v1336, %v1339
    %v1341 = vmul.f32 %v1340, %v927
    %v1342 = vadd.f32 %v1341, %v933
    %v1343 = vlaneseq
    %v1344 = vshrl.u32 %v1343, 7
    %v1345 = vsub.s32 3, %v1344
    %v1346 = vrot.slane %v1331, %v1345
    %v1347 = vmul.f32 %v1346, %v939
    %v1348 = vadd.f32 %v1342, %v1347
    %v1349 = vtanh.pop %v1348
    %v1350 = vadd.f32 %v1349, 1.0
    %v1351 = vmul.f32 %v1350, %v1325
    %v1353 = vrot.slane %v1349, 2
    %v1355 = vmul.f32 %v1350, %v1353
    %v1357 = vrot.slane %v1355, 7
    %v1359 = vadd.f32 %v1351, %v1357
    %v1360 = vmul.f32 %v1359, 0.5
    %v1361 = vmul.f32 %v1350, 0.5
    %v1362 = vtanh.pop %v1360
    %v1364 = vrot.slane %v1362, 6
    %v1366 = vmul.f32 %v1361, %v1364
    %s1367 = scalar_lea.vmem [#allocation2], %s1334
    %1368 = vst [vmem:[%s1367 - $0x3] sm:$0x8] %v1366
    %s1369 = sadd.s32 %s949, 12
    %s1370 = scalar_lea.vmem %s3, %s1369
    %v1371 = vld [vmem:[%s1370] sm:$0x1]
    %v1372 = vlaneseq
    %v1373 = vshrl.u32 %v1372, 7
    %v1374 = vsub.s32 0, %v1373
    %v1375 = vrot.slane %v1371, %v1374
    %v1376 = vmul.f32 %v1375, %v927
    %v1377 = vadd.f32 %v1376, %v933
    %v1378 = vlaneseq
    %v1379 = vshrl.u32 %v1378, 7
    %v1380 = vsub.s32 3, %v1379
    %v1381 = vrot.slane %v1366, %v1380
    %v1382 = vmul.f32 %v1381, %v939
    %v1383 = vadd.f32 %v1377, %v1382
    %v1384 = vtanh.pop %v1383
    %v1385 = vadd.f32 %v1384, 1.0
    %v1386 = vmul.f32 %v1385, %v1360
    %v1388 = vrot.slane %v1384, 2
    %v1390 = vmul.f32 %v1385, %v1388
    %v1392 = vrot.slane %v1390, 7
    %v1394 = vadd.f32 %v1386, %v1392
    %v1395 = vmul.f32 %v1394, 0.5
    %v1396 = vmul.f32 %v1385, 0.5
    %v1397 = vtanh.pop %v1395
    %v1399 = vrot.slane %v1397, 6
    %v1401 = vmul.f32 %v1396, %v1399
    %s1402 = scalar_lea.vmem [#allocation2], %s1369
    %1403 = vst [vmem:[%s1402 - $0x3] sm:$0x8] %v1401
    %s1404 = sadd.s32 %s949, 13
    %s1405 = scalar_lea.vmem %s3, %s1404
    %v1406 = vld [vmem:[%s1405] sm:$0x1]
    %v1407 = vlaneseq
    %v1408 = vshrl.u32 %v1407, 7
    %v1409 = vsub.s32 0, %v1408
    %v1410 = vrot.slane %v1406, %v1409
    %v1411 = vmul.f32 %v1410, %v927
    %v1412 = vadd.f32 %v1411, %v933
    %v1413 = vlaneseq
    %v1414 = vshrl.u32 %v1413, 7
    %v1415 = vsub.s32 3, %v1414
    %v1416 = vrot.slane %v1401, %v1415
    %v1417 = vmul.f32 %v1416, %v939
    %v1418 = vadd.f32 %v1412, %v1417
    %v1419 = vtanh.pop %v1418
    %v1420 = vadd.f32 %v1419, 1.0
    %v1421 = vmul.f32 %v1420, %v1395
    %v1423 = vrot.slane %v1419, 2
    %v1425 = vmul.f32 %v1420, %v1423
    %v1427 = vrot.slane %v1425, 7
    %v1429 = vadd.f32 %v1421, %v1427
    %v1430 = vmul.f32 %v1429, 0.5
    %v1431 = vmul.f32 %v1420, 0.5
    %v1432 = vtanh.pop %v1430
    %v1434 = vrot.slane %v1432, 6
    %v1436 = vmul.f32 %v1431, %v1434
    %s1437 = scalar_lea.vmem [#allocation2], %s1404
    %1438 = vst [vmem:[%s1437 - $0x3] sm:$0x8] %v1436
    %s1439 = sadd.s32 %s949, 14
    %s1440 = scalar_lea.vmem %s3, %s1439
    %v1441 = vld [vmem:[%s1440] sm:$0x1]
    %v1442 = vlaneseq
    %v1443 = vshrl.u32 %v1442, 7
    %v1444 = vsub.s32 0, %v1443
    %v1445 = vrot.slane %v1441, %v1444
    %v1446 = vmul.f32 %v1445, %v927
    %v1447 = vadd.f32 %v1446, %v933
    %v1448 = vlaneseq
    %v1449 = vshrl.u32 %v1448, 7
    %v1450 = vsub.s32 3, %v1449
    %v1451 = vrot.slane %v1436, %v1450
    %v1452 = vmul.f32 %v1451, %v939
    %v1453 = vadd.f32 %v1447, %v1452
    %v1454 = vtanh.pop %v1453
    %v1455 = vadd.f32 %v1454, 1.0
    %v1456 = vmul.f32 %v1455, %v1430
    %v1458 = vrot.slane %v1454, 2
    %v1460 = vmul.f32 %v1455, %v1458
    %v1462 = vrot.slane %v1460, 7
    %v1464 = vadd.f32 %v1456, %v1462
    %v1465 = vmul.f32 %v1464, 0.5
    %v1466 = vmul.f32 %v1455, 0.5
    %v1467 = vtanh.pop %v1465
    %v1469 = vrot.slane %v1467, 6
    %v1471 = vmul.f32 %v1466, %v1469
    %s1472 = scalar_lea.vmem [#allocation2], %s1439
    %1473 = vst [vmem:[%s1472 - $0x3] sm:$0x8] %v1471
    %s1474 = sadd.s32 %s949, 15
    %s1475 = scalar_lea.vmem %s3, %s1474
    %v1476 = vld [vmem:[%s1475] sm:$0x1]
    %v1477 = vlaneseq
    %v1478 = vshrl.u32 %v1477, 7
    %v1479 = vsub.s32 0, %v1478
    %v1480 = vrot.slane %v1476, %v1479
    %v1481 = vmul.f32 %v1480, %v927
    %v1482 = vadd.f32 %v1481, %v933
    %v1483 = vlaneseq
    %v1484 = vshrl.u32 %v1483, 7
    %v1485 = vsub.s32 3, %v1484
    %v1486 = vrot.slane %v1471, %v1485
    %v1487 = vmul.f32 %v1486, %v939
    %v1488 = vadd.f32 %v1482, %v1487
    %v1489 = vtanh.pop %v1488
    %v1490 = vadd.f32 %v1489, 1.0
    %v1491 = vmul.f32 %v1490, %v1465
    %v1493 = vrot.slane %v1489, 2
    %v1495 = vmul.f32 %v1490, %v1493
    %v1497 = vrot.slane %v1495, 7
    %v1499 = vadd.f32 %v1491, %v1497
    %v1500 = vmul.f32 %v1499, 0.5
    %v1501 = vmul.f32 %v1490, 0.5
    %v1502 = vtanh.pop %v1500
    %v1504 = vrot.slane %v1502, 6
    %v1506 = vmul.f32 %v1501, %v1504
    %s1507 = scalar_lea.vmem [#allocation2], %s1474
    %1508 = vst [vmem:[%s1507 - $0x3] sm:$0x8] %v1506
  $region136: #{rnn_forward.1} parent=0 // loop_footer
    %s946 = sadd.s32 1, %s942
  $region137: #{rnn_forward.1} parent=0 // loop_footer_branch
    %941 = sbr.rel target = $region133
  $region138: #{rnn_forward.1} parent=0 // loop_exit
    _
  %v1509 = vld [vmem:[#allocation2] sm:$0xff]
  %v1510 = vld [vmem:[#allocation2 + $0x8] sm:$0xff]
  %v1511 = vld [vmem:[#allocation2 + $0x10] sm:$0xff]
  %v1512 = vld [vmem:[#allocation2 + $0x18] sm:$0xff]
  %v1513 = vld [vmem:[#allocation2 + $0x20] sm:$0xff]
  %v1514 = vld [vmem:[#allocation2 + $0x28] sm:$0xff]
  %v1515 = vld [vmem:[#allocation2 + $0x30] sm:$0xff]
  %v1516 = vld [vmem:[#allocation2 + $0x38] sm:$0xff]
  %v1517 = vld [vmem:[#allocation2 + $0x40] sm:$0xff]
  %v1518 = vld [vmem:[#allocation2 + $0x48] sm:$0xff]
  %v1519 = vld [vmem:[#allocation2 + $0x50] sm:$0xff]
  %v1520 = vld [vmem:[#allocation2 + $0x58] sm:$0xff]
  %v1521 = vld [vmem:[#allocation2 + $0x60] sm:$0xff]
  %v1522 = vld [vmem:[#allocation2 + $0x68] sm:$0xff]
  %v1523 = vld [vmem:[#allocation2 + $0x70] sm:$0xff]
  %v1524 = vld [vmem:[#allocation2 + $0x78] sm:$0xff]
  %v1525 = vld [vmem:[#allocation2 + $0x80] sm:$0xff]
  %v1526 = vld [vmem:[#allocation2 + $0x88] sm:$0xff]
  %v1527 = vld [vmem:[#allocation2 + $0x90] sm:$0xff]
  %v1528 = vld [vmem:[#allocation2 + $0x98] sm:$0xff]
  %v1529 = vld [vmem:[#allocation2 + $0xa0] sm:$0xff]
  %v1530 = vld [vmem:[#allocation2 + $0xa8] sm:$0xff]
  %v1531 = vld [vmem:[#allocation2 + $0xb0] sm:$0xff]
  %v1532 = vld [vmem:[#allocation2 + $0xb8] sm:$0xff]
  %v1533 = vld [vmem:[#allocation2 + $0xc0] sm:$0xff]
  %v1534 = vld [vmem:[#allocation2 + $0xc8] sm:$0xff]
  %v1535 = vld [vmem:[#allocation2 + $0xd0] sm:$0xff]
  %v1536 = vld [vmem:[#allocation2 + $0xd8] sm:$0xff]
  %v1537 = vld [vmem:[#allocation2 + $0xe0] sm:$0xff]
  %v1538 = vld [vmem:[#allocation2 + $0xe8] sm:$0xff]
  %v1539 = vld [vmem:[#allocation2 + $0xf0] sm:$0xff]
  %v1540 = vld [vmem:[#allocation2 + $0xf8] sm:$0xff]
  %v1541 = vld [vmem:[#allocation2 + $0x100] sm:$0xff]
  %v1542 = vld [vmem:[#allocation2 + $0x108] sm:$0xff]
  %v1543 = vld [vmem:[#allocation2 + $0x110] sm:$0xff]
  %v1544 = vld [vmem:[#allocation2 + $0x118] sm:$0xff]
  %v1545 = vld [vmem:[#allocation2 + $0x120] sm:$0xff]
  %v1546 = vld [vmem:[#allocation2 + $0x128] sm:$0xff]
  %v1547 = vld [vmem:[#allocation2 + $0x130] sm:$0xff]
  %v1548 = vld [vmem:[#allocation2 + $0x138] sm:$0xff]
  %v1549 = vld [vmem:[#allocation2 + $0x140] sm:$0xff]
  %v1550 = vld [vmem:[#allocation2 + $0x148] sm:$0xff]
  %v1551 = vld [vmem:[#allocation2 + $0x150] sm:$0xff]
  %v1552 = vld [vmem:[#allocation2 + $0x158] sm:$0xff]
  %v1553 = vld [vmem:[#allocation2 + $0x160] sm:$0xff]
  %v1554 = vld [vmem:[#allocation2 + $0x168] sm:$0xff]
  %v1555 = vld [vmem:[#allocation2 + $0x170] sm:$0xff]
  %v1556 = vld [vmem:[#allocation2 + $0x178] sm:$0xff]
  %v1557 = vld [vmem:[#allocation2 + $0x180] sm:$0xff]
  %v1558 = vld [vmem:[#allocation2 + $0x188] sm:$0xff]
  %v1559 = vld [vmem:[#allocation2 + $0x190] sm:$0xff]
  %v1560 = vld [vmem:[#allocation2 + $0x198] sm:$0xff]
  %v1561 = vld [vmem:[#allocation2 + $0x1a0] sm:$0xff]
  %v1562 = vld [vmem:[#allocation2 + $0x1a8] sm:$0xff]
  %v1563 = vld [vmem:[#allocation2 + $0x1b0] sm:$0xff]
  %v1564 = vld [vmem:[#allocation2 + $0x1b8] sm:$0xff]
  %v1565 = vld [vmem:[#allocation2 + $0x1c0] sm:$0xff]
  %v1566 = vld [vmem:[#allocation2 + $0x1c8] sm:$0xff]
  %v1567 = vld [vmem:[#allocation2 + $0x1d0] sm:$0xff]
  %v1568 = vld [vmem:[#allocation2 + $0x1d8] sm:$0xff]
  %v1569 = vld [vmem:[#allocation2 + $0x1e0] sm:$0xff]
  %v1570 = vld [vmem:[#allocation2 + $0x1e8] sm:$0xff]
  %v1571 = vld [vmem:[#allocation2 + $0x1f0] sm:$0xff]
  %v1572 = vld [vmem:[#allocation2 + $0x1f8] sm:$0xff]
  %v1573 = vpack.c.bf16 %v1510, %v1509
  %v1574 = vpack.c.bf16 %v1512, %v1511
  %v1575 = vpack.c.bf16 %v1514, %v1513
  %v1576 = vpack.c.bf16 %v1516, %v1515
  %v1577 = vpack.c.bf16 %v1518, %v1517
  %v1578 = vpack.c.bf16 %v1520, %v1519
  %v1579 = vpack.c.bf16 %v1522, %v1521
  %v1580 = vpack.c.bf16 %v1524, %v1523
  %v1581 = vpack.c.bf16 %v1526, %v1525
  %v1582 = vpack.c.bf16 %v1528, %v1527
  %v1583 = vpack.c.bf16 %v1530, %v1529
  %v1584 = vpack.c.bf16 %v1532, %v1531
  %v1585 = vpack.c.bf16 %v1534, %v1533
  %v1586 = vpack.c.bf16 %v1536, %v1535
  %v1587 = vpack.c.bf16 %v1538, %v1537
  %v1588 = vpack.c.bf16 %v1540, %v1539
  %v1589 = vpack.c.bf16 %v1542, %v1541
  %v1590 = vpack.c.bf16 %v1544, %v1543
  %v1591 = vpack.c.bf16 %v1546, %v1545
  %v1592 = vpack.c.bf16 %v1548, %v1547
  %v1593 = vpack.c.bf16 %v1550, %v1549
  %v1594 = vpack.c.bf16 %v1552, %v1551
  %v1595 = vpack.c.bf16 %v1554, %v1553
  %v1596 = vpack.c.bf16 %v1556, %v1555
  %v1597 = vpack.c.bf16 %v1558, %v1557
  %v1598 = vpack.c.bf16 %v1560, %v1559
  %v1599 = vpack.c.bf16 %v1562, %v1561
  %v1600 = vpack.c.bf16 %v1564, %v1563
  %v1601 = vpack.c.bf16 %v1566, %v1565
  %v1602 = vpack.c.bf16 %v1568, %v1567
  %v1603 = vpack.c.bf16 %v1570, %v1569
  %v1604 = vpack.c.bf16 %v1572, %v1571
  %s1605 = smul.u32 4, 64
  %s1606 = smul.u32 %s1605, 4
  %s1607 = sshll.u32 %s1606, 4
  %1608 = dma.done [#allocation6], %s1607
  %v1609 = vld [vmem:[#allocation3] sm:$0xff]
  %v1610 = vld [vmem:[#allocation3 + $0x8] sm:$0xff]
  %v1611 = vld [vmem:[#allocation3 + $0x10] sm:$0xff]
  %v1612 = vld [vmem:[#allocation3 + $0x18] sm:$0xff]
  %v1613 = vld [vmem:[#allocation3 + $0x20] sm:$0xff]
  %v1614 = vld [vmem:[#allocation3 + $0x28] sm:$0xff]
  %v1615 = vld [vmem:[#allocation3 + $0x30] sm:$0xff]
  %v1616 = vld [vmem:[#allocation3 + $0x38] sm:$0xff]
  %v1617 = vld [vmem:[#allocation3 + $0x40] sm:$0xff]
  %v1618 = vld [vmem:[#allocation3 + $0x48] sm:$0xff]
  %v1619 = vld [vmem:[#allocation3 + $0x50] sm:$0xff]
  %v1620 = vld [vmem:[#allocation3 + $0x58] sm:$0xff]
  %v1621 = vld [vmem:[#allocation3 + $0x60] sm:$0xff]
  %v1622 = vld [vmem:[#allocation3 + $0x68] sm:$0xff]
  %v1623 = vld [vmem:[#allocation3 + $0x70] sm:$0xff]
  %v1624 = vld [vmem:[#allocation3 + $0x78] sm:$0xff]
  %v1625 = vld [vmem:[#allocation3 + $0x80] sm:$0xff]
  %v1626 = vld [vmem:[#allocation3 + $0x88] sm:$0xff]
  %v1627 = vld [vmem:[#allocation3 + $0x90] sm:$0xff]
  %v1628 = vld [vmem:[#allocation3 + $0x98] sm:$0xff]
  %v1629 = vld [vmem:[#allocation3 + $0xa0] sm:$0xff]
  %v1630 = vld [vmem:[#allocation3 + $0xa8] sm:$0xff]
  %v1631 = vld [vmem:[#allocation3 + $0xb0] sm:$0xff]
  %v1632 = vld [vmem:[#allocation3 + $0xb8] sm:$0xff]
  %v1633 = vld [vmem:[#allocation3 + $0xc0] sm:$0xff]
  %v1634 = vld [vmem:[#allocation3 + $0xc8] sm:$0xff]
  %v1635 = vld [vmem:[#allocation3 + $0xd0] sm:$0xff]
  %v1636 = vld [vmem:[#allocation3 + $0xd8] sm:$0xff]
  %v1637 = vld [vmem:[#allocation3 + $0xe0] sm:$0xff]
  %v1638 = vld [vmem:[#allocation3 + $0xe8] sm:$0xff]
  %v1639 = vld [vmem:[#allocation3 + $0xf0] sm:$0xff]
  %v1640 = vld [vmem:[#allocation3 + $0xf8] sm:$0xff]
  %v1641 = vld [vmem:[#allocation3 + $0x100] sm:$0xff]
  %v1642 = vld [vmem:[#allocation3 + $0x108] sm:$0xff]
  %v1643 = vld [vmem:[#allocation3 + $0x110] sm:$0xff]
  %v1644 = vld [vmem:[#allocation3 + $0x118] sm:$0xff]
  %v1645 = vld [vmem:[#allocation3 + $0x120] sm:$0xff]
  %v1646 = vld [vmem:[#allocation3 + $0x128] sm:$0xff]
  %v1647 = vld [vmem:[#allocation3 + $0x130] sm:$0xff]
  %v1648 = vld [vmem:[#allocation3 + $0x138] sm:$0xff]
  %v1649 = vld [vmem:[#allocation3 + $0x140] sm:$0xff]
  %v1650 = vld [vmem:[#allocation3 + $0x148] sm:$0xff]
  %v1651 = vld [vmem:[#allocation3 + $0x150] sm:$0xff]
  %v1652 = vld [vmem:[#allocation3 + $0x158] sm:$0xff]
  %v1653 = vld [vmem:[#allocation3 + $0x160] sm:$0xff]
  %v1654 = vld [vmem:[#allocation3 + $0x168] sm:$0xff]
  %v1655 = vld [vmem:[#allocation3 + $0x170] sm:$0xff]
  %v1656 = vld [vmem:[#allocation3 + $0x178] sm:$0xff]
  %v1657 = vld [vmem:[#allocation3 + $0x180] sm:$0xff]
  %v1658 = vld [vmem:[#allocation3 + $0x188] sm:$0xff]
  %v1659 = vld [vmem:[#allocation3 + $0x190] sm:$0xff]
  %v1660 = vld [vmem:[#allocation3 + $0x198] sm:$0xff]
  %v1661 = vld [vmem:[#allocation3 + $0x1a0] sm:$0xff]
  %v1662 = vld [vmem:[#allocation3 + $0x1a8] sm:$0xff]
  %v1663 = vld [vmem:[#allocation3 + $0x1b0] sm:$0xff]
  %v1664 = vld [vmem:[#allocation3 + $0x1b8] sm:$0xff]
  %v1665 = vld [vmem:[#allocation3 + $0x1c0] sm:$0xff]
  %v1666 = vld [vmem:[#allocation3 + $0x1c8] sm:$0xff]
  %v1667 = vld [vmem:[#allocation3 + $0x1d0] sm:$0xff]
  %v1668 = vld [vmem:[#allocation3 + $0x1d8] sm:$0xff]
  %v1669 = vld [vmem:[#allocation3 + $0x1e0] sm:$0xff]
  %v1670 = vld [vmem:[#allocation3 + $0x1e8] sm:$0xff]
  %v1671 = vld [vmem:[#allocation3 + $0x1f0] sm:$0xff]
  %v1672 = vld [vmem:[#allocation3 + $0x1f8] sm:$0xff]
  %v1673 = vld [vmem:[#allocation3 + $0x200] sm:$0xff]
  %v1674 = vld [vmem:[#allocation3 + $0x208] sm:$0xff]
  %v1675 = vld [vmem:[#allocation3 + $0x210] sm:$0xff]
  %v1676 = vld [vmem:[#allocation3 + $0x218] sm:$0xff]
  %v1677 = vld [vmem:[#allocation3 + $0x220] sm:$0xff]
  %v1678 = vld [vmem:[#allocation3 + $0x228] sm:$0xff]
  %v1679 = vld [vmem:[#allocation3 + $0x230] sm:$0xff]
  %v1680 = vld [vmem:[#allocation3 + $0x238] sm:$0xff]
  %v1681 = vld [vmem:[#allocation3 + $0x240] sm:$0xff]
  %v1682 = vld [vmem:[#allocation3 + $0x248] sm:$0xff]
  %v1683 = vld [vmem:[#allocation3 + $0x250] sm:$0xff]
  %v1684 = vld [vmem:[#allocation3 + $0x258] sm:$0xff]
  %v1685 = vld [vmem:[#allocation3 + $0x260] sm:$0xff]
  %v1686 = vld [vmem:[#allocation3 + $0x268] sm:$0xff]
  %v1687 = vld [vmem:[#allocation3 + $0x270] sm:$0xff]
  %v1688 = vld [vmem:[#allocation3 + $0x278] sm:$0xff]
  %v1689 = vld [vmem:[#allocation3 + $0x280] sm:$0xff]
  %v1690 = vld [vmem:[#allocation3 + $0x288] sm:$0xff]
  %v1691 = vld [vmem:[#allocation3 + $0x290] sm:$0xff]
  %v1692 = vld [vmem:[#allocation3 + $0x298] sm:$0xff]
  %v1693 = vld [vmem:[#allocation3 + $0x2a0] sm:$0xff]
  %v1694 = vld [vmem:[#allocation3 + $0x2a8] sm:$0xff]
  %v1695 = vld [vmem:[#allocation3 + $0x2b0] sm:$0xff]
  %v1696 = vld [vmem:[#allocation3 + $0x2b8] sm:$0xff]
  %v1697 = vld [vmem:[#allocation3 + $0x2c0] sm:$0xff]
  %v1698 = vld [vmem:[#allocation3 + $0x2c8] sm:$0xff]
  %v1699 = vld [vmem:[#allocation3 + $0x2d0] sm:$0xff]
  %v1700 = vld [vmem:[#allocation3 + $0x2d8] sm:$0xff]
  %v1701 = vld [vmem:[#allocation3 + $0x2e0] sm:$0xff]
  %v1702 = vld [vmem:[#allocation3 + $0x2e8] sm:$0xff]
  %v1703 = vld [vmem:[#allocation3 + $0x2f0] sm:$0xff]
  %v1704 = vld [vmem:[#allocation3 + $0x2f8] sm:$0xff]
  %v1705 = vld [vmem:[#allocation3 + $0x300] sm:$0xff]
  %v1706 = vld [vmem:[#allocation3 + $0x308] sm:$0xff]
  %v1707 = vld [vmem:[#allocation3 + $0x310] sm:$0xff]
  %v1708 = vld [vmem:[#allocation3 + $0x318] sm:$0xff]
  %v1709 = vld [vmem:[#allocation3 + $0x320] sm:$0xff]
  %v1710 = vld [vmem:[#allocation3 + $0x328] sm:$0xff]
  %v1711 = vld [vmem:[#allocation3 + $0x330] sm:$0xff]
  %v1712 = vld [vmem:[#allocation3 + $0x338] sm:$0xff]
  %v1713 = vld [vmem:[#allocation3 + $0x340] sm:$0xff]
  %v1714 = vld [vmem:[#allocation3 + $0x348] sm:$0xff]
  %v1715 = vld [vmem:[#allocation3 + $0x350] sm:$0xff]
  %v1716 = vld [vmem:[#allocation3 + $0x358] sm:$0xff]
  %v1717 = vld [vmem:[#allocation3 + $0x360] sm:$0xff]
  %v1718 = vld [vmem:[#allocation3 + $0x368] sm:$0xff]
  %v1719 = vld [vmem:[#allocation3 + $0x370] sm:$0xff]
  %v1720 = vld [vmem:[#allocation3 + $0x378] sm:$0xff]
  %v1721 = vld [vmem:[#allocation3 + $0x380] sm:$0xff]
  %v1722 = vld [vmem:[#allocation3 + $0x388] sm:$0xff]
  %v1723 = vld [vmem:[#allocation3 + $0x390] sm:$0xff]
  %v1724 = vld [vmem:[#allocation3 + $0x398] sm:$0xff]
  %v1725 = vld [vmem:[#allocation3 + $0x3a0] sm:$0xff]
  %v1726 = vld [vmem:[#allocation3 + $0x3a8] sm:$0xff]
  %v1727 = vld [vmem:[#allocation3 + $0x3b0] sm:$0xff]
  %v1728 = vld [vmem:[#allocation3 + $0x3b8] sm:$0xff]
  %v1729 = vld [vmem:[#allocation3 + $0x3c0] sm:$0xff]
  %v1730 = vld [vmem:[#allocation3 + $0x3c8] sm:$0xff]
  %v1731 = vld [vmem:[#allocation3 + $0x3d0] sm:$0xff]
  %v1732 = vld [vmem:[#allocation3 + $0x3d8] sm:$0xff]
  %v1733 = vld [vmem:[#allocation3 + $0x3e0] sm:$0xff]
  %v1734 = vld [vmem:[#allocation3 + $0x3e8] sm:$0xff]
  %v1735 = vld [vmem:[#allocation3 + $0x3f0] sm:$0xff]
  %v1736 = vld [vmem:[#allocation3 + $0x3f8] sm:$0xff]
  %v1737 = vld [vmem:[%s5] sm:$0xff]
  %v1738 = vld [vmem:[%s5 + $0x8] sm:$0xff]
  %v1739 = vld [vmem:[%s5 + $0x10] sm:$0xff]
  %v1740 = vld [vmem:[%s5 + $0x18] sm:$0xff]
  %v1741 = vld [vmem:[%s5 + $0x20] sm:$0xff]
  %v1742 = vld [vmem:[%s5 + $0x28] sm:$0xff]
  %v1743 = vld [vmem:[%s5 + $0x30] sm:$0xff]
  %v1744 = vld [vmem:[%s5 + $0x38] sm:$0xff]
  %v1745 = vld [vmem:[%s5 + $0x40] sm:$0xff]
  %v1746 = vld [vmem:[%s5 + $0x48] sm:$0xff]
  %v1747 = vld [vmem:[%s5 + $0x50] sm:$0xff]
  %v1748 = vld [vmem:[%s5 + $0x58] sm:$0xff]
  %v1749 = vld [vmem:[%s5 + $0x60] sm:$0xff]
  %v1750 = vld [vmem:[%s5 + $0x68] sm:$0xff]
  %v1751 = vld [vmem:[%s5 + $0x70] sm:$0xff]
  %v1752 = vld [vmem:[%s5 + $0x78] sm:$0xff]
  %v1753 = vld [vmem:[%s5 + $0x80] sm:$0xff]
  %v1754 = vld [vmem:[%s5 + $0x88] sm:$0xff]
  %v1755 = vld [vmem:[%s5 + $0x90] sm:$0xff]
  %v1756 = vld [vmem:[%s5 + $0x98] sm:$0xff]
  %v1757 = vld [vmem:[%s5 + $0xa0] sm:$0xff]
  %v1758 = vld [vmem:[%s5 + $0xa8] sm:$0xff]
  %v1759 = vld [vmem:[%s5 + $0xb0] sm:$0xff]
  %v1760 = vld [vmem:[%s5 + $0xb8] sm:$0xff]
  %v1761 = vld [vmem:[%s5 + $0xc0] sm:$0xff]
  %v1762 = vld [vmem:[%s5 + $0xc8] sm:$0xff]
  %v1763 = vld [vmem:[%s5 + $0xd0] sm:$0xff]
  %v1764 = vld [vmem:[%s5 + $0xd8] sm:$0xff]
  %v1765 = vld [vmem:[%s5 + $0xe0] sm:$0xff]
  %v1766 = vld [vmem:[%s5 + $0xe8] sm:$0xff]
  %v1767 = vld [vmem:[%s5 + $0xf0] sm:$0xff]
  %v1768 = vld [vmem:[%s5 + $0xf8] sm:$0xff]
  %v1769 = vld [vmem:[%s5 + $0x100] sm:$0xff]
  %v1770 = vld [vmem:[%s5 + $0x108] sm:$0xff]
  %v1771 = vld [vmem:[%s5 + $0x110] sm:$0xff]
  %v1772 = vld [vmem:[%s5 + $0x118] sm:$0xff]
  %v1773 = vld [vmem:[%s5 + $0x120] sm:$0xff]
  %v1774 = vld [vmem:[%s5 + $0x128] sm:$0xff]
  %v1775 = vld [vmem:[%s5 + $0x130] sm:$0xff]
  %v1776 = vld [vmem:[%s5 + $0x138] sm:$0xff]
  %v1777 = vld [vmem:[%s5 + $0x140] sm:$0xff]
  %v1778 = vld [vmem:[%s5 + $0x148] sm:$0xff]
  %v1779 = vld [vmem:[%s5 + $0x150] sm:$0xff]
  %v1780 = vld [vmem:[%s5 + $0x158] sm:$0xff]
  %v1781 = vld [vmem:[%s5 + $0x160] sm:$0xff]
  %v1782 = vld [vmem:[%s5 + $0x168] sm:$0xff]
  %v1783 = vld [vmem:[%s5 + $0x170] sm:$0xff]
  %v1784 = vld [vmem:[%s5 + $0x178] sm:$0xff]
  %v1785 = vld [vmem:[%s5 + $0x180] sm:$0xff]
  %v1786 = vld [vmem:[%s5 + $0x188] sm:$0xff]
  %v1787 = vld [vmem:[%s5 + $0x190] sm:$0xff]
  %v1788 = vld [vmem:[%s5 + $0x198] sm:$0xff]
  %v1789 = vld [vmem:[%s5 + $0x1a0] sm:$0xff]
  %v1790 = vld [vmem:[%s5 + $0x1a8] sm:$0xff]
  %v1791 = vld [vmem:[%s5 + $0x1b0] sm:$0xff]
  %v1792 = vld [vmem:[%s5 + $0x1b8] sm:$0xff]
  %v1793 = vld [vmem:[%s5 + $0x1c0] sm:$0xff]
  %v1794 = vld [vmem:[%s5 + $0x1c8] sm:$0xff]
  %v1795 = vld [vmem:[%s5 + $0x1d0] sm:$0xff]
  %v1796 = vld [vmem:[%s5 + $0x1d8] sm:$0xff]
  %v1797 = vld [vmem:[%s5 + $0x1e0] sm:$0xff]
  %v1798 = vld [vmem:[%s5 + $0x1e8] sm:$0xff]
  %v1799 = vld [vmem:[%s5 + $0x1f0] sm:$0xff]
  %v1800 = vld [vmem:[%s5 + $0x1f8] sm:$0xff]
  %1802 = vset.pattern.permute.xlu0 0
  %1803 = vperm.xlu0 %1802, %v1737
  %v1804 = vpop.permute.xlu0 %1803
  %1807 = vset.pattern.permute.xlu0 0
  %1808 = vperm.xlu0 %1807, %v1738
  %v1809 = vpop.permute.xlu0 %1808
  %1812 = vset.pattern.permute.xlu0 0
  %1813 = vperm.xlu0 %1812, %v1739
  %v1814 = vpop.permute.xlu0 %1813
  %1817 = vset.pattern.permute.xlu0 0
  %1818 = vperm.xlu0 %1817, %v1740
  %v1819 = vpop.permute.xlu0 %1818
  %1822 = vset.pattern.permute.xlu0 0
  %1823 = vperm.xlu0 %1822, %v1741
  %v1824 = vpop.permute.xlu0 %1823
  %1827 = vset.pattern.permute.xlu0 0
  %1828 = vperm.xlu0 %1827, %v1742
  %v1829 = vpop.permute.xlu0 %1828
  %1832 = vset.pattern.permute.xlu0 0
  %1833 = vperm.xlu0 %1832, %v1743
  %v1834 = vpop.permute.xlu0 %1833
  %1837 = vset.pattern.permute.xlu0 0
  %1838 = vperm.xlu0 %1837, %v1744
  %v1839 = vpop.permute.xlu0 %1838
  %1842 = vset.pattern.permute.xlu0 0
  %1843 = vperm.xlu0 %1842, %v1745
  %v1844 = vpop.permute.xlu0 %1843
  %1847 = vset.pattern.permute.xlu0 0
  %1848 = vperm.xlu0 %1847, %v1746
  %v1849 = vpop.permute.xlu0 %1848
  %1852 = vset.pattern.permute.xlu0 0
  %1853 = vperm.xlu0 %1852, %v1747
  %v1854 = vpop.permute.xlu0 %1853
  %1857 = vset.pattern.permute.xlu0 0
  %1858 = vperm.xlu0 %1857, %v1748
  %v1859 = vpop.permute.xlu0 %1858
  %1862 = vset.pattern.permute.xlu0 0
  %1863 = vperm.xlu0 %1862, %v1749
  %v1864 = vpop.permute.xlu0 %1863
  %1867 = vset.pattern.permute.xlu0 0
  %1868 = vperm.xlu0 %1867, %v1750
  %v1869 = vpop.permute.xlu0 %1868
  %1872 = vset.pattern.permute.xlu0 0
  %1873 = vperm.xlu0 %1872, %v1751
  %v1874 = vpop.permute.xlu0 %1873
  %1877 = vset.pattern.permute.xlu0 0
  %1878 = vperm.xlu0 %1877, %v1752
  %v1879 = vpop.permute.xlu0 %1878
  %1882 = vset.pattern.permute.xlu0 0
  %1883 = vperm.xlu0 %1882, %v1753
  %v1884 = vpop.permute.xlu0 %1883
  %1887 = vset.pattern.permute.xlu0 0
  %1888 = vperm.xlu0 %1887, %v1754
  %v1889 = vpop.permute.xlu0 %1888
  %1892 = vset.pattern.permute.xlu0 0
  %1893 = vperm.xlu0 %1892, %v1755
  %v1894 = vpop.permute.xlu0 %1893
  %1897 = vset.pattern.permute.xlu0 0
  %1898 = vperm.xlu0 %1897, %v1756
  %v1899 = vpop.permute.xlu0 %1898
  %1902 = vset.pattern.permute.xlu0 0
  %1903 = vperm.xlu0 %1902, %v1757
  %v1904 = vpop.permute.xlu0 %1903
  %1907 = vset.pattern.permute.xlu0 0
  %1908 = vperm.xlu0 %1907, %v1758
  %v1909 = vpop.permute.xlu0 %1908
  %1912 = vset.pattern.permute.xlu0 0
  %1913 = vperm.xlu0 %1912, %v1759
  %v1914 = vpop.permute.xlu0 %1913
  %1917 = vset.pattern.permute.xlu0 0
  %1918 = vperm.xlu0 %1917, %v1760
  %v1919 = vpop.permute.xlu0 %1918
  %1922 = vset.pattern.permute.xlu0 0
  %1923 = vperm.xlu0 %1922, %v1761
  %v1924 = vpop.permute.xlu0 %1923
  %1927 = vset.pattern.permute.xlu0 0
  %1928 = vperm.xlu0 %1927, %v1762
  %v1929 = vpop.permute.xlu0 %1928
  %1932 = vset.pattern.permute.xlu0 0
  %1933 = vperm.xlu0 %1932, %v1763
  %v1934 = vpop.permute.xlu0 %1933
  %1937 = vset.pattern.permute.xlu0 0
  %1938 = vperm.xlu0 %1937, %v1764
  %v1939 = vpop.permute.xlu0 %1938
  %1942 = vset.pattern.permute.xlu0 0
  %1943 = vperm.xlu0 %1942, %v1765
  %v1944 = vpop.permute.xlu0 %1943
  %1947 = vset.pattern.permute.xlu0 0
  %1948 = vperm.xlu0 %1947, %v1766
  %v1949 = vpop.permute.xlu0 %1948
  %1952 = vset.pattern.permute.xlu0 0
  %1953 = vperm.xlu0 %1952, %v1767
  %v1954 = vpop.permute.xlu0 %1953
  %1957 = vset.pattern.permute.xlu0 0
  %1958 = vperm.xlu0 %1957, %v1768
  %v1959 = vpop.permute.xlu0 %1958
  %1962 = vset.pattern.permute.xlu0 0
  %1963 = vperm.xlu0 %1962, %v1769
  %v1964 = vpop.permute.xlu0 %1963
  %1967 = vset.pattern.permute.xlu0 0
  %1968 = vperm.xlu0 %1967, %v1770
  %v1969 = vpop.permute.xlu0 %1968
  %1972 = vset.pattern.permute.xlu0 0
  %1973 = vperm.xlu0 %1972, %v1771
  %v1974 = vpop.permute.xlu0 %1973
  %1977 = vset.pattern.permute.xlu0 0
  %1978 = vperm.xlu0 %1977, %v1772
  %v1979 = vpop.permute.xlu0 %1978
  %1982 = vset.pattern.permute.xlu0 0
  %1983 = vperm.xlu0 %1982, %v1773
  %v1984 = vpop.permute.xlu0 %1983
  %1987 = vset.pattern.permute.xlu0 0
  %1988 = vperm.xlu0 %1987, %v1774
  %v1989 = vpop.permute.xlu0 %1988
  %1992 = vset.pattern.permute.xlu0 0
  %1993 = vperm.xlu0 %1992, %v1775
  %v1994 = vpop.permute.xlu0 %1993
  %1997 = vset.pattern.permute.xlu0 0
  %1998 = vperm.xlu0 %1997, %v1776
  %v1999 = vpop.permute.xlu0 %1998
  %2002 = vset.pattern.permute.xlu0 0
  %2003 = vperm.xlu0 %2002, %v1777
  %v2004 = vpop.permute.xlu0 %2003
  %2007 = vset.pattern.permute.xlu0 0
  %2008 = vperm.xlu0 %2007, %v1778
  %v2009 = vpop.permute.xlu0 %2008
  %2012 = vset.pattern.permute.xlu0 0
  %2013 = vperm.xlu0 %2012, %v1779
  %v2014 = vpop.permute.xlu0 %2013
  %2017 = vset.pattern.permute.xlu0 0
  %2018 = vperm.xlu0 %2017, %v1780
  %v2019 = vpop.permute.xlu0 %2018
  %2022 = vset.pattern.permute.xlu0 0
  %2023 = vperm.xlu0 %2022, %v1781
  %v2024 = vpop.permute.xlu0 %2023
  %2027 = vset.pattern.permute.xlu0 0
  %2028 = vperm.xlu0 %2027, %v1782
  %v2029 = vpop.permute.xlu0 %2028
  %2032 = vset.pattern.permute.xlu0 0
  %2033 = vperm.xlu0 %2032, %v1783
  %v2034 = vpop.permute.xlu0 %2033
  %2037 = vset.pattern.permute.xlu0 0
  %2038 = vperm.xlu0 %2037, %v1784
  %v2039 = vpop.permute.xlu0 %2038
  %2042 = vset.pattern.permute.xlu0 0
  %2043 = vperm.xlu0 %2042, %v1785
  %v2044 = vpop.permute.xlu0 %2043
  %2047 = vset.pattern.permute.xlu0 0
  %2048 = vperm.xlu0 %2047, %v1786
  %v2049 = vpop.permute.xlu0 %2048
  %2052 = vset.pattern.permute.xlu0 0
  %2053 = vperm.xlu0 %2052, %v1787
  %v2054 = vpop.permute.xlu0 %2053
  %2057 = vset.pattern.permute.xlu0 0
  %2058 = vperm.xlu0 %2057, %v1788
  %v2059 = vpop.permute.xlu0 %2058
  %2062 = vset.pattern.permute.xlu0 0
  %2063 = vperm.xlu0 %2062, %v1789
  %v2064 = vpop.permute.xlu0 %2063
  %2067 = vset.pattern.permute.xlu0 0
  %2068 = vperm.xlu0 %2067, %v1790
  %v2069 = vpop.permute.xlu0 %2068
  %2072 = vset.pattern.permute.xlu0 0
  %2073 = vperm.xlu0 %2072, %v1791
  %v2074 = vpop.permute.xlu0 %2073
  %2077 = vset.pattern.permute.xlu0 0
  %2078 = vperm.xlu0 %2077, %v1792
  %v2079 = vpop.permute.xlu0 %2078
  %2082 = vset.pattern.permute.xlu0 0
  %2083 = vperm.xlu0 %2082, %v1793
  %v2084 = vpop.permute.xlu0 %2083
  %2087 = vset.pattern.permute.xlu0 0
  %2088 = vperm.xlu0 %2087, %v1794
  %v2089 = vpop.permute.xlu0 %2088
  %2092 = vset.pattern.permute.xlu0 0
  %2093 = vperm.xlu0 %2092, %v1795
  %v2094 = vpop.permute.xlu0 %2093
  %2097 = vset.pattern.permute.xlu0 0
  %2098 = vperm.xlu0 %2097, %v1796
  %v2099 = vpop.permute.xlu0 %2098
  %2102 = vset.pattern.permute.xlu0 0
  %2103 = vperm.xlu0 %2102, %v1797
  %v2104 = vpop.permute.xlu0 %2103
  %2107 = vset.pattern.permute.xlu0 0
  %2108 = vperm.xlu0 %2107, %v1798
  %v2109 = vpop.permute.xlu0 %2108
  %2112 = vset.pattern.permute.xlu0 0
  %2113 = vperm.xlu0 %2112, %v1799
  %v2114 = vpop.permute.xlu0 %2113
  %2117 = vset.pattern.permute.xlu0 0
  %2118 = vperm.xlu0 %2117, %v1800
  %v2119 = vpop.permute.xlu0 %2118
  %v2249 = vunpack.c.l.b16 %v1609
  %v2250 = vunpack.c.h.b16 %v1609
  %v2251 = vunpack.c.l.b16 %v1610
  %v2252 = vunpack.c.h.b16 %v1610
  %v2253 = vunpack.c.l.b16 %v1611
  %v2254 = vunpack.c.h.b16 %v1611
  %v2255 = vunpack.c.l.b16 %v1612
  %v2256 = vunpack.c.h.b16 %v1612
  %v2257 = vunpack.c.l.b16 %v1613
  %v2258 = vunpack.c.h.b16 %v1613
  %v2259 = vunpack.c.l.b16 %v1614
  %v2260 = vunpack.c.h.b16 %v1614
  %v2261 = vunpack.c.l.b16 %v1615
  %v2262 = vunpack.c.h.b16 %v1615
  %v2263 = vunpack.c.l.b16 %v1616
  %v2264 = vunpack.c.h.b16 %v1616
  %v2265 = vunpack.c.l.b16 %v1617
  %v2266 = vunpack.c.h.b16 %v1617
  %v2267 = vunpack.c.l.b16 %v1618
  %v2268 = vunpack.c.h.b16 %v1618
  %v2269 = vunpack.c.l.b16 %v1619
  %v2270 = vunpack.c.h.b16 %v1619
  %v2271 = vunpack.c.l.b16 %v1620
  %v2272 = vunpack.c.h.b16 %v1620
  %v2273 = vunpack.c.l.b16 %v1621
  %v2274 = vunpack.c.h.b16 %v1621
  %v2275 = vunpack.c.l.b16 %v1622
  %v2276 = vunpack.c.h.b16 %v1622
  %v2277 = vunpack.c.l.b16 %v1623
  %v2278 = vunpack.c.h.b16 %v1623
  %v2279 = vunpack.c.l.b16 %v1624
  %v2280 = vunpack.c.h.b16 %v1624
  %v2281 = vunpack.c.l.b16 %v1625
  %v2282 = vunpack.c.h.b16 %v1625
  %v2283 = vunpack.c.l.b16 %v1626
  %v2284 = vunpack.c.h.b16 %v1626
  %v2285 = vunpack.c.l.b16 %v1627
  %v2286 = vunpack.c.h.b16 %v1627
  %v2287 = vunpack.c.l.b16 %v1628
  %v2288 = vunpack.c.h.b16 %v1628
  %v2289 = vunpack.c.l.b16 %v1629
  %v2290 = vunpack.c.h.b16 %v1629
  %v2291 = vunpack.c.l.b16 %v1630
  %v2292 = vunpack.c.h.b16 %v1630
  %v2293 = vunpack.c.l.b16 %v1631
  %v2294 = vunpack.c.h.b16 %v1631
  %v2295 = vunpack.c.l.b16 %v1632
  %v2296 = vunpack.c.h.b16 %v1632
  %v2297 = vunpack.c.l.b16 %v1633
  %v2298 = vunpack.c.h.b16 %v1633
  %v2299 = vunpack.c.l.b16 %v1634
  %v2300 = vunpack.c.h.b16 %v1634
  %v2301 = vunpack.c.l.b16 %v1635
  %v2302 = vunpack.c.h.b16 %v1635
  %v2303 = vunpack.c.l.b16 %v1636
  %v2304 = vunpack.c.h.b16 %v1636
  %v2305 = vunpack.c.l.b16 %v1637
  %v2306 = vunpack.c.h.b16 %v1637
  %v2307 = vunpack.c.l.b16 %v1638
  %v2308 = vunpack.c.h.b16 %v1638
  %v2309 = vunpack.c.l.b16 %v1639
  %v2310 = vunpack.c.h.b16 %v1639
  %v2311 = vunpack.c.l.b16 %v1640
  %v2312 = vunpack.c.h.b16 %v1640
  %v2313 = vunpack.c.l.b16 %v1641
  %v2314 = vunpack.c.h.b16 %v1641
  %v2315 = vunpack.c.l.b16 %v1642
  %v2316 = vunpack.c.h.b16 %v1642
  %v2317 = vunpack.c.l.b16 %v1643
  %v2318 = vunpack.c.h.b16 %v1643
  %v2319 = vunpack.c.l.b16 %v1644
  %v2320 = vunpack.c.h.b16 %v1644
  %v2321 = vunpack.c.l.b16 %v1645
  %v2322 = vunpack.c.h.b16 %v1645
  %v2323 = vunpack.c.l.b16 %v1646
  %v2324 = vunpack.c.h.b16 %v1646
  %v2325 = vunpack.c.l.b16 %v1647
  %v2326 = vunpack.c.h.b16 %v1647
  %v2327 = vunpack.c.l.b16 %v1648
  %v2328 = vunpack.c.h.b16 %v1648
  %v2329 = vunpack.c.l.b16 %v1649
  %v2330 = vunpack.c.h.b16 %v1649
  %v2331 = vunpack.c.l.b16 %v1650
  %v2332 = vunpack.c.h.b16 %v1650
  %v2333 = vunpack.c.l.b16 %v1651
  %v2334 = vunpack.c.h.b16 %v1651
  %v2335 = vunpack.c.l.b16 %v1652
  %v2336 = vunpack.c.h.b16 %v1652
  %v2337 = vunpack.c.l.b16 %v1653
  %v2338 = vunpack.c.h.b16 %v1653
  %v2339 = vunpack.c.l.b16 %v1654
  %v2340 = vunpack.c.h.b16 %v1654
  %v2341 = vunpack.c.l.b16 %v1655
  %v2342 = vunpack.c.h.b16 %v1655
  %v2343 = vunpack.c.l.b16 %v1656
  %v2344 = vunpack.c.h.b16 %v1656
  %v2345 = vunpack.c.l.b16 %v1657
  %v2346 = vunpack.c.h.b16 %v1657
  %v2347 = vunpack.c.l.b16 %v1658
  %v2348 = vunpack.c.h.b16 %v1658
  %v2349 = vunpack.c.l.b16 %v1659
  %v2350 = vunpack.c.h.b16 %v1659
  %v2351 = vunpack.c.l.b16 %v1660
  %v2352 = vunpack.c.h.b16 %v1660
  %v2353 = vunpack.c.l.b16 %v1661
  %v2354 = vunpack.c.h.b16 %v1661
  %v2355 = vunpack.c.l.b16 %v1662
  %v2356 = vunpack.c.h.b16 %v1662
  %v2357 = vunpack.c.l.b16 %v1663
  %v2358 = vunpack.c.h.b16 %v1663
  %v2359 = vunpack.c.l.b16 %v1664
  %v2360 = vunpack.c.h.b16 %v1664
  %v2361 = vunpack.c.l.b16 %v1665
  %v2362 = vunpack.c.h.b16 %v1665
  %v2363 = vunpack.c.l.b16 %v1666
  %v2364 = vunpack.c.h.b16 %v1666
  %v2365 = vunpack.c.l.b16 %v1667
  %v2366 = vunpack.c.h.b16 %v1667
  %v2367 = vunpack.c.l.b16 %v1668
  %v2368 = vunpack.c.h.b16 %v1668
  %v2369 = vunpack.c.l.b16 %v1669
  %v2370 = vunpack.c.h.b16 %v1669
  %v2371 = vunpack.c.l.b16 %v1670
  %v2372 = vunpack.c.h.b16 %v1670
  %v2373 = vunpack.c.l.b16 %v1671
  %v2374 = vunpack.c.h.b16 %v1671
  %v2375 = vunpack.c.l.b16 %v1672
  %v2376 = vunpack.c.h.b16 %v1672
  %v2377 = vunpack.c.l.b16 %v1673
  %v2378 = vunpack.c.h.b16 %v1673
  %v2379 = vunpack.c.l.b16 %v1674
  %v2380 = vunpack.c.h.b16 %v1674
  %v2381 = vunpack.c.l.b16 %v1675
  %v2382 = vunpack.c.h.b16 %v1675
  %v2383 = vunpack.c.l.b16 %v1676
  %v2384 = vunpack.c.h.b16 %v1676
  %v2385 = vunpack.c.l.b16 %v1677
  %v2386 = vunpack.c.h.b16 %v1677
  %v2387 = vunpack.c.l.b16 %v1678
  %v2388 = vunpack.c.h.b16 %v1678
  %v2389 = vunpack.c.l.b16 %v1679
  %v2390 = vunpack.c.h.b16 %v1679
  %v2391 = vunpack.c.l.b16 %v1680
  %v2392 = vunpack.c.h.b16 %v1680
  %v2393 = vunpack.c.l.b16 %v1681
  %v2394 = vunpack.c.h.b16 %v1681
  %v2395 = vunpack.c.l.b16 %v1682
  %v2396 = vunpack.c.h.b16 %v1682
  %v2397 = vunpack.c.l.b16 %v1683
  %v2398 = vunpack.c.h.b16 %v1683
  %v2399 = vunpack.c.l.b16 %v1684
  %v2400 = vunpack.c.h.b16 %v1684
  %v2401 = vunpack.c.l.b16 %v1685
  %v2402 = vunpack.c.h.b16 %v1685
  %v2403 = vunpack.c.l.b16 %v1686
  %v2404 = vunpack.c.h.b16 %v1686
  %v2405 = vunpack.c.l.b16 %v1687
  %v2406 = vunpack.c.h.b16 %v1687
  %v2407 = vunpack.c.l.b16 %v1688
  %v2408 = vunpack.c.h.b16 %v1688
  %v2409 = vunpack.c.l.b16 %v1689
  %v2410 = vunpack.c.h.b16 %v1689
  %v2411 = vunpack.c.l.b16 %v1690
  %v2412 = vunpack.c.h.b16 %v1690
  %v2413 = vunpack.c.l.b16 %v1691
  %v2414 = vunpack.c.h.b16 %v1691
  %v2415 = vunpack.c.l.b16 %v1692
  %v2416 = vunpack.c.h.b16 %v1692
  %v2417 = vunpack.c.l.b16 %v1693
  %v2418 = vunpack.c.h.b16 %v1693
  %v2419 = vunpack.c.l.b16 %v1694
  %v2420 = vunpack.c.h.b16 %v1694
  %v2421 = vunpack.c.l.b16 %v1695
  %v2422 = vunpack.c.h.b16 %v1695
  %v2423 = vunpack.c.l.b16 %v1696
  %v2424 = vunpack.c.h.b16 %v1696
  %v2425 = vunpack.c.l.b16 %v1697
  %v2426 = vunpack.c.h.b16 %v1697
  %v2427 = vunpack.c.l.b16 %v1698
  %v2428 = vunpack.c.h.b16 %v1698
  %v2429 = vunpack.c.l.b16 %v1699
  %v2430 = vunpack.c.h.b16 %v1699
  %v2431 = vunpack.c.l.b16 %v1700
  %v2432 = vunpack.c.h.b16 %v1700
  %v2433 = vunpack.c.l.b16 %v1701
  %v2434 = vunpack.c.h.b16 %v1701
  %v2435 = vunpack.c.l.b16 %v1702
  %v2436 = vunpack.c.h.b16 %v1702
  %v2437 = vunpack.c.l.b16 %v1703
  %v2438 = vunpack.c.h.b16 %v1703
  %v2439 = vunpack.c.l.b16 %v1704
  %v2440 = vunpack.c.h.b16 %v1704
  %v2441 = vunpack.c.l.b16 %v1705
  %v2442 = vunpack.c.h.b16 %v1705
  %v2443 = vunpack.c.l.b16 %v1706
  %v2444 = vunpack.c.h.b16 %v1706
  %v2445 = vunpack.c.l.b16 %v1707
  %v2446 = vunpack.c.h.b16 %v1707
  %v2447 = vunpack.c.l.b16 %v1708
  %v2448 = vunpack.c.h.b16 %v1708
  %v2449 = vunpack.c.l.b16 %v1709
  %v2450 = vunpack.c.h.b16 %v1709
  %v2451 = vunpack.c.l.b16 %v1710
  %v2452 = vunpack.c.h.b16 %v1710
  %v2453 = vunpack.c.l.b16 %v1711
  %v2454 = vunpack.c.h.b16 %v1711
  %v2455 = vunpack.c.l.b16 %v1712
  %v2456 = vunpack.c.h.b16 %v1712
  %v2457 = vunpack.c.l.b16 %v1713
  %v2458 = vunpack.c.h.b16 %v1713
  %v2459 = vunpack.c.l.b16 %v1714
  %v2460 = vunpack.c.h.b16 %v1714
  %v2461 = vunpack.c.l.b16 %v1715
  %v2462 = vunpack.c.h.b16 %v1715
  %v2463 = vunpack.c.l.b16 %v1716
  %v2464 = vunpack.c.h.b16 %v1716
  %v2465 = vunpack.c.l.b16 %v1717
  %v2466 = vunpack.c.h.b16 %v1717
  %v2467 = vunpack.c.l.b16 %v1718
  %v2468 = vunpack.c.h.b16 %v1718
  %v2469 = vunpack.c.l.b16 %v1719
  %v2470 = vunpack.c.h.b16 %v1719
  %v2471 = vunpack.c.l.b16 %v1720
  %v2472 = vunpack.c.h.b16 %v1720
  %v2473 = vunpack.c.l.b16 %v1721
  %v2474 = vunpack.c.h.b16 %v1721
  %v2475 = vunpack.c.l.b16 %v1722
  %v2476 = vunpack.c.h.b16 %v1722
  %v2477 = vunpack.c.l.b16 %v1723
  %v2478 = vunpack.c.h.b16 %v1723
  %v2479 = vunpack.c.l.b16 %v1724
  %v2480 = vunpack.c.h.b16 %v1724
  %v2481 = vunpack.c.l.b16 %v1725
  %v2482 = vunpack.c.h.b16 %v1725
  %v2483 = vunpack.c.l.b16 %v1726
  %v2484 = vunpack.c.h.b16 %v1726
  %v2485 = vunpack.c.l.b16 %v1727
  %v2486 = vunpack.c.h.b16 %v1727
  %v2487 = vunpack.c.l.b16 %v1728
  %v2488 = vunpack.c.h.b16 %v1728
  %v2489 = vunpack.c.l.b16 %v1729
  %v2490 = vunpack.c.h.b16 %v1729
  %v2491 = vunpack.c.l.b16 %v1730
  %v2492 = vunpack.c.h.b16 %v1730
  %v2493 = vunpack.c.l.b16 %v1731
  %v2494 = vunpack.c.h.b16 %v1731
  %v2495 = vunpack.c.l.b16 %v1732
  %v2496 = vunpack.c.h.b16 %v1732
  %v2497 = vunpack.c.l.b16 %v1733
  %v2498 = vunpack.c.h.b16 %v1733
  %v2499 = vunpack.c.l.b16 %v1734
  %v2500 = vunpack.c.h.b16 %v1734
  %v2501 = vunpack.c.l.b16 %v1735
  %v2502 = vunpack.c.h.b16 %v1735
  %v2503 = vunpack.c.l.b16 %v1736
  %v2504 = vunpack.c.h.b16 %v1736
  %v2505 = vpack.c.b16 %v2253, %v2249
  %v2506 = vpack.c.b16 %v2254, %v2250
  %v2507 = vpack.c.b16 %v2255, %v2251
  %v2508 = vpack.c.b16 %v2256, %v2252
  %v2509 = vpack.c.b16 %v2261, %v2257
  %v2510 = vpack.c.b16 %v2262, %v2258
  %v2511 = vpack.c.b16 %v2263, %v2259
  %v2512 = vpack.c.b16 %v2264, %v2260
  %v2513 = vpack.c.b16 %v2269, %v2265
  %v2514 = vpack.c.b16 %v2270, %v2266
  %v2515 = vpack.c.b16 %v2271, %v2267
  %v2516 = vpack.c.b16 %v2272, %v2268
  %v2517 = vpack.c.b16 %v2277, %v2273
  %v2518 = vpack.c.b16 %v2278, %v2274
  %v2519 = vpack.c.b16 %v2279, %v2275
  %v2520 = vpack.c.b16 %v2280, %v2276
  %v2521 = vpack.c.b16 %v2285, %v2281
  %v2522 = vpack.c.b16 %v2286, %v2282
  %v2523 = vpack.c.b16 %v2287, %v2283
  %v2524 = vpack.c.b16 %v2288, %v2284
  %v2525 = vpack.c.b16 %v2293, %v2289
  %v2526 = vpack.c.b16 %v2294, %v2290
  %v2527 = vpack.c.b16 %v2295, %v2291
  %v2528 = vpack.c.b16 %v2296, %v2292
  %v2529 = vpack.c.b16 %v2301, %v2297
  %v2530 = vpack.c.b16 %v2302, %v2298
  %v2531 = vpack.c.b16 %v2303, %v2299
  %v2532 = vpack.c.b16 %v2304, %v2300
  %v2533 = vpack.c.b16 %v2309, %v2305
  %v2534 = vpack.c.b16 %v2310, %v2306
  %v2535 = vpack.c.b16 %v2311, %v2307
  %v2536 = vpack.c.b16 %v2312, %v2308
  %v2537 = vpack.c.b16 %v2317, %v2313
  %v2538 = vpack.c.b16 %v2318, %v2314
  %v2539 = vpack.c.b16 %v2319, %v2315
  %v2540 = vpack.c.b16 %v2320, %v2316
  %v2541 = vpack.c.b16 %v2325, %v2321
  %v2542 = vpack.c.b16 %v2326, %v2322
  %v2543 = vpack.c.b16 %v2327, %v2323
  %v2544 = vpack.c.b16 %v2328, %v2324
  %v2545 = vpack.c.b16 %v2333, %v2329
  %v2546 = vpack.c.b16 %v2334, %v2330
  %v2547 = vpack.c.b16 %v2335, %v2331
  %v2548 = vpack.c.b16 %v2336, %v2332
  %v2549 = vpack.c.b16 %v2341, %v2337
  %v2550 = vpack.c.b16 %v2342, %v2338
  %v2551 = vpack.c.b16 %v2343, %v2339
  %v2552 = vpack.c.b16 %v2344, %v2340
  %v2553 = vpack.c.b16 %v2349, %v2345
  %v2554 = vpack.c.b16 %v2350, %v2346
  %v2555 = vpack.c.b16 %v2351, %v2347
  %v2556 = vpack.c.b16 %v2352, %v2348
  %v2557 = vpack.c.b16 %v2357, %v2353
  %v2558 = vpack.c.b16 %v2358, %v2354
  %v2559 = vpack.c.b16 %v2359, %v2355
  %v2560 = vpack.c.b16 %v2360, %v2356
  %v2561 = vpack.c.b16 %v2365, %v2361
  %v2562 = vpack.c.b16 %v2366, %v2362
  %v2563 = vpack.c.b16 %v2367, %v2363
  %v2564 = vpack.c.b16 %v2368, %v2364
  %v2565 = vpack.c.b16 %v2373, %v2369
  %v2566 = vpack.c.b16 %v2374, %v2370
  %v2567 = vpack.c.b16 %v2375, %v2371
  %v2568 = vpack.c.b16 %v2376, %v2372
  %v2569 = vpack.c.b16 %v2381, %v2377
  %v2570 = vpack.c.b16 %v2382, %v2378
  %v2571 = vpack.c.b16 %v2383, %v2379
  %v2572 = vpack.c.b16 %v2384, %v2380
  %v2573 = vpack.c.b16 %v2389, %v2385
  %v2574 = vpack.c.b16 %v2390, %v2386
  %v2575 = vpack.c.b16 %v2391, %v2387
  %v2576 = vpack.c.b16 %v2392, %v2388
  %v2577 = vpack.c.b16 %v2397, %v2393
  %v2578 = vpack.c.b16 %v2398, %v2394
  %v2579 = vpack.c.b16 %v2399, %v2395
  %v2580 = vpack.c.b16 %v2400, %v2396
  %v2581 = vpack.c.b16 %v2405, %v2401
  %v2582 = vpack.c.b16 %v2406, %v2402
  %v2583 = vpack.c.b16 %v2407, %v2403
  %v2584 = vpack.c.b16 %v2408, %v2404
  %v2585 = vpack.c.b16 %v2413, %v2409
  %v2586 = vpack.c.b16 %v2414, %v2410
  %v2587 = vpack.c.b16 %v2415, %v2411
  %v2588 = vpack.c.b16 %v2416, %v2412
  %v2589 = vpack.c.b16 %v2421, %v2417
  %v2590 = vpack.c.b16 %v2422, %v2418
  %v2591 = vpack.c.b16 %v2423, %v2419
  %v2592 = vpack.c.b16 %v2424, %v2420
  %v2593 = vpack.c.b16 %v2429, %v2425
  %v2594 = vpack.c.b16 %v2430, %v2426
  %v2595 = vpack.c.b16 %v2431, %v2427
  %v2596 = vpack.c.b16 %v2432, %v2428
  %v2597 = vpack.c.b16 %v2437, %v2433
  %v2598 = vpack.c.b16 %v2438, %v2434
  %v2599 = vpack.c.b16 %v2439, %v2435
  %v2600 = vpack.c.b16 %v2440, %v2436
  %v2601 = vpack.c.b16 %v2445, %v2441
  %v2602 = vpack.c.b16 %v2446, %v2442
  %v2603 = vpack.c.b16 %v2447, %v2443
  %v2604 = vpack.c.b16 %v2448, %v2444
  %v2605 = vpack.c.b16 %v2453, %v2449
  %v2606 = vpack.c.b16 %v2454, %v2450
  %v2607 = vpack.c.b16 %v2455, %v2451
  %v2608 = vpack.c.b16 %v2456, %v2452
  %v2609 = vpack.c.b16 %v2461, %v2457
  %v2610 = vpack.c.b16 %v2462, %v2458
  %v2611 = vpack.c.b16 %v2463, %v2459
  %v2612 = vpack.c.b16 %v2464, %v2460
  %v2613 = vpack.c.b16 %v2469, %v2465
  %v2614 = vpack.c.b16 %v2470, %v2466
  %v2615 = vpack.c.b16 %v2471, %v2467
  %v2616 = vpack.c.b16 %v2472, %v2468
  %v2617 = vpack.c.b16 %v2477, %v2473
  %v2618 = vpack.c.b16 %v2478, %v2474
  %v2619 = vpack.c.b16 %v2479, %v2475
  %v2620 = vpack.c.b16 %v2480, %v2476
  %v2621 = vpack.c.b16 %v2485, %v2481
  %v2622 = vpack.c.b16 %v2486, %v2482
  %v2623 = vpack.c.b16 %v2487, %v2483
  %v2624 = vpack.c.b16 %v2488, %v2484
  %v2625 = vpack.c.b16 %v2493, %v2489
  %v2626 = vpack.c.b16 %v2494, %v2490
  %v2627 = vpack.c.b16 %v2495, %v2491
  %v2628 = vpack.c.b16 %v2496, %v2492
  %v2629 = vpack.c.b16 %v2501, %v2497
  %v2630 = vpack.c.b16 %v2502, %v2498
  %v2631 = vpack.c.b16 %v2503, %v2499
  %v2632 = vpack.c.b16 %v2504, %v2500
  %2761 = vmatprep.subr.bf16.mxu0 0
  %2762 = vmatpush1.bf16.msra.mxu0 %v1580
  %2763 = vmatprep.subr.bf16.mxu0 0
  %2764 = vmatpush1.bf16.msra.mxu0 %v1579
  %2765 = vmatprep.subr.bf16.mxu0 0
  %2766 = vmatpush1.bf16.msra.mxu0 %v1578
  %2767 = vmatprep.subr.bf16.mxu0 0
  %2768 = vmatpush1.bf16.msra.mxu0 %v1577
  %2769 = vmatprep.subr.bf16.mxu0 0
  %2770 = vmatpush1.bf16.msra.mxu0 %v1576
  %2771 = vmatprep.subr.bf16.mxu0 0
  %2772 = vmatpush1.bf16.msra.mxu0 %v1575
  %2773 = vmatprep.subr.bf16.mxu0 0
  %2774 = vmatpush1.bf16.msra.mxu0 %v1574
  %2775 = vmatprep.subr.bf16.mxu0 0
  %2776 = vmatpush1.bf16.msra.mxu0 %v1573
  %2777 = vmatprep.subr.bf16.mxu0 0
  %2778 = vmatpush2.bf16.msra.mxu0 %v1588
  %2779 = vmatprep.subr.bf16.mxu0 0
  %2780 = vmatpush2.bf16.msra.mxu0 %v1587
  %2781 = vmatprep.subr.bf16.mxu0 0
  %2782 = vmatpush2.bf16.msra.mxu0 %v1586
  %2783 = vmatprep.subr.bf16.mxu0 0
  %2784 = vmatpush2.bf16.msra.mxu0 %v1585
  %2785 = vmatprep.subr.bf16.mxu0 0
  %2786 = vmatpush2.bf16.msra.mxu0 %v1584
  %2787 = vmatprep.subr.bf16.mxu0 0
  %2788 = vmatpush2.bf16.msra.mxu0 %v1583
  %2789 = vmatprep.subr.bf16.mxu0 0
  %2790 = vmatpush2.bf16.msra.mxu0 %v1582
  %2791 = vmatprep.subr.bf16.mxu0 0
  %2792 = vmatpush2.bf16.msra.mxu0 %v1581
  %2793 = vmatprep.mubr.bf16.mxu0 %v2506
  %2794 = vmatmul.mubr.bf16.gmra.mxu0 %v2505
  %v2795 = vpop.f32.mrf.mxu0
  %v2796 = vadd.f32 %v1804, %v2795
  %v2797 = vpop.f32.mrf.mxu0
  %v2798 = vpop.f32.mrf.mxu0
  %v2799 = vadd.f32 %v1809, %v2798
  %v2800 = vpop.f32.mrf.mxu0
  %2801 = vmatprep.mubr.bf16.mxu0 %v2510
  %2802 = vmatmul.mubr.bf16.gmra.mxu0 %v2509
  %v2803 = vpop.f32.mrf.mxu0
  %v2804 = vadd.f32 %v1814, %v2803
  %v2805 = vpop.f32.mrf.mxu0
  %v2806 = vpop.f32.mrf.mxu0
  %v2807 = vadd.f32 %v1819, %v2806
  %v2808 = vpop.f32.mrf.mxu0
  %2809 = vmatprep.mubr.bf16.mxu0 %v2514
  %2810 = vmatmul.mubr.bf16.gmra.mxu0 %v2513
  %v2811 = vpop.f32.mrf.mxu0
  %v2812 = vadd.f32 %v1824, %v2811
  %v2813 = vpop.f32.mrf.mxu0
  %v2814 = vpop.f32.mrf.mxu0
  %v2815 = vadd.f32 %v1829, %v2814
  %v2816 = vpop.f32.mrf.mxu0
  %2817 = vmatprep.mubr.bf16.mxu0 %v2518
  %2818 = vmatmul.mubr.bf16.gmra.mxu0 %v2517
  %v2819 = vpop.f32.mrf.mxu0
  %v2820 = vadd.f32 %v1834, %v2819
  %v2821 = vpop.f32.mrf.mxu0
  %v2822 = vpop.f32.mrf.mxu0
  %v2823 = vadd.f32 %v1839, %v2822
  %v2824 = vpop.f32.mrf.mxu0
  %2825 = vmatprep.mubr.bf16.mxu0 %v2522
  %2826 = vmatmul.mubr.bf16.gmra.mxu0 %v2521
  %v2827 = vpop.f32.mrf.mxu0
  %v2828 = vadd.f32 %v1844, %v2827
  %v2829 = vpop.f32.mrf.mxu0
  %v2830 = vpop.f32.mrf.mxu0
  %v2831 = vadd.f32 %v1849, %v2830
  %v2832 = vpop.f32.mrf.mxu0
  %2833 = vmatprep.mubr.bf16.mxu0 %v2526
  %2834 = vmatmul.mubr.bf16.gmra.mxu0 %v2525
  %v2835 = vpop.f32.mrf.mxu0
  %v2836 = vadd.f32 %v1854, %v2835
  %v2837 = vpop.f32.mrf.mxu0
  %v2838 = vpop.f32.mrf.mxu0
  %v2839 = vadd.f32 %v1859, %v2838
  %v2840 = vpop.f32.mrf.mxu0
  %2841 = vmatprep.mubr.bf16.mxu0 %v2530
  %2842 = vmatmul.mubr.bf16.gmra.mxu0 %v2529
  %v2843 = vpop.f32.mrf.mxu0
  %v2844 = vadd.f32 %v1864, %v2843
  %v2845 = vpop.f32.mrf.mxu0
  %v2846 = vpop.f32.mrf.mxu0
  %v2847 = vadd.f32 %v1869, %v2846
  %v2848 = vpop.f32.mrf.mxu0
  %2849 = vmatprep.mubr.bf16.mxu0 %v2534
  %2850 = vmatmul.mubr.bf16.gmra.mxu0 %v2533
  %v2851 = vpop.f32.mrf.mxu0
  %v2852 = vadd.f32 %v1874, %v2851
  %v2853 = vpop.f32.mrf.mxu0
  %v2854 = vpop.f32.mrf.mxu0
  %v2855 = vadd.f32 %v1879, %v2854
  %v2856 = vpop.f32.mrf.mxu0
  %2857 = vmatprep.mubr.bf16.mxu0 %v2538
  %2858 = vmatmul.mubr.bf16.gmra.mxu0 %v2537
  %v2859 = vpop.f32.mrf.mxu0
  %v2860 = vadd.f32 %v1884, %v2859
  %v2861 = vpop.f32.mrf.mxu0
  %v2862 = vpop.f32.mrf.mxu0
  %v2863 = vadd.f32 %v1889, %v2862
  %v2864 = vpop.f32.mrf.mxu0
  %2865 = vmatprep.mubr.bf16.mxu0 %v2542
  %2866 = vmatmul.mubr.bf16.gmra.mxu0 %v2541
  %v2867 = vpop.f32.mrf.mxu0
  %v2868 = vadd.f32 %v1894, %v2867
  %v2869 = vpop.f32.mrf.mxu0
  %v2870 = vpop.f32.mrf.mxu0
  %v2871 = vadd.f32 %v1899, %v2870
  %v2872 = vpop.f32.mrf.mxu0
  %2873 = vmatprep.mubr.bf16.mxu0 %v2546
  %2874 = vmatmul.mubr.bf16.gmra.mxu0 %v2545
  %v2875 = vpop.f32.mrf.mxu0
  %v2876 = vadd.f32 %v1904, %v2875
  %v2877 = vpop.f32.mrf.mxu0
  %v2878 = vpop.f32.mrf.mxu0
  %v2879 = vadd.f32 %v1909, %v2878
  %v2880 = vpop.f32.mrf.mxu0
  %2881 = vmatprep.mubr.bf16.mxu0 %v2550
  %2882 = vmatmul.mubr.bf16.gmra.mxu0 %v2549
  %v2883 = vpop.f32.mrf.mxu0
  %v2884 = vadd.f32 %v1914, %v2883
  %v2885 = vpop.f32.mrf.mxu0
  %v2886 = vpop.f32.mrf.mxu0
  %v2887 = vadd.f32 %v1919, %v2886
  %v2888 = vpop.f32.mrf.mxu0
  %2889 = vmatprep.mubr.bf16.mxu0 %v2554
  %2890 = vmatmul.mubr.bf16.gmra.mxu0 %v2553
  %v2891 = vpop.f32.mrf.mxu0
  %v2892 = vadd.f32 %v1924, %v2891
  %v2893 = vpop.f32.mrf.mxu0
  %v2894 = vpop.f32.mrf.mxu0
  %v2895 = vadd.f32 %v1929, %v2894
  %v2896 = vpop.f32.mrf.mxu0
  %2897 = vmatprep.mubr.bf16.mxu0 %v2558
  %2898 = vmatmul.mubr.bf16.gmra.mxu0 %v2557
  %v2899 = vpop.f32.mrf.mxu0
  %v2900 = vadd.f32 %v1934, %v2899
  %v2901 = vpop.f32.mrf.mxu0
  %v2902 = vpop.f32.mrf.mxu0
  %v2903 = vadd.f32 %v1939, %v2902
  %v2904 = vpop.f32.mrf.mxu0
  %2905 = vmatprep.mubr.bf16.mxu0 %v2562
  %2906 = vmatmul.mubr.bf16.gmra.mxu0 %v2561
  %v2907 = vpop.f32.mrf.mxu0
  %v2908 = vadd.f32 %v1944, %v2907
  %v2909 = vpop.f32.mrf.mxu0
  %v2910 = vpop.f32.mrf.mxu0
  %v2911 = vadd.f32 %v1949, %v2910
  %v2912 = vpop.f32.mrf.mxu0
  %2913 = vmatprep.mubr.bf16.mxu0 %v2566
  %2914 = vmatmul.mubr.bf16.gmra.mxu0 %v2565
  %v2915 = vpop.f32.mrf.mxu0
  %v2916 = vadd.f32 %v1954, %v2915
  %v2917 = vpop.f32.mrf.mxu0
  %v2918 = vpop.f32.mrf.mxu0
  %v2919 = vadd.f32 %v1959, %v2918
  %v2920 = vpop.f32.mrf.mxu0
  %2921 = vmatprep.mubr.bf16.mxu0 %v2570
  %2922 = vmatmul.mubr.bf16.gmra.mxu0 %v2569
  %v2923 = vpop.f32.mrf.mxu0
  %v2924 = vadd.f32 %v1964, %v2923
  %v2925 = vpop.f32.mrf.mxu0
  %v2926 = vpop.f32.mrf.mxu0
  %v2927 = vadd.f32 %v1969, %v2926
  %v2928 = vpop.f32.mrf.mxu0
  %2929 = vmatprep.mubr.bf16.mxu0 %v2574
  %2930 = vmatmul.mubr.bf16.gmra.mxu0 %v2573
  %v2931 = vpop.f32.mrf.mxu0
  %v2932 = vadd.f32 %v1974, %v2931
  %v2933 = vpop.f32.mrf.mxu0
  %v2934 = vpop.f32.mrf.mxu0
  %v2935 = vadd.f32 %v1979, %v2934
  %v2936 = vpop.f32.mrf.mxu0
  %2937 = vmatprep.mubr.bf16.mxu0 %v2578
  %2938 = vmatmul.mubr.bf16.gmra.mxu0 %v2577
  %v2939 = vpop.f32.mrf.mxu0
  %v2940 = vadd.f32 %v1984, %v2939
  %v2941 = vpop.f32.mrf.mxu0
  %v2942 = vpop.f32.mrf.mxu0
  %v2943 = vadd.f32 %v1989, %v2942
  %v2944 = vpop.f32.mrf.mxu0
  %2945 = vmatprep.mubr.bf16.mxu0 %v2582
  %2946 = vmatmul.mubr.bf16.gmra.mxu0 %v2581
  %v2947 = vpop.f32.mrf.mxu0
  %v2948 = vadd.f32 %v1994, %v2947
  %v2949 = vpop.f32.mrf.mxu0
  %v2950 = vpop.f32.mrf.mxu0
  %v2951 = vadd.f32 %v1999, %v2950
  %v2952 = vpop.f32.mrf.mxu0
  %2953 = vmatprep.mubr.bf16.mxu0 %v2586
  %2954 = vmatmul.mubr.bf16.gmra.mxu0 %v2585
  %v2955 = vpop.f32.mrf.mxu0
  %v2956 = vadd.f32 %v2004, %v2955
  %v2957 = vpop.f32.mrf.mxu0
  %v2958 = vpop.f32.mrf.mxu0
  %v2959 = vadd.f32 %v2009, %v2958
  %v2960 = vpop.f32.mrf.mxu0
  %2961 = vmatprep.mubr.bf16.mxu0 %v2590
  %2962 = vmatmul.mubr.bf16.gmra.mxu0 %v2589
  %v2963 = vpop.f32.mrf.mxu0
  %v2964 = vadd.f32 %v2014, %v2963
  %v2965 = vpop.f32.mrf.mxu0
  %v2966 = vpop.f32.mrf.mxu0
  %v2967 = vadd.f32 %v2019, %v2966
  %v2968 = vpop.f32.mrf.mxu0
  %2969 = vmatprep.mubr.bf16.mxu0 %v2594
  %2970 = vmatmul.mubr.bf16.gmra.mxu0 %v2593
  %v2971 = vpop.f32.mrf.mxu0
  %v2972 = vadd.f32 %v2024, %v2971
  %v2973 = vpop.f32.mrf.mxu0
  %v2974 = vpop.f32.mrf.mxu0
  %v2975 = vadd.f32 %v2029, %v2974
  %v2976 = vpop.f32.mrf.mxu0
  %2977 = vmatprep.mubr.bf16.mxu0 %v2598
  %2978 = vmatmul.mubr.bf16.gmra.mxu0 %v2597
  %v2979 = vpop.f32.mrf.mxu0
  %v2980 = vadd.f32 %v2034, %v2979
  %v2981 = vpop.f32.mrf.mxu0
  %v2982 = vpop.f32.mrf.mxu0
  %v2983 = vadd.f32 %v2039, %v2982
  %v2984 = vpop.f32.mrf.mxu0
  %2985 = vmatprep.mubr.bf16.mxu0 %v2602
  %2986 = vmatmul.mubr.bf16.gmra.mxu0 %v2601
  %v2987 = vpop.f32.mrf.mxu0
  %v2988 = vadd.f32 %v2044, %v2987
  %v2989 = vpop.f32.mrf.mxu0
  %v2990 = vpop.f32.mrf.mxu0
  %v2991 = vadd.f32 %v2049, %v2990
  %v2992 = vpop.f32.mrf.mxu0
  %2993 = vmatprep.mubr.bf16.mxu0 %v2606
  %2994 = vmatmul.mubr.bf16.gmra.mxu0 %v2605
  %v2995 = vpop.f32.mrf.mxu0
  %v2996 = vadd.f32 %v2054, %v2995
  %v2997 = vpop.f32.mrf.mxu0
  %v2998 = vpop.f32.mrf.mxu0
  %v2999 = vadd.f32 %v2059, %v2998
  %v3000 = vpop.f32.mrf.mxu0
  %3001 = vmatprep.mubr.bf16.mxu0 %v2610
  %3002 = vmatmul.mubr.bf16.gmra.mxu0 %v2609
  %v3003 = vpop.f32.mrf.mxu0
  %v3004 = vadd.f32 %v2064, %v3003
  %v3005 = vpop.f32.mrf.mxu0
  %v3006 = vpop.f32.mrf.mxu0
  %v3007 = vadd.f32 %v2069, %v3006
  %v3008 = vpop.f32.mrf.mxu0
  %3009 = vmatprep.mubr.bf16.mxu0 %v2614
  %3010 = vmatmul.mubr.bf16.gmra.mxu0 %v2613
  %v3011 = vpop.f32.mrf.mxu0
  %v3012 = vadd.f32 %v2074, %v3011
  %v3013 = vpop.f32.mrf.mxu0
  %v3014 = vpop.f32.mrf.mxu0
  %v3015 = vadd.f32 %v2079, %v3014
  %v3016 = vpop.f32.mrf.mxu0
  %3017 = vmatprep.mubr.bf16.mxu0 %v2618
  %3018 = vmatmul.mubr.bf16.gmra.mxu0 %v2617
  %v3019 = vpop.f32.mrf.mxu0
  %v3020 = vadd.f32 %v2084, %v3019
  %v3021 = vpop.f32.mrf.mxu0
  %v3022 = vpop.f32.mrf.mxu0
  %v3023 = vadd.f32 %v2089, %v3022
  %v3024 = vpop.f32.mrf.mxu0
  %3025 = vmatprep.mubr.bf16.mxu0 %v2622
  %3026 = vmatmul.mubr.bf16.gmra.mxu0 %v2621
  %v3027 = vpop.f32.mrf.mxu0
  %v3028 = vadd.f32 %v2094, %v3027
  %v3029 = vpop.f32.mrf.mxu0
  %v3030 = vpop.f32.mrf.mxu0
  %v3031 = vadd.f32 %v2099, %v3030
  %v3032 = vpop.f32.mrf.mxu0
  %3033 = vmatprep.mubr.bf16.mxu0 %v2626
  %3034 = vmatmul.mubr.bf16.gmra.mxu0 %v2625
  %v3035 = vpop.f32.mrf.mxu0
  %v3036 = vadd.f32 %v2104, %v3035
  %v3037 = vpop.f32.mrf.mxu0
  %v3038 = vpop.f32.mrf.mxu0
  %v3039 = vadd.f32 %v2109, %v3038
  %v3040 = vpop.f32.mrf.mxu0
  %3041 = vmatprep.mubr.bf16.mxu0 %v2630
  %3042 = vmatmul.mubr.bf16.gmra.mxu0 %v2629
  %v3043 = vpop.f32.mrf.mxu0
  %v3044 = vadd.f32 %v2114, %v3043
  %v3045 = vpop.f32.mrf.mxu0
  %v3046 = vpop.f32.mrf.mxu0
  %v3047 = vadd.f32 %v2119, %v3046
  %v3048 = vpop.f32.mrf.mxu0
  %3049 = vdwg.mxu0
  %3050 = vmatprep.subr.bf16.mxu0 0
  %3051 = vmatpush1.bf16.msra.mxu0 %v1596
  %3052 = vmatprep.subr.bf16.mxu0 0
  %3053 = vmatpush1.bf16.msra.mxu0 %v1595
  %3054 = vmatprep.subr.bf16.mxu0 0
  %3055 = vmatpush1.bf16.msra.mxu0 %v1594
  %3056 = vmatprep.subr.bf16.mxu0 0
  %3057 = vmatpush1.bf16.msra.mxu0 %v1593
  %3058 = vmatprep.subr.bf16.mxu0 0
  %3059 = vmatpush1.bf16.msra.mxu0 %v1592
  %3060 = vmatprep.subr.bf16.mxu0 0
  %3061 = vmatpush1.bf16.msra.mxu0 %v1591
  %3062 = vmatprep.subr.bf16.mxu0 0
  %3063 = vmatpush1.bf16.msra.mxu0 %v1590
  %3064 = vmatprep.subr.bf16.mxu0 0
  %3065 = vmatpush1.bf16.msra.mxu0 %v1589
  %3066 = vmatprep.subr.bf16.mxu0 0
  %3067 = vmatpush2.bf16.msra.mxu0 %v1604
  %3068 = vmatprep.subr.bf16.mxu0 0
  %3069 = vmatpush2.bf16.msra.mxu0 %v1603
  %3070 = vmatprep.subr.bf16.mxu0 0
  %3071 = vmatpush2.bf16.msra.mxu0 %v1602
  %3072 = vmatprep.subr.bf16.mxu0 0
  %3073 = vmatpush2.bf16.msra.mxu0 %v1601
  %3074 = vmatprep.subr.bf16.mxu0 0
  %3075 = vmatpush2.bf16.msra.mxu0 %v1600
  %3076 = vmatprep.subr.bf16.mxu0 0
  %3077 = vmatpush2.bf16.msra.mxu0 %v1599
  %3078 = vmatprep.subr.bf16.mxu0 0
  %3079 = vmatpush2.bf16.msra.mxu0 %v1598
  %3080 = vmatprep.subr.bf16.mxu0 0
  %3081 = vmatpush2.bf16.msra.mxu0 %v1597
  %3082 = vmatprep.mubr.bf16.mxu0 %v2508
  %3083 = vmatmul.mubr.bf16.gmra.mxu0 %v2507
  %v3084 = vpop.f32.mrf.mxu0
  %v3085 = vadd.f32 %v2796, %v3084
  %v3086 = vpop.f32.mrf.mxu0
  %v3087 = vpop.f32.mrf.mxu0
  %v3088 = vadd.f32 %v2799, %v3087
  %v3089 = vpop.f32.mrf.mxu0
  %3090 = vmatprep.mubr.bf16.mxu0 %v2512
  %3091 = vmatmul.mubr.bf16.gmra.mxu0 %v2511
  %v3092 = vpop.f32.mrf.mxu0
  %v3093 = vadd.f32 %v2804, %v3092
  %v3094 = vpop.f32.mrf.mxu0
  %v3095 = vpop.f32.mrf.mxu0
  %v3096 = vadd.f32 %v2807, %v3095
  %v3097 = vpop.f32.mrf.mxu0
  %3098 = vmatprep.mubr.bf16.mxu0 %v2516
  %3099 = vmatmul.mubr.bf16.gmra.mxu0 %v2515
  %v3100 = vpop.f32.mrf.mxu0
  %v3101 = vadd.f32 %v2812, %v3100
  %v3102 = vpop.f32.mrf.mxu0
  %v3103 = vpop.f32.mrf.mxu0
  %v3104 = vadd.f32 %v2815, %v3103
  %v3105 = vpop.f32.mrf.mxu0
  %3106 = vmatprep.mubr.bf16.mxu0 %v2520
  %3107 = vmatmul.mubr.bf16.gmra.mxu0 %v2519
  %v3108 = vpop.f32.mrf.mxu0
  %v3109 = vadd.f32 %v2820, %v3108
  %v3110 = vpop.f32.mrf.mxu0
  %v3111 = vpop.f32.mrf.mxu0
  %v3112 = vadd.f32 %v2823, %v3111
  %v3113 = vpop.f32.mrf.mxu0
  %3114 = vmatprep.mubr.bf16.mxu0 %v2524
  %3115 = vmatmul.mubr.bf16.gmra.mxu0 %v2523
  %v3116 = vpop.f32.mrf.mxu0
  %v3117 = vadd.f32 %v2828, %v3116
  %v3118 = vpop.f32.mrf.mxu0
  %v3119 = vpop.f32.mrf.mxu0
  %v3120 = vadd.f32 %v2831, %v3119
  %v3121 = vpop.f32.mrf.mxu0
  %3122 = vmatprep.mubr.bf16.mxu0 %v2528
  %3123 = vmatmul.mubr.bf16.gmra.mxu0 %v2527
  %v3124 = vpop.f32.mrf.mxu0
  %v3125 = vadd.f32 %v2836, %v3124
  %v3126 = vpop.f32.mrf.mxu0
  %v3127 = vpop.f32.mrf.mxu0
  %v3128 = vadd.f32 %v2839, %v3127
  %v3129 = vpop.f32.mrf.mxu0
  %3130 = vmatprep.mubr.bf16.mxu0 %v2532
  %3131 = vmatmul.mubr.bf16.gmra.mxu0 %v2531
  %v3132 = vpop.f32.mrf.mxu0
  %v3133 = vadd.f32 %v2844, %v3132
  %v3134 = vpop.f32.mrf.mxu0
  %v3135 = vpop.f32.mrf.mxu0
  %v3136 = vadd.f32 %v2847, %v3135
  %v3137 = vpop.f32.mrf.mxu0
  %3138 = vmatprep.mubr.bf16.mxu0 %v2536
  %3139 = vmatmul.mubr.bf16.gmra.mxu0 %v2535
  %v3140 = vpop.f32.mrf.mxu0
  %v3141 = vadd.f32 %v2852, %v3140
  %v3142 = vpop.f32.mrf.mxu0
  %v3143 = vpop.f32.mrf.mxu0
  %v3144 = vadd.f32 %v2855, %v3143
  %v3145 = vpop.f32.mrf.mxu0
  %3146 = vmatprep.mubr.bf16.mxu0 %v2540
  %3147 = vmatmul.mubr.bf16.gmra.mxu0 %v2539
  %v3148 = vpop.f32.mrf.mxu0
  %v3149 = vadd.f32 %v2860, %v3148
  %v3150 = vpop.f32.mrf.mxu0
  %v3151 = vpop.f32.mrf.mxu0
  %v3152 = vadd.f32 %v2863, %v3151
  %v3153 = vpop.f32.mrf.mxu0
  %3154 = vmatprep.mubr.bf16.mxu0 %v2544
  %3155 = vmatmul.mubr.bf16.gmra.mxu0 %v2543
  %v3156 = vpop.f32.mrf.mxu0
  %v3157 = vadd.f32 %v2868, %v3156
  %v3158 = vpop.f32.mrf.mxu0
  %v3159 = vpop.f32.mrf.mxu0
  %v3160 = vadd.f32 %v2871, %v3159
  %v3161 = vpop.f32.mrf.mxu0
  %3162 = vmatprep.mubr.bf16.mxu0 %v2548
  %3163 = vmatmul.mubr.bf16.gmra.mxu0 %v2547
  %v3164 = vpop.f32.mrf.mxu0
  %v3165 = vadd.f32 %v2876, %v3164
  %v3166 = vpop.f32.mrf.mxu0
  %v3167 = vpop.f32.mrf.mxu0
  %v3168 = vadd.f32 %v2879, %v3167
  %v3169 = vpop.f32.mrf.mxu0
  %3170 = vmatprep.mubr.bf16.mxu0 %v2552
  %3171 = vmatmul.mubr.bf16.gmra.mxu0 %v2551
  %v3172 = vpop.f32.mrf.mxu0
  %v3173 = vadd.f32 %v2884, %v3172
  %v3174 = vpop.f32.mrf.mxu0
  %v3175 = vpop.f32.mrf.mxu0
  %v3176 = vadd.f32 %v2887, %v3175
  %v3177 = vpop.f32.mrf.mxu0
  %3178 = vmatprep.mubr.bf16.mxu0 %v2556
  %3179 = vmatmul.mubr.bf16.gmra.mxu0 %v2555
  %v3180 = vpop.f32.mrf.mxu0
  %v3181 = vadd.f32 %v2892, %v3180
  %v3182 = vpop.f32.mrf.mxu0
  %v3183 = vpop.f32.mrf.mxu0
  %v3184 = vadd.f32 %v2895, %v3183
  %v3185 = vpop.f32.mrf.mxu0
  %3186 = vmatprep.mubr.bf16.mxu0 %v2560
  %3187 = vmatmul.mubr.bf16.gmra.mxu0 %v2559
  %v3188 = vpop.f32.mrf.mxu0
  %v3189 = vadd.f32 %v2900, %v3188
  %v3190 = vpop.f32.mrf.mxu0
  %v3191 = vpop.f32.mrf.mxu0
  %v3192 = vadd.f32 %v2903, %v3191
  %v3193 = vpop.f32.mrf.mxu0
  %3194 = vmatprep.mubr.bf16.mxu0 %v2564
  %3195 = vmatmul.mubr.bf16.gmra.mxu0 %v2563
  %v3196 = vpop.f32.mrf.mxu0
  %v3197 = vadd.f32 %v2908, %v3196
  %v3198 = vpop.f32.mrf.mxu0
  %v3199 = vpop.f32.mrf.mxu0
  %v3200 = vadd.f32 %v2911, %v3199
  %v3201 = vpop.f32.mrf.mxu0
  %3202 = vmatprep.mubr.bf16.mxu0 %v2568
  %3203 = vmatmul.mubr.bf16.gmra.mxu0 %v2567
  %v3204 = vpop.f32.mrf.mxu0
  %v3205 = vadd.f32 %v2916, %v3204
  %v3206 = vpop.f32.mrf.mxu0
  %v3207 = vpop.f32.mrf.mxu0
  %v3208 = vadd.f32 %v2919, %v3207
  %v3209 = vpop.f32.mrf.mxu0
  %3210 = vmatprep.mubr.bf16.mxu0 %v2572
  %3211 = vmatmul.mubr.bf16.gmra.mxu0 %v2571
  %v3212 = vpop.f32.mrf.mxu0
  %v3213 = vadd.f32 %v2924, %v3212
  %v3214 = vpop.f32.mrf.mxu0
  %v3215 = vpop.f32.mrf.mxu0
  %v3216 = vadd.f32 %v2927, %v3215
  %v3217 = vpop.f32.mrf.mxu0
  %3218 = vmatprep.mubr.bf16.mxu0 %v2576
  %3219 = vmatmul.mubr.bf16.gmra.mxu0 %v2575
  %v3220 = vpop.f32.mrf.mxu0
  %v3221 = vadd.f32 %v2932, %v3220
  %v3222 = vpop.f32.mrf.mxu0
  %v3223 = vpop.f32.mrf.mxu0
  %v3224 = vadd.f32 %v2935, %v3223
  %v3225 = vpop.f32.mrf.mxu0
  %3226 = vmatprep.mubr.bf16.mxu0 %v2580
  %3227 = vmatmul.mubr.bf16.gmra.mxu0 %v2579
  %v3228 = vpop.f32.mrf.mxu0
  %v3229 = vadd.f32 %v2940, %v3228
  %v3230 = vpop.f32.mrf.mxu0
  %v3231 = vpop.f32.mrf.mxu0
  %v3232 = vadd.f32 %v2943, %v3231
  %v3233 = vpop.f32.mrf.mxu0
  %3234 = vmatprep.mubr.bf16.mxu0 %v2584
  %3235 = vmatmul.mubr.bf16.gmra.mxu0 %v2583
  %v3236 = vpop.f32.mrf.mxu0
  %v3237 = vadd.f32 %v2948, %v3236
  %v3238 = vpop.f32.mrf.mxu0
  %v3239 = vpop.f32.mrf.mxu0
  %v3240 = vadd.f32 %v2951, %v3239
  %v3241 = vpop.f32.mrf.mxu0
  %3242 = vmatprep.mubr.bf16.mxu0 %v2588
  %3243 = vmatmul.mubr.bf16.gmra.mxu0 %v2587
  %v3244 = vpop.f32.mrf.mxu0
  %v3245 = vadd.f32 %v2956, %v3244
  %v3246 = vpop.f32.mrf.mxu0
  %v3247 = vpop.f32.mrf.mxu0
  %v3248 = vadd.f32 %v2959, %v3247
  %v3249 = vpop.f32.mrf.mxu0
  %3250 = vmatprep.mubr.bf16.mxu0 %v2592
  %3251 = vmatmul.mubr.bf16.gmra.mxu0 %v2591
  %v3252 = vpop.f32.mrf.mxu0
  %v3253 = vadd.f32 %v2964, %v3252
  %v3254 = vpop.f32.mrf.mxu0
  %v3255 = vpop.f32.mrf.mxu0
  %v3256 = vadd.f32 %v2967, %v3255
  %v3257 = vpop.f32.mrf.mxu0
  %3258 = vmatprep.mubr.bf16.mxu0 %v2596
  %3259 = vmatmul.mubr.bf16.gmra.mxu0 %v2595
  %v3260 = vpop.f32.mrf.mxu0
  %v3261 = vadd.f32 %v2972, %v3260
  %v3262 = vpop.f32.mrf.mxu0
  %v3263 = vpop.f32.mrf.mxu0
  %v3264 = vadd.f32 %v2975, %v3263
  %v3265 = vpop.f32.mrf.mxu0
  %3266 = vmatprep.mubr.bf16.mxu0 %v2600
  %3267 = vmatmul.mubr.bf16.gmra.mxu0 %v2599
  %v3268 = vpop.f32.mrf.mxu0
  %v3269 = vadd.f32 %v2980, %v3268
  %v3270 = vpop.f32.mrf.mxu0
  %v3271 = vpop.f32.mrf.mxu0
  %v3272 = vadd.f32 %v2983, %v3271
  %v3273 = vpop.f32.mrf.mxu0
  %3274 = vmatprep.mubr.bf16.mxu0 %v2604
  %3275 = vmatmul.mubr.bf16.gmra.mxu0 %v2603
  %v3276 = vpop.f32.mrf.mxu0
  %v3277 = vadd.f32 %v2988, %v3276
  %v3278 = vpop.f32.mrf.mxu0
  %v3279 = vpop.f32.mrf.mxu0
  %v3280 = vadd.f32 %v2991, %v3279
  %v3281 = vpop.f32.mrf.mxu0
  %3282 = vmatprep.mubr.bf16.mxu0 %v2608
  %3283 = vmatmul.mubr.bf16.gmra.mxu0 %v2607
  %v3284 = vpop.f32.mrf.mxu0
  %v3285 = vadd.f32 %v2996, %v3284
  %v3286 = vpop.f32.mrf.mxu0
  %v3287 = vpop.f32.mrf.mxu0
  %v3288 = vadd.f32 %v2999, %v3287
  %v3289 = vpop.f32.mrf.mxu0
  %3290 = vmatprep.mubr.bf16.mxu0 %v2612
  %3291 = vmatmul.mubr.bf16.gmra.mxu0 %v2611
  %v3292 = vpop.f32.mrf.mxu0
  %v3293 = vadd.f32 %v3004, %v3292
  %v3294 = vpop.f32.mrf.mxu0
  %v3295 = vpop.f32.mrf.mxu0
  %v3296 = vadd.f32 %v3007, %v3295
  %v3297 = vpop.f32.mrf.mxu0
  %3298 = vmatprep.mubr.bf16.mxu0 %v2616
  %3299 = vmatmul.mubr.bf16.gmra.mxu0 %v2615
  %v3300 = vpop.f32.mrf.mxu0
  %v3301 = vadd.f32 %v3012, %v3300
  %v3302 = vpop.f32.mrf.mxu0
  %v3303 = vpop.f32.mrf.mxu0
  %v3304 = vadd.f32 %v3015, %v3303
  %v3305 = vpop.f32.mrf.mxu0
  %3306 = vmatprep.mubr.bf16.mxu0 %v2620
  %3307 = vmatmul.mubr.bf16.gmra.mxu0 %v2619
  %v3308 = vpop.f32.mrf.mxu0
  %v3309 = vadd.f32 %v3020, %v3308
  %v3310 = vpop.f32.mrf.mxu0
  %v3311 = vpop.f32.mrf.mxu0
  %v3312 = vadd.f32 %v3023, %v3311
  %v3313 = vpop.f32.mrf.mxu0
  %3314 = vmatprep.mubr.bf16.mxu0 %v2624
  %3315 = vmatmul.mubr.bf16.gmra.mxu0 %v2623
  %v3316 = vpop.f32.mrf.mxu0
  %v3317 = vadd.f32 %v3028, %v3316
  %v3318 = vpop.f32.mrf.mxu0
  %v3319 = vpop.f32.mrf.mxu0
  %v3320 = vadd.f32 %v3031, %v3319
  %v3321 = vpop.f32.mrf.mxu0
  %3322 = vmatprep.mubr.bf16.mxu0 %v2628
  %3323 = vmatmul.mubr.bf16.gmra.mxu0 %v2627
  %v3324 = vpop.f32.mrf.mxu0
  %v3325 = vadd.f32 %v3036, %v3324
  %v3326 = vpop.f32.mrf.mxu0
  %v3327 = vpop.f32.mrf.mxu0
  %v3328 = vadd.f32 %v3039, %v3327
  %v3329 = vpop.f32.mrf.mxu0
  %3330 = vmatprep.mubr.bf16.mxu0 %v2632
  %3331 = vmatmul.mubr.bf16.gmra.mxu0 %v2631
  %v3332 = vpop.f32.mrf.mxu0
  %v3333 = vadd.f32 %v3044, %v3332
  %v3334 = vpop.f32.mrf.mxu0
  %v3335 = vpop.f32.mrf.mxu0
  %v3336 = vadd.f32 %v3047, %v3335
  %v3337 = vpop.f32.mrf.mxu0
  %3338 = vdwg.mxu0
  %v3339 = vmax.f32 %v3085, 0.0
  %v3340 = vmax.f32 %v3088, 0.0
  %v3341 = vmax.f32 %v3093, 0.0
  %v3342 = vmax.f32 %v3096, 0.0
  %v3343 = vmax.f32 %v3101, 0.0
  %v3344 = vmax.f32 %v3104, 0.0
  %v3345 = vmax.f32 %v3109, 0.0
  %v3346 = vmax.f32 %v3112, 0.0
  %v3347 = vmax.f32 %v3117, 0.0
  %v3348 = vmax.f32 %v3120, 0.0
  %v3349 = vmax.f32 %v3125, 0.0
  %v3350 = vmax.f32 %v3128, 0.0
  %v3351 = vmax.f32 %v3133, 0.0
  %v3352 = vmax.f32 %v3136, 0.0
  %v3353 = vmax.f32 %v3141, 0.0
  %v3354 = vmax.f32 %v3144, 0.0
  %v3355 = vmax.f32 %v3149, 0.0
  %v3356 = vmax.f32 %v3152, 0.0
  %v3357 = vmax.f32 %v3157, 0.0
  %v3358 = vmax.f32 %v3160, 0.0
  %v3359 = vmax.f32 %v3165, 0.0
  %v3360 = vmax.f32 %v3168, 0.0
  %v3361 = vmax.f32 %v3173, 0.0
  %v3362 = vmax.f32 %v3176, 0.0
  %v3363 = vmax.f32 %v3181, 0.0
  %v3364 = vmax.f32 %v3184, 0.0
  %v3365 = vmax.f32 %v3189, 0.0
  %v3366 = vmax.f32 %v3192, 0.0
  %v3367 = vmax.f32 %v3197, 0.0
  %v3368 = vmax.f32 %v3200, 0.0
  %v3369 = vmax.f32 %v3205, 0.0
  %v3370 = vmax.f32 %v3208, 0.0
  %v3371 = vmax.f32 %v3213, 0.0
  %v3372 = vmax.f32 %v3216, 0.0
  %v3373 = vmax.f32 %v3221, 0.0
  %v3374 = vmax.f32 %v3224, 0.0
  %v3375 = vmax.f32 %v3229, 0.0
  %v3376 = vmax.f32 %v3232, 0.0
  %v3377 = vmax.f32 %v3237, 0.0
  %v3378 = vmax.f32 %v3240, 0.0
  %v3379 = vmax.f32 %v3245, 0.0
  %v3380 = vmax.f32 %v3248, 0.0
  %v3381 = vmax.f32 %v3253, 0.0
  %v3382 = vmax.f32 %v3256, 0.0
  %v3383 = vmax.f32 %v3261, 0.0
  %v3384 = vmax.f32 %v3264, 0.0
  %v3385 = vmax.f32 %v3269, 0.0
  %v3386 = vmax.f32 %v3272, 0.0
  %v3387 = vmax.f32 %v3277, 0.0
  %v3388 = vmax.f32 %v3280, 0.0
  %v3389 = vmax.f32 %v3285, 0.0
  %v3390 = vmax.f32 %v3288, 0.0
  %v3391 = vmax.f32 %v3293, 0.0
  %v3392 = vmax.f32 %v3296, 0.0
  %v3393 = vmax.f32 %v3301, 0.0
  %v3394 = vmax.f32 %v3304, 0.0
  %v3395 = vmax.f32 %v3309, 0.0
  %v3396 = vmax.f32 %v3312, 0.0
  %v3397 = vmax.f32 %v3317, 0.0
  %v3398 = vmax.f32 %v3320, 0.0
  %v3399 = vmax.f32 %v3325, 0.0
  %v3400 = vmax.f32 %v3328, 0.0
  %v3401 = vmax.f32 %v3333, 0.0
  %v3402 = vmax.f32 %v3336, 0.0
  %v3403 = vpack.c.bf16 %v3340, %v3339
  %v3404 = vpack.c.bf16 %v3342, %v3341
  %v3405 = vpack.c.bf16 %v3344, %v3343
  %v3406 = vpack.c.bf16 %v3346, %v3345
  %v3407 = vpack.c.bf16 %v3348, %v3347
  %v3408 = vpack.c.bf16 %v3350, %v3349
  %v3409 = vpack.c.bf16 %v3352, %v3351
  %v3410 = vpack.c.bf16 %v3354, %v3353
  %v3411 = vpack.c.bf16 %v3356, %v3355
  %v3412 = vpack.c.bf16 %v3358, %v3357
  %v3413 = vpack.c.bf16 %v3360, %v3359
  %v3414 = vpack.c.bf16 %v3362, %v3361
  %v3415 = vpack.c.bf16 %v3364, %v3363
  %v3416 = vpack.c.bf16 %v3366, %v3365
  %v3417 = vpack.c.bf16 %v3368, %v3367
  %v3418 = vpack.c.bf16 %v3370, %v3369
  %v3419 = vpack.c.bf16 %v3372, %v3371
  %v3420 = vpack.c.bf16 %v3374, %v3373
  %v3421 = vpack.c.bf16 %v3376, %v3375
  %v3422 = vpack.c.bf16 %v3378, %v3377
  %v3423 = vpack.c.bf16 %v3380, %v3379
  %v3424 = vpack.c.bf16 %v3382, %v3381
  %v3425 = vpack.c.bf16 %v3384, %v3383
  %v3426 = vpack.c.bf16 %v3386, %v3385
  %v3427 = vpack.c.bf16 %v3388, %v3387
  %v3428 = vpack.c.bf16 %v3390, %v3389
  %v3429 = vpack.c.bf16 %v3392, %v3391
  %v3430 = vpack.c.bf16 %v3394, %v3393
  %v3431 = vpack.c.bf16 %v3396, %v3395
  %v3432 = vpack.c.bf16 %v3398, %v3397
  %v3433 = vpack.c.bf16 %v3400, %v3399
  %v3434 = vpack.c.bf16 %v3402, %v3401
  %s3435 = sshll.u32 %s1606, 4
  %3436 = dma.done %s327, %s3435
  %v3437 = vld [vmem:[#allocation4] sm:$0xff]
  %v3438 = vld [vmem:[#allocation4 + $0x8] sm:$0xff]
  %v3439 = vld [vmem:[#allocation4 + $0x10] sm:$0xff]
  %v3440 = vld [vmem:[#allocation4 + $0x18] sm:$0xff]
  %v3441 = vld [vmem:[#allocation4 + $0x20] sm:$0xff]
  %v3442 = vld [vmem:[#allocation4 + $0x28] sm:$0xff]
  %v3443 = vld [vmem:[#allocation4 + $0x30] sm:$0xff]
  %v3444 = vld [vmem:[#allocation4 + $0x38] sm:$0xff]
  %v3445 = vld [vmem:[#allocation4 + $0x40] sm:$0xff]
  %v3446 = vld [vmem:[#allocation4 + $0x48] sm:$0xff]
  %v3447 = vld [vmem:[#allocation4 + $0x50] sm:$0xff]
  %v3448 = vld [vmem:[#allocation4 + $0x58] sm:$0xff]
  %v3449 = vld [vmem:[#allocation4 + $0x60] sm:$0xff]
  %v3450 = vld [vmem:[#allocation4 + $0x68] sm:$0xff]
  %v3451 = vld [vmem:[#allocation4 + $0x70] sm:$0xff]
  %v3452 = vld [vmem:[#allocation4 + $0x78] sm:$0xff]
  %v3453 = vld [vmem:[#allocation4 + $0x80] sm:$0xff]
  %v3454 = vld [vmem:[#allocation4 + $0x88] sm:$0xff]
  %v3455 = vld [vmem:[#allocation4 + $0x90] sm:$0xff]
  %v3456 = vld [vmem:[#allocation4 + $0x98] sm:$0xff]
  %v3457 = vld [vmem:[#allocation4 + $0xa0] sm:$0xff]
  %v3458 = vld [vmem:[#allocation4 + $0xa8] sm:$0xff]
  %v3459 = vld [vmem:[#allocation4 + $0xb0] sm:$0xff]
  %v3460 = vld [vmem:[#allocation4 + $0xb8] sm:$0xff]
  %v3461 = vld [vmem:[#allocation4 + $0xc0] sm:$0xff]
  %v3462 = vld [vmem:[#allocation4 + $0xc8] sm:$0xff]
  %v3463 = vld [vmem:[#allocation4 + $0xd0] sm:$0xff]
  %v3464 = vld [vmem:[#allocation4 + $0xd8] sm:$0xff]
  %v3465 = vld [vmem:[#allocation4 + $0xe0] sm:$0xff]
  %v3466 = vld [vmem:[#allocation4 + $0xe8] sm:$0xff]
  %v3467 = vld [vmem:[#allocation4 + $0xf0] sm:$0xff]
  %v3468 = vld [vmem:[#allocation4 + $0xf8] sm:$0xff]
  %v3469 = vld [vmem:[#allocation4 + $0x100] sm:$0xff]
  %v3470 = vld [vmem:[#allocation4 + $0x108] sm:$0xff]
  %v3471 = vld [vmem:[#allocation4 + $0x110] sm:$0xff]
  %v3472 = vld [vmem:[#allocation4 + $0x118] sm:$0xff]
  %v3473 = vld [vmem:[#allocation4 + $0x120] sm:$0xff]
  %v3474 = vld [vmem:[#allocation4 + $0x128] sm:$0xff]
  %v3475 = vld [vmem:[#allocation4 + $0x130] sm:$0xff]
  %v3476 = vld [vmem:[#allocation4 + $0x138] sm:$0xff]
  %v3477 = vld [vmem:[#allocation4 + $0x140] sm:$0xff]
  %v3478 = vld [vmem:[#allocation4 + $0x148] sm:$0xff]
  %v3479 = vld [vmem:[#allocation4 + $0x150] sm:$0xff]
  %v3480 = vld [vmem:[#allocation4 + $0x158] sm:$0xff]
  %v3481 = vld [vmem:[#allocation4 + $0x160] sm:$0xff]
  %v3482 = vld [vmem:[#allocation4 + $0x168] sm:$0xff]
  %v3483 = vld [vmem:[#allocation4 + $0x170] sm:$0xff]
  %v3484 = vld [vmem:[#allocation4 + $0x178] sm:$0xff]
  %v3485 = vld [vmem:[#allocation4 + $0x180] sm:$0xff]
  %v3486 = vld [vmem:[#allocation4 + $0x188] sm:$0xff]
  %v3487 = vld [vmem:[#allocation4 + $0x190] sm:$0xff]
  %v3488 = vld [vmem:[#allocation4 + $0x198] sm:$0xff]
  %v3489 = vld [vmem:[#allocation4 + $0x1a0] sm:$0xff]
  %v3490 = vld [vmem:[#allocation4 + $0x1a8] sm:$0xff]
  %v3491 = vld [vmem:[#allocation4 + $0x1b0] sm:$0xff]
  %v3492 = vld [vmem:[#allocation4 + $0x1b8] sm:$0xff]
  %v3493 = vld [vmem:[#allocation4 + $0x1c0] sm:$0xff]
  %v3494 = vld [vmem:[#allocation4 + $0x1c8] sm:$0xff]
  %v3495 = vld [vmem:[#allocation4 + $0x1d0] sm:$0xff]
  %v3496 = vld [vmem:[#allocation4 + $0x1d8] sm:$0xff]
  %v3497 = vld [vmem:[#allocation4 + $0x1e0] sm:$0xff]
  %v3498 = vld [vmem:[#allocation4 + $0x1e8] sm:$0xff]
  %v3499 = vld [vmem:[#allocation4 + $0x1f0] sm:$0xff]
  %v3500 = vld [vmem:[#allocation4 + $0x1f8] sm:$0xff]
  %v3501 = vld [vmem:[#allocation4 + $0x200] sm:$0xff]
  %v3502 = vld [vmem:[#allocation4 + $0x208] sm:$0xff]
  %v3503 = vld [vmem:[#allocation4 + $0x210] sm:$0xff]
  %v3504 = vld [vmem:[#allocation4 + $0x218] sm:$0xff]
  %v3505 = vld [vmem:[#allocation4 + $0x220] sm:$0xff]
  %v3506 = vld [vmem:[#allocation4 + $0x228] sm:$0xff]
  %v3507 = vld [vmem:[#allocation4 + $0x230] sm:$0xff]
  %v3508 = vld [vmem:[#allocation4 + $0x238] sm:$0xff]
  %v3509 = vld [vmem:[#allocation4 + $0x240] sm:$0xff]
  %v3510 = vld [vmem:[#allocation4 + $0x248] sm:$0xff]
  %v3511 = vld [vmem:[#allocation4 + $0x250] sm:$0xff]
  %v3512 = vld [vmem:[#allocation4 + $0x258] sm:$0xff]
  %v3513 = vld [vmem:[#allocation4 + $0x260] sm:$0xff]
  %v3514 = vld [vmem:[#allocation4 + $0x268] sm:$0xff]
  %v3515 = vld [vmem:[#allocation4 + $0x270] sm:$0xff]
  %v3516 = vld [vmem:[#allocation4 + $0x278] sm:$0xff]
  %v3517 = vld [vmem:[#allocation4 + $0x280] sm:$0xff]
  %v3518 = vld [vmem:[#allocation4 + $0x288] sm:$0xff]
  %v3519 = vld [vmem:[#allocation4 + $0x290] sm:$0xff]
  %v3520 = vld [vmem:[#allocation4 + $0x298] sm:$0xff]
  %v3521 = vld [vmem:[#allocation4 + $0x2a0] sm:$0xff]
  %v3522 = vld [vmem:[#allocation4 + $0x2a8] sm:$0xff]
  %v3523 = vld [vmem:[#allocation4 + $0x2b0] sm:$0xff]
  %v3524 = vld [vmem:[#allocation4 + $0x2b8] sm:$0xff]
  %v3525 = vld [vmem:[#allocation4 + $0x2c0] sm:$0xff]
  %v3526 = vld [vmem:[#allocation4 + $0x2c8] sm:$0xff]
  %v3527 = vld [vmem:[#allocation4 + $0x2d0] sm:$0xff]
  %v3528 = vld [vmem:[#allocation4 + $0x2d8] sm:$0xff]
  %v3529 = vld [vmem:[#allocation4 + $0x2e0] sm:$0xff]
  %v3530 = vld [vmem:[#allocation4 + $0x2e8] sm:$0xff]
  %v3531 = vld [vmem:[#allocation4 + $0x2f0] sm:$0xff]
  %v3532 = vld [vmem:[#allocation4 + $0x2f8] sm:$0xff]
  %v3533 = vld [vmem:[#allocation4 + $0x300] sm:$0xff]
  %v3534 = vld [vmem:[#allocation4 + $0x308] sm:$0xff]
  %v3535 = vld [vmem:[#allocation4 + $0x310] sm:$0xff]
  %v3536 = vld [vmem:[#allocation4 + $0x318] sm:$0xff]
  %v3537 = vld [vmem:[#allocation4 + $0x320] sm:$0xff]
  %v3538 = vld [vmem:[#allocation4 + $0x328] sm:$0xff]
  %v3539 = vld [vmem:[#allocation4 + $0x330] sm:$0xff]
  %v3540 = vld [vmem:[#allocation4 + $0x338] sm:$0xff]
  %v3541 = vld [vmem:[#allocation4 + $0x340] sm:$0xff]
  %v3542 = vld [vmem:[#allocation4 + $0x348] sm:$0xff]
  %v3543 = vld [vmem:[#allocation4 + $0x350] sm:$0xff]
  %v3544 = vld [vmem:[#allocation4 + $0x358] sm:$0xff]
  %v3545 = vld [vmem:[#allocation4 + $0x360] sm:$0xff]
  %v3546 = vld [vmem:[#allocation4 + $0x368] sm:$0xff]
  %v3547 = vld [vmem:[#allocation4 + $0x370] sm:$0xff]
  %v3548 = vld [vmem:[#allocation4 + $0x378] sm:$0xff]
  %v3549 = vld [vmem:[#allocation4 + $0x380] sm:$0xff]
  %v3550 = vld [vmem:[#allocation4 + $0x388] sm:$0xff]
  %v3551 = vld [vmem:[#allocation4 + $0x390] sm:$0xff]
  %v3552 = vld [vmem:[#allocation4 + $0x398] sm:$0xff]
  %v3553 = vld [vmem:[#allocation4 + $0x3a0] sm:$0xff]
  %v3554 = vld [vmem:[#allocation4 + $0x3a8] sm:$0xff]
  %v3555 = vld [vmem:[#allocation4 + $0x3b0] sm:$0xff]
  %v3556 = vld [vmem:[#allocation4 + $0x3b8] sm:$0xff]
  %v3557 = vld [vmem:[#allocation4 + $0x3c0] sm:$0xff]
  %v3558 = vld [vmem:[#allocation4 + $0x3c8] sm:$0xff]
  %v3559 = vld [vmem:[#allocation4 + $0x3d0] sm:$0xff]
  %v3560 = vld [vmem:[#allocation4 + $0x3d8] sm:$0xff]
  %v3561 = vld [vmem:[#allocation4 + $0x3e0] sm:$0xff]
  %v3562 = vld [vmem:[#allocation4 + $0x3e8] sm:$0xff]
  %v3563 = vld [vmem:[#allocation4 + $0x3f0] sm:$0xff]
  %v3564 = vld [vmem:[#allocation4 + $0x3f8] sm:$0xff]
  %v3565 = vld [vmem:[%s7] sm:$0xff]
  %v3566 = vld [vmem:[%s7 + $0x8] sm:$0xff]
  %v3567 = vld [vmem:[%s7 + $0x10] sm:$0xff]
  %v3568 = vld [vmem:[%s7 + $0x18] sm:$0xff]
  %v3569 = vld [vmem:[%s7 + $0x20] sm:$0xff]
  %v3570 = vld [vmem:[%s7 + $0x28] sm:$0xff]
  %v3571 = vld [vmem:[%s7 + $0x30] sm:$0xff]
  %v3572 = vld [vmem:[%s7 + $0x38] sm:$0xff]
  %v3573 = vld [vmem:[%s7 + $0x40] sm:$0xff]
  %v3574 = vld [vmem:[%s7 + $0x48] sm:$0xff]
  %v3575 = vld [vmem:[%s7 + $0x50] sm:$0xff]
  %v3576 = vld [vmem:[%s7 + $0x58] sm:$0xff]
  %v3577 = vld [vmem:[%s7 + $0x60] sm:$0xff]
  %v3578 = vld [vmem:[%s7 + $0x68] sm:$0xff]
  %v3579 = vld [vmem:[%s7 + $0x70] sm:$0xff]
  %v3580 = vld [vmem:[%s7 + $0x78] sm:$0xff]
  %v3581 = vld [vmem:[%s7 + $0x80] sm:$0xff]
  %v3582 = vld [vmem:[%s7 + $0x88] sm:$0xff]
  %v3583 = vld [vmem:[%s7 + $0x90] sm:$0xff]
  %v3584 = vld [vmem:[%s7 + $0x98] sm:$0xff]
  %v3585 = vld [vmem:[%s7 + $0xa0] sm:$0xff]
  %v3586 = vld [vmem:[%s7 + $0xa8] sm:$0xff]
  %v3587 = vld [vmem:[%s7 + $0xb0] sm:$0xff]
  %v3588 = vld [vmem:[%s7 + $0xb8] sm:$0xff]
  %v3589 = vld [vmem:[%s7 + $0xc0] sm:$0xff]
  %v3590 = vld [vmem:[%s7 + $0xc8] sm:$0xff]
  %v3591 = vld [vmem:[%s7 + $0xd0] sm:$0xff]
  %v3592 = vld [vmem:[%s7 + $0xd8] sm:$0xff]
  %v3593 = vld [vmem:[%s7 + $0xe0] sm:$0xff]
  %v3594 = vld [vmem:[%s7 + $0xe8] sm:$0xff]
  %v3595 = vld [vmem:[%s7 + $0xf0] sm:$0xff]
  %v3596 = vld [vmem:[%s7 + $0xf8] sm:$0xff]
  %v3597 = vld [vmem:[%s7 + $0x100] sm:$0xff]
  %v3598 = vld [vmem:[%s7 + $0x108] sm:$0xff]
  %v3599 = vld [vmem:[%s7 + $0x110] sm:$0xff]
  %v3600 = vld [vmem:[%s7 + $0x118] sm:$0xff]
  %v3601 = vld [vmem:[%s7 + $0x120] sm:$0xff]
  %v3602 = vld [vmem:[%s7 + $0x128] sm:$0xff]
  %v3603 = vld [vmem:[%s7 + $0x130] sm:$0xff]
  %v3604 = vld [vmem:[%s7 + $0x138] sm:$0xff]
  %v3605 = vld [vmem:[%s7 + $0x140] sm:$0xff]
  %v3606 = vld [vmem:[%s7 + $0x148] sm:$0xff]
  %v3607 = vld [vmem:[%s7 + $0x150] sm:$0xff]
  %v3608 = vld [vmem:[%s7 + $0x158] sm:$0xff]
  %v3609 = vld [vmem:[%s7 + $0x160] sm:$0xff]
  %v3610 = vld [vmem:[%s7 + $0x168] sm:$0xff]
  %v3611 = vld [vmem:[%s7 + $0x170] sm:$0xff]
  %v3612 = vld [vmem:[%s7 + $0x178] sm:$0xff]
  %v3613 = vld [vmem:[%s7 + $0x180] sm:$0xff]
  %v3614 = vld [vmem:[%s7 + $0x188] sm:$0xff]
  %v3615 = vld [vmem:[%s7 + $0x190] sm:$0xff]
  %v3616 = vld [vmem:[%s7 + $0x198] sm:$0xff]
  %v3617 = vld [vmem:[%s7 + $0x1a0] sm:$0xff]
  %v3618 = vld [vmem:[%s7 + $0x1a8] sm:$0xff]
  %v3619 = vld [vmem:[%s7 + $0x1b0] sm:$0xff]
  %v3620 = vld [vmem:[%s7 + $0x1b8] sm:$0xff]
  %v3621 = vld [vmem:[%s7 + $0x1c0] sm:$0xff]
  %v3622 = vld [vmem:[%s7 + $0x1c8] sm:$0xff]
  %v3623 = vld [vmem:[%s7 + $0x1d0] sm:$0xff]
  %v3624 = vld [vmem:[%s7 + $0x1d8] sm:$0xff]
  %v3625 = vld [vmem:[%s7 + $0x1e0] sm:$0xff]
  %v3626 = vld [vmem:[%s7 + $0x1e8] sm:$0xff]
  %v3627 = vld [vmem:[%s7 + $0x1f0] sm:$0xff]
  %v3628 = vld [vmem:[%s7 + $0x1f8] sm:$0xff]
  %3630 = vset.pattern.permute.xlu0 0
  %3631 = vperm.xlu0 %3630, %v3565
  %v3632 = vpop.permute.xlu0 %3631
  %3635 = vset.pattern.permute.xlu0 0
  %3636 = vperm.xlu0 %3635, %v3566
  %v3637 = vpop.permute.xlu0 %3636
  %3640 = vset.pattern.permute.xlu0 0
  %3641 = vperm.xlu0 %3640, %v3567
  %v3642 = vpop.permute.xlu0 %3641
  %3645 = vset.pattern.permute.xlu0 0
  %3646 = vperm.xlu0 %3645, %v3568
  %v3647 = vpop.permute.xlu0 %3646
  %3650 = vset.pattern.permute.xlu0 0
  %3651 = vperm.xlu0 %3650, %v3569
  %v3652 = vpop.permute.xlu0 %3651
  %3655 = vset.pattern.permute.xlu0 0
  %3656 = vperm.xlu0 %3655, %v3570
  %v3657 = vpop.permute.xlu0 %3656
  %3660 = vset.pattern.permute.xlu0 0
  %3661 = vperm.xlu0 %3660, %v3571
  %v3662 = vpop.permute.xlu0 %3661
  %3665 = vset.pattern.permute.xlu0 0
  %3666 = vperm.xlu0 %3665, %v3572
  %v3667 = vpop.permute.xlu0 %3666
  %3670 = vset.pattern.permute.xlu0 0
  %3671 = vperm.xlu0 %3670, %v3573
  %v3672 = vpop.permute.xlu0 %3671
  %3675 = vset.pattern.permute.xlu0 0
  %3676 = vperm.xlu0 %3675, %v3574
  %v3677 = vpop.permute.xlu0 %3676
  %3680 = vset.pattern.permute.xlu0 0
  %3681 = vperm.xlu0 %3680, %v3575
  %v3682 = vpop.permute.xlu0 %3681
  %3685 = vset.pattern.permute.xlu0 0
  %3686 = vperm.xlu0 %3685, %v3576
  %v3687 = vpop.permute.xlu0 %3686
  %3690 = vset.pattern.permute.xlu0 0
  %3691 = vperm.xlu0 %3690, %v3577
  %v3692 = vpop.permute.xlu0 %3691
  %3695 = vset.pattern.permute.xlu0 0
  %3696 = vperm.xlu0 %3695, %v3578
  %v3697 = vpop.permute.xlu0 %3696
  %3700 = vset.pattern.permute.xlu0 0
  %3701 = vperm.xlu0 %3700, %v3579
  %v3702 = vpop.permute.xlu0 %3701
  %3705 = vset.pattern.permute.xlu0 0
  %3706 = vperm.xlu0 %3705, %v3580
  %v3707 = vpop.permute.xlu0 %3706
  %3710 = vset.pattern.permute.xlu0 0
  %3711 = vperm.xlu0 %3710, %v3581
  %v3712 = vpop.permute.xlu0 %3711
  %3715 = vset.pattern.permute.xlu0 0
  %3716 = vperm.xlu0 %3715, %v3582
  %v3717 = vpop.permute.xlu0 %3716
  %3720 = vset.pattern.permute.xlu0 0
  %3721 = vperm.xlu0 %3720, %v3583
  %v3722 = vpop.permute.xlu0 %3721
  %3725 = vset.pattern.permute.xlu0 0
  %3726 = vperm.xlu0 %3725, %v3584
  %v3727 = vpop.permute.xlu0 %3726
  %3730 = vset.pattern.permute.xlu0 0
  %3731 = vperm.xlu0 %3730, %v3585
  %v3732 = vpop.permute.xlu0 %3731
  %3735 = vset.pattern.permute.xlu0 0
  %3736 = vperm.xlu0 %3735, %v3586
  %v3737 = vpop.permute.xlu0 %3736
  %3740 = vset.pattern.permute.xlu0 0
  %3741 = vperm.xlu0 %3740, %v3587
  %v3742 = vpop.permute.xlu0 %3741
  %3745 = vset.pattern.permute.xlu0 0
  %3746 = vperm.xlu0 %3745, %v3588
  %v3747 = vpop.permute.xlu0 %3746
  %3750 = vset.pattern.permute.xlu0 0
  %3751 = vperm.xlu0 %3750, %v3589
  %v3752 = vpop.permute.xlu0 %3751
  %3755 = vset.pattern.permute.xlu0 0
  %3756 = vperm.xlu0 %3755, %v3590
  %v3757 = vpop.permute.xlu0 %3756
  %3760 = vset.pattern.permute.xlu0 0
  %3761 = vperm.xlu0 %3760, %v3591
  %v3762 = vpop.permute.xlu0 %3761
  %3765 = vset.pattern.permute.xlu0 0
  %3766 = vperm.xlu0 %3765, %v3592
  %v3767 = vpop.permute.xlu0 %3766
  %3770 = vset.pattern.permute.xlu0 0
  %3771 = vperm.xlu0 %3770, %v3593
  %v3772 = vpop.permute.xlu0 %3771
  %3775 = vset.pattern.permute.xlu0 0
  %3776 = vperm.xlu0 %3775, %v3594
  %v3777 = vpop.permute.xlu0 %3776
  %3780 = vset.pattern.permute.xlu0 0
  %3781 = vperm.xlu0 %3780, %v3595
  %v3782 = vpop.permute.xlu0 %3781
  %3785 = vset.pattern.permute.xlu0 0
  %3786 = vperm.xlu0 %3785, %v3596
  %v3787 = vpop.permute.xlu0 %3786
  %3790 = vset.pattern.permute.xlu0 0
  %3791 = vperm.xlu0 %3790, %v3597
  %v3792 = vpop.permute.xlu0 %3791
  %3795 = vset.pattern.permute.xlu0 0
  %3796 = vperm.xlu0 %3795, %v3598
  %v3797 = vpop.permute.xlu0 %3796
  %3800 = vset.pattern.permute.xlu0 0
  %3801 = vperm.xlu0 %3800, %v3599
  %v3802 = vpop.permute.xlu0 %3801
  %3805 = vset.pattern.permute.xlu0 0
  %3806 = vperm.xlu0 %3805, %v3600
  %v3807 = vpop.permute.xlu0 %3806
  %3810 = vset.pattern.permute.xlu0 0
  %3811 = vperm.xlu0 %3810, %v3601
  %v3812 = vpop.permute.xlu0 %3811
  %3815 = vset.pattern.permute.xlu0 0
  %3816 = vperm.xlu0 %3815, %v3602
  %v3817 = vpop.permute.xlu0 %3816
  %3820 = vset.pattern.permute.xlu0 0
  %3821 = vperm.xlu0 %3820, %v3603
  %v3822 = vpop.permute.xlu0 %3821
  %3825 = vset.pattern.permute.xlu0 0
  %3826 = vperm.xlu0 %3825, %v3604
  %v3827 = vpop.permute.xlu0 %3826
  %3830 = vset.pattern.permute.xlu0 0
  %3831 = vperm.xlu0 %3830, %v3605
  %v3832 = vpop.permute.xlu0 %3831
  %3835 = vset.pattern.permute.xlu0 0
  %3836 = vperm.xlu0 %3835, %v3606
  %v3837 = vpop.permute.xlu0 %3836
  %3840 = vset.pattern.permute.xlu0 0
  %3841 = vperm.xlu0 %3840, %v3607
  %v3842 = vpop.permute.xlu0 %3841
  %3845 = vset.pattern.permute.xlu0 0
  %3846 = vperm.xlu0 %3845, %v3608
  %v3847 = vpop.permute.xlu0 %3846
  %3850 = vset.pattern.permute.xlu0 0
  %3851 = vperm.xlu0 %3850, %v3609
  %v3852 = vpop.permute.xlu0 %3851
  %3855 = vset.pattern.permute.xlu0 0
  %3856 = vperm.xlu0 %3855, %v3610
  %v3857 = vpop.permute.xlu0 %3856
  %3860 = vset.pattern.permute.xlu0 0
  %3861 = vperm.xlu0 %3860, %v3611
  %v3862 = vpop.permute.xlu0 %3861
  %3865 = vset.pattern.permute.xlu0 0
  %3866 = vperm.xlu0 %3865, %v3612
  %v3867 = vpop.permute.xlu0 %3866
  %3870 = vset.pattern.permute.xlu0 0
  %3871 = vperm.xlu0 %3870, %v3613
  %v3872 = vpop.permute.xlu0 %3871
  %3875 = vset.pattern.permute.xlu0 0
  %3876 = vperm.xlu0 %3875, %v3614
  %v3877 = vpop.permute.xlu0 %3876
  %3880 = vset.pattern.permute.xlu0 0
  %3881 = vperm.xlu0 %3880, %v3615
  %v3882 = vpop.permute.xlu0 %3881
  %3885 = vset.pattern.permute.xlu0 0
  %3886 = vperm.xlu0 %3885, %v3616
  %v3887 = vpop.permute.xlu0 %3886
  %3890 = vset.pattern.permute.xlu0 0
  %3891 = vperm.xlu0 %3890, %v3617
  %v3892 = vpop.permute.xlu0 %3891
  %3895 = vset.pattern.permute.xlu0 0
  %3896 = vperm.xlu0 %3895, %v3618
  %v3897 = vpop.permute.xlu0 %3896
  %3900 = vset.pattern.permute.xlu0 0
  %3901 = vperm.xlu0 %3900, %v3619
  %v3902 = vpop.permute.xlu0 %3901
  %3905 = vset.pattern.permute.xlu0 0
  %3906 = vperm.xlu0 %3905, %v3620
  %v3907 = vpop.permute.xlu0 %3906
  %3910 = vset.pattern.permute.xlu0 0
  %3911 = vperm.xlu0 %3910, %v3621
  %v3912 = vpop.permute.xlu0 %3911
  %3915 = vset.pattern.permute.xlu0 0
  %3916 = vperm.xlu0 %3915, %v3622
  %v3917 = vpop.permute.xlu0 %3916
  %3920 = vset.pattern.permute.xlu0 0
  %3921 = vperm.xlu0 %3920, %v3623
  %v3922 = vpop.permute.xlu0 %3921
  %3925 = vset.pattern.permute.xlu0 0
  %3926 = vperm.xlu0 %3925, %v3624
  %v3927 = vpop.permute.xlu0 %3926
  %3930 = vset.pattern.permute.xlu0 0
  %3931 = vperm.xlu0 %3930, %v3625
  %v3932 = vpop.permute.xlu0 %3931
  %3935 = vset.pattern.permute.xlu0 0
  %3936 = vperm.xlu0 %3935, %v3626
  %v3937 = vpop.permute.xlu0 %3936
  %3940 = vset.pattern.permute.xlu0 0
  %3941 = vperm.xlu0 %3940, %v3627
  %v3942 = vpop.permute.xlu0 %3941
  %3945 = vset.pattern.permute.xlu0 0
  %3946 = vperm.xlu0 %3945, %v3628
  %v3947 = vpop.permute.xlu0 %3946
  %v4077 = vunpack.c.l.b16 %v3437
  %v4078 = vunpack.c.h.b16 %v3437
  %v4079 = vunpack.c.l.b16 %v3438
  %v4080 = vunpack.c.h.b16 %v3438
  %v4081 = vunpack.c.l.b16 %v3439
  %v4082 = vunpack.c.h.b16 %v3439
  %v4083 = vunpack.c.l.b16 %v3440
  %v4084 = vunpack.c.h.b16 %v3440
  %v4085 = vunpack.c.l.b16 %v3441
  %v4086 = vunpack.c.h.b16 %v3441
  %v4087 = vunpack.c.l.b16 %v3442
  %v4088 = vunpack.c.h.b16 %v3442
  %v4089 = vunpack.c.l.b16 %v3443
  %v4090 = vunpack.c.h.b16 %v3443
  %v4091 = vunpack.c.l.b16 %v3444
  %v4092 = vunpack.c.h.b16 %v3444
  %v4093 = vunpack.c.l.b16 %v3445
  %v4094 = vunpack.c.h.b16 %v3445
  %v4095 = vunpack.c.l.b16 %v3446
  %v4096 = vunpack.c.h.b16 %v3446
  %v4097 = vunpack.c.l.b16 %v3447
  %v4098 = vunpack.c.h.b16 %v3447
  %v4099 = vunpack.c.l.b16 %v3448
  %v4100 = vunpack.c.h.b16 %v3448
  %v4101 = vunpack.c.l.b16 %v3449
  %v4102 = vunpack.c.h.b16 %v3449
  %v4103 = vunpack.c.l.b16 %v3450
  %v4104 = vunpack.c.h.b16 %v3450
  %v4105 = vunpack.c.l.b16 %v3451
  %v4106 = vunpack.c.h.b16 %v3451
  %v4107 = vunpack.c.l.b16 %v3452
  %v4108 = vunpack.c.h.b16 %v3452
  %v4109 = vunpack.c.l.b16 %v3453
  %v4110 = vunpack.c.h.b16 %v3453
  %v4111 = vunpack.c.l.b16 %v3454
  %v4112 = vunpack.c.h.b16 %v3454
  %v4113 = vunpack.c.l.b16 %v3455
  %v4114 = vunpack.c.h.b16 %v3455
  %v4115 = vunpack.c.l.b16 %v3456
  %v4116 = vunpack.c.h.b16 %v3456
  %v4117 = vunpack.c.l.b16 %v3457
  %v4118 = vunpack.c.h.b16 %v3457
  %v4119 = vunpack.c.l.b16 %v3458
  %v4120 = vunpack.c.h.b16 %v3458
  %v4121 = vunpack.c.l.b16 %v3459
  %v4122 = vunpack.c.h.b16 %v3459
  %v4123 = vunpack.c.l.b16 %v3460
  %v4124 = vunpack.c.h.b16 %v3460
  %v4125 = vunpack.c.l.b16 %v3461
  %v4126 = vunpack.c.h.b16 %v3461
  %v4127 = vunpack.c.l.b16 %v3462
  %v4128 = vunpack.c.h.b16 %v3462
  %v4129 = vunpack.c.l.b16 %v3463
  %v4130 = vunpack.c.h.b16 %v3463
  %v4131 = vunpack.c.l.b16 %v3464
  %v4132 = vunpack.c.h.b16 %v3464
  %v4133 = vunpack.c.l.b16 %v3465
  %v4134 = vunpack.c.h.b16 %v3465
  %v4135 = vunpack.c.l.b16 %v3466
  %v4136 = vunpack.c.h.b16 %v3466
  %v4137 = vunpack.c.l.b16 %v3467
  %v4138 = vunpack.c.h.b16 %v3467
  %v4139 = vunpack.c.l.b16 %v3468
  %v4140 = vunpack.c.h.b16 %v3468
  %v4141 = vunpack.c.l.b16 %v3469
  %v4142 = vunpack.c.h.b16 %v3469
  %v4143 = vunpack.c.l.b16 %v3470
  %v4144 = vunpack.c.h.b16 %v3470
  %v4145 = vunpack.c.l.b16 %v3471
  %v4146 = vunpack.c.h.b16 %v3471
  %v4147 = vunpack.c.l.b16 %v3472
  %v4148 = vunpack.c.h.b16 %v3472
  %v4149 = vunpack.c.l.b16 %v3473
  %v4150 = vunpack.c.h.b16 %v3473
  %v4151 = vunpack.c.l.b16 %v3474
  %v4152 = vunpack.c.h.b16 %v3474
  %v4153 = vunpack.c.l.b16 %v3475
  %v4154 = vunpack.c.h.b16 %v3475
  %v4155 = vunpack.c.l.b16 %v3476
  %v4156 = vunpack.c.h.b16 %v3476
  %v4157 = vunpack.c.l.b16 %v3477
  %v4158 = vunpack.c.h.b16 %v3477
  %v4159 = vunpack.c.l.b16 %v3478
  %v4160 = vunpack.c.h.b16 %v3478
  %v4161 = vunpack.c.l.b16 %v3479
  %v4162 = vunpack.c.h.b16 %v3479
  %v4163 = vunpack.c.l.b16 %v3480
  %v4164 = vunpack.c.h.b16 %v3480
  %v4165 = vunpack.c.l.b16 %v3481
  %v4166 = vunpack.c.h.b16 %v3481
  %v4167 = vunpack.c.l.b16 %v3482
  %v4168 = vunpack.c.h.b16 %v3482
  %v4169 = vunpack.c.l.b16 %v3483
  %v4170 = vunpack.c.h.b16 %v3483
  %v4171 = vunpack.c.l.b16 %v3484
  %v4172 = vunpack.c.h.b16 %v3484
  %v4173 = vunpack.c.l.b16 %v3485
  %v4174 = vunpack.c.h.b16 %v3485
  %v4175 = vunpack.c.l.b16 %v3486
  %v4176 = vunpack.c.h.b16 %v3486
  %v4177 = vunpack.c.l.b16 %v3487
  %v4178 = vunpack.c.h.b16 %v3487
  %v4179 = vunpack.c.l.b16 %v3488
  %v4180 = vunpack.c.h.b16 %v3488
  %v4181 = vunpack.c.l.b16 %v3489
  %v4182 = vunpack.c.h.b16 %v3489
  %v4183 = vunpack.c.l.b16 %v3490
  %v4184 = vunpack.c.h.b16 %v3490
  %v4185 = vunpack.c.l.b16 %v3491
  %v4186 = vunpack.c.h.b16 %v3491
  %v4187 = vunpack.c.l.b16 %v3492
  %v4188 = vunpack.c.h.b16 %v3492
  %v4189 = vunpack.c.l.b16 %v3493
  %v4190 = vunpack.c.h.b16 %v3493
  %v4191 = vunpack.c.l.b16 %v3494
  %v4192 = vunpack.c.h.b16 %v3494
  %v4193 = vunpack.c.l.b16 %v3495
  %v4194 = vunpack.c.h.b16 %v3495
  %v4195 = vunpack.c.l.b16 %v3496
  %v4196 = vunpack.c.h.b16 %v3496
  %v4197 = vunpack.c.l.b16 %v3497
  %v4198 = vunpack.c.h.b16 %v3497
  %v4199 = vunpack.c.l.b16 %v3498
  %v4200 = vunpack.c.h.b16 %v3498
  %v4201 = vunpack.c.l.b16 %v3499
  %v4202 = vunpack.c.h.b16 %v3499
  %v4203 = vunpack.c.l.b16 %v3500
  %v4204 = vunpack.c.h.b16 %v3500
  %v4205 = vunpack.c.l.b16 %v3501
  %v4206 = vunpack.c.h.b16 %v3501
  %v4207 = vunpack.c.l.b16 %v3502
  %v4208 = vunpack.c.h.b16 %v3502
  %v4209 = vunpack.c.l.b16 %v3503
  %v4210 = vunpack.c.h.b16 %v3503
  %v4211 = vunpack.c.l.b16 %v3504
  %v4212 = vunpack.c.h.b16 %v3504
  %v4213 = vunpack.c.l.b16 %v3505
  %v4214 = vunpack.c.h.b16 %v3505
  %v4215 = vunpack.c.l.b16 %v3506
  %v4216 = vunpack.c.h.b16 %v3506
  %v4217 = vunpack.c.l.b16 %v3507
  %v4218 = vunpack.c.h.b16 %v3507
  %v4219 = vunpack.c.l.b16 %v3508
  %v4220 = vunpack.c.h.b16 %v3508
  %v4221 = vunpack.c.l.b16 %v3509
  %v4222 = vunpack.c.h.b16 %v3509
  %v4223 = vunpack.c.l.b16 %v3510
  %v4224 = vunpack.c.h.b16 %v3510
  %v4225 = vunpack.c.l.b16 %v3511
  %v4226 = vunpack.c.h.b16 %v3511
  %v4227 = vunpack.c.l.b16 %v3512
  %v4228 = vunpack.c.h.b16 %v3512
  %v4229 = vunpack.c.l.b16 %v3513
  %v4230 = vunpack.c.h.b16 %v3513
  %v4231 = vunpack.c.l.b16 %v3514
  %v4232 = vunpack.c.h.b16 %v3514
  %v4233 = vunpack.c.l.b16 %v3515
  %v4234 = vunpack.c.h.b16 %v3515
  %v4235 = vunpack.c.l.b16 %v3516
  %v4236 = vunpack.c.h.b16 %v3516
  %v4237 = vunpack.c.l.b16 %v3517
  %v4238 = vunpack.c.h.b16 %v3517
  %v4239 = vunpack.c.l.b16 %v3518
  %v4240 = vunpack.c.h.b16 %v3518
  %v4241 = vunpack.c.l.b16 %v3519
  %v4242 = vunpack.c.h.b16 %v3519
  %v4243 = vunpack.c.l.b16 %v3520
  %v4244 = vunpack.c.h.b16 %v3520
  %v4245 = vunpack.c.l.b16 %v3521
  %v4246 = vunpack.c.h.b16 %v3521
  %v4247 = vunpack.c.l.b16 %v3522
  %v4248 = vunpack.c.h.b16 %v3522
  %v4249 = vunpack.c.l.b16 %v3523
  %v4250 = vunpack.c.h.b16 %v3523
  %v4251 = vunpack.c.l.b16 %v3524
  %v4252 = vunpack.c.h.b16 %v3524
  %v4253 = vunpack.c.l.b16 %v3525
  %v4254 = vunpack.c.h.b16 %v3525
  %v4255 = vunpack.c.l.b16 %v3526
  %v4256 = vunpack.c.h.b16 %v3526
  %v4257 = vunpack.c.l.b16 %v3527
  %v4258 = vunpack.c.h.b16 %v3527
  %v4259 = vunpack.c.l.b16 %v3528
  %v4260 = vunpack.c.h.b16 %v3528
  %v4261 = vunpack.c.l.b16 %v3529
  %v4262 = vunpack.c.h.b16 %v3529
  %v4263 = vunpack.c.l.b16 %v3530
  %v4264 = vunpack.c.h.b16 %v3530
  %v4265 = vunpack.c.l.b16 %v3531
  %v4266 = vunpack.c.h.b16 %v3531
  %v4267 = vunpack.c.l.b16 %v3532
  %v4268 = vunpack.c.h.b16 %v3532
  %v4269 = vunpack.c.l.b16 %v3533
  %v4270 = vunpack.c.h.b16 %v3533
  %v4271 = vunpack.c.l.b16 %v3534
  %v4272 = vunpack.c.h.b16 %v3534
  %v4273 = vunpack.c.l.b16 %v3535
  %v4274 = vunpack.c.h.b16 %v3535
  %v4275 = vunpack.c.l.b16 %v3536
  %v4276 = vunpack.c.h.b16 %v3536
  %v4277 = vunpack.c.l.b16 %v3537
  %v4278 = vunpack.c.h.b16 %v3537
  %v4279 = vunpack.c.l.b16 %v3538
  %v4280 = vunpack.c.h.b16 %v3538
  %v4281 = vunpack.c.l.b16 %v3539
  %v4282 = vunpack.c.h.b16 %v3539
  %v4283 = vunpack.c.l.b16 %v3540
  %v4284 = vunpack.c.h.b16 %v3540
  %v4285 = vunpack.c.l.b16 %v3541
  %v4286 = vunpack.c.h.b16 %v3541
  %v4287 = vunpack.c.l.b16 %v3542
  %v4288 = vunpack.c.h.b16 %v3542
  %v4289 = vunpack.c.l.b16 %v3543
  %v4290 = vunpack.c.h.b16 %v3543
  %v4291 = vunpack.c.l.b16 %v3544
  %v4292 = vunpack.c.h.b16 %v3544
  %v4293 = vunpack.c.l.b16 %v3545
  %v4294 = vunpack.c.h.b16 %v3545
  %v4295 = vunpack.c.l.b16 %v3546
  %v4296 = vunpack.c.h.b16 %v3546
  %v4297 = vunpack.c.l.b16 %v3547
  %v4298 = vunpack.c.h.b16 %v3547
  %v4299 = vunpack.c.l.b16 %v3548
  %v4300 = vunpack.c.h.b16 %v3548
  %v4301 = vunpack.c.l.b16 %v3549
  %v4302 = vunpack.c.h.b16 %v3549
  %v4303 = vunpack.c.l.b16 %v3550
  %v4304 = vunpack.c.h.b16 %v3550
  %v4305 = vunpack.c.l.b16 %v3551
  %v4306 = vunpack.c.h.b16 %v3551
  %v4307 = vunpack.c.l.b16 %v3552
  %v4308 = vunpack.c.h.b16 %v3552
  %v4309 = vunpack.c.l.b16 %v3553
  %v4310 = vunpack.c.h.b16 %v3553
  %v4311 = vunpack.c.l.b16 %v3554
  %v4312 = vunpack.c.h.b16 %v3554
  %v4313 = vunpack.c.l.b16 %v3555
  %v4314 = vunpack.c.h.b16 %v3555
  %v4315 = vunpack.c.l.b16 %v3556
  %v4316 = vunpack.c.h.b16 %v3556
  %v4317 = vunpack.c.l.b16 %v3557
  %v4318 = vunpack.c.h.b16 %v3557
  %v4319 = vunpack.c.l.b16 %v3558
  %v4320 = vunpack.c.h.b16 %v3558
  %v4321 = vunpack.c.l.b16 %v3559
  %v4322 = vunpack.c.h.b16 %v3559
  %v4323 = vunpack.c.l.b16 %v3560
  %v4324 = vunpack.c.h.b16 %v3560
  %v4325 = vunpack.c.l.b16 %v3561
  %v4326 = vunpack.c.h.b16 %v3561
  %v4327 = vunpack.c.l.b16 %v3562
  %v4328 = vunpack.c.h.b16 %v3562
  %v4329 = vunpack.c.l.b16 %v3563
  %v4330 = vunpack.c.h.b16 %v3563
  %v4331 = vunpack.c.l.b16 %v3564
  %v4332 = vunpack.c.h.b16 %v3564
  %v4333 = vpack.c.b16 %v4081, %v4077
  %v4334 = vpack.c.b16 %v4082, %v4078
  %v4335 = vpack.c.b16 %v4083, %v4079
  %v4336 = vpack.c.b16 %v4084, %v4080
  %v4337 = vpack.c.b16 %v4089, %v4085
  %v4338 = vpack.c.b16 %v4090, %v4086
  %v4339 = vpack.c.b16 %v4091, %v4087
  %v4340 = vpack.c.b16 %v4092, %v4088
  %v4341 = vpack.c.b16 %v4097, %v4093
  %v4342 = vpack.c.b16 %v4098, %v4094
  %v4343 = vpack.c.b16 %v4099, %v4095
  %v4344 = vpack.c.b16 %v4100, %v4096
  %v4345 = vpack.c.b16 %v4105, %v4101
  %v4346 = vpack.c.b16 %v4106, %v4102
  %v4347 = vpack.c.b16 %v4107, %v4103
  %v4348 = vpack.c.b16 %v4108, %v4104
  %v4349 = vpack.c.b16 %v4113, %v4109
  %v4350 = vpack.c.b16 %v4114, %v4110
  %v4351 = vpack.c.b16 %v4115, %v4111
  %v4352 = vpack.c.b16 %v4116, %v4112
  %v4353 = vpack.c.b16 %v4121, %v4117
  %v4354 = vpack.c.b16 %v4122, %v4118
  %v4355 = vpack.c.b16 %v4123, %v4119
  %v4356 = vpack.c.b16 %v4124, %v4120
  %v4357 = vpack.c.b16 %v4129, %v4125
  %v4358 = vpack.c.b16 %v4130, %v4126
  %v4359 = vpack.c.b16 %v4131, %v4127
  %v4360 = vpack.c.b16 %v4132, %v4128
  %v4361 = vpack.c.b16 %v4137, %v4133
  %v4362 = vpack.c.b16 %v4138, %v4134
  %v4363 = vpack.c.b16 %v4139, %v4135
  %v4364 = vpack.c.b16 %v4140, %v4136
  %v4365 = vpack.c.b16 %v4145, %v4141
  %v4366 = vpack.c.b16 %v4146, %v4142
  %v4367 = vpack.c.b16 %v4147, %v4143
  %v4368 = vpack.c.b16 %v4148, %v4144
  %v4369 = vpack.c.b16 %v4153, %v4149
  %v4370 = vpack.c.b16 %v4154, %v4150
  %v4371 = vpack.c.b16 %v4155, %v4151
  %v4372 = vpack.c.b16 %v4156, %v4152
  %v4373 = vpack.c.b16 %v4161, %v4157
  %v4374 = vpack.c.b16 %v4162, %v4158
  %v4375 = vpack.c.b16 %v4163, %v4159
  %v4376 = vpack.c.b16 %v4164, %v4160
  %v4377 = vpack.c.b16 %v4169, %v4165
  %v4378 = vpack.c.b16 %v4170, %v4166
  %v4379 = vpack.c.b16 %v4171, %v4167
  %v4380 = vpack.c.b16 %v4172, %v4168
  %v4381 = vpack.c.b16 %v4177, %v4173
  %v4382 = vpack.c.b16 %v4178, %v4174
  %v4383 = vpack.c.b16 %v4179, %v4175
  %v4384 = vpack.c.b16 %v4180, %v4176
  %v4385 = vpack.c.b16 %v4185, %v4181
  %v4386 = vpack.c.b16 %v4186, %v4182
  %v4387 = vpack.c.b16 %v4187, %v4183
  %v4388 = vpack.c.b16 %v4188, %v4184
  %v4389 = vpack.c.b16 %v4193, %v4189
  %v4390 = vpack.c.b16 %v4194, %v4190
  %v4391 = vpack.c.b16 %v4195, %v4191
  %v4392 = vpack.c.b16 %v4196, %v4192
  %v4393 = vpack.c.b16 %v4201, %v4197
  %v4394 = vpack.c.b16 %v4202, %v4198
  %v4395 = vpack.c.b16 %v4203, %v4199
  %v4396 = vpack.c.b16 %v4204, %v4200
  %v4397 = vpack.c.b16 %v4209, %v4205
  %v4398 = vpack.c.b16 %v4210, %v4206
  %v4399 = vpack.c.b16 %v4211, %v4207
  %v4400 = vpack.c.b16 %v4212, %v4208
  %v4401 = vpack.c.b16 %v4217, %v4213
  %v4402 = vpack.c.b16 %v4218, %v4214
  %v4403 = vpack.c.b16 %v4219, %v4215
  %v4404 = vpack.c.b16 %v4220, %v4216
  %v4405 = vpack.c.b16 %v4225, %v4221
  %v4406 = vpack.c.b16 %v4226, %v4222
  %v4407 = vpack.c.b16 %v4227, %v4223
  %v4408 = vpack.c.b16 %v4228, %v4224
  %v4409 = vpack.c.b16 %v4233, %v4229
  %v4410 = vpack.c.b16 %v4234, %v4230
  %v4411 = vpack.c.b16 %v4235, %v4231
  %v4412 = vpack.c.b16 %v4236, %v4232
  %v4413 = vpack.c.b16 %v4241, %v4237
  %v4414 = vpack.c.b16 %v4242, %v4238
  %v4415 = vpack.c.b16 %v4243, %v4239
  %v4416 = vpack.c.b16 %v4244, %v4240
  %v4417 = vpack.c.b16 %v4249, %v4245
  %v4418 = vpack.c.b16 %v4250, %v4246
  %v4419 = vpack.c.b16 %v4251, %v4247
  %v4420 = vpack.c.b16 %v4252, %v4248
  %v4421 = vpack.c.b16 %v4257, %v4253
  %v4422 = vpack.c.b16 %v4258, %v4254
  %v4423 = vpack.c.b16 %v4259, %v4255
  %v4424 = vpack.c.b16 %v4260, %v4256
  %v4425 = vpack.c.b16 %v4265, %v4261
  %v4426 = vpack.c.b16 %v4266, %v4262
  %v4427 = vpack.c.b16 %v4267, %v4263
  %v4428 = vpack.c.b16 %v4268, %v4264
  %v4429 = vpack.c.b16 %v4273, %v4269
  %v4430 = vpack.c.b16 %v4274, %v4270
  %v4431 = vpack.c.b16 %v4275, %v4271
  %v4432 = vpack.c.b16 %v4276, %v4272
  %v4433 = vpack.c.b16 %v4281, %v4277
  %v4434 = vpack.c.b16 %v4282, %v4278
  %v4435 = vpack.c.b16 %v4283, %v4279
  %v4436 = vpack.c.b16 %v4284, %v4280
  %v4437 = vpack.c.b16 %v4289, %v4285
  %v4438 = vpack.c.b16 %v4290, %v4286
  %v4439 = vpack.c.b16 %v4291, %v4287
  %v4440 = vpack.c.b16 %v4292, %v4288
  %v4441 = vpack.c.b16 %v4297, %v4293
  %v4442 = vpack.c.b16 %v4298, %v4294
  %v4443 = vpack.c.b16 %v4299, %v4295
  %v4444 = vpack.c.b16 %v4300, %v4296
  %v4445 = vpack.c.b16 %v4305, %v4301
  %v4446 = vpack.c.b16 %v4306, %v4302
  %v4447 = vpack.c.b16 %v4307, %v4303
  %v4448 = vpack.c.b16 %v4308, %v4304
  %v4449 = vpack.c.b16 %v4313, %v4309
  %v4450 = vpack.c.b16 %v4314, %v4310
  %v4451 = vpack.c.b16 %v4315, %v4311
  %v4452 = vpack.c.b16 %v4316, %v4312
  %v4453 = vpack.c.b16 %v4321, %v4317
  %v4454 = vpack.c.b16 %v4322, %v4318
  %v4455 = vpack.c.b16 %v4323, %v4319
  %v4456 = vpack.c.b16 %v4324, %v4320
  %v4457 = vpack.c.b16 %v4329, %v4325
  %v4458 = vpack.c.b16 %v4330, %v4326
  %v4459 = vpack.c.b16 %v4331, %v4327
  %v4460 = vpack.c.b16 %v4332, %v4328
  %4589 = vmatprep.subr.bf16.mxu0 0
  %4590 = vmatpush1.bf16.msra.mxu0 %v3410
  %4591 = vmatprep.subr.bf16.mxu0 0
  %4592 = vmatpush1.bf16.msra.mxu0 %v3409
  %4593 = vmatprep.subr.bf16.mxu0 0
  %4594 = vmatpush1.bf16.msra.mxu0 %v3408
  %4595 = vmatprep.subr.bf16.mxu0 0
  %4596 = vmatpush1.bf16.msra.mxu0 %v3407
  %4597 = vmatprep.subr.bf16.mxu0 0
  %4598 = vmatpush1.bf16.msra.mxu0 %v3406
  %4599 = vmatprep.subr.bf16.mxu0 0
  %4600 = vmatpush1.bf16.msra.mxu0 %v3405
  %4601 = vmatprep.subr.bf16.mxu0 0
  %4602 = vmatpush1.bf16.msra.mxu0 %v3404
  %4603 = vmatprep.subr.bf16.mxu0 0
  %4604 = vmatpush1.bf16.msra.mxu0 %v3403
  %4605 = vmatprep.subr.bf16.mxu0 0
  %4606 = vmatpush2.bf16.msra.mxu0 %v3418
  %4607 = vmatprep.subr.bf16.mxu0 0
  %4608 = vmatpush2.bf16.msra.mxu0 %v3417
  %4609 = vmatprep.subr.bf16.mxu0 0
  %4610 = vmatpush2.bf16.msra.mxu0 %v3416
  %4611 = vmatprep.subr.bf16.mxu0 0
  %4612 = vmatpush2.bf16.msra.mxu0 %v3415
  %4613 = vmatprep.subr.bf16.mxu0 0
  %4614 = vmatpush2.bf16.msra.mxu0 %v3414
  %4615 = vmatprep.subr.bf16.mxu0 0
  %4616 = vmatpush2.bf16.msra.mxu0 %v3413
  %4617 = vmatprep.subr.bf16.mxu0 0
  %4618 = vmatpush2.bf16.msra.mxu0 %v3412
  %4619 = vmatprep.subr.bf16.mxu0 0
  %4620 = vmatpush2.bf16.msra.mxu0 %v3411
  %4621 = vmatprep.mubr.bf16.mxu0 %v4334
  %4622 = vmatmul.mubr.bf16.gmra.mxu0 %v4333
  %v4623 = vpop.f32.mrf.mxu0
  %v4624 = vadd.f32 %v3632, %v4623
  %v4625 = vpop.f32.mrf.mxu0
  %v4626 = vpop.f32.mrf.mxu0
  %v4627 = vadd.f32 %v3637, %v4626
  %v4628 = vpop.f32.mrf.mxu0
  %4629 = vmatprep.mubr.bf16.mxu0 %v4338
  %4630 = vmatmul.mubr.bf16.gmra.mxu0 %v4337
  %v4631 = vpop.f32.mrf.mxu0
  %v4632 = vadd.f32 %v3642, %v4631
  %v4633 = vpop.f32.mrf.mxu0
  %v4634 = vpop.f32.mrf.mxu0
  %v4635 = vadd.f32 %v3647, %v4634
  %v4636 = vpop.f32.mrf.mxu0
  %4637 = vmatprep.mubr.bf16.mxu0 %v4342
  %4638 = vmatmul.mubr.bf16.gmra.mxu0 %v4341
  %v4639 = vpop.f32.mrf.mxu0
  %v4640 = vadd.f32 %v3652, %v4639
  %v4641 = vpop.f32.mrf.mxu0
  %v4642 = vpop.f32.mrf.mxu0
  %v4643 = vadd.f32 %v3657, %v4642
  %v4644 = vpop.f32.mrf.mxu0
  %4645 = vmatprep.mubr.bf16.mxu0 %v4346
  %4646 = vmatmul.mubr.bf16.gmra.mxu0 %v4345
  %v4647 = vpop.f32.mrf.mxu0
  %v4648 = vadd.f32 %v3662, %v4647
  %v4649 = vpop.f32.mrf.mxu0
  %v4650 = vpop.f32.mrf.mxu0
  %v4651 = vadd.f32 %v3667, %v4650
  %v4652 = vpop.f32.mrf.mxu0
  %4653 = vmatprep.mubr.bf16.mxu0 %v4350
  %4654 = vmatmul.mubr.bf16.gmra.mxu0 %v4349
  %v4655 = vpop.f32.mrf.mxu0
  %v4656 = vadd.f32 %v3672, %v4655
  %v4657 = vpop.f32.mrf.mxu0
  %v4658 = vpop.f32.mrf.mxu0
  %v4659 = vadd.f32 %v3677, %v4658
  %v4660 = vpop.f32.mrf.mxu0
  %4661 = vmatprep.mubr.bf16.mxu0 %v4354
  %4662 = vmatmul.mubr.bf16.gmra.mxu0 %v4353
  %v4663 = vpop.f32.mrf.mxu0
  %v4664 = vadd.f32 %v3682, %v4663
  %v4665 = vpop.f32.mrf.mxu0
  %v4666 = vpop.f32.mrf.mxu0
  %v4667 = vadd.f32 %v3687, %v4666
  %v4668 = vpop.f32.mrf.mxu0
  %4669 = vmatprep.mubr.bf16.mxu0 %v4358
  %4670 = vmatmul.mubr.bf16.gmra.mxu0 %v4357
  %v4671 = vpop.f32.mrf.mxu0
  %v4672 = vadd.f32 %v3692, %v4671
  %v4673 = vpop.f32.mrf.mxu0
  %v4674 = vpop.f32.mrf.mxu0
  %v4675 = vadd.f32 %v3697, %v4674
  %v4676 = vpop.f32.mrf.mxu0
  %4677 = vmatprep.mubr.bf16.mxu0 %v4362
  %4678 = vmatmul.mubr.bf16.gmra.mxu0 %v4361
  %v4679 = vpop.f32.mrf.mxu0
  %v4680 = vadd.f32 %v3702, %v4679
  %v4681 = vpop.f32.mrf.mxu0
  %v4682 = vpop.f32.mrf.mxu0
  %v4683 = vadd.f32 %v3707, %v4682
  %v4684 = vpop.f32.mrf.mxu0
  %4685 = vmatprep.mubr.bf16.mxu0 %v4366
  %4686 = vmatmul.mubr.bf16.gmra.mxu0 %v4365
  %v4687 = vpop.f32.mrf.mxu0
  %v4688 = vadd.f32 %v3712, %v4687
  %v4689 = vpop.f32.mrf.mxu0
  %v4690 = vpop.f32.mrf.mxu0
  %v4691 = vadd.f32 %v3717, %v4690
  %v4692 = vpop.f32.mrf.mxu0
  %4693 = vmatprep.mubr.bf16.mxu0 %v4370
  %4694 = vmatmul.mubr.bf16.gmra.mxu0 %v4369
  %v4695 = vpop.f32.mrf.mxu0
  %v4696 = vadd.f32 %v3722, %v4695
  %v4697 = vpop.f32.mrf.mxu0
  %v4698 = vpop.f32.mrf.mxu0
  %v4699 = vadd.f32 %v3727, %v4698
  %v4700 = vpop.f32.mrf.mxu0
  %4701 = vmatprep.mubr.bf16.mxu0 %v4374
  %4702 = vmatmul.mubr.bf16.gmra.mxu0 %v4373
  %v4703 = vpop.f32.mrf.mxu0
  %v4704 = vadd.f32 %v3732, %v4703
  %v4705 = vpop.f32.mrf.mxu0
  %v4706 = vpop.f32.mrf.mxu0
  %v4707 = vadd.f32 %v3737, %v4706
  %v4708 = vpop.f32.mrf.mxu0
  %4709 = vmatprep.mubr.bf16.mxu0 %v4378
  %4710 = vmatmul.mubr.bf16.gmra.mxu0 %v4377
  %v4711 = vpop.f32.mrf.mxu0
  %v4712 = vadd.f32 %v3742, %v4711
  %v4713 = vpop.f32.mrf.mxu0
  %v4714 = vpop.f32.mrf.mxu0
  %v4715 = vadd.f32 %v3747, %v4714
  %v4716 = vpop.f32.mrf.mxu0
  %4717 = vmatprep.mubr.bf16.mxu0 %v4382
  %4718 = vmatmul.mubr.bf16.gmra.mxu0 %v4381
  %v4719 = vpop.f32.mrf.mxu0
  %v4720 = vadd.f32 %v3752, %v4719
  %v4721 = vpop.f32.mrf.mxu0
  %v4722 = vpop.f32.mrf.mxu0
  %v4723 = vadd.f32 %v3757, %v4722
  %v4724 = vpop.f32.mrf.mxu0
  %4725 = vmatprep.mubr.bf16.mxu0 %v4386
  %4726 = vmatmul.mubr.bf16.gmra.mxu0 %v4385
  %v4727 = vpop.f32.mrf.mxu0
  %v4728 = vadd.f32 %v3762, %v4727
  %v4729 = vpop.f32.mrf.mxu0
  %v4730 = vpop.f32.mrf.mxu0
  %v4731 = vadd.f32 %v3767, %v4730
  %v4732 = vpop.f32.mrf.mxu0
  %4733 = vmatprep.mubr.bf16.mxu0 %v4390
  %4734 = vmatmul.mubr.bf16.gmra.mxu0 %v4389
  %v4735 = vpop.f32.mrf.mxu0
  %v4736 = vadd.f32 %v3772, %v4735
  %v4737 = vpop.f32.mrf.mxu0
  %v4738 = vpop.f32.mrf.mxu0
  %v4739 = vadd.f32 %v3777, %v4738
  %v4740 = vpop.f32.mrf.mxu0
  %4741 = vmatprep.mubr.bf16.mxu0 %v4394
  %4742 = vmatmul.mubr.bf16.gmra.mxu0 %v4393
  %v4743 = vpop.f32.mrf.mxu0
  %v4744 = vadd.f32 %v3782, %v4743
  %v4745 = vpop.f32.mrf.mxu0
  %v4746 = vpop.f32.mrf.mxu0
  %v4747 = vadd.f32 %v3787, %v4746
  %v4748 = vpop.f32.mrf.mxu0
  %4749 = vmatprep.mubr.bf16.mxu0 %v4398
  %4750 = vmatmul.mubr.bf16.gmra.mxu0 %v4397
  %v4751 = vpop.f32.mrf.mxu0
  %v4752 = vadd.f32 %v3792, %v4751
  %v4753 = vpop.f32.mrf.mxu0
  %v4754 = vpop.f32.mrf.mxu0
  %v4755 = vadd.f32 %v3797, %v4754
  %v4756 = vpop.f32.mrf.mxu0
  %4757 = vmatprep.mubr.bf16.mxu0 %v4402
  %4758 = vmatmul.mubr.bf16.gmra.mxu0 %v4401
  %v4759 = vpop.f32.mrf.mxu0
  %v4760 = vadd.f32 %v3802, %v4759
  %v4761 = vpop.f32.mrf.mxu0
  %v4762 = vpop.f32.mrf.mxu0
  %v4763 = vadd.f32 %v3807, %v4762
  %v4764 = vpop.f32.mrf.mxu0
  %4765 = vmatprep.mubr.bf16.mxu0 %v4406
  %4766 = vmatmul.mubr.bf16.gmra.mxu0 %v4405
  %v4767 = vpop.f32.mrf.mxu0
  %v4768 = vadd.f32 %v3812, %v4767
  %v4769 = vpop.f32.mrf.mxu0
  %v4770 = vpop.f32.mrf.mxu0
  %v4771 = vadd.f32 %v3817, %v4770
  %v4772 = vpop.f32.mrf.mxu0
  %4773 = vmatprep.mubr.bf16.mxu0 %v4410
  %4774 = vmatmul.mubr.bf16.gmra.mxu0 %v4409
  %v4775 = vpop.f32.mrf.mxu0
  %v4776 = vadd.f32 %v3822, %v4775
  %v4777 = vpop.f32.mrf.mxu0
  %v4778 = vpop.f32.mrf.mxu0
  %v4779 = vadd.f32 %v3827, %v4778
  %v4780 = vpop.f32.mrf.mxu0
  %4781 = vmatprep.mubr.bf16.mxu0 %v4414
  %4782 = vmatmul.mubr.bf16.gmra.mxu0 %v4413
  %v4783 = vpop.f32.mrf.mxu0
  %v4784 = vadd.f32 %v3832, %v4783
  %v4785 = vpop.f32.mrf.mxu0
  %v4786 = vpop.f32.mrf.mxu0
  %v4787 = vadd.f32 %v3837, %v4786
  %v4788 = vpop.f32.mrf.mxu0
  %4789 = vmatprep.mubr.bf16.mxu0 %v4418
  %4790 = vmatmul.mubr.bf16.gmra.mxu0 %v4417
  %v4791 = vpop.f32.mrf.mxu0
  %v4792 = vadd.f32 %v3842, %v4791
  %v4793 = vpop.f32.mrf.mxu0
  %v4794 = vpop.f32.mrf.mxu0
  %v4795 = vadd.f32 %v3847, %v4794
  %v4796 = vpop.f32.mrf.mxu0
  %4797 = vmatprep.mubr.bf16.mxu0 %v4422
  %4798 = vmatmul.mubr.bf16.gmra.mxu0 %v4421
  %v4799 = vpop.f32.mrf.mxu0
  %v4800 = vadd.f32 %v3852, %v4799
  %v4801 = vpop.f32.mrf.mxu0
  %v4802 = vpop.f32.mrf.mxu0
  %v4803 = vadd.f32 %v3857, %v4802
  %v4804 = vpop.f32.mrf.mxu0
  %4805 = vmatprep.mubr.bf16.mxu0 %v4426
  %4806 = vmatmul.mubr.bf16.gmra.mxu0 %v4425
  %v4807 = vpop.f32.mrf.mxu0
  %v4808 = vadd.f32 %v3862, %v4807
  %v4809 = vpop.f32.mrf.mxu0
  %v4810 = vpop.f32.mrf.mxu0
  %v4811 = vadd.f32 %v3867, %v4810
  %v4812 = vpop.f32.mrf.mxu0
  %4813 = vmatprep.mubr.bf16.mxu0 %v4430
  %4814 = vmatmul.mubr.bf16.gmra.mxu0 %v4429
  %v4815 = vpop.f32.mrf.mxu0
  %v4816 = vadd.f32 %v3872, %v4815
  %v4817 = vpop.f32.mrf.mxu0
  %v4818 = vpop.f32.mrf.mxu0
  %v4819 = vadd.f32 %v3877, %v4818
  %v4820 = vpop.f32.mrf.mxu0
  %4821 = vmatprep.mubr.bf16.mxu0 %v4434
  %4822 = vmatmul.mubr.bf16.gmra.mxu0 %v4433
  %v4823 = vpop.f32.mrf.mxu0
  %v4824 = vadd.f32 %v3882, %v4823
  %v4825 = vpop.f32.mrf.mxu0
  %v4826 = vpop.f32.mrf.mxu0
  %v4827 = vadd.f32 %v3887, %v4826
  %v4828 = vpop.f32.mrf.mxu0
  %4829 = vmatprep.mubr.bf16.mxu0 %v4438
  %4830 = vmatmul.mubr.bf16.gmra.mxu0 %v4437
  %v4831 = vpop.f32.mrf.mxu0
  %v4832 = vadd.f32 %v3892, %v4831
  %v4833 = vpop.f32.mrf.mxu0
  %v4834 = vpop.f32.mrf.mxu0
  %v4835 = vadd.f32 %v3897, %v4834
  %v4836 = vpop.f32.mrf.mxu0
  %4837 = vmatprep.mubr.bf16.mxu0 %v4442
  %4838 = vmatmul.mubr.bf16.gmra.mxu0 %v4441
  %v4839 = vpop.f32.mrf.mxu0
  %v4840 = vadd.f32 %v3902, %v4839
  %v4841 = vpop.f32.mrf.mxu0
  %v4842 = vpop.f32.mrf.mxu0
  %v4843 = vadd.f32 %v3907, %v4842
  %v4844 = vpop.f32.mrf.mxu0
  %4845 = vmatprep.mubr.bf16.mxu0 %v4446
  %4846 = vmatmul.mubr.bf16.gmra.mxu0 %v4445
  %v4847 = vpop.f32.mrf.mxu0
  %v4848 = vadd.f32 %v3912, %v4847
  %v4849 = vpop.f32.mrf.mxu0
  %v4850 = vpop.f32.mrf.mxu0
  %v4851 = vadd.f32 %v3917, %v4850
  %v4852 = vpop.f32.mrf.mxu0
  %4853 = vmatprep.mubr.bf16.mxu0 %v4450
  %4854 = vmatmul.mubr.bf16.gmra.mxu0 %v4449
  %v4855 = vpop.f32.mrf.mxu0
  %v4856 = vadd.f32 %v3922, %v4855
  %v4857 = vpop.f32.mrf.mxu0
  %v4858 = vpop.f32.mrf.mxu0
  %v4859 = vadd.f32 %v3927, %v4858
  %v4860 = vpop.f32.mrf.mxu0
  %4861 = vmatprep.mubr.bf16.mxu0 %v4454
  %4862 = vmatmul.mubr.bf16.gmra.mxu0 %v4453
  %v4863 = vpop.f32.mrf.mxu0
  %v4864 = vadd.f32 %v3932, %v4863
  %v4865 = vpop.f32.mrf.mxu0
  %v4866 = vpop.f32.mrf.mxu0
  %v4867 = vadd.f32 %v3937, %v4866
  %v4868 = vpop.f32.mrf.mxu0
  %4869 = vmatprep.mubr.bf16.mxu0 %v4458
  %4870 = vmatmul.mubr.bf16.gmra.mxu0 %v4457
  %v4871 = vpop.f32.mrf.mxu0
  %v4872 = vadd.f32 %v3942, %v4871
  %v4873 = vpop.f32.mrf.mxu0
  %v4874 = vpop.f32.mrf.mxu0
  %v4875 = vadd.f32 %v3947, %v4874
  %v4876 = vpop.f32.mrf.mxu0
  %4877 = vdwg.mxu0
  %4878 = vmatprep.subr.bf16.mxu0 0
  %4879 = vmatpush1.bf16.msra.mxu0 %v3426
  %4880 = vmatprep.subr.bf16.mxu0 0
  %4881 = vmatpush1.bf16.msra.mxu0 %v3425
  %4882 = vmatprep.subr.bf16.mxu0 0
  %4883 = vmatpush1.bf16.msra.mxu0 %v3424
  %4884 = vmatprep.subr.bf16.mxu0 0
  %4885 = vmatpush1.bf16.msra.mxu0 %v3423
  %4886 = vmatprep.subr.bf16.mxu0 0
  %4887 = vmatpush1.bf16.msra.mxu0 %v3422
  %4888 = vmatprep.subr.bf16.mxu0 0
  %4889 = vmatpush1.bf16.msra.mxu0 %v3421
  %4890 = vmatprep.subr.bf16.mxu0 0
  %4891 = vmatpush1.bf16.msra.mxu0 %v3420
  %4892 = vmatprep.subr.bf16.mxu0 0
  %4893 = vmatpush1.bf16.msra.mxu0 %v3419
  %4894 = vmatprep.subr.bf16.mxu0 0
  %4895 = vmatpush2.bf16.msra.mxu0 %v3434
  %4896 = vmatprep.subr.bf16.mxu0 0
  %4897 = vmatpush2.bf16.msra.mxu0 %v3433
  %4898 = vmatprep.subr.bf16.mxu0 0
  %4899 = vmatpush2.bf16.msra.mxu0 %v3432
  %4900 = vmatprep.subr.bf16.mxu0 0
  %4901 = vmatpush2.bf16.msra.mxu0 %v3431
  %4902 = vmatprep.subr.bf16.mxu0 0
  %4903 = vmatpush2.bf16.msra.mxu0 %v3430
  %4904 = vmatprep.subr.bf16.mxu0 0
  %4905 = vmatpush2.bf16.msra.mxu0 %v3429
  %4906 = vmatprep.subr.bf16.mxu0 0
  %4907 = vmatpush2.bf16.msra.mxu0 %v3428
  %4908 = vmatprep.subr.bf16.mxu0 0
  %4909 = vmatpush2.bf16.msra.mxu0 %v3427
  %4910 = vmatprep.mubr.bf16.mxu0 %v4336
  %4911 = vmatmul.mubr.bf16.gmra.mxu0 %v4335
  %v4912 = vpop.f32.mrf.mxu0
  %v4913 = vadd.f32 %v4624, %v4912
  %v4914 = vpop.f32.mrf.mxu0
  %v4915 = vpop.f32.mrf.mxu0
  %v4916 = vadd.f32 %v4627, %v4915
  %v4917 = vpop.f32.mrf.mxu0
  %4918 = vmatprep.mubr.bf16.mxu0 %v4340
  %4919 = vmatmul.mubr.bf16.gmra.mxu0 %v4339
  %v4920 = vpop.f32.mrf.mxu0
  %v4921 = vadd.f32 %v4632, %v4920
  %v4922 = vpop.f32.mrf.mxu0
  %v4923 = vpop.f32.mrf.mxu0
  %v4924 = vadd.f32 %v4635, %v4923
  %v4925 = vpop.f32.mrf.mxu0
  %4926 = vmatprep.mubr.bf16.mxu0 %v4344
  %4927 = vmatmul.mubr.bf16.gmra.mxu0 %v4343
  %v4928 = vpop.f32.mrf.mxu0
  %v4929 = vadd.f32 %v4640, %v4928
  %v4930 = vpop.f32.mrf.mxu0
  %v4931 = vpop.f32.mrf.mxu0
  %v4932 = vadd.f32 %v4643, %v4931
  %v4933 = vpop.f32.mrf.mxu0
  %4934 = vmatprep.mubr.bf16.mxu0 %v4348
  %4935 = vmatmul.mubr.bf16.gmra.mxu0 %v4347
  %v4936 = vpop.f32.mrf.mxu0
  %v4937 = vadd.f32 %v4648, %v4936
  %v4938 = vpop.f32.mrf.mxu0
  %v4939 = vpop.f32.mrf.mxu0
  %v4940 = vadd.f32 %v4651, %v4939
  %v4941 = vpop.f32.mrf.mxu0
  %4942 = vmatprep.mubr.bf16.mxu0 %v4352
  %4943 = vmatmul.mubr.bf16.gmra.mxu0 %v4351
  %v4944 = vpop.f32.mrf.mxu0
  %v4945 = vadd.f32 %v4656, %v4944
  %v4946 = vpop.f32.mrf.mxu0
  %v4947 = vpop.f32.mrf.mxu0
  %v4948 = vadd.f32 %v4659, %v4947
  %v4949 = vpop.f32.mrf.mxu0
  %4950 = vmatprep.mubr.bf16.mxu0 %v4356
  %4951 = vmatmul.mubr.bf16.gmra.mxu0 %v4355
  %v4952 = vpop.f32.mrf.mxu0
  %v4953 = vadd.f32 %v4664, %v4952
  %v4954 = vpop.f32.mrf.mxu0
  %v4955 = vpop.f32.mrf.mxu0
  %v4956 = vadd.f32 %v4667, %v4955
  %v4957 = vpop.f32.mrf.mxu0
  %4958 = vmatprep.mubr.bf16.mxu0 %v4360
  %4959 = vmatmul.mubr.bf16.gmra.mxu0 %v4359
  %v4960 = vpop.f32.mrf.mxu0
  %v4961 = vadd.f32 %v4672, %v4960
  %v4962 = vpop.f32.mrf.mxu0
  %v4963 = vpop.f32.mrf.mxu0
  %v4964 = vadd.f32 %v4675, %v4963
  %v4965 = vpop.f32.mrf.mxu0
  %4966 = vmatprep.mubr.bf16.mxu0 %v4364
  %4967 = vmatmul.mubr.bf16.gmra.mxu0 %v4363
  %v4968 = vpop.f32.mrf.mxu0
  %v4969 = vadd.f32 %v4680, %v4968
  %v4970 = vpop.f32.mrf.mxu0
  %v4971 = vpop.f32.mrf.mxu0
  %v4972 = vadd.f32 %v4683, %v4971
  %v4973 = vpop.f32.mrf.mxu0
  %4974 = vmatprep.mubr.bf16.mxu0 %v4368
  %4975 = vmatmul.mubr.bf16.gmra.mxu0 %v4367
  %v4976 = vpop.f32.mrf.mxu0
  %v4977 = vadd.f32 %v4688, %v4976
  %v4978 = vpop.f32.mrf.mxu0
  %v4979 = vpop.f32.mrf.mxu0
  %v4980 = vadd.f32 %v4691, %v4979
  %v4981 = vpop.f32.mrf.mxu0
  %4982 = vmatprep.mubr.bf16.mxu0 %v4372
  %4983 = vmatmul.mubr.bf16.gmra.mxu0 %v4371
  %v4984 = vpop.f32.mrf.mxu0
  %v4985 = vadd.f32 %v4696, %v4984
  %v4986 = vpop.f32.mrf.mxu0
  %v4987 = vpop.f32.mrf.mxu0
  %v4988 = vadd.f32 %v4699, %v4987
  %v4989 = vpop.f32.mrf.mxu0
  %4990 = vmatprep.mubr.bf16.mxu0 %v4376
  %4991 = vmatmul.mubr.bf16.gmra.mxu0 %v4375
  %v4992 = vpop.f32.mrf.mxu0
  %v4993 = vadd.f32 %v4704, %v4992
  %v4994 = vpop.f32.mrf.mxu0
  %v4995 = vpop.f32.mrf.mxu0
  %v4996 = vadd.f32 %v4707, %v4995
  %v4997 = vpop.f32.mrf.mxu0
  %4998 = vmatprep.mubr.bf16.mxu0 %v4380
  %4999 = vmatmul.mubr.bf16.gmra.mxu0 %v4379
  %v5000 = vpop.f32.mrf.mxu0
  %v5001 = vadd.f32 %v4712, %v5000
  %v5002 = vpop.f32.mrf.mxu0
  %v5003 = vpop.f32.mrf.mxu0
  %v5004 = vadd.f32 %v4715, %v5003
  %v5005 = vpop.f32.mrf.mxu0
  %5006 = vmatprep.mubr.bf16.mxu0 %v4384
  %5007 = vmatmul.mubr.bf16.gmra.mxu0 %v4383
  %v5008 = vpop.f32.mrf.mxu0
  %v5009 = vadd.f32 %v4720, %v5008
  %v5010 = vpop.f32.mrf.mxu0
  %v5011 = vpop.f32.mrf.mxu0
  %v5012 = vadd.f32 %v4723, %v5011
  %v5013 = vpop.f32.mrf.mxu0
  %5014 = vmatprep.mubr.bf16.mxu0 %v4388
  %5015 = vmatmul.mubr.bf16.gmra.mxu0 %v4387
  %v5016 = vpop.f32.mrf.mxu0
  %v5017 = vadd.f32 %v4728, %v5016
  %v5018 = vpop.f32.mrf.mxu0
  %v5019 = vpop.f32.mrf.mxu0
  %v5020 = vadd.f32 %v4731, %v5019
  %v5021 = vpop.f32.mrf.mxu0
  %5022 = vmatprep.mubr.bf16.mxu0 %v4392
  %5023 = vmatmul.mubr.bf16.gmra.mxu0 %v4391
  %v5024 = vpop.f32.mrf.mxu0
  %v5025 = vadd.f32 %v4736, %v5024
  %v5026 = vpop.f32.mrf.mxu0
  %v5027 = vpop.f32.mrf.mxu0
  %v5028 = vadd.f32 %v4739, %v5027
  %v5029 = vpop.f32.mrf.mxu0
  %5030 = vmatprep.mubr.bf16.mxu0 %v4396
  %5031 = vmatmul.mubr.bf16.gmra.mxu0 %v4395
  %v5032 = vpop.f32.mrf.mxu0
  %v5033 = vadd.f32 %v4744, %v5032
  %v5034 = vpop.f32.mrf.mxu0
  %v5035 = vpop.f32.mrf.mxu0
  %v5036 = vadd.f32 %v4747, %v5035
  %v5037 = vpop.f32.mrf.mxu0
  %5038 = vmatprep.mubr.bf16.mxu0 %v4400
  %5039 = vmatmul.mubr.bf16.gmra.mxu0 %v4399
  %v5040 = vpop.f32.mrf.mxu0
  %v5041 = vadd.f32 %v4752, %v5040
  %v5042 = vpop.f32.mrf.mxu0
  %v5043 = vpop.f32.mrf.mxu0
  %v5044 = vadd.f32 %v4755, %v5043
  %v5045 = vpop.f32.mrf.mxu0
  %5046 = vmatprep.mubr.bf16.mxu0 %v4404
  %5047 = vmatmul.mubr.bf16.gmra.mxu0 %v4403
  %v5048 = vpop.f32.mrf.mxu0
  %v5049 = vadd.f32 %v4760, %v5048
  %v5050 = vpop.f32.mrf.mxu0
  %v5051 = vpop.f32.mrf.mxu0
  %v5052 = vadd.f32 %v4763, %v5051
  %v5053 = vpop.f32.mrf.mxu0
  %5054 = vmatprep.mubr.bf16.mxu0 %v4408
  %5055 = vmatmul.mubr.bf16.gmra.mxu0 %v4407
  %v5056 = vpop.f32.mrf.mxu0
  %v5057 = vadd.f32 %v4768, %v5056
  %v5058 = vpop.f32.mrf.mxu0
  %v5059 = vpop.f32.mrf.mxu0
  %v5060 = vadd.f32 %v4771, %v5059
  %v5061 = vpop.f32.mrf.mxu0
  %5062 = vmatprep.mubr.bf16.mxu0 %v4412
  %5063 = vmatmul.mubr.bf16.gmra.mxu0 %v4411
  %v5064 = vpop.f32.mrf.mxu0
  %v5065 = vadd.f32 %v4776, %v5064
  %v5066 = vpop.f32.mrf.mxu0
  %v5067 = vpop.f32.mrf.mxu0
  %v5068 = vadd.f32 %v4779, %v5067
  %v5069 = vpop.f32.mrf.mxu0
  %5070 = vmatprep.mubr.bf16.mxu0 %v4416
  %5071 = vmatmul.mubr.bf16.gmra.mxu0 %v4415
  %v5072 = vpop.f32.mrf.mxu0
  %v5073 = vadd.f32 %v4784, %v5072
  %v5074 = vpop.f32.mrf.mxu0
  %v5075 = vpop.f32.mrf.mxu0
  %v5076 = vadd.f32 %v4787, %v5075
  %v5077 = vpop.f32.mrf.mxu0
  %5078 = vmatprep.mubr.bf16.mxu0 %v4420
  %5079 = vmatmul.mubr.bf16.gmra.mxu0 %v4419
  %v5080 = vpop.f32.mrf.mxu0
  %v5081 = vadd.f32 %v4792, %v5080
  %v5082 = vpop.f32.mrf.mxu0
  %v5083 = vpop.f32.mrf.mxu0
  %v5084 = vadd.f32 %v4795, %v5083
  %v5085 = vpop.f32.mrf.mxu0
  %5086 = vmatprep.mubr.bf16.mxu0 %v4424
  %5087 = vmatmul.mubr.bf16.gmra.mxu0 %v4423
  %v5088 = vpop.f32.mrf.mxu0
  %v5089 = vadd.f32 %v4800, %v5088
  %v5090 = vpop.f32.mrf.mxu0
  %v5091 = vpop.f32.mrf.mxu0
  %v5092 = vadd.f32 %v4803, %v5091
  %v5093 = vpop.f32.mrf.mxu0
  %5094 = vmatprep.mubr.bf16.mxu0 %v4428
  %5095 = vmatmul.mubr.bf16.gmra.mxu0 %v4427
  %v5096 = vpop.f32.mrf.mxu0
  %v5097 = vadd.f32 %v4808, %v5096
  %v5098 = vpop.f32.mrf.mxu0
  %v5099 = vpop.f32.mrf.mxu0
  %v5100 = vadd.f32 %v4811, %v5099
  %v5101 = vpop.f32.mrf.mxu0
  %5102 = vmatprep.mubr.bf16.mxu0 %v4432
  %5103 = vmatmul.mubr.bf16.gmra.mxu0 %v4431
  %v5104 = vpop.f32.mrf.mxu0
  %v5105 = vadd.f32 %v4816, %v5104
  %v5106 = vpop.f32.mrf.mxu0
  %v5107 = vpop.f32.mrf.mxu0
  %v5108 = vadd.f32 %v4819, %v5107
  %v5109 = vpop.f32.mrf.mxu0
  %5110 = vmatprep.mubr.bf16.mxu0 %v4436
  %5111 = vmatmul.mubr.bf16.gmra.mxu0 %v4435
  %v5112 = vpop.f32.mrf.mxu0
  %v5113 = vadd.f32 %v4824, %v5112
  %v5114 = vpop.f32.mrf.mxu0
  %v5115 = vpop.f32.mrf.mxu0
  %v5116 = vadd.f32 %v4827, %v5115
  %v5117 = vpop.f32.mrf.mxu0
  %5118 = vmatprep.mubr.bf16.mxu0 %v4440
  %5119 = vmatmul.mubr.bf16.gmra.mxu0 %v4439
  %v5120 = vpop.f32.mrf.mxu0
  %v5121 = vadd.f32 %v4832, %v5120
  %v5122 = vpop.f32.mrf.mxu0
  %v5123 = vpop.f32.mrf.mxu0
  %v5124 = vadd.f32 %v4835, %v5123
  %v5125 = vpop.f32.mrf.mxu0
  %5126 = vmatprep.mubr.bf16.mxu0 %v4444
  %5127 = vmatmul.mubr.bf16.gmra.mxu0 %v4443
  %v5128 = vpop.f32.mrf.mxu0
  %v5129 = vadd.f32 %v4840, %v5128
  %v5130 = vpop.f32.mrf.mxu0
  %v5131 = vpop.f32.mrf.mxu0
  %v5132 = vadd.f32 %v4843, %v5131
  %v5133 = vpop.f32.mrf.mxu0
  %5134 = vmatprep.mubr.bf16.mxu0 %v4448
  %5135 = vmatmul.mubr.bf16.gmra.mxu0 %v4447
  %v5136 = vpop.f32.mrf.mxu0
  %v5137 = vadd.f32 %v4848, %v5136
  %v5138 = vpop.f32.mrf.mxu0
  %v5139 = vpop.f32.mrf.mxu0
  %v5140 = vadd.f32 %v4851, %v5139
  %v5141 = vpop.f32.mrf.mxu0
  %5142 = vmatprep.mubr.bf16.mxu0 %v4452
  %5143 = vmatmul.mubr.bf16.gmra.mxu0 %v4451
  %v5144 = vpop.f32.mrf.mxu0
  %v5145 = vadd.f32 %v4856, %v5144
  %v5146 = vpop.f32.mrf.mxu0
  %v5147 = vpop.f32.mrf.mxu0
  %v5148 = vadd.f32 %v4859, %v5147
  %v5149 = vpop.f32.mrf.mxu0
  %5150 = vmatprep.mubr.bf16.mxu0 %v4456
  %5151 = vmatmul.mubr.bf16.gmra.mxu0 %v4455
  %v5152 = vpop.f32.mrf.mxu0
  %v5153 = vadd.f32 %v4864, %v5152
  %v5154 = vpop.f32.mrf.mxu0
  %v5155 = vpop.f32.mrf.mxu0
  %v5156 = vadd.f32 %v4867, %v5155
  %v5157 = vpop.f32.mrf.mxu0
  %5158 = vmatprep.mubr.bf16.mxu0 %v4460
  %5159 = vmatmul.mubr.bf16.gmra.mxu0 %v4459
  %v5160 = vpop.f32.mrf.mxu0
  %v5161 = vadd.f32 %v4872, %v5160
  %v5162 = vpop.f32.mrf.mxu0
  %v5163 = vpop.f32.mrf.mxu0
  %v5164 = vadd.f32 %v4875, %v5163
  %v5165 = vpop.f32.mrf.mxu0
  %5166 = vdwg.mxu0
  %v5167 = vmax.f32 %v4913, 0.0
  %v5168 = vmax.f32 %v4916, 0.0
  %v5169 = vmax.f32 %v4921, 0.0
  %v5170 = vmax.f32 %v4924, 0.0
  %v5171 = vmax.f32 %v4929, 0.0
  %v5172 = vmax.f32 %v4932, 0.0
  %v5173 = vmax.f32 %v4937, 0.0
  %v5174 = vmax.f32 %v4940, 0.0
  %v5175 = vmax.f32 %v4945, 0.0
  %v5176 = vmax.f32 %v4948, 0.0
  %v5177 = vmax.f32 %v4953, 0.0
  %v5178 = vmax.f32 %v4956, 0.0
  %v5179 = vmax.f32 %v4961, 0.0
  %v5180 = vmax.f32 %v4964, 0.0
  %v5181 = vmax.f32 %v4969, 0.0
  %v5182 = vmax.f32 %v4972, 0.0
  %v5183 = vmax.f32 %v4977, 0.0
  %v5184 = vmax.f32 %v4980, 0.0
  %v5185 = vmax.f32 %v4985, 0.0
  %v5186 = vmax.f32 %v4988, 0.0
  %v5187 = vmax.f32 %v4993, 0.0
  %v5188 = vmax.f32 %v4996, 0.0
  %v5189 = vmax.f32 %v5001, 0.0
  %v5190 = vmax.f32 %v5004, 0.0
  %v5191 = vmax.f32 %v5009, 0.0
  %v5192 = vmax.f32 %v5012, 0.0
  %v5193 = vmax.f32 %v5017, 0.0
  %v5194 = vmax.f32 %v5020, 0.0
  %v5195 = vmax.f32 %v5025, 0.0
  %v5196 = vmax.f32 %v5028, 0.0
  %v5197 = vmax.f32 %v5033, 0.0
  %v5198 = vmax.f32 %v5036, 0.0
  %v5199 = vmax.f32 %v5041, 0.0
  %v5200 = vmax.f32 %v5044, 0.0
  %v5201 = vmax.f32 %v5049, 0.0
  %v5202 = vmax.f32 %v5052, 0.0
  %v5203 = vmax.f32 %v5057, 0.0
  %v5204 = vmax.f32 %v5060, 0.0
  %v5205 = vmax.f32 %v5065, 0.0
  %v5206 = vmax.f32 %v5068, 0.0
  %v5207 = vmax.f32 %v5073, 0.0
  %v5208 = vmax.f32 %v5076, 0.0
  %v5209 = vmax.f32 %v5081, 0.0
  %v5210 = vmax.f32 %v5084, 0.0
  %v5211 = vmax.f32 %v5089, 0.0
  %v5212 = vmax.f32 %v5092, 0.0
  %v5213 = vmax.f32 %v5097, 0.0
  %v5214 = vmax.f32 %v5100, 0.0
  %v5215 = vmax.f32 %v5105, 0.0
  %v5216 = vmax.f32 %v5108, 0.0
  %v5217 = vmax.f32 %v5113, 0.0
  %v5218 = vmax.f32 %v5116, 0.0
  %v5219 = vmax.f32 %v5121, 0.0
  %v5220 = vmax.f32 %v5124, 0.0
  %v5221 = vmax.f32 %v5129, 0.0
  %v5222 = vmax.f32 %v5132, 0.0
  %v5223 = vmax.f32 %v5137, 0.0
  %v5224 = vmax.f32 %v5140, 0.0
  %v5225 = vmax.f32 %v5145, 0.0
  %v5226 = vmax.f32 %v5148, 0.0
  %v5227 = vmax.f32 %v5153, 0.0
  %v5228 = vmax.f32 %v5156, 0.0
  %v5229 = vmax.f32 %v5161, 0.0
  %v5230 = vmax.f32 %v5164, 0.0
  %v5231 = vpack.c.bf16 %v5168, %v5167
  %v5232 = vpack.c.bf16 %v5170, %v5169
  %v5233 = vpack.c.bf16 %v5172, %v5171
  %v5234 = vpack.c.bf16 %v5174, %v5173
  %v5235 = vpack.c.bf16 %v5176, %v5175
  %v5236 = vpack.c.bf16 %v5178, %v5177
  %v5237 = vpack.c.bf16 %v5180, %v5179
  %v5238 = vpack.c.bf16 %v5182, %v5181
  %v5239 = vpack.c.bf16 %v5184, %v5183
  %v5240 = vpack.c.bf16 %v5186, %v5185
  %v5241 = vpack.c.bf16 %v5188, %v5187
  %v5242 = vpack.c.bf16 %v5190, %v5189
  %v5243 = vpack.c.bf16 %v5192, %v5191
  %v5244 = vpack.c.bf16 %v5194, %v5193
  %v5245 = vpack.c.bf16 %v5196, %v5195
  %v5246 = vpack.c.bf16 %v5198, %v5197
  %v5247 = vpack.c.bf16 %v5200, %v5199
  %v5248 = vpack.c.bf16 %v5202, %v5201
  %v5249 = vpack.c.bf16 %v5204, %v5203
  %v5250 = vpack.c.bf16 %v5206, %v5205
  %v5251 = vpack.c.bf16 %v5208, %v5207
  %v5252 = vpack.c.bf16 %v5210, %v5209
  %v5253 = vpack.c.bf16 %v5212, %v5211
  %v5254 = vpack.c.bf16 %v5214, %v5213
  %v5255 = vpack.c.bf16 %v5216, %v5215
  %v5256 = vpack.c.bf16 %v5218, %v5217
  %v5257 = vpack.c.bf16 %v5220, %v5219
  %v5258 = vpack.c.bf16 %v5222, %v5221
  %v5259 = vpack.c.bf16 %v5224, %v5223
  %v5260 = vpack.c.bf16 %v5226, %v5225
  %v5261 = vpack.c.bf16 %v5228, %v5227
  %v5262 = vpack.c.bf16 %v5230, %v5229
  %s5263 = sshll.u32 %s1606, 4
  %5264 = dma.done %s625, %s5263
  %v5265 = vld [vmem:[#allocation5] sm:$0xff]
  %v5266 = vld [vmem:[#allocation5 + $0x8] sm:$0xff]
  %v5267 = vld [vmem:[#allocation5 + $0x10] sm:$0xff]
  %v5268 = vld [vmem:[#allocation5 + $0x18] sm:$0xff]
  %v5269 = vld [vmem:[#allocation5 + $0x20] sm:$0xff]
  %v5270 = vld [vmem:[#allocation5 + $0x28] sm:$0xff]
  %v5271 = vld [vmem:[#allocation5 + $0x30] sm:$0xff]
  %v5272 = vld [vmem:[#allocation5 + $0x38] sm:$0xff]
  %v5273 = vld [vmem:[#allocation5 + $0x40] sm:$0xff]
  %v5274 = vld [vmem:[#allocation5 + $0x48] sm:$0xff]
  %v5275 = vld [vmem:[#allocation5 + $0x50] sm:$0xff]
  %v5276 = vld [vmem:[#allocation5 + $0x58] sm:$0xff]
  %v5277 = vld [vmem:[#allocation5 + $0x60] sm:$0xff]
  %v5278 = vld [vmem:[#allocation5 + $0x68] sm:$0xff]
  %v5279 = vld [vmem:[#allocation5 + $0x70] sm:$0xff]
  %v5280 = vld [vmem:[#allocation5 + $0x78] sm:$0xff]
  %v5281 = vld [vmem:[#allocation5 + $0x80] sm:$0xff]
  %v5282 = vld [vmem:[#allocation5 + $0x88] sm:$0xff]
  %v5283 = vld [vmem:[#allocation5 + $0x90] sm:$0xff]
  %v5284 = vld [vmem:[#allocation5 + $0x98] sm:$0xff]
  %v5285 = vld [vmem:[#allocation5 + $0xa0] sm:$0xff]
  %v5286 = vld [vmem:[#allocation5 + $0xa8] sm:$0xff]
  %v5287 = vld [vmem:[#allocation5 + $0xb0] sm:$0xff]
  %v5288 = vld [vmem:[#allocation5 + $0xb8] sm:$0xff]
  %v5289 = vld [vmem:[#allocation5 + $0xc0] sm:$0xff]
  %v5290 = vld [vmem:[#allocation5 + $0xc8] sm:$0xff]
  %v5291 = vld [vmem:[#allocation5 + $0xd0] sm:$0xff]
  %v5292 = vld [vmem:[#allocation5 + $0xd8] sm:$0xff]
  %v5293 = vld [vmem:[#allocation5 + $0xe0] sm:$0xff]
  %v5294 = vld [vmem:[#allocation5 + $0xe8] sm:$0xff]
  %v5295 = vld [vmem:[#allocation5 + $0xf0] sm:$0xff]
  %v5296 = vld [vmem:[#allocation5 + $0xf8] sm:$0xff]
  %v5297 = vld [vmem:[#allocation5 + $0x100] sm:$0xff]
  %v5298 = vld [vmem:[#allocation5 + $0x108] sm:$0xff]
  %v5299 = vld [vmem:[#allocation5 + $0x110] sm:$0xff]
  %v5300 = vld [vmem:[#allocation5 + $0x118] sm:$0xff]
  %v5301 = vld [vmem:[#allocation5 + $0x120] sm:$0xff]
  %v5302 = vld [vmem:[#allocation5 + $0x128] sm:$0xff]
  %v5303 = vld [vmem:[#allocation5 + $0x130] sm:$0xff]
  %v5304 = vld [vmem:[#allocation5 + $0x138] sm:$0xff]
  %v5305 = vld [vmem:[#allocation5 + $0x140] sm:$0xff]
  %v5306 = vld [vmem:[#allocation5 + $0x148] sm:$0xff]
  %v5307 = vld [vmem:[#allocation5 + $0x150] sm:$0xff]
  %v5308 = vld [vmem:[#allocation5 + $0x158] sm:$0xff]
  %v5309 = vld [vmem:[#allocation5 + $0x160] sm:$0xff]
  %v5310 = vld [vmem:[#allocation5 + $0x168] sm:$0xff]
  %v5311 = vld [vmem:[#allocation5 + $0x170] sm:$0xff]
  %v5312 = vld [vmem:[#allocation5 + $0x178] sm:$0xff]
  %v5313 = vld [vmem:[#allocation5 + $0x180] sm:$0xff]
  %v5314 = vld [vmem:[#allocation5 + $0x188] sm:$0xff]
  %v5315 = vld [vmem:[#allocation5 + $0x190] sm:$0xff]
  %v5316 = vld [vmem:[#allocation5 + $0x198] sm:$0xff]
  %v5317 = vld [vmem:[#allocation5 + $0x1a0] sm:$0xff]
  %v5318 = vld [vmem:[#allocation5 + $0x1a8] sm:$0xff]
  %v5319 = vld [vmem:[#allocation5 + $0x1b0] sm:$0xff]
  %v5320 = vld [vmem:[#allocation5 + $0x1b8] sm:$0xff]
  %v5321 = vld [vmem:[#allocation5 + $0x1c0] sm:$0xff]
  %v5322 = vld [vmem:[#allocation5 + $0x1c8] sm:$0xff]
  %v5323 = vld [vmem:[#allocation5 + $0x1d0] sm:$0xff]
  %v5324 = vld [vmem:[#allocation5 + $0x1d8] sm:$0xff]
  %v5325 = vld [vmem:[#allocation5 + $0x1e0] sm:$0xff]
  %v5326 = vld [vmem:[#allocation5 + $0x1e8] sm:$0xff]
  %v5327 = vld [vmem:[#allocation5 + $0x1f0] sm:$0xff]
  %v5328 = vld [vmem:[#allocation5 + $0x1f8] sm:$0xff]
  %v5329 = vld [vmem:[#allocation5 + $0x200] sm:$0xff]
  %v5330 = vld [vmem:[#allocation5 + $0x208] sm:$0xff]
  %v5331 = vld [vmem:[#allocation5 + $0x210] sm:$0xff]
  %v5332 = vld [vmem:[#allocation5 + $0x218] sm:$0xff]
  %v5333 = vld [vmem:[#allocation5 + $0x220] sm:$0xff]
  %v5334 = vld [vmem:[#allocation5 + $0x228] sm:$0xff]
  %v5335 = vld [vmem:[#allocation5 + $0x230] sm:$0xff]
  %v5336 = vld [vmem:[#allocation5 + $0x238] sm:$0xff]
  %v5337 = vld [vmem:[#allocation5 + $0x240] sm:$0xff]
  %v5338 = vld [vmem:[#allocation5 + $0x248] sm:$0xff]
  %v5339 = vld [vmem:[#allocation5 + $0x250] sm:$0xff]
  %v5340 = vld [vmem:[#allocation5 + $0x258] sm:$0xff]
  %v5341 = vld [vmem:[#allocation5 + $0x260] sm:$0xff]
  %v5342 = vld [vmem:[#allocation5 + $0x268] sm:$0xff]
  %v5343 = vld [vmem:[#allocation5 + $0x270] sm:$0xff]
  %v5344 = vld [vmem:[#allocation5 + $0x278] sm:$0xff]
  %v5345 = vld [vmem:[#allocation5 + $0x280] sm:$0xff]
  %v5346 = vld [vmem:[#allocation5 + $0x288] sm:$0xff]
  %v5347 = vld [vmem:[#allocation5 + $0x290] sm:$0xff]
  %v5348 = vld [vmem:[#allocation5 + $0x298] sm:$0xff]
  %v5349 = vld [vmem:[#allocation5 + $0x2a0] sm:$0xff]
  %v5350 = vld [vmem:[#allocation5 + $0x2a8] sm:$0xff]
  %v5351 = vld [vmem:[#allocation5 + $0x2b0] sm:$0xff]
  %v5352 = vld [vmem:[#allocation5 + $0x2b8] sm:$0xff]
  %v5353 = vld [vmem:[#allocation5 + $0x2c0] sm:$0xff]
  %v5354 = vld [vmem:[#allocation5 + $0x2c8] sm:$0xff]
  %v5355 = vld [vmem:[#allocation5 + $0x2d0] sm:$0xff]
  %v5356 = vld [vmem:[#allocation5 + $0x2d8] sm:$0xff]
  %v5357 = vld [vmem:[#allocation5 + $0x2e0] sm:$0xff]
  %v5358 = vld [vmem:[#allocation5 + $0x2e8] sm:$0xff]
  %v5359 = vld [vmem:[#allocation5 + $0x2f0] sm:$0xff]
  %v5360 = vld [vmem:[#allocation5 + $0x2f8] sm:$0xff]
  %v5361 = vld [vmem:[#allocation5 + $0x300] sm:$0xff]
  %v5362 = vld [vmem:[#allocation5 + $0x308] sm:$0xff]
  %v5363 = vld [vmem:[#allocation5 + $0x310] sm:$0xff]
  %v5364 = vld [vmem:[#allocation5 + $0x318] sm:$0xff]
  %v5365 = vld [vmem:[#allocation5 + $0x320] sm:$0xff]
  %v5366 = vld [vmem:[#allocation5 + $0x328] sm:$0xff]
  %v5367 = vld [vmem:[#allocation5 + $0x330] sm:$0xff]
  %v5368 = vld [vmem:[#allocation5 + $0x338] sm:$0xff]
  %v5369 = vld [vmem:[#allocation5 + $0x340] sm:$0xff]
  %v5370 = vld [vmem:[#allocation5 + $0x348] sm:$0xff]
  %v5371 = vld [vmem:[#allocation5 + $0x350] sm:$0xff]
  %v5372 = vld [vmem:[#allocation5 + $0x358] sm:$0xff]
  %v5373 = vld [vmem:[#allocation5 + $0x360] sm:$0xff]
  %v5374 = vld [vmem:[#allocation5 + $0x368] sm:$0xff]
  %v5375 = vld [vmem:[#allocation5 + $0x370] sm:$0xff]
  %v5376 = vld [vmem:[#allocation5 + $0x378] sm:$0xff]
  %v5377 = vld [vmem:[#allocation5 + $0x380] sm:$0xff]
  %v5378 = vld [vmem:[#allocation5 + $0x388] sm:$0xff]
  %v5379 = vld [vmem:[#allocation5 + $0x390] sm:$0xff]
  %v5380 = vld [vmem:[#allocation5 + $0x398] sm:$0xff]
  %v5381 = vld [vmem:[#allocation5 + $0x3a0] sm:$0xff]
  %v5382 = vld [vmem:[#allocation5 + $0x3a8] sm:$0xff]
  %v5383 = vld [vmem:[#allocation5 + $0x3b0] sm:$0xff]
  %v5384 = vld [vmem:[#allocation5 + $0x3b8] sm:$0xff]
  %v5385 = vld [vmem:[#allocation5 + $0x3c0] sm:$0xff]
  %v5386 = vld [vmem:[#allocation5 + $0x3c8] sm:$0xff]
  %v5387 = vld [vmem:[#allocation5 + $0x3d0] sm:$0xff]
  %v5388 = vld [vmem:[#allocation5 + $0x3d8] sm:$0xff]
  %v5389 = vld [vmem:[#allocation5 + $0x3e0] sm:$0xff]
  %v5390 = vld [vmem:[#allocation5 + $0x3e8] sm:$0xff]
  %v5391 = vld [vmem:[#allocation5 + $0x3f0] sm:$0xff]
  %v5392 = vld [vmem:[#allocation5 + $0x3f8] sm:$0xff]
  %v5393 = vld [vmem:[%s9] sm:$0xff]
  %v5394 = vld [vmem:[%s9 + $0x8] sm:$0xff]
  %v5395 = vld [vmem:[%s9 + $0x10] sm:$0xff]
  %v5396 = vld [vmem:[%s9 + $0x18] sm:$0xff]
  %v5397 = vld [vmem:[%s9 + $0x20] sm:$0xff]
  %v5398 = vld [vmem:[%s9 + $0x28] sm:$0xff]
  %v5399 = vld [vmem:[%s9 + $0x30] sm:$0xff]
  %v5400 = vld [vmem:[%s9 + $0x38] sm:$0xff]
  %v5401 = vld [vmem:[%s9 + $0x40] sm:$0xff]
  %v5402 = vld [vmem:[%s9 + $0x48] sm:$0xff]
  %v5403 = vld [vmem:[%s9 + $0x50] sm:$0xff]
  %v5404 = vld [vmem:[%s9 + $0x58] sm:$0xff]
  %v5405 = vld [vmem:[%s9 + $0x60] sm:$0xff]
  %v5406 = vld [vmem:[%s9 + $0x68] sm:$0xff]
  %v5407 = vld [vmem:[%s9 + $0x70] sm:$0xff]
  %v5408 = vld [vmem:[%s9 + $0x78] sm:$0xff]
  %v5409 = vld [vmem:[%s9 + $0x80] sm:$0xff]
  %v5410 = vld [vmem:[%s9 + $0x88] sm:$0xff]
  %v5411 = vld [vmem:[%s9 + $0x90] sm:$0xff]
  %v5412 = vld [vmem:[%s9 + $0x98] sm:$0xff]
  %v5413 = vld [vmem:[%s9 + $0xa0] sm:$0xff]
  %v5414 = vld [vmem:[%s9 + $0xa8] sm:$0xff]
  %v5415 = vld [vmem:[%s9 + $0xb0] sm:$0xff]
  %v5416 = vld [vmem:[%s9 + $0xb8] sm:$0xff]
  %v5417 = vld [vmem:[%s9 + $0xc0] sm:$0xff]
  %v5418 = vld [vmem:[%s9 + $0xc8] sm:$0xff]
  %v5419 = vld [vmem:[%s9 + $0xd0] sm:$0xff]
  %v5420 = vld [vmem:[%s9 + $0xd8] sm:$0xff]
  %v5421 = vld [vmem:[%s9 + $0xe0] sm:$0xff]
  %v5422 = vld [vmem:[%s9 + $0xe8] sm:$0xff]
  %v5423 = vld [vmem:[%s9 + $0xf0] sm:$0xff]
  %v5424 = vld [vmem:[%s9 + $0xf8] sm:$0xff]
  %v5425 = vld [vmem:[%s9 + $0x100] sm:$0xff]
  %v5426 = vld [vmem:[%s9 + $0x108] sm:$0xff]
  %v5427 = vld [vmem:[%s9 + $0x110] sm:$0xff]
  %v5428 = vld [vmem:[%s9 + $0x118] sm:$0xff]
  %v5429 = vld [vmem:[%s9 + $0x120] sm:$0xff]
  %v5430 = vld [vmem:[%s9 + $0x128] sm:$0xff]
  %v5431 = vld [vmem:[%s9 + $0x130] sm:$0xff]
  %v5432 = vld [vmem:[%s9 + $0x138] sm:$0xff]
  %v5433 = vld [vmem:[%s9 + $0x140] sm:$0xff]
  %v5434 = vld [vmem:[%s9 + $0x148] sm:$0xff]
  %v5435 = vld [vmem:[%s9 + $0x150] sm:$0xff]
  %v5436 = vld [vmem:[%s9 + $0x158] sm:$0xff]
  %v5437 = vld [vmem:[%s9 + $0x160] sm:$0xff]
  %v5438 = vld [vmem:[%s9 + $0x168] sm:$0xff]
  %v5439 = vld [vmem:[%s9 + $0x170] sm:$0xff]
  %v5440 = vld [vmem:[%s9 + $0x178] sm:$0xff]
  %v5441 = vld [vmem:[%s9 + $0x180] sm:$0xff]
  %v5442 = vld [vmem:[%s9 + $0x188] sm:$0xff]
  %v5443 = vld [vmem:[%s9 + $0x190] sm:$0xff]
  %v5444 = vld [vmem:[%s9 + $0x198] sm:$0xff]
  %v5445 = vld [vmem:[%s9 + $0x1a0] sm:$0xff]
  %v5446 = vld [vmem:[%s9 + $0x1a8] sm:$0xff]
  %v5447 = vld [vmem:[%s9 + $0x1b0] sm:$0xff]
  %v5448 = vld [vmem:[%s9 + $0x1b8] sm:$0xff]
  %v5449 = vld [vmem:[%s9 + $0x1c0] sm:$0xff]
  %v5450 = vld [vmem:[%s9 + $0x1c8] sm:$0xff]
  %v5451 = vld [vmem:[%s9 + $0x1d0] sm:$0xff]
  %v5452 = vld [vmem:[%s9 + $0x1d8] sm:$0xff]
  %v5453 = vld [vmem:[%s9 + $0x1e0] sm:$0xff]
  %v5454 = vld [vmem:[%s9 + $0x1e8] sm:$0xff]
  %v5455 = vld [vmem:[%s9 + $0x1f0] sm:$0xff]
  %v5456 = vld [vmem:[%s9 + $0x1f8] sm:$0xff]
  %5458 = vset.pattern.permute.xlu0 0
  %5459 = vperm.xlu0 %5458, %v5393
  %v5460 = vpop.permute.xlu0 %5459
  %5463 = vset.pattern.permute.xlu0 0
  %5464 = vperm.xlu0 %5463, %v5394
  %v5465 = vpop.permute.xlu0 %5464
  %5468 = vset.pattern.permute.xlu0 0
  %5469 = vperm.xlu0 %5468, %v5395
  %v5470 = vpop.permute.xlu0 %5469
  %5473 = vset.pattern.permute.xlu0 0
  %5474 = vperm.xlu0 %5473, %v5396
  %v5475 = vpop.permute.xlu0 %5474
  %5478 = vset.pattern.permute.xlu0 0
  %5479 = vperm.xlu0 %5478, %v5397
  %v5480 = vpop.permute.xlu0 %5479
  %5483 = vset.pattern.permute.xlu0 0
  %5484 = vperm.xlu0 %5483, %v5398
  %v5485 = vpop.permute.xlu0 %5484
  %5488 = vset.pattern.permute.xlu0 0
  %5489 = vperm.xlu0 %5488, %v5399
  %v5490 = vpop.permute.xlu0 %5489
  %5493 = vset.pattern.permute.xlu0 0
  %5494 = vperm.xlu0 %5493, %v5400
  %v5495 = vpop.permute.xlu0 %5494
  %5498 = vset.pattern.permute.xlu0 0
  %5499 = vperm.xlu0 %5498, %v5401
  %v5500 = vpop.permute.xlu0 %5499
  %5503 = vset.pattern.permute.xlu0 0
  %5504 = vperm.xlu0 %5503, %v5402
  %v5505 = vpop.permute.xlu0 %5504
  %5508 = vset.pattern.permute.xlu0 0
  %5509 = vperm.xlu0 %5508, %v5403
  %v5510 = vpop.permute.xlu0 %5509
  %5513 = vset.pattern.permute.xlu0 0
  %5514 = vperm.xlu0 %5513, %v5404
  %v5515 = vpop.permute.xlu0 %5514
  %5518 = vset.pattern.permute.xlu0 0
  %5519 = vperm.xlu0 %5518, %v5405
  %v5520 = vpop.permute.xlu0 %5519
  %5523 = vset.pattern.permute.xlu0 0
  %5524 = vperm.xlu0 %5523, %v5406
  %v5525 = vpop.permute.xlu0 %5524
  %5528 = vset.pattern.permute.xlu0 0
  %5529 = vperm.xlu0 %5528, %v5407
  %v5530 = vpop.permute.xlu0 %5529
  %5533 = vset.pattern.permute.xlu0 0
  %5534 = vperm.xlu0 %5533, %v5408
  %v5535 = vpop.permute.xlu0 %5534
  %5538 = vset.pattern.permute.xlu0 0
  %5539 = vperm.xlu0 %5538, %v5409
  %v5540 = vpop.permute.xlu0 %5539
  %5543 = vset.pattern.permute.xlu0 0
  %5544 = vperm.xlu0 %5543, %v5410
  %v5545 = vpop.permute.xlu0 %5544
  %5548 = vset.pattern.permute.xlu0 0
  %5549 = vperm.xlu0 %5548, %v5411
  %v5550 = vpop.permute.xlu0 %5549
  %5553 = vset.pattern.permute.xlu0 0
  %5554 = vperm.xlu0 %5553, %v5412
  %v5555 = vpop.permute.xlu0 %5554
  %5558 = vset.pattern.permute.xlu0 0
  %5559 = vperm.xlu0 %5558, %v5413
  %v5560 = vpop.permute.xlu0 %5559
  %5563 = vset.pattern.permute.xlu0 0
  %5564 = vperm.xlu0 %5563, %v5414
  %v5565 = vpop.permute.xlu0 %5564
  %5568 = vset.pattern.permute.xlu0 0
  %5569 = vperm.xlu0 %5568, %v5415
  %v5570 = vpop.permute.xlu0 %5569
  %5573 = vset.pattern.permute.xlu0 0
  %5574 = vperm.xlu0 %5573, %v5416
  %v5575 = vpop.permute.xlu0 %5574
  %5578 = vset.pattern.permute.xlu0 0
  %5579 = vperm.xlu0 %5578, %v5417
  %v5580 = vpop.permute.xlu0 %5579
  %5583 = vset.pattern.permute.xlu0 0
  %5584 = vperm.xlu0 %5583, %v5418
  %v5585 = vpop.permute.xlu0 %5584
  %5588 = vset.pattern.permute.xlu0 0
  %5589 = vperm.xlu0 %5588, %v5419
  %v5590 = vpop.permute.xlu0 %5589
  %5593 = vset.pattern.permute.xlu0 0
  %5594 = vperm.xlu0 %5593, %v5420
  %v5595 = vpop.permute.xlu0 %5594
  %5598 = vset.pattern.permute.xlu0 0
  %5599 = vperm.xlu0 %5598, %v5421
  %v5600 = vpop.permute.xlu0 %5599
  %5603 = vset.pattern.permute.xlu0 0
  %5604 = vperm.xlu0 %5603, %v5422
  %v5605 = vpop.permute.xlu0 %5604
  %5608 = vset.pattern.permute.xlu0 0
  %5609 = vperm.xlu0 %5608, %v5423
  %v5610 = vpop.permute.xlu0 %5609
  %5613 = vset.pattern.permute.xlu0 0
  %5614 = vperm.xlu0 %5613, %v5424
  %v5615 = vpop.permute.xlu0 %5614
  %5618 = vset.pattern.permute.xlu0 0
  %5619 = vperm.xlu0 %5618, %v5425
  %v5620 = vpop.permute.xlu0 %5619
  %5623 = vset.pattern.permute.xlu0 0
  %5624 = vperm.xlu0 %5623, %v5426
  %v5625 = vpop.permute.xlu0 %5624
  %5628 = vset.pattern.permute.xlu0 0
  %5629 = vperm.xlu0 %5628, %v5427
  %v5630 = vpop.permute.xlu0 %5629
  %5633 = vset.pattern.permute.xlu0 0
  %5634 = vperm.xlu0 %5633, %v5428
  %v5635 = vpop.permute.xlu0 %5634
  %5638 = vset.pattern.permute.xlu0 0
  %5639 = vperm.xlu0 %5638, %v5429
  %v5640 = vpop.permute.xlu0 %5639
  %5643 = vset.pattern.permute.xlu0 0
  %5644 = vperm.xlu0 %5643, %v5430
  %v5645 = vpop.permute.xlu0 %5644
  %5648 = vset.pattern.permute.xlu0 0
  %5649 = vperm.xlu0 %5648, %v5431
  %v5650 = vpop.permute.xlu0 %5649
  %5653 = vset.pattern.permute.xlu0 0
  %5654 = vperm.xlu0 %5653, %v5432
  %v5655 = vpop.permute.xlu0 %5654
  %5658 = vset.pattern.permute.xlu0 0
  %5659 = vperm.xlu0 %5658, %v5433
  %v5660 = vpop.permute.xlu0 %5659
  %5663 = vset.pattern.permute.xlu0 0
  %5664 = vperm.xlu0 %5663, %v5434
  %v5665 = vpop.permute.xlu0 %5664
  %5668 = vset.pattern.permute.xlu0 0
  %5669 = vperm.xlu0 %5668, %v5435
  %v5670 = vpop.permute.xlu0 %5669
  %5673 = vset.pattern.permute.xlu0 0
  %5674 = vperm.xlu0 %5673, %v5436
  %v5675 = vpop.permute.xlu0 %5674
  %5678 = vset.pattern.permute.xlu0 0
  %5679 = vperm.xlu0 %5678, %v5437
  %v5680 = vpop.permute.xlu0 %5679
  %5683 = vset.pattern.permute.xlu0 0
  %5684 = vperm.xlu0 %5683, %v5438
  %v5685 = vpop.permute.xlu0 %5684
  %5688 = vset.pattern.permute.xlu0 0
  %5689 = vperm.xlu0 %5688, %v5439
  %v5690 = vpop.permute.xlu0 %5689
  %5693 = vset.pattern.permute.xlu0 0
  %5694 = vperm.xlu0 %5693, %v5440
  %v5695 = vpop.permute.xlu0 %5694
  %5698 = vset.pattern.permute.xlu0 0
  %5699 = vperm.xlu0 %5698, %v5441
  %v5700 = vpop.permute.xlu0 %5699
  %5703 = vset.pattern.permute.xlu0 0
  %5704 = vperm.xlu0 %5703, %v5442
  %v5705 = vpop.permute.xlu0 %5704
  %5708 = vset.pattern.permute.xlu0 0
  %5709 = vperm.xlu0 %5708, %v5443
  %v5710 = vpop.permute.xlu0 %5709
  %5713 = vset.pattern.permute.xlu0 0
  %5714 = vperm.xlu0 %5713, %v5444
  %v5715 = vpop.permute.xlu0 %5714
  %5718 = vset.pattern.permute.xlu0 0
  %5719 = vperm.xlu0 %5718, %v5445
  %v5720 = vpop.permute.xlu0 %5719
  %5723 = vset.pattern.permute.xlu0 0
  %5724 = vperm.xlu0 %5723, %v5446
  %v5725 = vpop.permute.xlu0 %5724
  %5728 = vset.pattern.permute.xlu0 0
  %5729 = vperm.xlu0 %5728, %v5447
  %v5730 = vpop.permute.xlu0 %5729
  %5733 = vset.pattern.permute.xlu0 0
  %5734 = vperm.xlu0 %5733, %v5448
  %v5735 = vpop.permute.xlu0 %5734
  %5738 = vset.pattern.permute.xlu0 0
  %5739 = vperm.xlu0 %5738, %v5449
  %v5740 = vpop.permute.xlu0 %5739
  %5743 = vset.pattern.permute.xlu0 0
  %5744 = vperm.xlu0 %5743, %v5450
  %v5745 = vpop.permute.xlu0 %5744
  %5748 = vset.pattern.permute.xlu0 0
  %5749 = vperm.xlu0 %5748, %v5451
  %v5750 = vpop.permute.xlu0 %5749
  %5753 = vset.pattern.permute.xlu0 0
  %5754 = vperm.xlu0 %5753, %v5452
  %v5755 = vpop.permute.xlu0 %5754
  %5758 = vset.pattern.permute.xlu0 0
  %5759 = vperm.xlu0 %5758, %v5453
  %v5760 = vpop.permute.xlu0 %5759
  %5763 = vset.pattern.permute.xlu0 0
  %5764 = vperm.xlu0 %5763, %v5454
  %v5765 = vpop.permute.xlu0 %5764
  %5768 = vset.pattern.permute.xlu0 0
  %5769 = vperm.xlu0 %5768, %v5455
  %v5770 = vpop.permute.xlu0 %5769
  %5773 = vset.pattern.permute.xlu0 0
  %5774 = vperm.xlu0 %5773, %v5456
  %v5775 = vpop.permute.xlu0 %5774
  %v5905 = vunpack.c.l.b16 %v5265
  %v5906 = vunpack.c.h.b16 %v5265
  %v5907 = vunpack.c.l.b16 %v5266
  %v5908 = vunpack.c.h.b16 %v5266
  %v5909 = vunpack.c.l.b16 %v5267
  %v5910 = vunpack.c.h.b16 %v5267
  %v5911 = vunpack.c.l.b16 %v5268
  %v5912 = vunpack.c.h.b16 %v5268
  %v5913 = vunpack.c.l.b16 %v5269
  %v5914 = vunpack.c.h.b16 %v5269
  %v5915 = vunpack.c.l.b16 %v5270
  %v5916 = vunpack.c.h.b16 %v5270
  %v5917 = vunpack.c.l.b16 %v5271
  %v5918 = vunpack.c.h.b16 %v5271
  %v5919 = vunpack.c.l.b16 %v5272
  %v5920 = vunpack.c.h.b16 %v5272
  %v5921 = vunpack.c.l.b16 %v5273
  %v5922 = vunpack.c.h.b16 %v5273
  %v5923 = vunpack.c.l.b16 %v5274
  %v5924 = vunpack.c.h.b16 %v5274
  %v5925 = vunpack.c.l.b16 %v5275
  %v5926 = vunpack.c.h.b16 %v5275
  %v5927 = vunpack.c.l.b16 %v5276
  %v5928 = vunpack.c.h.b16 %v5276
  %v5929 = vunpack.c.l.b16 %v5277
  %v5930 = vunpack.c.h.b16 %v5277
  %v5931 = vunpack.c.l.b16 %v5278
  %v5932 = vunpack.c.h.b16 %v5278
  %v5933 = vunpack.c.l.b16 %v5279
  %v5934 = vunpack.c.h.b16 %v5279
  %v5935 = vunpack.c.l.b16 %v5280
  %v5936 = vunpack.c.h.b16 %v5280
  %v5937 = vunpack.c.l.b16 %v5281
  %v5938 = vunpack.c.h.b16 %v5281
  %v5939 = vunpack.c.l.b16 %v5282
  %v5940 = vunpack.c.h.b16 %v5282
  %v5941 = vunpack.c.l.b16 %v5283
  %v5942 = vunpack.c.h.b16 %v5283
  %v5943 = vunpack.c.l.b16 %v5284
  %v5944 = vunpack.c.h.b16 %v5284
  %v5945 = vunpack.c.l.b16 %v5285
  %v5946 = vunpack.c.h.b16 %v5285
  %v5947 = vunpack.c.l.b16 %v5286
  %v5948 = vunpack.c.h.b16 %v5286
  %v5949 = vunpack.c.l.b16 %v5287
  %v5950 = vunpack.c.h.b16 %v5287
  %v5951 = vunpack.c.l.b16 %v5288
  %v5952 = vunpack.c.h.b16 %v5288
  %v5953 = vunpack.c.l.b16 %v5289
  %v5954 = vunpack.c.h.b16 %v5289
  %v5955 = vunpack.c.l.b16 %v5290
  %v5956 = vunpack.c.h.b16 %v5290
  %v5957 = vunpack.c.l.b16 %v5291
  %v5958 = vunpack.c.h.b16 %v5291
  %v5959 = vunpack.c.l.b16 %v5292
  %v5960 = vunpack.c.h.b16 %v5292
  %v5961 = vunpack.c.l.b16 %v5293
  %v5962 = vunpack.c.h.b16 %v5293
  %v5963 = vunpack.c.l.b16 %v5294
  %v5964 = vunpack.c.h.b16 %v5294
  %v5965 = vunpack.c.l.b16 %v5295
  %v5966 = vunpack.c.h.b16 %v5295
  %v5967 = vunpack.c.l.b16 %v5296
  %v5968 = vunpack.c.h.b16 %v5296
  %v5969 = vunpack.c.l.b16 %v5297
  %v5970 = vunpack.c.h.b16 %v5297
  %v5971 = vunpack.c.l.b16 %v5298
  %v5972 = vunpack.c.h.b16 %v5298
  %v5973 = vunpack.c.l.b16 %v5299
  %v5974 = vunpack.c.h.b16 %v5299
  %v5975 = vunpack.c.l.b16 %v5300
  %v5976 = vunpack.c.h.b16 %v5300
  %v5977 = vunpack.c.l.b16 %v5301
  %v5978 = vunpack.c.h.b16 %v5301
  %v5979 = vunpack.c.l.b16 %v5302
  %v5980 = vunpack.c.h.b16 %v5302
  %v5981 = vunpack.c.l.b16 %v5303
  %v5982 = vunpack.c.h.b16 %v5303
  %v5983 = vunpack.c.l.b16 %v5304
  %v5984 = vunpack.c.h.b16 %v5304
  %v5985 = vunpack.c.l.b16 %v5305
  %v5986 = vunpack.c.h.b16 %v5305
  %v5987 = vunpack.c.l.b16 %v5306
  %v5988 = vunpack.c.h.b16 %v5306
  %v5989 = vunpack.c.l.b16 %v5307
  %v5990 = vunpack.c.h.b16 %v5307
  %v5991 = vunpack.c.l.b16 %v5308
  %v5992 = vunpack.c.h.b16 %v5308
  %v5993 = vunpack.c.l.b16 %v5309
  %v5994 = vunpack.c.h.b16 %v5309
  %v5995 = vunpack.c.l.b16 %v5310
  %v5996 = vunpack.c.h.b16 %v5310
  %v5997 = vunpack.c.l.b16 %v5311
  %v5998 = vunpack.c.h.b16 %v5311
  %v5999 = vunpack.c.l.b16 %v5312
  %v6000 = vunpack.c.h.b16 %v5312
  %v6001 = vunpack.c.l.b16 %v5313
  %v6002 = vunpack.c.h.b16 %v5313
  %v6003 = vunpack.c.l.b16 %v5314
  %v6004 = vunpack.c.h.b16 %v5314
  %v6005 = vunpack.c.l.b16 %v5315
  %v6006 = vunpack.c.h.b16 %v5315
  %v6007 = vunpack.c.l.b16 %v5316
  %v6008 = vunpack.c.h.b16 %v5316
  %v6009 = vunpack.c.l.b16 %v5317
  %v6010 = vunpack.c.h.b16 %v5317
  %v6011 = vunpack.c.l.b16 %v5318
  %v6012 = vunpack.c.h.b16 %v5318
  %v6013 = vunpack.c.l.b16 %v5319
  %v6014 = vunpack.c.h.b16 %v5319
  %v6015 = vunpack.c.l.b16 %v5320
  %v6016 = vunpack.c.h.b16 %v5320
  %v6017 = vunpack.c.l.b16 %v5321
  %v6018 = vunpack.c.h.b16 %v5321
  %v6019 = vunpack.c.l.b16 %v5322
  %v6020 = vunpack.c.h.b16 %v5322
  %v6021 = vunpack.c.l.b16 %v5323
  %v6022 = vunpack.c.h.b16 %v5323
  %v6023 = vunpack.c.l.b16 %v5324
  %v6024 = vunpack.c.h.b16 %v5324
  %v6025 = vunpack.c.l.b16 %v5325
  %v6026 = vunpack.c.h.b16 %v5325
  %v6027 = vunpack.c.l.b16 %v5326
  %v6028 = vunpack.c.h.b16 %v5326
  %v6029 = vunpack.c.l.b16 %v5327
  %v6030 = vunpack.c.h.b16 %v5327
  %v6031 = vunpack.c.l.b16 %v5328
  %v6032 = vunpack.c.h.b16 %v5328
  %v6033 = vunpack.c.l.b16 %v5329
  %v6034 = vunpack.c.h.b16 %v5329
  %v6035 = vunpack.c.l.b16 %v5330
  %v6036 = vunpack.c.h.b16 %v5330
  %v6037 = vunpack.c.l.b16 %v5331
  %v6038 = vunpack.c.h.b16 %v5331
  %v6039 = vunpack.c.l.b16 %v5332
  %v6040 = vunpack.c.h.b16 %v5332
  %v6041 = vunpack.c.l.b16 %v5333
  %v6042 = vunpack.c.h.b16 %v5333
  %v6043 = vunpack.c.l.b16 %v5334
  %v6044 = vunpack.c.h.b16 %v5334
  %v6045 = vunpack.c.l.b16 %v5335
  %v6046 = vunpack.c.h.b16 %v5335
  %v6047 = vunpack.c.l.b16 %v5336
  %v6048 = vunpack.c.h.b16 %v5336
  %v6049 = vunpack.c.l.b16 %v5337
  %v6050 = vunpack.c.h.b16 %v5337
  %v6051 = vunpack.c.l.b16 %v5338
  %v6052 = vunpack.c.h.b16 %v5338
  %v6053 = vunpack.c.l.b16 %v5339
  %v6054 = vunpack.c.h.b16 %v5339
  %v6055 = vunpack.c.l.b16 %v5340
  %v6056 = vunpack.c.h.b16 %v5340
  %v6057 = vunpack.c.l.b16 %v5341
  %v6058 = vunpack.c.h.b16 %v5341
  %v6059 = vunpack.c.l.b16 %v5342
  %v6060 = vunpack.c.h.b16 %v5342
  %v6061 = vunpack.c.l.b16 %v5343
  %v6062 = vunpack.c.h.b16 %v5343
  %v6063 = vunpack.c.l.b16 %v5344
  %v6064 = vunpack.c.h.b16 %v5344
  %v6065 = vunpack.c.l.b16 %v5345
  %v6066 = vunpack.c.h.b16 %v5345
  %v6067 = vunpack.c.l.b16 %v5346
  %v6068 = vunpack.c.h.b16 %v5346
  %v6069 = vunpack.c.l.b16 %v5347
  %v6070 = vunpack.c.h.b16 %v5347
  %v6071 = vunpack.c.l.b16 %v5348
  %v6072 = vunpack.c.h.b16 %v5348
  %v6073 = vunpack.c.l.b16 %v5349
  %v6074 = vunpack.c.h.b16 %v5349
  %v6075 = vunpack.c.l.b16 %v5350
  %v6076 = vunpack.c.h.b16 %v5350
  %v6077 = vunpack.c.l.b16 %v5351
  %v6078 = vunpack.c.h.b16 %v5351
  %v6079 = vunpack.c.l.b16 %v5352
  %v6080 = vunpack.c.h.b16 %v5352
  %v6081 = vunpack.c.l.b16 %v5353
  %v6082 = vunpack.c.h.b16 %v5353
  %v6083 = vunpack.c.l.b16 %v5354
  %v6084 = vunpack.c.h.b16 %v5354
  %v6085 = vunpack.c.l.b16 %v5355
  %v6086 = vunpack.c.h.b16 %v5355
  %v6087 = vunpack.c.l.b16 %v5356
  %v6088 = vunpack.c.h.b16 %v5356
  %v6089 = vunpack.c.l.b16 %v5357
  %v6090 = vunpack.c.h.b16 %v5357
  %v6091 = vunpack.c.l.b16 %v5358
  %v6092 = vunpack.c.h.b16 %v5358
  %v6093 = vunpack.c.l.b16 %v5359
  %v6094 = vunpack.c.h.b16 %v5359
  %v6095 = vunpack.c.l.b16 %v5360
  %v6096 = vunpack.c.h.b16 %v5360
  %v6097 = vunpack.c.l.b16 %v5361
  %v6098 = vunpack.c.h.b16 %v5361
  %v6099 = vunpack.c.l.b16 %v5362
  %v6100 = vunpack.c.h.b16 %v5362
  %v6101 = vunpack.c.l.b16 %v5363
  %v6102 = vunpack.c.h.b16 %v5363
  %v6103 = vunpack.c.l.b16 %v5364
  %v6104 = vunpack.c.h.b16 %v5364
  %v6105 = vunpack.c.l.b16 %v5365
  %v6106 = vunpack.c.h.b16 %v5365
  %v6107 = vunpack.c.l.b16 %v5366
  %v6108 = vunpack.c.h.b16 %v5366
  %v6109 = vunpack.c.l.b16 %v5367
  %v6110 = vunpack.c.h.b16 %v5367
  %v6111 = vunpack.c.l.b16 %v5368
  %v6112 = vunpack.c.h.b16 %v5368
  %v6113 = vunpack.c.l.b16 %v5369
  %v6114 = vunpack.c.h.b16 %v5369
  %v6115 = vunpack.c.l.b16 %v5370
  %v6116 = vunpack.c.h.b16 %v5370
  %v6117 = vunpack.c.l.b16 %v5371
  %v6118 = vunpack.c.h.b16 %v5371
  %v6119 = vunpack.c.l.b16 %v5372
  %v6120 = vunpack.c.h.b16 %v5372
  %v6121 = vunpack.c.l.b16 %v5373
  %v6122 = vunpack.c.h.b16 %v5373
  %v6123 = vunpack.c.l.b16 %v5374
  %v6124 = vunpack.c.h.b16 %v5374
  %v6125 = vunpack.c.l.b16 %v5375
  %v6126 = vunpack.c.h.b16 %v5375
  %v6127 = vunpack.c.l.b16 %v5376
  %v6128 = vunpack.c.h.b16 %v5376
  %v6129 = vunpack.c.l.b16 %v5377
  %v6130 = vunpack.c.h.b16 %v5377
  %v6131 = vunpack.c.l.b16 %v5378
  %v6132 = vunpack.c.h.b16 %v5378
  %v6133 = vunpack.c.l.b16 %v5379
  %v6134 = vunpack.c.h.b16 %v5379
  %v6135 = vunpack.c.l.b16 %v5380
  %v6136 = vunpack.c.h.b16 %v5380
  %v6137 = vunpack.c.l.b16 %v5381
  %v6138 = vunpack.c.h.b16 %v5381
  %v6139 = vunpack.c.l.b16 %v5382
  %v6140 = vunpack.c.h.b16 %v5382
  %v6141 = vunpack.c.l.b16 %v5383
  %v6142 = vunpack.c.h.b16 %v5383
  %v6143 = vunpack.c.l.b16 %v5384
  %v6144 = vunpack.c.h.b16 %v5384
  %v6145 = vunpack.c.l.b16 %v5385
  %v6146 = vunpack.c.h.b16 %v5385
  %v6147 = vunpack.c.l.b16 %v5386
  %v6148 = vunpack.c.h.b16 %v5386
  %v6149 = vunpack.c.l.b16 %v5387
  %v6150 = vunpack.c.h.b16 %v5387
  %v6151 = vunpack.c.l.b16 %v5388
  %v6152 = vunpack.c.h.b16 %v5388
  %v6153 = vunpack.c.l.b16 %v5389
  %v6154 = vunpack.c.h.b16 %v5389
  %v6155 = vunpack.c.l.b16 %v5390
  %v6156 = vunpack.c.h.b16 %v5390
  %v6157 = vunpack.c.l.b16 %v5391
  %v6158 = vunpack.c.h.b16 %v5391
  %v6159 = vunpack.c.l.b16 %v5392
  %v6160 = vunpack.c.h.b16 %v5392
  %v6161 = vpack.c.b16 %v5909, %v5905
  %v6162 = vpack.c.b16 %v5910, %v5906
  %v6163 = vpack.c.b16 %v5911, %v5907
  %v6164 = vpack.c.b16 %v5912, %v5908
  %v6165 = vpack.c.b16 %v5917, %v5913
  %v6166 = vpack.c.b16 %v5918, %v5914
  %v6167 = vpack.c.b16 %v5919, %v5915
  %v6168 = vpack.c.b16 %v5920, %v5916
  %v6169 = vpack.c.b16 %v5925, %v5921
  %v6170 = vpack.c.b16 %v5926, %v5922
  %v6171 = vpack.c.b16 %v5927, %v5923
  %v6172 = vpack.c.b16 %v5928, %v5924
  %v6173 = vpack.c.b16 %v5933, %v5929
  %v6174 = vpack.c.b16 %v5934, %v5930
  %v6175 = vpack.c.b16 %v5935, %v5931
  %v6176 = vpack.c.b16 %v5936, %v5932
  %v6177 = vpack.c.b16 %v5941, %v5937
  %v6178 = vpack.c.b16 %v5942, %v5938
  %v6179 = vpack.c.b16 %v5943, %v5939
  %v6180 = vpack.c.b16 %v5944, %v5940
  %v6181 = vpack.c.b16 %v5949, %v5945
  %v6182 = vpack.c.b16 %v5950, %v5946
  %v6183 = vpack.c.b16 %v5951, %v5947
  %v6184 = vpack.c.b16 %v5952, %v5948
  %v6185 = vpack.c.b16 %v5957, %v5953
  %v6186 = vpack.c.b16 %v5958, %v5954
  %v6187 = vpack.c.b16 %v5959, %v5955
  %v6188 = vpack.c.b16 %v5960, %v5956
  %v6189 = vpack.c.b16 %v5965, %v5961
  %v6190 = vpack.c.b16 %v5966, %v5962
  %v6191 = vpack.c.b16 %v5967, %v5963
  %v6192 = vpack.c.b16 %v5968, %v5964
  %v6193 = vpack.c.b16 %v5973, %v5969
  %v6194 = vpack.c.b16 %v5974, %v5970
  %v6195 = vpack.c.b16 %v5975, %v5971
  %v6196 = vpack.c.b16 %v5976, %v5972
  %v6197 = vpack.c.b16 %v5981, %v5977
  %v6198 = vpack.c.b16 %v5982, %v5978
  %v6199 = vpack.c.b16 %v5983, %v5979
  %v6200 = vpack.c.b16 %v5984, %v5980
  %v6201 = vpack.c.b16 %v5989, %v5985
  %v6202 = vpack.c.b16 %v5990, %v5986
  %v6203 = vpack.c.b16 %v5991, %v5987
  %v6204 = vpack.c.b16 %v5992, %v5988
  %v6205 = vpack.c.b16 %v5997, %v5993
  %v6206 = vpack.c.b16 %v5998, %v5994
  %v6207 = vpack.c.b16 %v5999, %v5995
  %v6208 = vpack.c.b16 %v6000, %v5996
  %v6209 = vpack.c.b16 %v6005, %v6001
  %v6210 = vpack.c.b16 %v6006, %v6002
  %v6211 = vpack.c.b16 %v6007, %v6003
  %v6212 = vpack.c.b16 %v6008, %v6004
  %v6213 = vpack.c.b16 %v6013, %v6009
  %v6214 = vpack.c.b16 %v6014, %v6010
  %v6215 = vpack.c.b16 %v6015, %v6011
  %v6216 = vpack.c.b16 %v6016, %v6012
  %v6217 = vpack.c.b16 %v6021, %v6017
  %v6218 = vpack.c.b16 %v6022, %v6018
  %v6219 = vpack.c.b16 %v6023, %v6019
  %v6220 = vpack.c.b16 %v6024, %v6020
  %v6221 = vpack.c.b16 %v6029, %v6025
  %v6222 = vpack.c.b16 %v6030, %v6026
  %v6223 = vpack.c.b16 %v6031, %v6027
  %v6224 = vpack.c.b16 %v6032, %v6028
  %v6225 = vpack.c.b16 %v6037, %v6033
  %v6226 = vpack.c.b16 %v6038, %v6034
  %v6227 = vpack.c.b16 %v6039, %v6035
  %v6228 = vpack.c.b16 %v6040, %v6036
  %v6229 = vpack.c.b16 %v6045, %v6041
  %v6230 = vpack.c.b16 %v6046, %v6042
  %v6231 = vpack.c.b16 %v6047, %v6043
  %v6232 = vpack.c.b16 %v6048, %v6044
  %v6233 = vpack.c.b16 %v6053, %v6049
  %v6234 = vpack.c.b16 %v6054, %v6050
  %v6235 = vpack.c.b16 %v6055, %v6051
  %v6236 = vpack.c.b16 %v6056, %v6052
  %v6237 = vpack.c.b16 %v6061, %v6057
  %v6238 = vpack.c.b16 %v6062, %v6058
  %v6239 = vpack.c.b16 %v6063, %v6059
  %v6240 = vpack.c.b16 %v6064, %v6060
  %v6241 = vpack.c.b16 %v6069, %v6065
  %v6242 = vpack.c.b16 %v6070, %v6066
  %v6243 = vpack.c.b16 %v6071, %v6067
  %v6244 = vpack.c.b16 %v6072, %v6068
  %v6245 = vpack.c.b16 %v6077, %v6073
  %v6246 = vpack.c.b16 %v6078, %v6074
  %v6247 = vpack.c.b16 %v6079, %v6075
  %v6248 = vpack.c.b16 %v6080, %v6076
  %v6249 = vpack.c.b16 %v6085, %v6081
  %v6250 = vpack.c.b16 %v6086, %v6082
  %v6251 = vpack.c.b16 %v6087, %v6083
  %v6252 = vpack.c.b16 %v6088, %v6084
  %v6253 = vpack.c.b16 %v6093, %v6089
  %v6254 = vpack.c.b16 %v6094, %v6090
  %v6255 = vpack.c.b16 %v6095, %v6091
  %v6256 = vpack.c.b16 %v6096, %v6092
  %v6257 = vpack.c.b16 %v6101, %v6097
  %v6258 = vpack.c.b16 %v6102, %v6098
  %v6259 = vpack.c.b16 %v6103, %v6099
  %v6260 = vpack.c.b16 %v6104, %v6100
  %v6261 = vpack.c.b16 %v6109, %v6105
  %v6262 = vpack.c.b16 %v6110, %v6106
  %v6263 = vpack.c.b16 %v6111, %v6107
  %v6264 = vpack.c.b16 %v6112, %v6108
  %v6265 = vpack.c.b16 %v6117, %v6113
  %v6266 = vpack.c.b16 %v6118, %v6114
  %v6267 = vpack.c.b16 %v6119, %v6115
  %v6268 = vpack.c.b16 %v6120, %v6116
  %v6269 = vpack.c.b16 %v6125, %v6121
  %v6270 = vpack.c.b16 %v6126, %v6122
  %v6271 = vpack.c.b16 %v6127, %v6123
  %v6272 = vpack.c.b16 %v6128, %v6124
  %v6273 = vpack.c.b16 %v6133, %v6129
  %v6274 = vpack.c.b16 %v6134, %v6130
  %v6275 = vpack.c.b16 %v6135, %v6131
  %v6276 = vpack.c.b16 %v6136, %v6132
  %v6277 = vpack.c.b16 %v6141, %v6137
  %v6278 = vpack.c.b16 %v6142, %v6138
  %v6279 = vpack.c.b16 %v6143, %v6139
  %v6280 = vpack.c.b16 %v6144, %v6140
  %v6281 = vpack.c.b16 %v6149, %v6145
  %v6282 = vpack.c.b16 %v6150, %v6146
  %v6283 = vpack.c.b16 %v6151, %v6147
  %v6284 = vpack.c.b16 %v6152, %v6148
  %v6285 = vpack.c.b16 %v6157, %v6153
  %v6286 = vpack.c.b16 %v6158, %v6154
  %v6287 = vpack.c.b16 %v6159, %v6155
  %v6288 = vpack.c.b16 %v6160, %v6156
  %6417 = vmatprep.subr.bf16.mxu0 0
  %6418 = vmatpush1.bf16.msra.mxu0 %v5238
  %6419 = vmatprep.subr.bf16.mxu0 0
  %6420 = vmatpush1.bf16.msra.mxu0 %v5237
  %6421 = vmatprep.subr.bf16.mxu0 0
  %6422 = vmatpush1.bf16.msra.mxu0 %v5236
  %6423 = vmatprep.subr.bf16.mxu0 0
  %6424 = vmatpush1.bf16.msra.mxu0 %v5235
  %6425 = vmatprep.subr.bf16.mxu0 0
  %6426 = vmatpush1.bf16.msra.mxu0 %v5234
  %6427 = vmatprep.subr.bf16.mxu0 0
  %6428 = vmatpush1.bf16.msra.mxu0 %v5233
  %6429 = vmatprep.subr.bf16.mxu0 0
  %6430 = vmatpush1.bf16.msra.mxu0 %v5232
  %6431 = vmatprep.subr.bf16.mxu0 0
  %6432 = vmatpush1.bf16.msra.mxu0 %v5231
  %6433 = vmatprep.subr.bf16.mxu0 0
  %6434 = vmatpush2.bf16.msra.mxu0 %v5246
  %6435 = vmatprep.subr.bf16.mxu0 0
  %6436 = vmatpush2.bf16.msra.mxu0 %v5245
  %6437 = vmatprep.subr.bf16.mxu0 0
  %6438 = vmatpush2.bf16.msra.mxu0 %v5244
  %6439 = vmatprep.subr.bf16.mxu0 0
  %6440 = vmatpush2.bf16.msra.mxu0 %v5243
  %6441 = vmatprep.subr.bf16.mxu0 0
  %6442 = vmatpush2.bf16.msra.mxu0 %v5242
  %6443 = vmatprep.subr.bf16.mxu0 0
  %6444 = vmatpush2.bf16.msra.mxu0 %v5241
  %6445 = vmatprep.subr.bf16.mxu0 0
  %6446 = vmatpush2.bf16.msra.mxu0 %v5240
  %6447 = vmatprep.subr.bf16.mxu0 0
  %6448 = vmatpush2.bf16.msra.mxu0 %v5239
  %6449 = vmatprep.mubr.bf16.mxu0 %v6162
  %6450 = vmatmul.mubr.bf16.gmra.mxu0 %v6161
  %v6451 = vpop.f32.mrf.mxu0
  %v6452 = vadd.f32 %v5460, %v6451
  %v6453 = vpop.f32.mrf.mxu0
  %v6454 = vpop.f32.mrf.mxu0
  %v6455 = vadd.f32 %v5465, %v6454
  %v6456 = vpop.f32.mrf.mxu0
  %6457 = vmatprep.mubr.bf16.mxu0 %v6166
  %6458 = vmatmul.mubr.bf16.gmra.mxu0 %v6165
  %v6459 = vpop.f32.mrf.mxu0
  %v6460 = vadd.f32 %v5470, %v6459
  %v6461 = vpop.f32.mrf.mxu0
  %v6462 = vpop.f32.mrf.mxu0
  %v6463 = vadd.f32 %v5475, %v6462
  %v6464 = vpop.f32.mrf.mxu0
  %6465 = vmatprep.mubr.bf16.mxu0 %v6170
  %6466 = vmatmul.mubr.bf16.gmra.mxu0 %v6169
  %v6467 = vpop.f32.mrf.mxu0
  %v6468 = vadd.f32 %v5480, %v6467
  %v6469 = vpop.f32.mrf.mxu0
  %v6470 = vpop.f32.mrf.mxu0
  %v6471 = vadd.f32 %v5485, %v6470
  %v6472 = vpop.f32.mrf.mxu0
  %6473 = vmatprep.mubr.bf16.mxu0 %v6174
  %6474 = vmatmul.mubr.bf16.gmra.mxu0 %v6173
  %v6475 = vpop.f32.mrf.mxu0
  %v6476 = vadd.f32 %v5490, %v6475
  %v6477 = vpop.f32.mrf.mxu0
  %v6478 = vpop.f32.mrf.mxu0
  %v6479 = vadd.f32 %v5495, %v6478
  %v6480 = vpop.f32.mrf.mxu0
  %6481 = vmatprep.mubr.bf16.mxu0 %v6178
  %6482 = vmatmul.mubr.bf16.gmra.mxu0 %v6177
  %v6483 = vpop.f32.mrf.mxu0
  %v6484 = vadd.f32 %v5500, %v6483
  %v6485 = vpop.f32.mrf.mxu0
  %v6486 = vpop.f32.mrf.mxu0
  %v6487 = vadd.f32 %v5505, %v6486
  %v6488 = vpop.f32.mrf.mxu0
  %6489 = vmatprep.mubr.bf16.mxu0 %v6182
  %6490 = vmatmul.mubr.bf16.gmra.mxu0 %v6181
  %v6491 = vpop.f32.mrf.mxu0
  %v6492 = vadd.f32 %v5510, %v6491
  %v6493 = vpop.f32.mrf.mxu0
  %v6494 = vpop.f32.mrf.mxu0
  %v6495 = vadd.f32 %v5515, %v6494
  %v6496 = vpop.f32.mrf.mxu0
  %6497 = vmatprep.mubr.bf16.mxu0 %v6186
  %6498 = vmatmul.mubr.bf16.gmra.mxu0 %v6185
  %v6499 = vpop.f32.mrf.mxu0
  %v6500 = vadd.f32 %v5520, %v6499
  %v6501 = vpop.f32.mrf.mxu0
  %v6502 = vpop.f32.mrf.mxu0
  %v6503 = vadd.f32 %v5525, %v6502
  %v6504 = vpop.f32.mrf.mxu0
  %6505 = vmatprep.mubr.bf16.mxu0 %v6190
  %6506 = vmatmul.mubr.bf16.gmra.mxu0 %v6189
  %v6507 = vpop.f32.mrf.mxu0
  %v6508 = vadd.f32 %v5530, %v6507
  %v6509 = vpop.f32.mrf.mxu0
  %v6510 = vpop.f32.mrf.mxu0
  %v6511 = vadd.f32 %v5535, %v6510
  %v6512 = vpop.f32.mrf.mxu0
  %6513 = vmatprep.mubr.bf16.mxu0 %v6194
  %6514 = vmatmul.mubr.bf16.gmra.mxu0 %v6193
  %v6515 = vpop.f32.mrf.mxu0
  %v6516 = vadd.f32 %v5540, %v6515
  %v6517 = vpop.f32.mrf.mxu0
  %v6518 = vpop.f32.mrf.mxu0
  %v6519 = vadd.f32 %v5545, %v6518
  %v6520 = vpop.f32.mrf.mxu0
  %6521 = vmatprep.mubr.bf16.mxu0 %v6198
  %6522 = vmatmul.mubr.bf16.gmra.mxu0 %v6197
  %v6523 = vpop.f32.mrf.mxu0
  %v6524 = vadd.f32 %v5550, %v6523
  %v6525 = vpop.f32.mrf.mxu0
  %v6526 = vpop.f32.mrf.mxu0
  %v6527 = vadd.f32 %v5555, %v6526
  %v6528 = vpop.f32.mrf.mxu0
  %6529 = vmatprep.mubr.bf16.mxu0 %v6202
  %6530 = vmatmul.mubr.bf16.gmra.mxu0 %v6201
  %v6531 = vpop.f32.mrf.mxu0
  %v6532 = vadd.f32 %v5560, %v6531
  %v6533 = vpop.f32.mrf.mxu0
  %v6534 = vpop.f32.mrf.mxu0
  %v6535 = vadd.f32 %v5565, %v6534
  %v6536 = vpop.f32.mrf.mxu0
  %6537 = vmatprep.mubr.bf16.mxu0 %v6206
  %6538 = vmatmul.mubr.bf16.gmra.mxu0 %v6205
  %v6539 = vpop.f32.mrf.mxu0
  %v6540 = vadd.f32 %v5570, %v6539
  %v6541 = vpop.f32.mrf.mxu0
  %v6542 = vpop.f32.mrf.mxu0
  %v6543 = vadd.f32 %v5575, %v6542
  %v6544 = vpop.f32.mrf.mxu0
  %6545 = vmatprep.mubr.bf16.mxu0 %v6210
  %6546 = vmatmul.mubr.bf16.gmra.mxu0 %v6209
  %v6547 = vpop.f32.mrf.mxu0
  %v6548 = vadd.f32 %v5580, %v6547
  %v6549 = vpop.f32.mrf.mxu0
  %v6550 = vpop.f32.mrf.mxu0
  %v6551 = vadd.f32 %v5585, %v6550
  %v6552 = vpop.f32.mrf.mxu0
  %6553 = vmatprep.mubr.bf16.mxu0 %v6214
  %6554 = vmatmul.mubr.bf16.gmra.mxu0 %v6213
  %v6555 = vpop.f32.mrf.mxu0
  %v6556 = vadd.f32 %v5590, %v6555
  %v6557 = vpop.f32.mrf.mxu0
  %v6558 = vpop.f32.mrf.mxu0
  %v6559 = vadd.f32 %v5595, %v6558
  %v6560 = vpop.f32.mrf.mxu0
  %6561 = vmatprep.mubr.bf16.mxu0 %v6218
  %6562 = vmatmul.mubr.bf16.gmra.mxu0 %v6217
  %v6563 = vpop.f32.mrf.mxu0
  %v6564 = vadd.f32 %v5600, %v6563
  %v6565 = vpop.f32.mrf.mxu0
  %v6566 = vpop.f32.mrf.mxu0
  %v6567 = vadd.f32 %v5605, %v6566
  %v6568 = vpop.f32.mrf.mxu0
  %6569 = vmatprep.mubr.bf16.mxu0 %v6222
  %6570 = vmatmul.mubr.bf16.gmra.mxu0 %v6221
  %v6571 = vpop.f32.mrf.mxu0
  %v6572 = vadd.f32 %v5610, %v6571
  %v6573 = vpop.f32.mrf.mxu0
  %v6574 = vpop.f32.mrf.mxu0
  %v6575 = vadd.f32 %v5615, %v6574
  %v6576 = vpop.f32.mrf.mxu0
  %6577 = vmatprep.mubr.bf16.mxu0 %v6226
  %6578 = vmatmul.mubr.bf16.gmra.mxu0 %v6225
  %v6579 = vpop.f32.mrf.mxu0
  %v6580 = vadd.f32 %v5620, %v6579
  %v6581 = vpop.f32.mrf.mxu0
  %v6582 = vpop.f32.mrf.mxu0
  %v6583 = vadd.f32 %v5625, %v6582
  %v6584 = vpop.f32.mrf.mxu0
  %6585 = vmatprep.mubr.bf16.mxu0 %v6230
  %6586 = vmatmul.mubr.bf16.gmra.mxu0 %v6229
  %v6587 = vpop.f32.mrf.mxu0
  %v6588 = vadd.f32 %v5630, %v6587
  %v6589 = vpop.f32.mrf.mxu0
  %v6590 = vpop.f32.mrf.mxu0
  %v6591 = vadd.f32 %v5635, %v6590
  %v6592 = vpop.f32.mrf.mxu0
  %6593 = vmatprep.mubr.bf16.mxu0 %v6234
  %6594 = vmatmul.mubr.bf16.gmra.mxu0 %v6233
  %v6595 = vpop.f32.mrf.mxu0
  %v6596 = vadd.f32 %v5640, %v6595
  %v6597 = vpop.f32.mrf.mxu0
  %v6598 = vpop.f32.mrf.mxu0
  %v6599 = vadd.f32 %v5645, %v6598
  %v6600 = vpop.f32.mrf.mxu0
  %6601 = vmatprep.mubr.bf16.mxu0 %v6238
  %6602 = vmatmul.mubr.bf16.gmra.mxu0 %v6237
  %v6603 = vpop.f32.mrf.mxu0
  %v6604 = vadd.f32 %v5650, %v6603
  %v6605 = vpop.f32.mrf.mxu0
  %v6606 = vpop.f32.mrf.mxu0
  %v6607 = vadd.f32 %v5655, %v6606
  %v6608 = vpop.f32.mrf.mxu0
  %6609 = vmatprep.mubr.bf16.mxu0 %v6242
  %6610 = vmatmul.mubr.bf16.gmra.mxu0 %v6241
  %v6611 = vpop.f32.mrf.mxu0
  %v6612 = vadd.f32 %v5660, %v6611
  %v6613 = vpop.f32.mrf.mxu0
  %v6614 = vpop.f32.mrf.mxu0
  %v6615 = vadd.f32 %v5665, %v6614
  %v6616 = vpop.f32.mrf.mxu0
  %6617 = vmatprep.mubr.bf16.mxu0 %v6246
  %6618 = vmatmul.mubr.bf16.gmra.mxu0 %v6245
  %v6619 = vpop.f32.mrf.mxu0
  %v6620 = vadd.f32 %v5670, %v6619
  %v6621 = vpop.f32.mrf.mxu0
  %v6622 = vpop.f32.mrf.mxu0
  %v6623 = vadd.f32 %v5675, %v6622
  %v6624 = vpop.f32.mrf.mxu0
  %6625 = vmatprep.mubr.bf16.mxu0 %v6250
  %6626 = vmatmul.mubr.bf16.gmra.mxu0 %v6249
  %v6627 = vpop.f32.mrf.mxu0
  %v6628 = vadd.f32 %v5680, %v6627
  %v6629 = vpop.f32.mrf.mxu0
  %v6630 = vpop.f32.mrf.mxu0
  %v6631 = vadd.f32 %v5685, %v6630
  %v6632 = vpop.f32.mrf.mxu0
  %6633 = vmatprep.mubr.bf16.mxu0 %v6254
  %6634 = vmatmul.mubr.bf16.gmra.mxu0 %v6253
  %v6635 = vpop.f32.mrf.mxu0
  %v6636 = vadd.f32 %v5690, %v6635
  %v6637 = vpop.f32.mrf.mxu0
  %v6638 = vpop.f32.mrf.mxu0
  %v6639 = vadd.f32 %v5695, %v6638
  %v6640 = vpop.f32.mrf.mxu0
  %6641 = vmatprep.mubr.bf16.mxu0 %v6258
  %6642 = vmatmul.mubr.bf16.gmra.mxu0 %v6257
  %v6643 = vpop.f32.mrf.mxu0
  %v6644 = vadd.f32 %v5700, %v6643
  %v6645 = vpop.f32.mrf.mxu0
  %v6646 = vpop.f32.mrf.mxu0
  %v6647 = vadd.f32 %v5705, %v6646
  %v6648 = vpop.f32.mrf.mxu0
  %6649 = vmatprep.mubr.bf16.mxu0 %v6262
  %6650 = vmatmul.mubr.bf16.gmra.mxu0 %v6261
  %v6651 = vpop.f32.mrf.mxu0
  %v6652 = vadd.f32 %v5710, %v6651
  %v6653 = vpop.f32.mrf.mxu0
  %v6654 = vpop.f32.mrf.mxu0
  %v6655 = vadd.f32 %v5715, %v6654
  %v6656 = vpop.f32.mrf.mxu0
  %6657 = vmatprep.mubr.bf16.mxu0 %v6266
  %6658 = vmatmul.mubr.bf16.gmra.mxu0 %v6265
  %v6659 = vpop.f32.mrf.mxu0
  %v6660 = vadd.f32 %v5720, %v6659
  %v6661 = vpop.f32.mrf.mxu0
  %v6662 = vpop.f32.mrf.mxu0
  %v6663 = vadd.f32 %v5725, %v6662
  %v6664 = vpop.f32.mrf.mxu0
  %6665 = vmatprep.mubr.bf16.mxu0 %v6270
  %6666 = vmatmul.mubr.bf16.gmra.mxu0 %v6269
  %v6667 = vpop.f32.mrf.mxu0
  %v6668 = vadd.f32 %v5730, %v6667
  %v6669 = vpop.f32.mrf.mxu0
  %v6670 = vpop.f32.mrf.mxu0
  %v6671 = vadd.f32 %v5735, %v6670
  %v6672 = vpop.f32.mrf.mxu0
  %6673 = vmatprep.mubr.bf16.mxu0 %v6274
  %6674 = vmatmul.mubr.bf16.gmra.mxu0 %v6273
  %v6675 = vpop.f32.mrf.mxu0
  %v6676 = vadd.f32 %v5740, %v6675
  %v6677 = vpop.f32.mrf.mxu0
  %v6678 = vpop.f32.mrf.mxu0
  %v6679 = vadd.f32 %v5745, %v6678
  %v6680 = vpop.f32.mrf.mxu0
  %6681 = vmatprep.mubr.bf16.mxu0 %v6278
  %6682 = vmatmul.mubr.bf16.gmra.mxu0 %v6277
  %v6683 = vpop.f32.mrf.mxu0
  %v6684 = vadd.f32 %v5750, %v6683
  %v6685 = vpop.f32.mrf.mxu0
  %v6686 = vpop.f32.mrf.mxu0
  %v6687 = vadd.f32 %v5755, %v6686
  %v6688 = vpop.f32.mrf.mxu0
  %6689 = vmatprep.mubr.bf16.mxu0 %v6282
  %6690 = vmatmul.mubr.bf16.gmra.mxu0 %v6281
  %v6691 = vpop.f32.mrf.mxu0
  %v6692 = vadd.f32 %v5760, %v6691
  %v6693 = vpop.f32.mrf.mxu0
  %v6694 = vpop.f32.mrf.mxu0
  %v6695 = vadd.f32 %v5765, %v6694
  %v6696 = vpop.f32.mrf.mxu0
  %6697 = vmatprep.mubr.bf16.mxu0 %v6286
  %6698 = vmatmul.mubr.bf16.gmra.mxu0 %v6285
  %v6699 = vpop.f32.mrf.mxu0
  %v6700 = vadd.f32 %v5770, %v6699
  %v6701 = vpop.f32.mrf.mxu0
  %v6702 = vpop.f32.mrf.mxu0
  %v6703 = vadd.f32 %v5775, %v6702
  %v6704 = vpop.f32.mrf.mxu0
  %6705 = vdwg.mxu0
  %6706 = vmatprep.subr.bf16.mxu0 0
  %6707 = vmatpush1.bf16.msra.mxu0 %v5254
  %6708 = vmatprep.subr.bf16.mxu0 0
  %6709 = vmatpush1.bf16.msra.mxu0 %v5253
  %6710 = vmatprep.subr.bf16.mxu0 0
  %6711 = vmatpush1.bf16.msra.mxu0 %v5252
  %6712 = vmatprep.subr.bf16.mxu0 0
  %6713 = vmatpush1.bf16.msra.mxu0 %v5251
  %6714 = vmatprep.subr.bf16.mxu0 0
  %6715 = vmatpush1.bf16.msra.mxu0 %v5250
  %6716 = vmatprep.subr.bf16.mxu0 0
  %6717 = vmatpush1.bf16.msra.mxu0 %v5249
  %6718 = vmatprep.subr.bf16.mxu0 0
  %6719 = vmatpush1.bf16.msra.mxu0 %v5248
  %6720 = vmatprep.subr.bf16.mxu0 0
  %6721 = vmatpush1.bf16.msra.mxu0 %v5247
  %6722 = vmatprep.subr.bf16.mxu0 0
  %6723 = vmatpush2.bf16.msra.mxu0 %v5262
  %6724 = vmatprep.subr.bf16.mxu0 0
  %6725 = vmatpush2.bf16.msra.mxu0 %v5261
  %6726 = vmatprep.subr.bf16.mxu0 0
  %6727 = vmatpush2.bf16.msra.mxu0 %v5260
  %6728 = vmatprep.subr.bf16.mxu0 0
  %6729 = vmatpush2.bf16.msra.mxu0 %v5259
  %6730 = vmatprep.subr.bf16.mxu0 0
  %6731 = vmatpush2.bf16.msra.mxu0 %v5258
  %6732 = vmatprep.subr.bf16.mxu0 0
  %6733 = vmatpush2.bf16.msra.mxu0 %v5257
  %6734 = vmatprep.subr.bf16.mxu0 0
  %6735 = vmatpush2.bf16.msra.mxu0 %v5256
  %6736 = vmatprep.subr.bf16.mxu0 0
  %6737 = vmatpush2.bf16.msra.mxu0 %v5255
  %6738 = vmatprep.mubr.bf16.mxu0 %v6164
  %6739 = vmatmul.mubr.bf16.gmra.mxu0 %v6163
  %v6740 = vpop.f32.mrf.mxu0
  %v6741 = vadd.f32 %v6452, %v6740
  %v6742 = vpop.f32.mrf.mxu0
  %v6743 = vpop.f32.mrf.mxu0
  %v6744 = vadd.f32 %v6455, %v6743
  %v6745 = vpop.f32.mrf.mxu0
  %6746 = vmatprep.mubr.bf16.mxu0 %v6168
  %6747 = vmatmul.mubr.bf16.gmra.mxu0 %v6167
  %v6748 = vpop.f32.mrf.mxu0
  %v6749 = vadd.f32 %v6460, %v6748
  %v6750 = vpop.f32.mrf.mxu0
  %v6751 = vpop.f32.mrf.mxu0
  %v6752 = vadd.f32 %v6463, %v6751
  %v6753 = vpop.f32.mrf.mxu0
  %6754 = vmatprep.mubr.bf16.mxu0 %v6172
  %6755 = vmatmul.mubr.bf16.gmra.mxu0 %v6171
  %v6756 = vpop.f32.mrf.mxu0
  %v6757 = vadd.f32 %v6468, %v6756
  %v6758 = vpop.f32.mrf.mxu0
  %v6759 = vpop.f32.mrf.mxu0
  %v6760 = vadd.f32 %v6471, %v6759
  %v6761 = vpop.f32.mrf.mxu0
  %6762 = vmatprep.mubr.bf16.mxu0 %v6176
  %6763 = vmatmul.mubr.bf16.gmra.mxu0 %v6175
  %v6764 = vpop.f32.mrf.mxu0
  %v6765 = vadd.f32 %v6476, %v6764
  %v6766 = vpop.f32.mrf.mxu0
  %v6767 = vpop.f32.mrf.mxu0
  %v6768 = vadd.f32 %v6479, %v6767
  %v6769 = vpop.f32.mrf.mxu0
  %6770 = vmatprep.mubr.bf16.mxu0 %v6180
  %6771 = vmatmul.mubr.bf16.gmra.mxu0 %v6179
  %v6772 = vpop.f32.mrf.mxu0
  %v6773 = vadd.f32 %v6484, %v6772
  %v6774 = vpop.f32.mrf.mxu0
  %v6775 = vpop.f32.mrf.mxu0
  %v6776 = vadd.f32 %v6487, %v6775
  %v6777 = vpop.f32.mrf.mxu0
  %6778 = vmatprep.mubr.bf16.mxu0 %v6184
  %6779 = vmatmul.mubr.bf16.gmra.mxu0 %v6183
  %v6780 = vpop.f32.mrf.mxu0
  %v6781 = vadd.f32 %v6492, %v6780
  %v6782 = vpop.f32.mrf.mxu0
  %v6783 = vpop.f32.mrf.mxu0
  %v6784 = vadd.f32 %v6495, %v6783
  %v6785 = vpop.f32.mrf.mxu0
  %6786 = vmatprep.mubr.bf16.mxu0 %v6188
  %6787 = vmatmul.mubr.bf16.gmra.mxu0 %v6187
  %v6788 = vpop.f32.mrf.mxu0
  %v6789 = vadd.f32 %v6500, %v6788
  %v6790 = vpop.f32.mrf.mxu0
  %v6791 = vpop.f32.mrf.mxu0
  %v6792 = vadd.f32 %v6503, %v6791
  %v6793 = vpop.f32.mrf.mxu0
  %6794 = vmatprep.mubr.bf16.mxu0 %v6192
  %6795 = vmatmul.mubr.bf16.gmra.mxu0 %v6191
  %v6796 = vpop.f32.mrf.mxu0
  %v6797 = vadd.f32 %v6508, %v6796
  %v6798 = vpop.f32.mrf.mxu0
  %v6799 = vpop.f32.mrf.mxu0
  %v6800 = vadd.f32 %v6511, %v6799
  %v6801 = vpop.f32.mrf.mxu0
  %6802 = vmatprep.mubr.bf16.mxu0 %v6196
  %6803 = vmatmul.mubr.bf16.gmra.mxu0 %v6195
  %v6804 = vpop.f32.mrf.mxu0
  %v6805 = vadd.f32 %v6516, %v6804
  %v6806 = vpop.f32.mrf.mxu0
  %v6807 = vpop.f32.mrf.mxu0
  %v6808 = vadd.f32 %v6519, %v6807
  %v6809 = vpop.f32.mrf.mxu0
  %6810 = vmatprep.mubr.bf16.mxu0 %v6200
  %6811 = vmatmul.mubr.bf16.gmra.mxu0 %v6199
  %v6812 = vpop.f32.mrf.mxu0
  %v6813 = vadd.f32 %v6524, %v6812
  %v6814 = vpop.f32.mrf.mxu0
  %v6815 = vpop.f32.mrf.mxu0
  %v6816 = vadd.f32 %v6527, %v6815
  %v6817 = vpop.f32.mrf.mxu0
  %6818 = vmatprep.mubr.bf16.mxu0 %v6204
  %6819 = vmatmul.mubr.bf16.gmra.mxu0 %v6203
  %v6820 = vpop.f32.mrf.mxu0
  %v6821 = vadd.f32 %v6532, %v6820
  %v6822 = vpop.f32.mrf.mxu0
  %v6823 = vpop.f32.mrf.mxu0
  %v6824 = vadd.f32 %v6535, %v6823
  %v6825 = vpop.f32.mrf.mxu0
  %6826 = vmatprep.mubr.bf16.mxu0 %v6208
  %6827 = vmatmul.mubr.bf16.gmra.mxu0 %v6207
  %v6828 = vpop.f32.mrf.mxu0
  %v6829 = vadd.f32 %v6540, %v6828
  %v6830 = vpop.f32.mrf.mxu0
  %v6831 = vpop.f32.mrf.mxu0
  %v6832 = vadd.f32 %v6543, %v6831
  %v6833 = vpop.f32.mrf.mxu0
  %6834 = vmatprep.mubr.bf16.mxu0 %v6212
  %6835 = vmatmul.mubr.bf16.gmra.mxu0 %v6211
  %v6836 = vpop.f32.mrf.mxu0
  %v6837 = vadd.f32 %v6548, %v6836
  %v6838 = vpop.f32.mrf.mxu0
  %v6839 = vpop.f32.mrf.mxu0
  %v6840 = vadd.f32 %v6551, %v6839
  %v6841 = vpop.f32.mrf.mxu0
  %6842 = vmatprep.mubr.bf16.mxu0 %v6216
  %6843 = vmatmul.mubr.bf16.gmra.mxu0 %v6215
  %v6844 = vpop.f32.mrf.mxu0
  %v6845 = vadd.f32 %v6556, %v6844
  %v6846 = vpop.f32.mrf.mxu0
  %v6847 = vpop.f32.mrf.mxu0
  %v6848 = vadd.f32 %v6559, %v6847
  %v6849 = vpop.f32.mrf.mxu0
  %6850 = vmatprep.mubr.bf16.mxu0 %v6220
  %6851 = vmatmul.mubr.bf16.gmra.mxu0 %v6219
  %v6852 = vpop.f32.mrf.mxu0
  %v6853 = vadd.f32 %v6564, %v6852
  %v6854 = vpop.f32.mrf.mxu0
  %v6855 = vpop.f32.mrf.mxu0
  %v6856 = vadd.f32 %v6567, %v6855
  %v6857 = vpop.f32.mrf.mxu0
  %6858 = vmatprep.mubr.bf16.mxu0 %v6224
  %6859 = vmatmul.mubr.bf16.gmra.mxu0 %v6223
  %v6860 = vpop.f32.mrf.mxu0
  %v6861 = vadd.f32 %v6572, %v6860
  %v6862 = vpop.f32.mrf.mxu0
  %v6863 = vpop.f32.mrf.mxu0
  %v6864 = vadd.f32 %v6575, %v6863
  %v6865 = vpop.f32.mrf.mxu0
  %6866 = vmatprep.mubr.bf16.mxu0 %v6228
  %6867 = vmatmul.mubr.bf16.gmra.mxu0 %v6227
  %v6868 = vpop.f32.mrf.mxu0
  %v6869 = vadd.f32 %v6580, %v6868
  %v6870 = vpop.f32.mrf.mxu0
  %v6871 = vpop.f32.mrf.mxu0
  %v6872 = vadd.f32 %v6583, %v6871
  %v6873 = vpop.f32.mrf.mxu0
  %6874 = vmatprep.mubr.bf16.mxu0 %v6232
  %6875 = vmatmul.mubr.bf16.gmra.mxu0 %v6231
  %v6876 = vpop.f32.mrf.mxu0
  %v6877 = vadd.f32 %v6588, %v6876
  %v6878 = vpop.f32.mrf.mxu0
  %v6879 = vpop.f32.mrf.mxu0
  %v6880 = vadd.f32 %v6591, %v6879
  %v6881 = vpop.f32.mrf.mxu0
  %6882 = vmatprep.mubr.bf16.mxu0 %v6236
  %6883 = vmatmul.mubr.bf16.gmra.mxu0 %v6235
  %v6884 = vpop.f32.mrf.mxu0
  %v6885 = vadd.f32 %v6596, %v6884
  %v6886 = vpop.f32.mrf.mxu0
  %v6887 = vpop.f32.mrf.mxu0
  %v6888 = vadd.f32 %v6599, %v6887
  %v6889 = vpop.f32.mrf.mxu0
  %6890 = vmatprep.mubr.bf16.mxu0 %v6240
  %6891 = vmatmul.mubr.bf16.gmra.mxu0 %v6239
  %v6892 = vpop.f32.mrf.mxu0
  %v6893 = vadd.f32 %v6604, %v6892
  %v6894 = vpop.f32.mrf.mxu0
  %v6895 = vpop.f32.mrf.mxu0
  %v6896 = vadd.f32 %v6607, %v6895
  %v6897 = vpop.f32.mrf.mxu0
  %6898 = vmatprep.mubr.bf16.mxu0 %v6244
  %6899 = vmatmul.mubr.bf16.gmra.mxu0 %v6243
  %v6900 = vpop.f32.mrf.mxu0
  %v6901 = vadd.f32 %v6612, %v6900
  %v6902 = vpop.f32.mrf.mxu0
  %v6903 = vpop.f32.mrf.mxu0
  %v6904 = vadd.f32 %v6615, %v6903
  %v6905 = vpop.f32.mrf.mxu0
  %6906 = vmatprep.mubr.bf16.mxu0 %v6248
  %6907 = vmatmul.mubr.bf16.gmra.mxu0 %v6247
  %v6908 = vpop.f32.mrf.mxu0
  %v6909 = vadd.f32 %v6620, %v6908
  %v6910 = vpop.f32.mrf.mxu0
  %v6911 = vpop.f32.mrf.mxu0
  %v6912 = vadd.f32 %v6623, %v6911
  %v6913 = vpop.f32.mrf.mxu0
  %6914 = vmatprep.mubr.bf16.mxu0 %v6252
  %6915 = vmatmul.mubr.bf16.gmra.mxu0 %v6251
  %v6916 = vpop.f32.mrf.mxu0
  %v6917 = vadd.f32 %v6628, %v6916
  %v6918 = vpop.f32.mrf.mxu0
  %v6919 = vpop.f32.mrf.mxu0
  %v6920 = vadd.f32 %v6631, %v6919
  %v6921 = vpop.f32.mrf.mxu0
  %6922 = vmatprep.mubr.bf16.mxu0 %v6256
  %6923 = vmatmul.mubr.bf16.gmra.mxu0 %v6255
  %v6924 = vpop.f32.mrf.mxu0
  %v6925 = vadd.f32 %v6636, %v6924
  %v6926 = vpop.f32.mrf.mxu0
  %v6927 = vpop.f32.mrf.mxu0
  %v6928 = vadd.f32 %v6639, %v6927
  %v6929 = vpop.f32.mrf.mxu0
  %6930 = vmatprep.mubr.bf16.mxu0 %v6260
  %6931 = vmatmul.mubr.bf16.gmra.mxu0 %v6259
  %v6932 = vpop.f32.mrf.mxu0
  %v6933 = vadd.f32 %v6644, %v6932
  %v6934 = vpop.f32.mrf.mxu0
  %v6935 = vpop.f32.mrf.mxu0
  %v6936 = vadd.f32 %v6647, %v6935
  %v6937 = vpop.f32.mrf.mxu0
  %6938 = vmatprep.mubr.bf16.mxu0 %v6264
  %6939 = vmatmul.mubr.bf16.gmra.mxu0 %v6263
  %v6940 = vpop.f32.mrf.mxu0
  %v6941 = vadd.f32 %v6652, %v6940
  %v6942 = vpop.f32.mrf.mxu0
  %v6943 = vpop.f32.mrf.mxu0
  %v6944 = vadd.f32 %v6655, %v6943
  %v6945 = vpop.f32.mrf.mxu0
  %6946 = vmatprep.mubr.bf16.mxu0 %v6268
  %6947 = vmatmul.mubr.bf16.gmra.mxu0 %v6267
  %v6948 = vpop.f32.mrf.mxu0
  %v6949 = vadd.f32 %v6660, %v6948
  %v6950 = vpop.f32.mrf.mxu0
  %v6951 = vpop.f32.mrf.mxu0
  %v6952 = vadd.f32 %v6663, %v6951
  %v6953 = vpop.f32.mrf.mxu0
  %6954 = vmatprep.mubr.bf16.mxu0 %v6272
  %6955 = vmatmul.mubr.bf16.gmra.mxu0 %v6271
  %v6956 = vpop.f32.mrf.mxu0
  %v6957 = vadd.f32 %v6668, %v6956
  %v6958 = vpop.f32.mrf.mxu0
  %v6959 = vpop.f32.mrf.mxu0
  %v6960 = vadd.f32 %v6671, %v6959
  %v6961 = vpop.f32.mrf.mxu0
  %6962 = vmatprep.mubr.bf16.mxu0 %v6276
  %6963 = vmatmul.mubr.bf16.gmra.mxu0 %v6275
  %v6964 = vpop.f32.mrf.mxu0
  %v6965 = vadd.f32 %v6676, %v6964
  %v6966 = vpop.f32.mrf.mxu0
  %v6967 = vpop.f32.mrf.mxu0
  %v6968 = vadd.f32 %v6679, %v6967
  %v6969 = vpop.f32.mrf.mxu0
  %6970 = vmatprep.mubr.bf16.mxu0 %v6280
  %6971 = vmatmul.mubr.bf16.gmra.mxu0 %v6279
  %v6972 = vpop.f32.mrf.mxu0
  %v6973 = vadd.f32 %v6684, %v6972
  %v6974 = vpop.f32.mrf.mxu0
  %v6975 = vpop.f32.mrf.mxu0
  %v6976 = vadd.f32 %v6687, %v6975
  %v6977 = vpop.f32.mrf.mxu0
  %6978 = vmatprep.mubr.bf16.mxu0 %v6284
  %6979 = vmatmul.mubr.bf16.gmra.mxu0 %v6283
  %v6980 = vpop.f32.mrf.mxu0
  %v6981 = vadd.f32 %v6692, %v6980
  %v6982 = vpop.f32.mrf.mxu0
  %v6983 = vpop.f32.mrf.mxu0
  %v6984 = vadd.f32 %v6695, %v6983
  %v6985 = vpop.f32.mrf.mxu0
  %6986 = vmatprep.mubr.bf16.mxu0 %v6288
  %6987 = vmatmul.mubr.bf16.gmra.mxu0 %v6287
  %v6988 = vpop.f32.mrf.mxu0
  %v6989 = vadd.f32 %v6700, %v6988
  %v6990 = vpop.f32.mrf.mxu0
  %v6991 = vpop.f32.mrf.mxu0
  %v6992 = vadd.f32 %v6703, %v6991
  %v6993 = vpop.f32.mrf.mxu0
  %6994 = vdwg.mxu0
  %6995 = vst [vmem:[%s10] sm:$0xff] %v6741
  %6996 = vst [vmem:[%s10 + $0x8] sm:$0xff] %v6744
  %6997 = vst [vmem:[%s10 + $0x10] sm:$0xff] %v6749
  %6998 = vst [vmem:[%s10 + $0x18] sm:$0xff] %v6752
  %6999 = vst [vmem:[%s10 + $0x20] sm:$0xff] %v6757
  %7000 = vst [vmem:[%s10 + $0x28] sm:$0xff] %v6760
  %7001 = vst [vmem:[%s10 + $0x30] sm:$0xff] %v6765
  %7002 = vst [vmem:[%s10 + $0x38] sm:$0xff] %v6768
  %7003 = vst [vmem:[%s10 + $0x40] sm:$0xff] %v6773
  %7004 = vst [vmem:[%s10 + $0x48] sm:$0xff] %v6776
  %7005 = vst [vmem:[%s10 + $0x50] sm:$0xff] %v6781
  %7006 = vst [vmem:[%s10 + $0x58] sm:$0xff] %v6784
  %7007 = vst [vmem:[%s10 + $0x60] sm:$0xff] %v6789
  %7008 = vst [vmem:[%s10 + $0x68] sm:$0xff] %v6792
  %7009 = vst [vmem:[%s10 + $0x70] sm:$0xff] %v6797
  %7010 = vst [vmem:[%s10 + $0x78] sm:$0xff] %v6800
  %7011 = vst [vmem:[%s10 + $0x80] sm:$0xff] %v6805
  %7012 = vst [vmem:[%s10 + $0x88] sm:$0xff] %v6808
  %7013 = vst [vmem:[%s10 + $0x90] sm:$0xff] %v6813
  %7014 = vst [vmem:[%s10 + $0x98] sm:$0xff] %v6816
  %7015 = vst [vmem:[%s10 + $0xa0] sm:$0xff] %v6821
  %7016 = vst [vmem:[%s10 + $0xa8] sm:$0xff] %v6824
  %7017 = vst [vmem:[%s10 + $0xb0] sm:$0xff] %v6829
  %7018 = vst [vmem:[%s10 + $0xb8] sm:$0xff] %v6832
  %7019 = vst [vmem:[%s10 + $0xc0] sm:$0xff] %v6837
  %7020 = vst [vmem:[%s10 + $0xc8] sm:$0xff] %v6840
  %7021 = vst [vmem:[%s10 + $0xd0] sm:$0xff] %v6845
  %7022 = vst [vmem:[%s10 + $0xd8] sm:$0xff] %v6848
  %7023 = vst [vmem:[%s10 + $0xe0] sm:$0xff] %v6853
  %7024 = vst [vmem:[%s10 + $0xe8] sm:$0xff] %v6856
  %7025 = vst [vmem:[%s10 + $0xf0] sm:$0xff] %v6861
  %7026 = vst [vmem:[%s10 + $0xf8] sm:$0xff] %v6864
  %7027 = vst [vmem:[%s10 + $0x100] sm:$0xff] %v6869
  %7028 = vst [vmem:[%s10 + $0x108] sm:$0xff] %v6872
  %7029 = vst [vmem:[%s10 + $0x110] sm:$0xff] %v6877
  %7030 = vst [vmem:[%s10 + $0x118] sm:$0xff] %v6880
  %7031 = vst [vmem:[%s10 + $0x120] sm:$0xff] %v6885
  %7032 = vst [vmem:[%s10 + $0x128] sm:$0xff] %v6888
  %7033 = vst [vmem:[%s10 + $0x130] sm:$0xff] %v6893
  %7034 = vst [vmem:[%s10 + $0x138] sm:$0xff] %v6896
  %7035 = vst [vmem:[%s10 + $0x140] sm:$0xff] %v6901
  %7036 = vst [vmem:[%s10 + $0x148] sm:$0xff] %v6904
  %7037 = vst [vmem:[%s10 + $0x150] sm:$0xff] %v6909
  %7038 = vst [vmem:[%s10 + $0x158] sm:$0xff] %v6912
  %7039 = vst [vmem:[%s10 + $0x160] sm:$0xff] %v6917
  %7040 = vst [vmem:[%s10 + $0x168] sm:$0xff] %v6920
  %7041 = vst [vmem:[%s10 + $0x170] sm:$0xff] %v6925
  %7042 = vst [vmem:[%s10 + $0x178] sm:$0xff] %v6928
  %7043 = vst [vmem:[%s10 + $0x180] sm:$0xff] %v6933
  %7044 = vst [vmem:[%s10 + $0x188] sm:$0xff] %v6936
  %7045 = vst [vmem:[%s10 + $0x190] sm:$0xff] %v6941
  %7046 = vst [vmem:[%s10 + $0x198] sm:$0xff] %v6944
  %7047 = vst [vmem:[%s10 + $0x1a0] sm:$0xff] %v6949
  %7048 = vst [vmem:[%s10 + $0x1a8] sm:$0xff] %v6952
  %7049 = vst [vmem:[%s10 + $0x1b0] sm:$0xff] %v6957
  %7050 = vst [vmem:[%s10 + $0x1b8] sm:$0xff] %v6960
  %7051 = vst [vmem:[%s10 + $0x1c0] sm:$0xff] %v6965
  %7052 = vst [vmem:[%s10 + $0x1c8] sm:$0xff] %v6968
  %7053 = vst [vmem:[%s10 + $0x1d0] sm:$0xff] %v6973
  %7054 = vst [vmem:[%s10 + $0x1d8] sm:$0xff] %v6976
  %7055 = vst [vmem:[%s10 + $0x1e0] sm:$0xff] %v6981
  %7056 = vst [vmem:[%s10 + $0x1e8] sm:$0xff] %v6984
  %7057 = vst [vmem:[%s10 + $0x1f0] sm:$0xff] %v6989
  %7058 = vst [vmem:[%s10 + $0x1f8] sm:$0xff] %v6992
  // Predicated region
  $region139: #{rnn_forward.1} parent=0 // pred_check
    _
  $region140: #{rnn_forward.1} parent=0 // pred_check_branch
    %7060 = sbr.rel (0) target = $region142
  $region141: #{rnn_forward.1} parent=0 // pred_region
    _
  $region142: #{rnn_forward.1} parent=0 // pred_fallthru
    _
  // Predicated region
  $region143: #{rnn_forward.1} parent=0 // pred_check
    _
  $region144: #{rnn_forward.1} parent=0 // pred_check_branch
    %7062 = sbr.rel (0) target = $region146
  $region145: #{rnn_forward.1} parent=0 // pred_region
    _
  $region146: #{rnn_forward.1} parent=0 // pred_fallthru
    _
  %7063 = vsyncmov [#allocation6]
  %s7064 = vpop.sfrf %7063
  %p7065 = scmp.eq.s32.totalorder %s7064, 0
  %p7066 = pneg %p7065
  %7068 = shalt.err (%p7066)
  %s7069 = scalar_lea.sflag [#allocation6], 1
  %7070 = vsyncmov %s7069
  %s7071 = vpop.sfrf %7070
  %p7072 = scmp.eq.s32.totalorder %s7071, 0
  %p7073 = pneg %p7072
  %7075 = shalt.err (%p7073)
  %s7076 = scalar_lea.sflag [#allocation6], 2
  %7077 = vsyncmov %s7076
  %s7078 = vpop.sfrf %7077
  %p7079 = scmp.eq.s32.totalorder %s7078, 0
  %p7080 = pneg %p7079
  %7082 = shalt.err (%p7080)

</llo_original>
